<compile_context>
chip_gen: v7x
topology: tpu7x:2x2x1
jax: 0.10.0
libtpu: 0.0.40
codegen_flags: <defaults>
</compile_context>

<pallas_src>
import jax
import jax.numpy as jnp
import numpy as np
from jax import lax
from jax.experimental import pallas as pl
from jax.experimental.pallas import tpu as pltpu


def _round_up(x, m):
    return (x + m - 1) // m * m


def _lka_kernel(x_ref, w0_ref, b0_ref, w1_ref, b1_ref, wp_ref, bp_ref,
                o_ref, buf_ref):
    """One batch element per grid step.

    x_ref : (1, H, W, C)                      input block (NHWC)
    w0_ref: (25, C)  b0_ref: (1, C)           depthwise 5x5 taps / bias
    w1_ref: (49, C)  b1_ref: (1, C)           depthwise 7x7 (dil 3) taps / bias
    wp_ref: (C, C)   bp_ref: (1, C)           1x1 pointwise
    buf_ref: (H + 18, round_up(W + 18, 8), C) shared zero-padded scratch
    """
    _, H, W, C = x_ref.shape
    PH1 = PW1 = 2          # conv0: 5x5, padding 2
    PH2 = PW2 = 9          # conv_spatial: 7x7, dilation 3, padding 9
    DIL = 3
    W1U = _round_up(W + 2 * PW1, 8)   # aligned used width, stage 1
    W2U = buf_ref.shape[1]            # = round_up(W + 2*PW2, 8), stage 2

    def zero_border(ph, pw, cols):
        # Zero only the halo frame: top/bottom row strips plus sublane-aligned
        # left/right column bands.  The bands may overlap the interior; that is
        # fine because the interior is rewritten right after (before any read).
        zrow = jnp.zeros((ph, cols, C), jnp.float32)
        buf_ref[0:ph, 0:cols, :] = zrow
        buf_ref[ph + H:ph + H + ph, 0:cols, :] = zrow
        lw = min(_round_up(pw, 8), cols)
        buf_ref[ph:ph + H, 0:lw, :] = jnp.zeros((H, lw, C), jnp.float32)
        r0 = (pw + W) // 8 * 8
        if r0 < cols:
            buf_ref[ph:ph + H, r0:cols, :] = jnp.zeros((H, cols - r0, C),
                                                       jnp.float32)

    # ---- stage 1: depthwise 5x5, padding 2 ---------------------------------
    zero_border(PH1, PW1, W1U)
    buf_ref[PH1:PH1 + H, PW1:PW1 + W, :] = x_ref[0].astype(jnp.float32)

    attn = jnp.zeros((H, W, C), jnp.float32)
    for j in range(5):
        # One VMEM load per kernel column; row shifts are leading-dim slices.
        col = buf_ref[0:H + 2 * PH1, j:j + W, :]
        for i in range(5):
            attn = attn + col[i:i + H] * w0_ref[i * 5 + j]
    attn = attn + b0_ref[0]

    # ---- stage 2: depthwise 7x7, dilation 3, padding 9 ---------------------
    zero_border(PH2, PW2, W2U)
    buf_ref[PH2:PH2 + H, PW2:PW2 + W, :] = attn

    attn2 = jnp.zeros((H, W, C), jnp.float32)
    for j in range(7):
        col = buf_ref[0:H + 2 * PH2, DIL * j:DIL * j + W, :]
        for i in range(7):
            attn2 = attn2 + col[DIL * i:DIL * i + H] * w1_ref[i * 7 + j]
    attn2 = attn2 + b1_ref[0]

    # ---- 1x1 pointwise == channel matmul on the MXU ------------------------
    proj = jnp.dot(attn2.reshape(H * W, C), wp_ref[...],
                   preferred_element_type=jnp.float32) + bp_ref[...]

    # ---- gate: u * attn (re-load x instead of keeping it live) -------------
    o_ref[0] = (x_ref[0].astype(jnp.float32)
                * proj.reshape(H, W, C)).astype(o_ref.dtype)


def lka_attention(x_nchw, params):
    """x_nchw: (B, C, H, W); params in PyTorch layouts."""
    w0, b0, w1, b1, wp, bp = params
    B, C, H, W = x_nchw.shape

    # NOTE: in an all-NHWC model these transposes disappear; they exist only to
    # match the PyTorch NCHW interface of the spec.
    x = jnp.transpose(x_nchw, (0, 2, 3, 1))                       # NHWC
    w0_k = jnp.transpose(w0[:, 0], (1, 2, 0)).reshape(25, C)      # (C,1,5,5)->(25,C)
    w1_k = jnp.transpose(w1[:, 0], (1, 2, 0)).reshape(49, C)      # (C,1,7,7)->(49,C)
    wp_k = jnp.transpose(wp[:, :, 0, 0], (1, 0))                  # (Cout,Cin,1,1)->(Cin,Cout)
    b0_k = b0.reshape(1, C)
    b1_k = b1.reshape(1, C)
    bp_k = bp.reshape(1, C)

    w2u = _round_up(W + 18, 8)
    itemsize = jnp.dtype(x.dtype).itemsize
    est = ((H + 18) * w2u * C * 4                 # shared scratch pad
           + 2 * 2 * H * W * C * itemsize         # double-buffered in/out blocks
           + (25 + 49 + 3 + C) * C * 4)           # weights / biases
    vmem_limit = int(min(32 * 1024 * 1024, max(16 * 1024 * 1024, 2 * est)))

    out = pl.pallas_call(
        _lka_kernel,
        out_shape=jax.ShapeDtypeStruct((B, H, W, C), x.dtype),
        grid_spec=pltpu.PrefetchScalarGridSpec(
            num_scalar_prefetch=0,
            grid=(B,),
            in_specs=[
                pl.BlockSpec((1, H, W, C), lambda b: (b, 0, 0, 0)),
                pl.BlockSpec((25, C), lambda b: (0, 0)),
                pl.BlockSpec((1, C), lambda b: (0, 0)),
                pl.BlockSpec((49, C), lambda b: (0, 0)),
                pl.BlockSpec((1, C), lambda b: (0, 0)),
                pl.BlockSpec((C, C), lambda b: (0, 0)),
                pl.BlockSpec((1, C), lambda b: (0, 0)),
            ],
            out_specs=pl.BlockSpec((1, H, W, C), lambda b: (b, 0, 0, 0)),
            scratch_shapes=[
                pltpu.VMEM((H + 18, w2u, C), jnp.float32),  # shared padded pad
            ],
        ),
        compiler_params=pltpu.CompilerParams(
            dimension_semantics=("parallel",),
            vmem_limit_bytes=vmem_limit),
    )(x, w0_k, b0_k, w1_k, b1_k, wp_k, bp_k)

    return jnp.transpose(out, (0, 3, 1, 2))                       # back to NCHW


def ref_lka(x, w0, b0, w1, b1, wp, bp):
    """Pure-JAX reference (NCHW, PyTorch semantics)."""
    C = x.shape[1]
    dn = lax.conv_dimension_numbers(x.shape, w0.shape, ('NCHW', 'OIHW', 'NCHW'))
    a = lax.conv_general_dilated(x, w0, (1, 1), [(2, 2), (2, 2)],
                                 dimension_numbers=dn, feature_group_count=C)
    a = a + b0[None, :, None, None]
    a = lax.conv_general_dilated(a, w1, (1, 1), [(9, 9), (9, 9)],
                                 rhs_dilation=(3, 3),
                                 dimension_numbers=dn, feature_group_count=C)
    a = a + b1[None, :, None, None]
    a = lax.conv_general_dilated(a, wp, (1, 1), [(0, 0), (0, 0)],
                                 dimension_numbers=dn)
    a = a + bp[None, :, None, None]
    return x * a


if __name__ == "__main__":
    key = jax.random.PRNGKey(0)
    B, C, H, W = 2, 32, 16, 16
    ks = jax.random.split(key, 7)

    # Deterministic synthetic parameters (PyTorch layouts).
    x = jax.random.normal(ks[0], (B, C, H, W), jnp.float32)
    w0 = jax.random.normal(ks[1], (C, 1, 5, 5), jnp.float32) * 0.1   # conv0.weight
    b0 = jax.random.normal(ks[2], (C,), jnp.float32) * 0.1           # conv0.bias
    w1 = jax.random.normal(ks[3], (C, 1, 7, 7), jnp.float32) * 0.1   # conv_spatial.weight
    b1 = jax.random.normal(ks[4], (C,), jnp.float32) * 0.1           # conv_spatial.bias
    wp = jax.random.normal(ks[5], (C, C, 1, 1), jnp.float32) * 0.1   # conv1.weight
    bp = jax.random.normal(ks[6], (C,), jnp.float32) * 0.1           # conv1.bias

    out = lka_attention(x, (w0, b0, w1, b1, wp, bp))
    out = jax.block_until_ready(out)

    ref = ref_lka(x, w0, b0, w1, b1, wp, bp)
    np.testing.assert_allclose(np.asarray(out), np.asarray(ref), rtol=1e-4, atol=1e-4)
    print("KERNEL_OK")
</pallas_src>

<mosaic_0001>
module attributes {stable_mosaic.version = 11 : i64} {
  func.func @_lka_kernel(%arg0: i32, %arg1: memref<1x16x16x32xf32, #tpu.memory_space<vmem>>, %arg2: memref<25x32xf32, #tpu.memory_space<vmem>>, %arg3: memref<1x32xf32, #tpu.memory_space<vmem>>, %arg4: memref<49x32xf32, #tpu.memory_space<vmem>>, %arg5: memref<1x32xf32, #tpu.memory_space<vmem>>, %arg6: memref<32x32xf32, #tpu.memory_space<vmem>>, %arg7: memref<1x32xf32, #tpu.memory_space<vmem>>, %arg8: memref<1x16x16x32xf32, #tpu.memory_space<vmem>>, %arg9: memref<34x40x32xf32, #tpu.memory_space<vmem>>) attributes {dimension_semantics = [#tpu.dimension_semantics<parallel>], iteration_bounds = array<i64: 2>, scalar_prefetch = 0 : i64, scratch_operands = 1 : i64, tpu.core_type = #tpu.core_type<tc>, window_params = [{transform_indices = @transform_0, window_bounds = array<i64: 1, 16, 16, 32>}, {pipeline_mode = #tpu.pipeline_mode<synchronous>, transform_indices = @transform_1, window_bounds = array<i64: 25, 32>}, {pipeline_mode = #tpu.pipeline_mode<synchronous>, transform_indices = @transform_2, window_bounds = array<i64: 1, 32>}, {pipeline_mode = #tpu.pipeline_mode<synchronous>, transform_indices = @transform_3, window_bounds = array<i64: 49, 32>}, {pipeline_mode = #tpu.pipeline_mode<synchronous>, transform_indices = @transform_4, window_bounds = array<i64: 1, 32>}, {pipeline_mode = #tpu.pipeline_mode<synchronous>, transform_indices = @transform_5, window_bounds = array<i64: 32, 32>}, {pipeline_mode = #tpu.pipeline_mode<synchronous>, transform_indices = @transform_6, window_bounds = array<i64: 1, 32>}, {transform_indices = @transform_7, window_bounds = array<i64: 1, 16, 16, 32>}]} {
    %cst = arith.constant 0.000000e+00 : f32
    %0 = vector.broadcast %cst : f32 to vector<2x24x32xf32>
    %c0 = arith.constant 0 : index
    %c0_0 = arith.constant 0 : index
    %c0_1 = arith.constant 0 : index
    %1 = vector.load %arg9[%c0, %c0_0, %c0_1] : memref<34x40x32xf32, #tpu.memory_space<vmem>>, vector<2x24x32xf32>
    tpu.vector_store %arg9[%c0, %c0_0, %c0_1], %0 {strides = array<i32>} : memref<34x40x32xf32, #tpu.memory_space<vmem>>, vector<2x24x32xf32>,
    %c18 = arith.constant 18 : index
    %c0_2 = arith.constant 0 : index
    %c0_3 = arith.constant 0 : index
    %2 = vector.load %arg9[%c18, %c0_2, %c0_3] : memref<34x40x32xf32, #tpu.memory_space<vmem>>, vector<2x24x32xf32>
    tpu.vector_store %arg9[%c18, %c0_2, %c0_3], %0 {strides = array<i32>} : memref<34x40x32xf32, #tpu.memory_space<vmem>>, vector<2x24x32xf32>,
    %cst_4 = arith.constant 0.000000e+00 : f32
    %3 = vector.broadcast %cst_4 : f32 to vector<16x8x32xf32>
    %c2 = arith.constant 2 : index
    %c0_5 = arith.constant 0 : index
    %c0_6 = arith.constant 0 : index
    %4 = vector.load %arg9[%c2, %c0_5, %c0_6] : memref<34x40x32xf32, #tpu.memory_space<vmem>>, vector<16x8x32xf32>
    tpu.vector_store %arg9[%c2, %c0_5, %c0_6], %3 {strides = array<i32>} : memref<34x40x32xf32, #tpu.memory_space<vmem>>, vector<16x8x32xf32>,
    %cst_7 = arith.constant 0.000000e+00 : f32
    %5 = vector.broadcast %cst_7 : f32 to vector<16x8x32xf32>
    %c2_8 = arith.constant 2 : index
    %c16 = arith.constant 16 : index
    %c0_9 = arith.constant 0 : index
    %6 = vector.load %arg9[%c2_8, %c16, %c0_9] : memref<34x40x32xf32, #tpu.memory_space<vmem>>, vector<16x8x32xf32>
    tpu.vector_store %arg9[%c2_8, %c16, %c0_9], %5 {strides = array<i32>} : memref<34x40x32xf32, #tpu.memory_space<vmem>>, vector<16x8x32xf32>,
    %c0_10 = arith.constant 0 : index
    %c0_11 = arith.constant 0 : index
    %c0_12 = arith.constant 0 : index
    %c0_13 = arith.constant 0 : index
    %7 = vector.load %arg1[%c0_10, %c0_11, %c0_12, %c0_13] : memref<1x16x16x32xf32, #tpu.memory_space<vmem>>, vector<1x16x16x32xf32>
    %8 = vector.shape_cast %7 : vector<1x16x16x32xf32> to vector<16x16x32xf32>
    %c2_14 = arith.constant 2 : index
    %c2_15 = arith.constant 2 : index
    %c0_16 = arith.constant 0 : index
    %9 = vector.load %arg9[%c2_14, %c2_15, %c0_16] : memref<34x40x32xf32, #tpu.memory_space<vmem>>, vector<16x16x32xf32>
    tpu.vector_store %arg9[%c2_14, %c2_15, %c0_16], %8 {strides = array<i32>} : memref<34x40x32xf32, #tpu.memory_space<vmem>>, vector<16x16x32xf32>,
    %cst_17 = arith.constant 0.000000e+00 : f32
    %10 = vector.broadcast %cst_17 : f32 to vector<16x16x32xf32>
    %c0_18 = arith.constant 0 : index
    %c0_19 = arith.constant 0 : index
    %c0_20 = arith.constant 0 : index
    %11 = vector.load %arg9[%c0_18, %c0_19, %c0_20] : memref<34x40x32xf32, #tpu.memory_space<vmem>>, vector<20x16x32xf32>
    %12 = vector.extract_strided_slice %11 {offsets = [0, 0, 0], sizes = [16, 16, 32], strides = [1, 1, 1]} : vector<20x16x32xf32> to vector<16x16x32xf32>
    %c0_21 = arith.constant 0 : index
    %c0_22 = arith.constant 0 : index
    %13 = vector.load %arg2[%c0_21, %c0_22] : memref<25x32xf32, #tpu.memory_space<vmem>>, vector<1x32xf32>
    %14 = vector.shape_cast %13 : vector<1x32xf32> to vector<32xf32>
    %15 = vector.shape_cast %14 : vector<32xf32> to vector<1x1x32xf32>
    %16 = vector.broadcast %15 : vector<1x1x32xf32> to vector<16x16x32xf32>
    %17 = arith.mulf %12, %16 : vector<16x16x32xf32>
    %18 = arith.addf %10, %17 : vector<16x16x32xf32>
    %19 = vector.extract_strided_slice %11 {offsets = [1, 0, 0], sizes = [16, 16, 32], strides = [1, 1, 1]} : vector<20x16x32xf32> to vector<16x16x32xf32>
    %c5 = arith.constant 5 : index
    %c0_23 = arith.constant 0 : index
    %20 = vector.load %arg2[%c5, %c0_23] : memref<25x32xf32, #tpu.memory_space<vmem>>, vector<1x32xf32>
    %21 = vector.shape_cast %20 : vector<1x32xf32> to vector<32xf32>
    %22 = vector.shape_cast %21 : vector<32xf32> to vector<1x1x32xf32>
    %23 = vector.broadcast %22 : vector<1x1x32xf32> to vector<16x16x32xf32>
    %24 = arith.mulf %19, %23 : vector<16x16x32xf32>
    %25 = arith.addf %18, %24 : vector<16x16x32xf32>
    %26 = vector.extract_strided_slice %11 {offsets = [2, 0, 0], sizes = [16, 16, 32], strides = [1, 1, 1]} : vector<20x16x32xf32> to vector<16x16x32xf32>
    %c10 = arith.constant 10 : index
    %c0_24 = arith.constant 0 : index
    %27 = vector.load %arg2[%c10, %c0_24] : memref<25x32xf32, #tpu.memory_space<vmem>>, vector<1x32xf32>
    %28 = vector.shape_cast %27 : vector<1x32xf32> to vector<32xf32>
    %29 = vector.shape_cast %28 : vector<32xf32> to vector<1x1x32xf32>
    %30 = vector.broadcast %29 : vector<1x1x32xf32> to vector<16x16x32xf32>
    %31 = arith.mulf %26, %30 : vector<16x16x32xf32>
    %32 = arith.addf %25, %31 : vector<16x16x32xf32>
    %33 = vector.extract_strided_slice %11 {offsets = [3, 0, 0], sizes = [16, 16, 32], strides = [1, 1, 1]} : vector<20x16x32xf32> to vector<16x16x32xf32>
    %c15 = arith.constant 15 : index
    %c0_25 = arith.constant 0 : index
    %34 = vector.load %arg2[%c15, %c0_25] : memref<25x32xf32, #tpu.memory_space<vmem>>, vector<1x32xf32>
    %35 = vector.shape_cast %34 : vector<1x32xf32> to vector<32xf32>
    %36 = vector.shape_cast %35 : vector<32xf32> to vector<1x1x32xf32>
    %37 = vector.broadcast %36 : vector<1x1x32xf32> to vector<16x16x32xf32>
    %38 = arith.mulf %33, %37 : vector<16x16x32xf32>
    %39 = arith.addf %32, %38 : vector<16x16x32xf32>
    %40 = vector.extract_strided_slice %11 {offsets = [4, 0, 0], sizes = [16, 16, 32], strides = [1, 1, 1]} : vector<20x16x32xf32> to vector<16x16x32xf32>
    %c20 = arith.constant 20 : index
    %c0_26 = arith.constant 0 : index
    %41 = vector.load %arg2[%c20, %c0_26] : memref<25x32xf32, #tpu.memory_space<vmem>>, vector<1x32xf32>
    %42 = vector.shape_cast %41 : vector<1x32xf32> to vector<32xf32>
    %43 = vector.shape_cast %42 : vector<32xf32> to vector<1x1x32xf32>
    %44 = vector.broadcast %43 : vector<1x1x32xf32> to vector<16x16x32xf32>
    %45 = arith.mulf %40, %44 : vector<16x16x32xf32>
    %46 = arith.addf %39, %45 : vector<16x16x32xf32>
    %c0_27 = arith.constant 0 : index
    %c1 = arith.constant 1 : index
    %c0_28 = arith.constant 0 : index
    %47 = vector.load %arg9[%c0_27, %c1, %c0_28] : memref<34x40x32xf32, #tpu.memory_space<vmem>>, vector<20x16x32xf32>
    %48 = vector.extract_strided_slice %47 {offsets = [0, 0, 0], sizes = [16, 16, 32], strides = [1, 1, 1]} : vector<20x16x32xf32> to vector<16x16x32xf32>
    %c1_29 = arith.constant 1 : index
    %c0_30 = arith.constant 0 : index
    %49 = vector.load %arg2[%c1_29, %c0_30] : memref<25x32xf32, #tpu.memory_space<vmem>>, vector<1x32xf32>
    %50 = vector.shape_cast %49 : vector<1x32xf32> to vector<32xf32>
    %51 = vector.shape_cast %50 : vector<32xf32> to vector<1x1x32xf32>
    %52 = vector.broadcast %51 : vector<1x1x32xf32> to vector<16x16x32xf32>
    %53 = arith.mulf %48, %52 : vector<16x16x32xf32>
    %54 = arith.addf %46, %53 : vector<16x16x32xf32>
    %55 = vector.extract_strided_slice %47 {offsets = [1, 0, 0], sizes = [16, 16, 32], strides = [1, 1, 1]} : vector<20x16x32xf32> to vector<16x16x32xf32>
    %c6 = arith.constant 6 : index
    %c0_31 = arith.constant 0 : index
    %56 = vector.load %arg2[%c6, %c0_31] : memref<25x32xf32, #tpu.memory_space<vmem>>, vector<1x32xf32>
    %57 = vector.shape_cast %56 : vector<1x32xf32> to vector<32xf32>
    %58 = vector.shape_cast %57 : vector<32xf32> to vector<1x1x32xf32>
    %59 = vector.broadcast %58 : vector<1x1x32xf32> to vector<16x16x32xf32>
    %60 = arith.mulf %55, %59 : vector<16x16x32xf32>
    %61 = arith.addf %54, %60 : vector<16x16x32xf32>
    %62 = vector.extract_strided_slice %47 {offsets = [2, 0, 0], sizes = [16, 16, 32], strides = [1, 1, 1]} : vector<20x16x32xf32> to vector<16x16x32xf32>
    %c11 = arith.constant 11 : index
    %c0_32 = arith.constant 0 : index
    %63 = vector.load %arg2[%c11, %c0_32] : memref<25x32xf32, #tpu.memory_space<vmem>>, vector<1x32xf32>
    %64 = vector.shape_cast %63 : vector<1x32xf32> to vector<32xf32>
    %65 = vector.shape_cast %64 : vector<32xf32> to vector<1x1x32xf32>
    %66 = vector.broadcast %65 : vector<1x1x32xf32> to vector<16x16x32xf32>
    %67 = arith.mulf %62, %66 : vector<16x16x32xf32>
    %68 = arith.addf %61, %67 : vector<16x16x32xf32>
    %69 = vector.extract_strided_slice %47 {offsets = [3, 0, 0], sizes = [16, 16, 32], strides = [1, 1, 1]} : vector<20x16x32xf32> to vector<16x16x32xf32>
    %c16_33 = arith.constant 16 : index
    %c0_34 = arith.constant 0 : index
    %70 = vector.load %arg2[%c16_33, %c0_34] : memref<25x32xf32, #tpu.memory_space<vmem>>, vector<1x32xf32>
    %71 = vector.shape_cast %70 : vector<1x32xf32> to vector<32xf32>
    %72 = vector.shape_cast %71 : vector<32xf32> to vector<1x1x32xf32>
    %73 = vector.broadcast %72 : vector<1x1x32xf32> to vector<16x16x32xf32>
    %74 = arith.mulf %69, %73 : vector<16x16x32xf32>
    %75 = arith.addf %68, %74 : vector<16x16x32xf32>
    %76 = vector.extract_strided_slice %47 {offsets = [4, 0, 0], sizes = [16, 16, 32], strides = [1, 1, 1]} : vector<20x16x32xf32> to vector<16x16x32xf32>
    %c21 = arith.constant 21 : index
    %c0_35 = arith.constant 0 : index
    %77 = vector.load %arg2[%c21, %c0_35] : memref<25x32xf32, #tpu.memory_space<vmem>>, vector<1x32xf32>
    %78 = vector.shape_cast %77 : vector<1x32xf32> to vector<32xf32>
    %79 = vector.shape_cast %78 : vector<32xf32> to vector<1x1x32xf32>
    %80 = vector.broadcast %79 : vector<1x1x32xf32> to vector<16x16x32xf32>
    %81 = arith.mulf %76, %80 : vector<16x16x32xf32>
    %82 = arith.addf %75, %81 : vector<16x16x32xf32>
    %c0_36 = arith.constant 0 : index
    %c2_37 = arith.constant 2 : index
    %c0_38 = arith.constant 0 : index
    %83 = vector.load %arg9[%c0_36, %c2_37, %c0_38] : memref<34x40x32xf32, #tpu.memory_space<vmem>>, vector<20x16x32xf32>
    %84 = vector.extract_strided_slice %83 {offsets = [0, 0, 0], sizes = [16, 16, 32], strides = [1, 1, 1]} : vector<20x16x32xf32> to vector<16x16x32xf32>
    %c2_39 = arith.constant 2 : index
    %c0_40 = arith.constant 0 : index
    %85 = vector.load %arg2[%c2_39, %c0_40] : memref<25x32xf32, #tpu.memory_space<vmem>>, vector<1x32xf32>
    %86 = vector.shape_cast %85 : vector<1x32xf32> to vector<32xf32>
    %87 = vector.shape_cast %86 : vector<32xf32> to vector<1x1x32xf32>
    %88 = vector.broadcast %87 : vector<1x1x32xf32> to vector<16x16x32xf32>
    %89 = arith.mulf %84, %88 : vector<16x16x32xf32>
    %90 = arith.addf %82, %89 : vector<16x16x32xf32>
    %91 = vector.extract_strided_slice %83 {offsets = [1, 0, 0], sizes = [16, 16, 32], strides = [1, 1, 1]} : vector<20x16x32xf32> to vector<16x16x32xf32>
    %c7 = arith.constant 7 : index
    %c0_41 = arith.constant 0 : index
    %92 = vector.load %arg2[%c7, %c0_41] : memref<25x32xf32, #tpu.memory_space<vmem>>, vector<1x32xf32>
    %93 = vector.shape_cast %92 : vector<1x32xf32> to vector<32xf32>
    %94 = vector.shape_cast %93 : vector<32xf32> to vector<1x1x32xf32>
    %95 = vector.broadcast %94 : vector<1x1x32xf32> to vector<16x16x32xf32>
    %96 = arith.mulf %91, %95 : vector<16x16x32xf32>
    %97 = arith.addf %90, %96 : vector<16x16x32xf32>
    %98 = vector.extract_strided_slice %83 {offsets = [2, 0, 0], sizes = [16, 16, 32], strides = [1, 1, 1]} : vector<20x16x32xf32> to vector<16x16x32xf32>
    %c12 = arith.constant 12 : index
    %c0_42 = arith.constant 0 : index
    %99 = vector.load %arg2[%c12, %c0_42] : memref<25x32xf32, #tpu.memory_space<vmem>>, vector<1x32xf32>
    %100 = vector.shape_cast %99 : vector<1x32xf32> to vector<32xf32>
    %101 = vector.shape_cast %100 : vector<32xf32> to vector<1x1x32xf32>
    %102 = vector.broadcast %101 : vector<1x1x32xf32> to vector<16x16x32xf32>
    %103 = arith.mulf %98, %102 : vector<16x16x32xf32>
    %104 = arith.addf %97, %103 : vector<16x16x32xf32>
    %105 = vector.extract_strided_slice %83 {offsets = [3, 0, 0], sizes = [16, 16, 32], strides = [1, 1, 1]} : vector<20x16x32xf32> to vector<16x16x32xf32>
    %c17 = arith.constant 17 : index
    %c0_43 = arith.constant 0 : index
    %106 = vector.load %arg2[%c17, %c0_43] : memref<25x32xf32, #tpu.memory_space<vmem>>, vector<1x32xf32>
    %107 = vector.shape_cast %106 : vector<1x32xf32> to vector<32xf32>
    %108 = vector.shape_cast %107 : vector<32xf32> to vector<1x1x32xf32>
    %109 = vector.broadcast %108 : vector<1x1x32xf32> to vector<16x16x32xf32>
    %110 = arith.mulf %105, %109 : vector<16x16x32xf32>
    %111 = arith.addf %104, %110 : vector<16x16x32xf32>
    %112 = vector.extract_strided_slice %83 {offsets = [4, 0, 0], sizes = [16, 16, 32], strides = [1, 1, 1]} : vector<20x16x32xf32> to vector<16x16x32xf32>
    %c22 = arith.constant 22 : index
    %c0_44 = arith.constant 0 : index
    %113 = vector.load %arg2[%c22, %c0_44] : memref<25x32xf32, #tpu.memory_space<vmem>>, vector<1x32xf32>
    %114 = vector.shape_cast %113 : vector<1x32xf32> to vector<32xf32>
    %115 = vector.shape_cast %114 : vector<32xf32> to vector<1x1x32xf32>
    %116 = vector.broadcast %115 : vector<1x1x32xf32> to vector<16x16x32xf32>
    %117 = arith.mulf %112, %116 : vector<16x16x32xf32>
    %118 = arith.addf %111, %117 : vector<16x16x32xf32>
    %c0_45 = arith.constant 0 : index
    %c3 = arith.constant 3 : index
    %c0_46 = arith.constant 0 : index
    %119 = vector.load %arg9[%c0_45, %c3, %c0_46] : memref<34x40x32xf32, #tpu.memory_space<vmem>>, vector<20x16x32xf32>
    %120 = vector.extract_strided_slice %119 {offsets = [0, 0, 0], sizes = [16, 16, 32], strides = [1, 1, 1]} : vector<20x16x32xf32> to vector<16x16x32xf32>
    %c3_47 = arith.constant 3 : index
    %c0_48 = arith.constant 0 : index
    %121 = vector.load %arg2[%c3_47, %c0_48] : memref<25x32xf32, #tpu.memory_space<vmem>>, vector<1x32xf32>
    %122 = vector.shape_cast %121 : vector<1x32xf32> to vector<32xf32>
    %123 = vector.shape_cast %122 : vector<32xf32> to vector<1x1x32xf32>
    %124 = vector.broadcast %123 : vector<1x1x32xf32> to vector<16x16x32xf32>
    %125 = arith.mulf %120, %124 : vector<16x16x32xf32>
    %126 = arith.addf %118, %125 : vector<16x16x32xf32>
    %127 = vector.extract_strided_slice %119 {offsets = [1, 0, 0], sizes = [16, 16, 32], strides = [1, 1, 1]} : vector<20x16x32xf32> to vector<16x16x32xf32>
    %c8 = arith.constant 8 : index
    %c0_49 = arith.constant 0 : index
    %128 = vector.load %arg2[%c8, %c0_49] : memref<25x32xf32, #tpu.memory_space<vmem>>, vector<1x32xf32>
    %129 = vector.shape_cast %128 : vector<1x32xf32> to vector<32xf32>
    %130 = vector.shape_cast %129 : vector<32xf32> to vector<1x1x32xf32>
    %131 = vector.broadcast %130 : vector<1x1x32xf32> to vector<16x16x32xf32>
    %132 = arith.mulf %127, %131 : vector<16x16x32xf32>
    %133 = arith.addf %126, %132 : vector<16x16x32xf32>
    %134 = vector.extract_strided_slice %119 {offsets = [2, 0, 0], sizes = [16, 16, 32], strides = [1, 1, 1]} : vector<20x16x32xf32> to vector<16x16x32xf32>
    %c13 = arith.constant 13 : index
    %c0_50 = arith.constant 0 : index
    %135 = vector.load %arg2[%c13, %c0_50] : memref<25x32xf32, #tpu.memory_space<vmem>>, vector<1x32xf32>
    %136 = vector.shape_cast %135 : vector<1x32xf32> to vector<32xf32>
    %137 = vector.shape_cast %136 : vector<32xf32> to vector<1x1x32xf32>
    %138 = vector.broadcast %137 : vector<1x1x32xf32> to vector<16x16x32xf32>
    %139 = arith.mulf %134, %138 : vector<16x16x32xf32>
    %140 = arith.addf %133, %139 : vector<16x16x32xf32>
    %141 = vector.extract_strided_slice %119 {offsets = [3, 0, 0], sizes = [16, 16, 32], strides = [1, 1, 1]} : vector<20x16x32xf32> to vector<16x16x32xf32>
    %c18_51 = arith.constant 18 : index
    %c0_52 = arith.constant 0 : index
    %142 = vector.load %arg2[%c18_51, %c0_52] : memref<25x32xf32, #tpu.memory_space<vmem>>, vector<1x32xf32>
    %143 = vector.shape_cast %142 : vector<1x32xf32> to vector<32xf32>
    %144 = vector.shape_cast %143 : vector<32xf32> to vector<1x1x32xf32>
    %145 = vector.broadcast %144 : vector<1x1x32xf32> to vector<16x16x32xf32>
    %146 = arith.mulf %141, %145 : vector<16x16x32xf32>
    %147 = arith.addf %140, %146 : vector<16x16x32xf32>
    %148 = vector.extract_strided_slice %119 {offsets = [4, 0, 0], sizes = [16, 16, 32], strides = [1, 1, 1]} : vector<20x16x32xf32> to vector<16x16x32xf32>
    %c23 = arith.constant 23 : index
    %c0_53 = arith.constant 0 : index
    %149 = vector.load %arg2[%c23, %c0_53] : memref<25x32xf32, #tpu.memory_space<vmem>>, vector<1x32xf32>
    %150 = vector.shape_cast %149 : vector<1x32xf32> to vector<32xf32>
    %151 = vector.shape_cast %150 : vector<32xf32> to vector<1x1x32xf32>
    %152 = vector.broadcast %151 : vector<1x1x32xf32> to vector<16x16x32xf32>
    %153 = arith.mulf %148, %152 : vector<16x16x32xf32>
    %154 = arith.addf %147, %153 : vector<16x16x32xf32>
    %c0_54 = arith.constant 0 : index
    %c4 = arith.constant 4 : index
    %c0_55 = arith.constant 0 : index
    %155 = vector.load %arg9[%c0_54, %c4, %c0_55] : memref<34x40x32xf32, #tpu.memory_space<vmem>>, vector<20x16x32xf32>
    %156 = vector.extract_strided_slice %155 {offsets = [0, 0, 0], sizes = [16, 16, 32], strides = [1, 1, 1]} : vector<20x16x32xf32> to vector<16x16x32xf32>
    %c4_56 = arith.constant 4 : index
    %c0_57 = arith.constant 0 : index
    %157 = vector.load %arg2[%c4_56, %c0_57] : memref<25x32xf32, #tpu.memory_space<vmem>>, vector<1x32xf32>
    %158 = vector.shape_cast %157 : vector<1x32xf32> to vector<32xf32>
    %159 = vector.shape_cast %158 : vector<32xf32> to vector<1x1x32xf32>
    %160 = vector.broadcast %159 : vector<1x1x32xf32> to vector<16x16x32xf32>
    %161 = arith.mulf %156, %160 : vector<16x16x32xf32>
    %162 = arith.addf %154, %161 : vector<16x16x32xf32>
    %163 = vector.extract_strided_slice %155 {offsets = [1, 0, 0], sizes = [16, 16, 32], strides = [1, 1, 1]} : vector<20x16x32xf32> to vector<16x16x32xf32>
    %c9 = arith.constant 9 : index
    %c0_58 = arith.constant 0 : index
    %164 = vector.load %arg2[%c9, %c0_58] : memref<25x32xf32, #tpu.memory_space<vmem>>, vector<1x32xf32>
    %165 = vector.shape_cast %164 : vector<1x32xf32> to vector<32xf32>
    %166 = vector.shape_cast %165 : vector<32xf32> to vector<1x1x32xf32>
    %167 = vector.broadcast %166 : vector<1x1x32xf32> to vector<16x16x32xf32>
    %168 = arith.mulf %163, %167 : vector<16x16x32xf32>
    %169 = arith.addf %162, %168 : vector<16x16x32xf32>
    %170 = vector.extract_strided_slice %155 {offsets = [2, 0, 0], sizes = [16, 16, 32], strides = [1, 1, 1]} : vector<20x16x32xf32> to vector<16x16x32xf32>
    %c14 = arith.constant 14 : index
    %c0_59 = arith.constant 0 : index
    %171 = vector.load %arg2[%c14, %c0_59] : memref<25x32xf32, #tpu.memory_space<vmem>>, vector<1x32xf32>
    %172 = vector.shape_cast %171 : vector<1x32xf32> to vector<32xf32>
    %173 = vector.shape_cast %172 : vector<32xf32> to vector<1x1x32xf32>
    %174 = vector.broadcast %173 : vector<1x1x32xf32> to vector<16x16x32xf32>
    %175 = arith.mulf %170, %174 : vector<16x16x32xf32>
    %176 = arith.addf %169, %175 : vector<16x16x32xf32>
    %177 = vector.extract_strided_slice %155 {offsets = [3, 0, 0], sizes = [16, 16, 32], strides = [1, 1, 1]} : vector<20x16x32xf32> to vector<16x16x32xf32>
    %c19 = arith.constant 19 : index
    %c0_60 = arith.constant 0 : index
    %178 = vector.load %arg2[%c19, %c0_60] : memref<25x32xf32, #tpu.memory_space<vmem>>, vector<1x32xf32>
    %179 = vector.shape_cast %178 : vector<1x32xf32> to vector<32xf32>
    %180 = vector.shape_cast %179 : vector<32xf32> to vector<1x1x32xf32>
    %181 = vector.broadcast %180 : vector<1x1x32xf32> to vector<16x16x32xf32>
    %182 = arith.mulf %177, %181 : vector<16x16x32xf32>
    %183 = arith.addf %176, %182 : vector<16x16x32xf32>
    %184 = vector.extract_strided_slice %155 {offsets = [4, 0, 0], sizes = [16, 16, 32], strides = [1, 1, 1]} : vector<20x16x32xf32> to vector<16x16x32xf32>
    %c24 = arith.constant 24 : index
    %c0_61 = arith.constant 0 : index
    %185 = vector.load %arg2[%c24, %c0_61] : memref<25x32xf32, #tpu.memory_space<vmem>>, vector<1x32xf32>
    %186 = vector.shape_cast %185 : vector<1x32xf32> to vector<32xf32>
    %187 = vector.shape_cast %186 : vector<32xf32> to vector<1x1x32xf32>
    %188 = vector.broadcast %187 : vector<1x1x32xf32> to vector<16x16x32xf32>
    %189 = arith.mulf %184, %188 : vector<16x16x32xf32>
    %190 = arith.addf %183, %189 : vector<16x16x32xf32>
    %c0_62 = arith.constant 0 : index
    %c0_63 = arith.constant 0 : index
    %191 = vector.load %arg3[%c0_62, %c0_63] : memref<1x32xf32, #tpu.memory_space<vmem>>, vector<1x32xf32>
    %192 = vector.shape_cast %191 : vector<1x32xf32> to vector<32xf32>
    %193 = vector.shape_cast %192 : vector<32xf32> to vector<1x1x32xf32>
    %194 = vector.broadcast %193 : vector<1x1x32xf32> to vector<16x16x32xf32>
    %195 = arith.addf %190, %194 : vector<16x16x32xf32>
    %cst_64 = arith.constant 0.000000e+00 : f32
    %196 = vector.broadcast %cst_64 : f32 to vector<9x40x32xf32>
    %c0_65 = arith.constant 0 : index
    %c0_66 = arith.constant 0 : index
    %c0_67 = arith.constant 0 : index
    %197 = vector.load %arg9[%c0_65, %c0_66, %c0_67] : memref<34x40x32xf32, #tpu.memory_space<vmem>>, vector<9x40x32xf32>
    tpu.vector_store %arg9[%c0_65, %c0_66, %c0_67], %196 {strides = array<i32>} : memref<34x40x32xf32, #tpu.memory_space<vmem>>, vector<9x40x32xf32>,
    %c25 = arith.constant 25 : index
    %c0_68 = arith.constant 0 : index
    %c0_69 = arith.constant 0 : index
    %198 = vector.load %arg9[%c25, %c0_68, %c0_69] : memref<34x40x32xf32, #tpu.memory_space<vmem>>, vector<9x40x32xf32>
    tpu.vector_store %arg9[%c25, %c0_68, %c0_69], %196 {strides = array<i32>} : memref<34x40x32xf32, #tpu.memory_space<vmem>>, vector<9x40x32xf32>,
    %cst_70 = arith.constant 0.000000e+00 : f32
    %199 = vector.broadcast %cst_70 : f32 to vector<16x16x32xf32>
    %c9_71 = arith.constant 9 : index
    %c0_72 = arith.constant 0 : index
    %c0_73 = arith.constant 0 : index
    %200 = vector.load %arg9[%c9_71, %c0_72, %c0_73] : memref<34x40x32xf32, #tpu.memory_space<vmem>>, vector<16x16x32xf32>
    tpu.vector_store %arg9[%c9_71, %c0_72, %c0_73], %199 {strides = array<i32>} : memref<34x40x32xf32, #tpu.memory_space<vmem>>, vector<16x16x32xf32>,
    %cst_74 = arith.constant 0.000000e+00 : f32
    %201 = vector.broadcast %cst_74 : f32 to vector<16x16x32xf32>
    %c9_75 = arith.constant 9 : index
    %c24_76 = arith.constant 24 : index
    %c0_77 = arith.constant 0 : index
    %202 = vector.load %arg9[%c9_75, %c24_76, %c0_77] : memref<34x40x32xf32, #tpu.memory_space<vmem>>, vector<16x16x32xf32>
    tpu.vector_store %arg9[%c9_75, %c24_76, %c0_77], %201 {strides = array<i32>} : memref<34x40x32xf32, #tpu.memory_space<vmem>>, vector<16x16x32xf32>,
    %c9_78 = arith.constant 9 : index
    %c9_79 = arith.constant 9 : index
    %c0_80 = arith.constant 0 : index
    %203 = vector.load %arg9[%c9_78, %c9_79, %c0_80] : memref<34x40x32xf32, #tpu.memory_space<vmem>>, vector<16x16x32xf32>
    tpu.vector_store %arg9[%c9_78, %c9_79, %c0_80], %195 {strides = array<i32>} : memref<34x40x32xf32, #tpu.memory_space<vmem>>, vector<16x16x32xf32>,
    %cst_81 = arith.constant 0.000000e+00 : f32
    %204 = vector.broadcast %cst_81 : f32 to vector<16x16x32xf32>
    %c0_82 = arith.constant 0 : index
    %c0_83 = arith.constant 0 : index
    %c0_84 = arith.constant 0 : index
    %205 = vector.load %arg9[%c0_82, %c0_83, %c0_84] : memref<34x40x32xf32, #tpu.memory_space<vmem>>, vector<34x16x32xf32>
    %206 = vector.extract_strided_slice %205 {offsets = [0, 0, 0], sizes = [16, 16, 32], strides = [1, 1, 1]} : vector<34x16x32xf32> to vector<16x16x32xf32>
    %c0_85 = arith.constant 0 : index
    %c0_86 = arith.constant 0 : index
    %207 = vector.load %arg4[%c0_85, %c0_86] : memref<49x32xf32, #tpu.memory_space<vmem>>, vector<1x32xf32>
    %208 = vector.shape_cast %207 : vector<1x32xf32> to vector<32xf32>
    %209 = vector.shape_cast %208 : vector<32xf32> to vector<1x1x32xf32>
    %210 = vector.broadcast %209 : vector<1x1x32xf32> to vector<16x16x32xf32>
    %211 = arith.mulf %206, %210 : vector<16x16x32xf32>
    %212 = arith.addf %204, %211 : vector<16x16x32xf32>
    %213 = vector.extract_strided_slice %205 {offsets = [3, 0, 0], sizes = [16, 16, 32], strides = [1, 1, 1]} : vector<34x16x32xf32> to vector<16x16x32xf32>
    %c7_87 = arith.constant 7 : index
    %c0_88 = arith.constant 0 : index
    %214 = vector.load %arg4[%c7_87, %c0_88] : memref<49x32xf32, #tpu.memory_space<vmem>>, vector<1x32xf32>
    %215 = vector.shape_cast %214 : vector<1x32xf32> to vector<32xf32>
    %216 = vector.shape_cast %215 : vector<32xf32> to vector<1x1x32xf32>
    %217 = vector.broadcast %216 : vector<1x1x32xf32> to vector<16x16x32xf32>
    %218 = arith.mulf %213, %217 : vector<16x16x32xf32>
    %219 = arith.addf %212, %218 : vector<16x16x32xf32>
    %220 = vector.extract_strided_slice %205 {offsets = [6, 0, 0], sizes = [16, 16, 32], strides = [1, 1, 1]} : vector<34x16x32xf32> to vector<16x16x32xf32>
    %c14_89 = arith.constant 14 : index
    %c0_90 = arith.constant 0 : index
    %221 = vector.load %arg4[%c14_89, %c0_90] : memref<49x32xf32, #tpu.memory_space<vmem>>, vector<1x32xf32>
    %222 = vector.shape_cast %221 : vector<1x32xf32> to vector<32xf32>
    %223 = vector.shape_cast %222 : vector<32xf32> to vector<1x1x32xf32>
    %224 = vector.broadcast %223 : vector<1x1x32xf32> to vector<16x16x32xf32>
    %225 = arith.mulf %220, %224 : vector<16x16x32xf32>
    %226 = arith.addf %219, %225 : vector<16x16x32xf32>
    %227 = vector.extract_strided_slice %205 {offsets = [9, 0, 0], sizes = [16, 16, 32], strides = [1, 1, 1]} : vector<34x16x32xf32> to vector<16x16x32xf32>
    %c21_91 = arith.constant 21 : index
    %c0_92 = arith.constant 0 : index
    %228 = vector.load %arg4[%c21_91, %c0_92] : memref<49x32xf32, #tpu.memory_space<vmem>>, vector<1x32xf32>
    %229 = vector.shape_cast %228 : vector<1x32xf32> to vector<32xf32>
    %230 = vector.shape_cast %229 : vector<32xf32> to vector<1x1x32xf32>
    %231 = vector.broadcast %230 : vector<1x1x32xf32> to vector<16x16x32xf32>
    %232 = arith.mulf %227, %231 : vector<16x16x32xf32>
    %233 = arith.addf %226, %232 : vector<16x16x32xf32>
    %234 = vector.extract_strided_slice %205 {offsets = [12, 0, 0], sizes = [16, 16, 32], strides = [1, 1, 1]} : vector<34x16x32xf32> to vector<16x16x32xf32>
    %c28 = arith.constant 28 : index
    %c0_93 = arith.constant 0 : index
    %235 = vector.load %arg4[%c28, %c0_93] : memref<49x32xf32, #tpu.memory_space<vmem>>, vector<1x32xf32>
    %236 = vector.shape_cast %235 : vector<1x32xf32> to vector<32xf32>
    %237 = vector.shape_cast %236 : vector<32xf32> to vector<1x1x32xf32>
    %238 = vector.broadcast %237 : vector<1x1x32xf32> to vector<16x16x32xf32>
    %239 = arith.mulf %234, %238 : vector<16x16x32xf32>
    %240 = arith.addf %233, %239 : vector<16x16x32xf32>
    %241 = vector.extract_strided_slice %205 {offsets = [15, 0, 0], sizes = [16, 16, 32], strides = [1, 1, 1]} : vector<34x16x32xf32> to vector<16x16x32xf32>
    %c35 = arith.constant 35 : index
    %c0_94 = arith.constant 0 : index
    %242 = vector.load %arg4[%c35, %c0_94] : memref<49x32xf32, #tpu.memory_space<vmem>>, vector<1x32xf32>
    %243 = vector.shape_cast %242 : vector<1x32xf32> to vector<32xf32>
    %244 = vector.shape_cast %243 : vector<32xf32> to vector<1x1x32xf32>
    %245 = vector.broadcast %244 : vector<1x1x32xf32> to vector<16x16x32xf32>
    %246 = arith.mulf %241, %245 : vector<16x16x32xf32>
    %247 = arith.addf %240, %246 : vector<16x16x32xf32>
    %248 = vector.extract_strided_slice %205 {offsets = [18, 0, 0], sizes = [16, 16, 32], strides = [1, 1, 1]} : vector<34x16x32xf32> to vector<16x16x32xf32>
    %c42 = arith.constant 42 : index
    %c0_95 = arith.constant 0 : index
    %249 = vector.load %arg4[%c42, %c0_95] : memref<49x32xf32, #tpu.memory_space<vmem>>, vector<1x32xf32>
    %250 = vector.shape_cast %249 : vector<1x32xf32> to vector<32xf32>
    %251 = vector.shape_cast %250 : vector<32xf32> to vector<1x1x32xf32>
    %252 = vector.broadcast %251 : vector<1x1x32xf32> to vector<16x16x32xf32>
    %253 = arith.mulf %248, %252 : vector<16x16x32xf32>
    %254 = arith.addf %247, %253 : vector<16x16x32xf32>
    %c0_96 = arith.constant 0 : index
    %c3_97 = arith.constant 3 : index
    %c0_98 = arith.constant 0 : index
    %255 = vector.load %arg9[%c0_96, %c3_97, %c0_98] : memref<34x40x32xf32, #tpu.memory_space<vmem>>, vector<34x16x32xf32>
    %256 = vector.extract_strided_slice %255 {offsets = [0, 0, 0], sizes = [16, 16, 32], strides = [1, 1, 1]} : vector<34x16x32xf32> to vector<16x16x32xf32>
    %c1_99 = arith.constant 1 : index
    %c0_100 = arith.constant 0 : index
    %257 = vector.load %arg4[%c1_99, %c0_100] : memref<49x32xf32, #tpu.memory_space<vmem>>, vector<1x32xf32>
    %258 = vector.shape_cast %257 : vector<1x32xf32> to vector<32xf32>
    %259 = vector.shape_cast %258 : vector<32xf32> to vector<1x1x32xf32>
    %260 = vector.broadcast %259 : vector<1x1x32xf32> to vector<16x16x32xf32>
    %261 = arith.mulf %256, %260 : vector<16x16x32xf32>
    %262 = arith.addf %254, %261 : vector<16x16x32xf32>
    %263 = vector.extract_strided_slice %255 {offsets = [3, 0, 0], sizes = [16, 16, 32], strides = [1, 1, 1]} : vector<34x16x32xf32> to vector<16x16x32xf32>
    %c8_101 = arith.constant 8 : index
    %c0_102 = arith.constant 0 : index
    %264 = vector.load %arg4[%c8_101, %c0_102] : memref<49x32xf32, #tpu.memory_space<vmem>>, vector<1x32xf32>
    %265 = vector.shape_cast %264 : vector<1x32xf32> to vector<32xf32>
    %266 = vector.shape_cast %265 : vector<32xf32> to vector<1x1x32xf32>
    %267 = vector.broadcast %266 : vector<1x1x32xf32> to vector<16x16x32xf32>
    %268 = arith.mulf %263, %267 : vector<16x16x32xf32>
    %269 = arith.addf %262, %268 : vector<16x16x32xf32>
    %270 = vector.extract_strided_slice %255 {offsets = [6, 0, 0], sizes = [16, 16, 32], strides = [1, 1, 1]} : vector<34x16x32xf32> to vector<16x16x32xf32>
    %c15_103 = arith.constant 15 : index
    %c0_104 = arith.constant 0 : index
    %271 = vector.load %arg4[%c15_103, %c0_104] : memref<49x32xf32, #tpu.memory_space<vmem>>, vector<1x32xf32>
    %272 = vector.shape_cast %271 : vector<1x32xf32> to vector<32xf32>
    %273 = vector.shape_cast %272 : vector<32xf32> to vector<1x1x32xf32>
    %274 = vector.broadcast %273 : vector<1x1x32xf32> to vector<16x16x32xf32>
    %275 = arith.mulf %270, %274 : vector<16x16x32xf32>
    %276 = arith.addf %269, %275 : vector<16x16x32xf32>
    %277 = vector.extract_strided_slice %255 {offsets = [9, 0, 0], sizes = [16, 16, 32], strides = [1, 1, 1]} : vector<34x16x32xf32> to vector<16x16x32xf32>
    %c22_105 = arith.constant 22 : index
    %c0_106 = arith.constant 0 : index
    %278 = vector.load %arg4[%c22_105, %c0_106] : memref<49x32xf32, #tpu.memory_space<vmem>>, vector<1x32xf32>
    %279 = vector.shape_cast %278 : vector<1x32xf32> to vector<32xf32>
    %280 = vector.shape_cast %279 : vector<32xf32> to vector<1x1x32xf32>
    %281 = vector.broadcast %280 : vector<1x1x32xf32> to vector<16x16x32xf32>
    %282 = arith.mulf %277, %281 : vector<16x16x32xf32>
    %283 = arith.addf %276, %282 : vector<16x16x32xf32>
    %284 = vector.extract_strided_slice %255 {offsets = [12, 0, 0], sizes = [16, 16, 32], strides = [1, 1, 1]} : vector<34x16x32xf32> to vector<16x16x32xf32>
    %c29 = arith.constant 29 : index
    %c0_107 = arith.constant 0 : index
    %285 = vector.load %arg4[%c29, %c0_107] : memref<49x32xf32, #tpu.memory_space<vmem>>, vector<1x32xf32>
    %286 = vector.shape_cast %285 : vector<1x32xf32> to vector<32xf32>
    %287 = vector.shape_cast %286 : vector<32xf32> to vector<1x1x32xf32>
    %288 = vector.broadcast %287 : vector<1x1x32xf32> to vector<16x16x32xf32>
    %289 = arith.mulf %284, %288 : vector<16x16x32xf32>
    %290 = arith.addf %283, %289 : vector<16x16x32xf32>
    %291 = vector.extract_strided_slice %255 {offsets = [15, 0, 0], sizes = [16, 16, 32], strides = [1, 1, 1]} : vector<34x16x32xf32> to vector<16x16x32xf32>
    %c36 = arith.constant 36 : index
    %c0_108 = arith.constant 0 : index
    %292 = vector.load %arg4[%c36, %c0_108] : memref<49x32xf32, #tpu.memory_space<vmem>>, vector<1x32xf32>
    %293 = vector.shape_cast %292 : vector<1x32xf32> to vector<32xf32>
    %294 = vector.shape_cast %293 : vector<32xf32> to vector<1x1x32xf32>
    %295 = vector.broadcast %294 : vector<1x1x32xf32> to vector<16x16x32xf32>
    %296 = arith.mulf %291, %295 : vector<16x16x32xf32>
    %297 = arith.addf %290, %296 : vector<16x16x32xf32>
    %298 = vector.extract_strided_slice %255 {offsets = [18, 0, 0], sizes = [16, 16, 32], strides = [1, 1, 1]} : vector<34x16x32xf32> to vector<16x16x32xf32>
    %c43 = arith.constant 43 : index
    %c0_109 = arith.constant 0 : index
    %299 = vector.load %arg4[%c43, %c0_109] : memref<49x32xf32, #tpu.memory_space<vmem>>, vector<1x32xf32>
    %300 = vector.shape_cast %299 : vector<1x32xf32> to vector<32xf32>
    %301 = vector.shape_cast %300 : vector<32xf32> to vector<1x1x32xf32>
    %302 = vector.broadcast %301 : vector<1x1x32xf32> to vector<16x16x32xf32>
    %303 = arith.mulf %298, %302 : vector<16x16x32xf32>
    %304 = arith.addf %297, %303 : vector<16x16x32xf32>
    %c0_110 = arith.constant 0 : index
    %c6_111 = arith.constant 6 : index
    %c0_112 = arith.constant 0 : index
    %305 = vector.load %arg9[%c0_110, %c6_111, %c0_112] : memref<34x40x32xf32, #tpu.memory_space<vmem>>, vector<34x16x32xf32>
    %306 = vector.extract_strided_slice %305 {offsets = [0, 0, 0], sizes = [16, 16, 32], strides = [1, 1, 1]} : vector<34x16x32xf32> to vector<16x16x32xf32>
    %c2_113 = arith.constant 2 : index
    %c0_114 = arith.constant 0 : index
    %307 = vector.load %arg4[%c2_113, %c0_114] : memref<49x32xf32, #tpu.memory_space<vmem>>, vector<1x32xf32>
    %308 = vector.shape_cast %307 : vector<1x32xf32> to vector<32xf32>
    %309 = vector.shape_cast %308 : vector<32xf32> to vector<1x1x32xf32>
    %310 = vector.broadcast %309 : vector<1x1x32xf32> to vector<16x16x32xf32>
    %311 = arith.mulf %306, %310 : vector<16x16x32xf32>
    %312 = arith.addf %304, %311 : vector<16x16x32xf32>
    %313 = vector.extract_strided_slice %305 {offsets = [3, 0, 0], sizes = [16, 16, 32], strides = [1, 1, 1]} : vector<34x16x32xf32> to vector<16x16x32xf32>
    %c9_115 = arith.constant 9 : index
    %c0_116 = arith.constant 0 : index
    %314 = vector.load %arg4[%c9_115, %c0_116] : memref<49x32xf32, #tpu.memory_space<vmem>>, vector<1x32xf32>
    %315 = vector.shape_cast %314 : vector<1x32xf32> to vector<32xf32>
    %316 = vector.shape_cast %315 : vector<32xf32> to vector<1x1x32xf32>
    %317 = vector.broadcast %316 : vector<1x1x32xf32> to vector<16x16x32xf32>
    %318 = arith.mulf %313, %317 : vector<16x16x32xf32>
    %319 = arith.addf %312, %318 : vector<16x16x32xf32>
    %320 = vector.extract_strided_slice %305 {offsets = [6, 0, 0], sizes = [16, 16, 32], strides = [1, 1, 1]} : vector<34x16x32xf32> to vector<16x16x32xf32>
    %c16_117 = arith.constant 16 : index
    %c0_118 = arith.constant 0 : index
    %321 = vector.load %arg4[%c16_117, %c0_118] : memref<49x32xf32, #tpu.memory_space<vmem>>, vector<1x32xf32>
    %322 = vector.shape_cast %321 : vector<1x32xf32> to vector<32xf32>
    %323 = vector.shape_cast %322 : vector<32xf32> to vector<1x1x32xf32>
    %324 = vector.broadcast %323 : vector<1x1x32xf32> to vector<16x16x32xf32>
    %325 = arith.mulf %320, %324 : vector<16x16x32xf32>
    %326 = arith.addf %319, %325 : vector<16x16x32xf32>
    %327 = vector.extract_strided_slice %305 {offsets = [9, 0, 0], sizes = [16, 16, 32], strides = [1, 1, 1]} : vector<34x16x32xf32> to vector<16x16x32xf32>
    %c23_119 = arith.constant 23 : index
    %c0_120 = arith.constant 0 : index
    %328 = vector.load %arg4[%c23_119, %c0_120] : memref<49x32xf32, #tpu.memory_space<vmem>>, vector<1x32xf32>
    %329 = vector.shape_cast %328 : vector<1x32xf32> to vector<32xf32>
    %330 = vector.shape_cast %329 : vector<32xf32> to vector<1x1x32xf32>
    %331 = vector.broadcast %330 : vector<1x1x32xf32> to vector<16x16x32xf32>
    %332 = arith.mulf %327, %331 : vector<16x16x32xf32>
    %333 = arith.addf %326, %332 : vector<16x16x32xf32>
    %334 = vector.extract_strided_slice %305 {offsets = [12, 0, 0], sizes = [16, 16, 32], strides = [1, 1, 1]} : vector<34x16x32xf32> to vector<16x16x32xf32>
    %c30 = arith.constant 30 : index
    %c0_121 = arith.constant 0 : index
    %335 = vector.load %arg4[%c30, %c0_121] : memref<49x32xf32, #tpu.memory_space<vmem>>, vector<1x32xf32>
    %336 = vector.shape_cast %335 : vector<1x32xf32> to vector<32xf32>
    %337 = vector.shape_cast %336 : vector<32xf32> to vector<1x1x32xf32>
    %338 = vector.broadcast %337 : vector<1x1x32xf32> to vector<16x16x32xf32>
    %339 = arith.mulf %334, %338 : vector<16x16x32xf32>
    %340 = arith.addf %333, %339 : vector<16x16x32xf32>
    %341 = vector.extract_strided_slice %305 {offsets = [15, 0, 0], sizes = [16, 16, 32], strides = [1, 1, 1]} : vector<34x16x32xf32> to vector<16x16x32xf32>
    %c37 = arith.constant 37 : index
    %c0_122 = arith.constant 0 : index
    %342 = vector.load %arg4[%c37, %c0_122] : memref<49x32xf32, #tpu.memory_space<vmem>>, vector<1x32xf32>
    %343 = vector.shape_cast %342 : vector<1x32xf32> to vector<32xf32>
    %344 = vector.shape_cast %343 : vector<32xf32> to vector<1x1x32xf32>
    %345 = vector.broadcast %344 : vector<1x1x32xf32> to vector<16x16x32xf32>
    %346 = arith.mulf %341, %345 : vector<16x16x32xf32>
    %347 = arith.addf %340, %346 : vector<16x16x32xf32>
    %348 = vector.extract_strided_slice %305 {offsets = [18, 0, 0], sizes = [16, 16, 32], strides = [1, 1, 1]} : vector<34x16x32xf32> to vector<16x16x32xf32>
    %c44 = arith.constant 44 : index
    %c0_123 = arith.constant 0 : index
    %349 = vector.load %arg4[%c44, %c0_123] : memref<49x32xf32, #tpu.memory_space<vmem>>, vector<1x32xf32>
    %350 = vector.shape_cast %349 : vector<1x32xf32> to vector<32xf32>
    %351 = vector.shape_cast %350 : vector<32xf32> to vector<1x1x32xf32>
    %352 = vector.broadcast %351 : vector<1x1x32xf32> to vector<16x16x32xf32>
    %353 = arith.mulf %348, %352 : vector<16x16x32xf32>
    %354 = arith.addf %347, %353 : vector<16x16x32xf32>
    %c0_124 = arith.constant 0 : index
    %c9_125 = arith.constant 9 : index
    %c0_126 = arith.constant 0 : index
    %355 = vector.load %arg9[%c0_124, %c9_125, %c0_126] : memref<34x40x32xf32, #tpu.memory_space<vmem>>, vector<34x16x32xf32>
    %356 = vector.extract_strided_slice %355 {offsets = [0, 0, 0], sizes = [16, 16, 32], strides = [1, 1, 1]} : vector<34x16x32xf32> to vector<16x16x32xf32>
    %c3_127 = arith.constant 3 : index
    %c0_128 = arith.constant 0 : index
    %357 = vector.load %arg4[%c3_127, %c0_128] : memref<49x32xf32, #tpu.memory_space<vmem>>, vector<1x32xf32>
    %358 = vector.shape_cast %357 : vector<1x32xf32> to vector<32xf32>
    %359 = vector.shape_cast %358 : vector<32xf32> to vector<1x1x32xf32>
    %360 = vector.broadcast %359 : vector<1x1x32xf32> to vector<16x16x32xf32>
    %361 = arith.mulf %356, %360 : vector<16x16x32xf32>
    %362 = arith.addf %354, %361 : vector<16x16x32xf32>
    %363 = vector.extract_strided_slice %355 {offsets = [3, 0, 0], sizes = [16, 16, 32], strides = [1, 1, 1]} : vector<34x16x32xf32> to vector<16x16x32xf32>
    %c10_129 = arith.constant 10 : index
    %c0_130 = arith.constant 0 : index
    %364 = vector.load %arg4[%c10_129, %c0_130] : memref<49x32xf32, #tpu.memory_space<vmem>>, vector<1x32xf32>
    %365 = vector.shape_cast %364 : vector<1x32xf32> to vector<32xf32>
    %366 = vector.shape_cast %365 : vector<32xf32> to vector<1x1x32xf32>
    %367 = vector.broadcast %366 : vector<1x1x32xf32> to vector<16x16x32xf32>
    %368 = arith.mulf %363, %367 : vector<16x16x32xf32>
    %369 = arith.addf %362, %368 : vector<16x16x32xf32>
    %370 = vector.extract_strided_slice %355 {offsets = [6, 0, 0], sizes = [16, 16, 32], strides = [1, 1, 1]} : vector<34x16x32xf32> to vector<16x16x32xf32>
    %c17_131 = arith.constant 17 : index
    %c0_132 = arith.constant 0 : index
    %371 = vector.load %arg4[%c17_131, %c0_132] : memref<49x32xf32, #tpu.memory_space<vmem>>, vector<1x32xf32>
    %372 = vector.shape_cast %371 : vector<1x32xf32> to vector<32xf32>
    %373 = vector.shape_cast %372 : vector<32xf32> to vector<1x1x32xf32>
    %374 = vector.broadcast %373 : vector<1x1x32xf32> to vector<16x16x32xf32>
    %375 = arith.mulf %370, %374 : vector<16x16x32xf32>
    %376 = arith.addf %369, %375 : vector<16x16x32xf32>
    %377 = vector.extract_strided_slice %355 {offsets = [9, 0, 0], sizes = [16, 16, 32], strides = [1, 1, 1]} : vector<34x16x32xf32> to vector<16x16x32xf32>
    %c24_133 = arith.constant 24 : index
    %c0_134 = arith.constant 0 : index
    %378 = vector.load %arg4[%c24_133, %c0_134] : memref<49x32xf32, #tpu.memory_space<vmem>>, vector<1x32xf32>
    %379 = vector.shape_cast %378 : vector<1x32xf32> to vector<32xf32>
    %380 = vector.shape_cast %379 : vector<32xf32> to vector<1x1x32xf32>
    %381 = vector.broadcast %380 : vector<1x1x32xf32> to vector<16x16x32xf32>
    %382 = arith.mulf %377, %381 : vector<16x16x32xf32>
    %383 = arith.addf %376, %382 : vector<16x16x32xf32>
    %384 = vector.extract_strided_slice %355 {offsets = [12, 0, 0], sizes = [16, 16, 32], strides = [1, 1, 1]} : vector<34x16x32xf32> to vector<16x16x32xf32>
    %c31 = arith.constant 31 : index
    %c0_135 = arith.constant 0 : index
    %385 = vector.load %arg4[%c31, %c0_135] : memref<49x32xf32, #tpu.memory_space<vmem>>, vector<1x32xf32>
    %386 = vector.shape_cast %385 : vector<1x32xf32> to vector<32xf32>
    %387 = vector.shape_cast %386 : vector<32xf32> to vector<1x1x32xf32>
    %388 = vector.broadcast %387 : vector<1x1x32xf32> to vector<16x16x32xf32>
    %389 = arith.mulf %384, %388 : vector<16x16x32xf32>
    %390 = arith.addf %383, %389 : vector<16x16x32xf32>
    %391 = vector.extract_strided_slice %355 {offsets = [15, 0, 0], sizes = [16, 16, 32], strides = [1, 1, 1]} : vector<34x16x32xf32> to vector<16x16x32xf32>
    %c38 = arith.constant 38 : index
    %c0_136 = arith.constant 0 : index
    %392 = vector.load %arg4[%c38, %c0_136] : memref<49x32xf32, #tpu.memory_space<vmem>>, vector<1x32xf32>
    %393 = vector.shape_cast %392 : vector<1x32xf32> to vector<32xf32>
    %394 = vector.shape_cast %393 : vector<32xf32> to vector<1x1x32xf32>
    %395 = vector.broadcast %394 : vector<1x1x32xf32> to vector<16x16x32xf32>
    %396 = arith.mulf %391, %395 : vector<16x16x32xf32>
    %397 = arith.addf %390, %396 : vector<16x16x32xf32>
    %398 = vector.extract_strided_slice %355 {offsets = [18, 0, 0], sizes = [16, 16, 32], strides = [1, 1, 1]} : vector<34x16x32xf32> to vector<16x16x32xf32>
    %c45 = arith.constant 45 : index
    %c0_137 = arith.constant 0 : index
    %399 = vector.load %arg4[%c45, %c0_137] : memref<49x32xf32, #tpu.memory_space<vmem>>, vector<1x32xf32>
    %400 = vector.shape_cast %399 : vector<1x32xf32> to vector<32xf32>
    %401 = vector.shape_cast %400 : vector<32xf32> to vector<1x1x32xf32>
    %402 = vector.broadcast %401 : vector<1x1x32xf32> to vector<16x16x32xf32>
    %403 = arith.mulf %398, %402 : vector<16x16x32xf32>
    %404 = arith.addf %397, %403 : vector<16x16x32xf32>
    %c0_138 = arith.constant 0 : index
    %c12_139 = arith.constant 12 : index
    %c0_140 = arith.constant 0 : index
    %405 = vector.load %arg9[%c0_138, %c12_139, %c0_140] : memref<34x40x32xf32, #tpu.memory_space<vmem>>, vector<34x16x32xf32>
    %406 = vector.extract_strided_slice %405 {offsets = [0, 0, 0], sizes = [16, 16, 32], strides = [1, 1, 1]} : vector<34x16x32xf32> to vector<16x16x32xf32>
    %c4_141 = arith.constant 4 : index
    %c0_142 = arith.constant 0 : index
    %407 = vector.load %arg4[%c4_141, %c0_142] : memref<49x32xf32, #tpu.memory_space<vmem>>, vector<1x32xf32>
    %408 = vector.shape_cast %407 : vector<1x32xf32> to vector<32xf32>
    %409 = vector.shape_cast %408 : vector<32xf32> to vector<1x1x32xf32>
    %410 = vector.broadcast %409 : vector<1x1x32xf32> to vector<16x16x32xf32>
    %411 = arith.mulf %406, %410 : vector<16x16x32xf32>
    %412 = arith.addf %404, %411 : vector<16x16x32xf32>
    %413 = vector.extract_strided_slice %405 {offsets = [3, 0, 0], sizes = [16, 16, 32], strides = [1, 1, 1]} : vector<34x16x32xf32> to vector<16x16x32xf32>
    %c11_143 = arith.constant 11 : index
    %c0_144 = arith.constant 0 : index
    %414 = vector.load %arg4[%c11_143, %c0_144] : memref<49x32xf32, #tpu.memory_space<vmem>>, vector<1x32xf32>
    %415 = vector.shape_cast %414 : vector<1x32xf32> to vector<32xf32>
    %416 = vector.shape_cast %415 : vector<32xf32> to vector<1x1x32xf32>
    %417 = vector.broadcast %416 : vector<1x1x32xf32> to vector<16x16x32xf32>
    %418 = arith.mulf %413, %417 : vector<16x16x32xf32>
    %419 = arith.addf %412, %418 : vector<16x16x32xf32>
    %420 = vector.extract_strided_slice %405 {offsets = [6, 0, 0], sizes = [16, 16, 32], strides = [1, 1, 1]} : vector<34x16x32xf32> to vector<16x16x32xf32>
    %c18_145 = arith.constant 18 : index
    %c0_146 = arith.constant 0 : index
    %421 = vector.load %arg4[%c18_145, %c0_146] : memref<49x32xf32, #tpu.memory_space<vmem>>, vector<1x32xf32>
    %422 = vector.shape_cast %421 : vector<1x32xf32> to vector<32xf32>
    %423 = vector.shape_cast %422 : vector<32xf32> to vector<1x1x32xf32>
    %424 = vector.broadcast %423 : vector<1x1x32xf32> to vector<16x16x32xf32>
    %425 = arith.mulf %420, %424 : vector<16x16x32xf32>
    %426 = arith.addf %419, %425 : vector<16x16x32xf32>
    %427 = vector.extract_strided_slice %405 {offsets = [9, 0, 0], sizes = [16, 16, 32], strides = [1, 1, 1]} : vector<34x16x32xf32> to vector<16x16x32xf32>
    %c25_147 = arith.constant 25 : index
    %c0_148 = arith.constant 0 : index
    %428 = vector.load %arg4[%c25_147, %c0_148] : memref<49x32xf32, #tpu.memory_space<vmem>>, vector<1x32xf32>
    %429 = vector.shape_cast %428 : vector<1x32xf32> to vector<32xf32>
    %430 = vector.shape_cast %429 : vector<32xf32> to vector<1x1x32xf32>
    %431 = vector.broadcast %430 : vector<1x1x32xf32> to vector<16x16x32xf32>
    %432 = arith.mulf %427, %431 : vector<16x16x32xf32>
    %433 = arith.addf %426, %432 : vector<16x16x32xf32>
    %434 = vector.extract_strided_slice %405 {offsets = [12, 0, 0], sizes = [16, 16, 32], strides = [1, 1, 1]} : vector<34x16x32xf32> to vector<16x16x32xf32>
    %c32 = arith.constant 32 : index
    %c0_149 = arith.constant 0 : index
    %435 = vector.load %arg4[%c32, %c0_149] : memref<49x32xf32, #tpu.memory_space<vmem>>, vector<1x32xf32>
    %436 = vector.shape_cast %435 : vector<1x32xf32> to vector<32xf32>
    %437 = vector.shape_cast %436 : vector<32xf32> to vector<1x1x32xf32>
    %438 = vector.broadcast %437 : vector<1x1x32xf32> to vector<16x16x32xf32>
    %439 = arith.mulf %434, %438 : vector<16x16x32xf32>
    %440 = arith.addf %433, %439 : vector<16x16x32xf32>
    %441 = vector.extract_strided_slice %405 {offsets = [15, 0, 0], sizes = [16, 16, 32], strides = [1, 1, 1]} : vector<34x16x32xf32> to vector<16x16x32xf32>
    %c39 = arith.constant 39 : index
    %c0_150 = arith.constant 0 : index
    %442 = vector.load %arg4[%c39, %c0_150] : memref<49x32xf32, #tpu.memory_space<vmem>>, vector<1x32xf32>
    %443 = vector.shape_cast %442 : vector<1x32xf32> to vector<32xf32>
    %444 = vector.shape_cast %443 : vector<32xf32> to vector<1x1x32xf32>
    %445 = vector.broadcast %444 : vector<1x1x32xf32> to vector<16x16x32xf32>
    %446 = arith.mulf %441, %445 : vector<16x16x32xf32>
    %447 = arith.addf %440, %446 : vector<16x16x32xf32>
    %448 = vector.extract_strided_slice %405 {offsets = [18, 0, 0], sizes = [16, 16, 32], strides = [1, 1, 1]} : vector<34x16x32xf32> to vector<16x16x32xf32>
    %c46 = arith.constant 46 : index
    %c0_151 = arith.constant 0 : index
    %449 = vector.load %arg4[%c46, %c0_151] : memref<49x32xf32, #tpu.memory_space<vmem>>, vector<1x32xf32>
    %450 = vector.shape_cast %449 : vector<1x32xf32> to vector<32xf32>
    %451 = vector.shape_cast %450 : vector<32xf32> to vector<1x1x32xf32>
    %452 = vector.broadcast %451 : vector<1x1x32xf32> to vector<16x16x32xf32>
    %453 = arith.mulf %448, %452 : vector<16x16x32xf32>
    %454 = arith.addf %447, %453 : vector<16x16x32xf32>
    %c0_152 = arith.constant 0 : index
    %c15_153 = arith.constant 15 : index
    %c0_154 = arith.constant 0 : index
    %455 = vector.load %arg9[%c0_152, %c15_153, %c0_154] : memref<34x40x32xf32, #tpu.memory_space<vmem>>, vector<34x16x32xf32>
    %456 = vector.extract_strided_slice %455 {offsets = [0, 0, 0], sizes = [16, 16, 32], strides = [1, 1, 1]} : vector<34x16x32xf32> to vector<16x16x32xf32>
    %c5_155 = arith.constant 5 : index
    %c0_156 = arith.constant 0 : index
    %457 = vector.load %arg4[%c5_155, %c0_156] : memref<49x32xf32, #tpu.memory_space<vmem>>, vector<1x32xf32>
    %458 = vector.shape_cast %457 : vector<1x32xf32> to vector<32xf32>
    %459 = vector.shape_cast %458 : vector<32xf32> to vector<1x1x32xf32>
    %460 = vector.broadcast %459 : vector<1x1x32xf32> to vector<16x16x32xf32>
    %461 = arith.mulf %456, %460 : vector<16x16x32xf32>
    %462 = arith.addf %454, %461 : vector<16x16x32xf32>
    %463 = vector.extract_strided_slice %455 {offsets = [3, 0, 0], sizes = [16, 16, 32], strides = [1, 1, 1]} : vector<34x16x32xf32> to vector<16x16x32xf32>
    %c12_157 = arith.constant 12 : index
    %c0_158 = arith.constant 0 : index
    %464 = vector.load %arg4[%c12_157, %c0_158] : memref<49x32xf32, #tpu.memory_space<vmem>>, vector<1x32xf32>
    %465 = vector.shape_cast %464 : vector<1x32xf32> to vector<32xf32>
    %466 = vector.shape_cast %465 : vector<32xf32> to vector<1x1x32xf32>
    %467 = vector.broadcast %466 : vector<1x1x32xf32> to vector<16x16x32xf32>
    %468 = arith.mulf %463, %467 : vector<16x16x32xf32>
    %469 = arith.addf %462, %468 : vector<16x16x32xf32>
    %470 = vector.extract_strided_slice %455 {offsets = [6, 0, 0], sizes = [16, 16, 32], strides = [1, 1, 1]} : vector<34x16x32xf32> to vector<16x16x32xf32>
    %c19_159 = arith.constant 19 : index
    %c0_160 = arith.constant 0 : index
    %471 = vector.load %arg4[%c19_159, %c0_160] : memref<49x32xf32, #tpu.memory_space<vmem>>, vector<1x32xf32>
    %472 = vector.shape_cast %471 : vector<1x32xf32> to vector<32xf32>
    %473 = vector.shape_cast %472 : vector<32xf32> to vector<1x1x32xf32>
    %474 = vector.broadcast %473 : vector<1x1x32xf32> to vector<16x16x32xf32>
    %475 = arith.mulf %470, %474 : vector<16x16x32xf32>
    %476 = arith.addf %469, %475 : vector<16x16x32xf32>
    %477 = vector.extract_strided_slice %455 {offsets = [9, 0, 0], sizes = [16, 16, 32], strides = [1, 1, 1]} : vector<34x16x32xf32> to vector<16x16x32xf32>
    %c26 = arith.constant 26 : index
    %c0_161 = arith.constant 0 : index
    %478 = vector.load %arg4[%c26, %c0_161] : memref<49x32xf32, #tpu.memory_space<vmem>>, vector<1x32xf32>
    %479 = vector.shape_cast %478 : vector<1x32xf32> to vector<32xf32>
    %480 = vector.shape_cast %479 : vector<32xf32> to vector<1x1x32xf32>
    %481 = vector.broadcast %480 : vector<1x1x32xf32> to vector<16x16x32xf32>
    %482 = arith.mulf %477, %481 : vector<16x16x32xf32>
    %483 = arith.addf %476, %482 : vector<16x16x32xf32>
    %484 = vector.extract_strided_slice %455 {offsets = [12, 0, 0], sizes = [16, 16, 32], strides = [1, 1, 1]} : vector<34x16x32xf32> to vector<16x16x32xf32>
    %c33 = arith.constant 33 : index
    %c0_162 = arith.constant 0 : index
    %485 = vector.load %arg4[%c33, %c0_162] : memref<49x32xf32, #tpu.memory_space<vmem>>, vector<1x32xf32>
    %486 = vector.shape_cast %485 : vector<1x32xf32> to vector<32xf32>
    %487 = vector.shape_cast %486 : vector<32xf32> to vector<1x1x32xf32>
    %488 = vector.broadcast %487 : vector<1x1x32xf32> to vector<16x16x32xf32>
    %489 = arith.mulf %484, %488 : vector<16x16x32xf32>
    %490 = arith.addf %483, %489 : vector<16x16x32xf32>
    %491 = vector.extract_strided_slice %455 {offsets = [15, 0, 0], sizes = [16, 16, 32], strides = [1, 1, 1]} : vector<34x16x32xf32> to vector<16x16x32xf32>
    %c40 = arith.constant 40 : index
    %c0_163 = arith.constant 0 : index
    %492 = vector.load %arg4[%c40, %c0_163] : memref<49x32xf32, #tpu.memory_space<vmem>>, vector<1x32xf32>
    %493 = vector.shape_cast %492 : vector<1x32xf32> to vector<32xf32>
    %494 = vector.shape_cast %493 : vector<32xf32> to vector<1x1x32xf32>
    %495 = vector.broadcast %494 : vector<1x1x32xf32> to vector<16x16x32xf32>
    %496 = arith.mulf %491, %495 : vector<16x16x32xf32>
    %497 = arith.addf %490, %496 : vector<16x16x32xf32>
    %498 = vector.extract_strided_slice %455 {offsets = [18, 0, 0], sizes = [16, 16, 32], strides = [1, 1, 1]} : vector<34x16x32xf32> to vector<16x16x32xf32>
    %c47 = arith.constant 47 : index
    %c0_164 = arith.constant 0 : index
    %499 = vector.load %arg4[%c47, %c0_164] : memref<49x32xf32, #tpu.memory_space<vmem>>, vector<1x32xf32>
    %500 = vector.shape_cast %499 : vector<1x32xf32> to vector<32xf32>
    %501 = vector.shape_cast %500 : vector<32xf32> to vector<1x1x32xf32>
    %502 = vector.broadcast %501 : vector<1x1x32xf32> to vector<16x16x32xf32>
    %503 = arith.mulf %498, %502 : vector<16x16x32xf32>
    %504 = arith.addf %497, %503 : vector<16x16x32xf32>
    %c0_165 = arith.constant 0 : index
    %c18_166 = arith.constant 18 : index
    %c0_167 = arith.constant 0 : index
    %505 = vector.load %arg9[%c0_165, %c18_166, %c0_167] : memref<34x40x32xf32, #tpu.memory_space<vmem>>, vector<34x16x32xf32>
    %506 = vector.extract_strided_slice %505 {offsets = [0, 0, 0], sizes = [16, 16, 32], strides = [1, 1, 1]} : vector<34x16x32xf32> to vector<16x16x32xf32>
    %c6_168 = arith.constant 6 : index
    %c0_169 = arith.constant 0 : index
    %507 = vector.load %arg4[%c6_168, %c0_169] : memref<49x32xf32, #tpu.memory_space<vmem>>, vector<1x32xf32>
    %508 = vector.shape_cast %507 : vector<1x32xf32> to vector<32xf32>
    %509 = vector.shape_cast %508 : vector<32xf32> to vector<1x1x32xf32>
    %510 = vector.broadcast %509 : vector<1x1x32xf32> to vector<16x16x32xf32>
    %511 = arith.mulf %506, %510 : vector<16x16x32xf32>
    %512 = arith.addf %504, %511 : vector<16x16x32xf32>
    %513 = vector.extract_strided_slice %505 {offsets = [3, 0, 0], sizes = [16, 16, 32], strides = [1, 1, 1]} : vector<34x16x32xf32> to vector<16x16x32xf32>
    %c13_170 = arith.constant 13 : index
    %c0_171 = arith.constant 0 : index
    %514 = vector.load %arg4[%c13_170, %c0_171] : memref<49x32xf32, #tpu.memory_space<vmem>>, vector<1x32xf32>
    %515 = vector.shape_cast %514 : vector<1x32xf32> to vector<32xf32>
    %516 = vector.shape_cast %515 : vector<32xf32> to vector<1x1x32xf32>
    %517 = vector.broadcast %516 : vector<1x1x32xf32> to vector<16x16x32xf32>
    %518 = arith.mulf %513, %517 : vector<16x16x32xf32>
    %519 = arith.addf %512, %518 : vector<16x16x32xf32>
    %520 = vector.extract_strided_slice %505 {offsets = [6, 0, 0], sizes = [16, 16, 32], strides = [1, 1, 1]} : vector<34x16x32xf32> to vector<16x16x32xf32>
    %c20_172 = arith.constant 20 : index
    %c0_173 = arith.constant 0 : index
    %521 = vector.load %arg4[%c20_172, %c0_173] : memref<49x32xf32, #tpu.memory_space<vmem>>, vector<1x32xf32>
    %522 = vector.shape_cast %521 : vector<1x32xf32> to vector<32xf32>
    %523 = vector.shape_cast %522 : vector<32xf32> to vector<1x1x32xf32>
    %524 = vector.broadcast %523 : vector<1x1x32xf32> to vector<16x16x32xf32>
    %525 = arith.mulf %520, %524 : vector<16x16x32xf32>
    %526 = arith.addf %519, %525 : vector<16x16x32xf32>
    %527 = vector.extract_strided_slice %505 {offsets = [9, 0, 0], sizes = [16, 16, 32], strides = [1, 1, 1]} : vector<34x16x32xf32> to vector<16x16x32xf32>
    %c27 = arith.constant 27 : index
    %c0_174 = arith.constant 0 : index
    %528 = vector.load %arg4[%c27, %c0_174] : memref<49x32xf32, #tpu.memory_space<vmem>>, vector<1x32xf32>
    %529 = vector.shape_cast %528 : vector<1x32xf32> to vector<32xf32>
    %530 = vector.shape_cast %529 : vector<32xf32> to vector<1x1x32xf32>
    %531 = vector.broadcast %530 : vector<1x1x32xf32> to vector<16x16x32xf32>
    %532 = arith.mulf %527, %531 : vector<16x16x32xf32>
    %533 = arith.addf %526, %532 : vector<16x16x32xf32>
    %534 = vector.extract_strided_slice %505 {offsets = [12, 0, 0], sizes = [16, 16, 32], strides = [1, 1, 1]} : vector<34x16x32xf32> to vector<16x16x32xf32>
    %c34 = arith.constant 34 : index
    %c0_175 = arith.constant 0 : index
    %535 = vector.load %arg4[%c34, %c0_175] : memref<49x32xf32, #tpu.memory_space<vmem>>, vector<1x32xf32>
    %536 = vector.shape_cast %535 : vector<1x32xf32> to vector<32xf32>
    %537 = vector.shape_cast %536 : vector<32xf32> to vector<1x1x32xf32>
    %538 = vector.broadcast %537 : vector<1x1x32xf32> to vector<16x16x32xf32>
    %539 = arith.mulf %534, %538 : vector<16x16x32xf32>
    %540 = arith.addf %533, %539 : vector<16x16x32xf32>
    %541 = vector.extract_strided_slice %505 {offsets = [15, 0, 0], sizes = [16, 16, 32], strides = [1, 1, 1]} : vector<34x16x32xf32> to vector<16x16x32xf32>
    %c41 = arith.constant 41 : index
    %c0_176 = arith.constant 0 : index
    %542 = vector.load %arg4[%c41, %c0_176] : memref<49x32xf32, #tpu.memory_space<vmem>>, vector<1x32xf32>
    %543 = vector.shape_cast %542 : vector<1x32xf32> to vector<32xf32>
    %544 = vector.shape_cast %543 : vector<32xf32> to vector<1x1x32xf32>
    %545 = vector.broadcast %544 : vector<1x1x32xf32> to vector<16x16x32xf32>
    %546 = arith.mulf %541, %545 : vector<16x16x32xf32>
    %547 = arith.addf %540, %546 : vector<16x16x32xf32>
    %548 = vector.extract_strided_slice %505 {offsets = [18, 0, 0], sizes = [16, 16, 32], strides = [1, 1, 1]} : vector<34x16x32xf32> to vector<16x16x32xf32>
    %c48 = arith.constant 48 : index
    %c0_177 = arith.constant 0 : index
    %549 = vector.load %arg4[%c48, %c0_177] : memref<49x32xf32, #tpu.memory_space<vmem>>, vector<1x32xf32>
    %550 = vector.shape_cast %549 : vector<1x32xf32> to vector<32xf32>
    %551 = vector.shape_cast %550 : vector<32xf32> to vector<1x1x32xf32>
    %552 = vector.broadcast %551 : vector<1x1x32xf32> to vector<16x16x32xf32>
    %553 = arith.mulf %548, %552 : vector<16x16x32xf32>
    %554 = arith.addf %547, %553 : vector<16x16x32xf32>
    %c0_178 = arith.constant 0 : index
    %c0_179 = arith.constant 0 : index
    %555 = vector.load %arg5[%c0_178, %c0_179] : memref<1x32xf32, #tpu.memory_space<vmem>>, vector<1x32xf32>
    %556 = vector.shape_cast %555 : vector<1x32xf32> to vector<32xf32>
    %557 = vector.shape_cast %556 : vector<32xf32> to vector<1x1x32xf32>
    %558 = vector.broadcast %557 : vector<1x1x32xf32> to vector<16x16x32xf32>
    %559 = arith.addf %554, %558 : vector<16x16x32xf32>
    %560 = vector.shape_cast %559 : vector<16x16x32xf32> to vector<256x32xf32>
    %c0_180 = arith.constant 0 : index
    %c0_181 = arith.constant 0 : index
    %561 = vector.load %arg6[%c0_180, %c0_181] : memref<32x32xf32, #tpu.memory_space<vmem>>, vector<32x32xf32>
    %cst_182 = arith.constant dense<0.000000e+00> : vector<256x32xf32>
    %562 = tpu.matmul %560, %561, %cst_182 {dimension_numbers = #tpu.dot_dimension_numbers<[1], [0], [0], [1], [0, 0, 1, 1], [], []>} : vector<256x32xf32>, vector<32x32xf32>, vector<256x32xf32> -> vector<256x32xf32>
    %c0_183 = arith.constant 0 : index
    %c0_184 = arith.constant 0 : index
    %563 = vector.load %arg7[%c0_183, %c0_184] : memref<1x32xf32, #tpu.memory_space<vmem>>, vector<1x32xf32>
    %564 = vector.broadcast %563 : vector<1x32xf32> to vector<256x32xf32>
    %565 = arith.addf %562, %564 : vector<256x32xf32>
    %c0_185 = arith.constant 0 : index
    %c0_186 = arith.constant 0 : index
    %c0_187 = arith.constant 0 : index
    %c0_188 = arith.constant 0 : index
    %566 = vector.load %arg1[%c0_185, %c0_186, %c0_187, %c0_188] : memref<1x16x16x32xf32, #tpu.memory_space<vmem>>, vector<1x16x16x32xf32>
    %567 = vector.shape_cast %566 : vector<1x16x16x32xf32> to vector<16x16x32xf32>
    %568 = vector.shape_cast %565 : vector<256x32xf32> to vector<16x16x32xf32>
    %569 = arith.mulf %567, %568 : vector<16x16x32xf32>
    %c0_189 = arith.constant 0 : index
    %c0_190 = arith.constant 0 : index
    %c0_191 = arith.constant 0 : index
    %c0_192 = arith.constant 0 : index
    %570 = vector.load %arg8[%c0_189, %c0_190, %c0_191, %c0_192] : memref<1x16x16x32xf32, #tpu.memory_space<vmem>>, vector<1x16x16x32xf32>
    %571 = vector.shape_cast %570 : vector<1x16x16x32xf32> to vector<16x16x32xf32>
    %572 = vector.shape_cast %569 : vector<16x16x32xf32> to vector<1x16x16x32xf32>
    tpu.vector_store %arg8[%c0_189, %c0_190, %c0_191, %c0_192], %572 {strides = array<i32>} : memref<1x16x16x32xf32, #tpu.memory_space<vmem>>, vector<1x16x16x32xf32>,
    return
  }
  func.func @transform_0(%arg0: i32) -> (i32, i32, i32, i32) {
    %c0_i32 = arith.constant 0 : i32
    %c0_i32_0 = arith.constant 0 : i32
    %c0_i32_1 = arith.constant 0 : i32
    %c0_i32_2 = arith.constant 0 : i32
    return %arg0, %c0_i32, %c0_i32_0, %c0_i32_1 : i32, i32, i32, i32
  }
  func.func @transform_1(%arg0: i32) -> (i32, i32) {
    %c0_i32 = arith.constant 0 : i32
    %c0_i32_0 = arith.constant 0 : i32
    %c0_i32_1 = arith.constant 0 : i32
    return %c0_i32, %c0_i32_0 : i32, i32
  }
  func.func @transform_2(%arg0: i32) -> (i32, i32) {
    %c0_i32 = arith.constant 0 : i32
    %c0_i32_0 = arith.constant 0 : i32
    %c0_i32_1 = arith.constant 0 : i32
    return %c0_i32, %c0_i32_0 : i32, i32
  }
  func.func @transform_3(%arg0: i32) -> (i32, i32) {
    %c0_i32 = arith.constant 0 : i32
    %c0_i32_0 = arith.constant 0 : i32
    %c0_i32_1 = arith.constant 0 : i32
    return %c0_i32, %c0_i32_0 : i32, i32
  }
  func.func @transform_4(%arg0: i32) -> (i32, i32) {
    %c0_i32 = arith.constant 0 : i32
    %c0_i32_0 = arith.constant 0 : i32
    %c0_i32_1 = arith.constant 0 : i32
    return %c0_i32, %c0_i32_0 : i32, i32
  }
  func.func @transform_5(%arg0: i32) -> (i32, i32) {
    %c0_i32 = arith.constant 0 : i32
    %c0_i32_0 = arith.constant 0 : i32
    %c0_i32_1 = arith.constant 0 : i32
    return %c0_i32, %c0_i32_0 : i32, i32
  }
  func.func @transform_6(%arg0: i32) -> (i32, i32) {
    %c0_i32 = arith.constant 0 : i32
    %c0_i32_0 = arith.constant 0 : i32
    %c0_i32_1 = arith.constant 0 : i32
    return %c0_i32, %c0_i32_0 : i32, i32
  }
  func.func @transform_7(%arg0: i32) -> (i32, i32, i32, i32) {
    %c0_i32 = arith.constant 0 : i32
    %c0_i32_0 = arith.constant 0 : i32
    %c0_i32_1 = arith.constant 0 : i32
    %c0_i32_2 = arith.constant 0 : i32
    return %arg0, %c0_i32, %c0_i32_0, %c0_i32_1 : i32, i32, i32, i32
  }
}

</mosaic_0001>

<llo_original>
// kernel: tpu_custom_call.1
$region0: #{tpu_custom_call.1}
  #allocation0 [shape = 'u32[]', space=smem, size = 0x4, offset = 0x4, fixed_abs, tag = 'smem constant byte address 0x4 - core index']
  #allocation1 [shape = 'u32[144,128]{1,0:T(1,128)}', space=vmem, size = 0x12000, scoped, tag = 'internal scratch']
  #allocation2 [shape = 'f32[34,40,32]{2,1,0:T(8,128)}', space=vmem, size = 0xaa000, scoped, tag = 'scratch operand']
  %s0 = inlined_call_operand.hbm [shape: f32[2,16,16,32], index: 0, kind: input, shape index: {}]
  %s1 = inlined_call_operand.vmem [shape: f32[25,32], index: 1, kind: input, shape index: {}]
  %s2 = inlined_call_operand.vmem [shape: f32[1,32], index: 2, kind: input, shape index: {}]
  %s3 = inlined_call_operand.vmem [shape: f32[49,32], index: 3, kind: input, shape index: {}]
  %s4 = inlined_call_operand.vmem [shape: f32[1,32], index: 4, kind: input, shape index: {}]
  %s5 = inlined_call_operand.vmem [shape: f32[32,32], index: 5, kind: input, shape index: {}]
  %s6 = inlined_call_operand.vmem [shape: f32[1,32], index: 6, kind: input, shape index: {}]
  %s7 = inlined_call_operand.hbm [shape: f32[2,16,16,32], index: 7, kind: output, shape index: {}]
  %s8 = sld [smem:[#allocation0]]
  $region65: #{tpu_custom_call.1} parent=0
    _
  %s10 = ssub.s32 1, %s8
  %s11 = scalar_select 0, %s10, %s8
  $region1: #{tpu_custom_call.1} parent=0
    #allocation3 [shape = 'u8[262144]{0}', space=vmem, size = 0x40000, scoped, tag = 'input window, operand 0']
    #allocation4 [shape = 's32[2]{0}', space=sflag, size = 0x8, scoped, tag = 'scoped memory for tpu_custom_call.1']
    #allocation5 [shape = 's32[2]{0}', space=sflag, size = 0x8, scoped, tag = 'scoped memory for tpu_custom_call.1']
    #allocation6 [shape = 'u8[262144]{0}', space=vmem, size = 0x40000, scoped, tag = 'output window, operand 0']
    %12 = vsyncpa [#allocation4], 0
    %s13 = scalar_lea.sflag [#allocation4], 1
    %14 = vsyncpa %s13, 0
    %15 = vsyncpa [#allocation5], 0
    %s16 = scalar_lea.sflag [#allocation5], 1
    %17 = vsyncpa %s16, 0
    loop: start=0, step=1, limit=4
    $region2: #{tpu_custom_call.1} parent=1 // loop_pre_header
      _
    $region3: #{tpu_custom_call.1} parent=1 // loop_header
      %s19 = sphi 0, %s23
      %p20 = scmp.ge.s32.totalorder %s19, 4
      %s29 = sphi 0, %s31
      %s32 = sphi 0, %s29
      %s33 = sphi 0, %s32
      %s49 = sphi 0, %s33
      %s53 = sphi 0, %s53
      %s55 = sphi 0, %s53
      %s56 = sphi 0, %s55
      %s70 = sphi 0, %s56
      %s74 = sphi 0, %s74
      %s76 = sphi 0, %s74
      %s77 = sphi 0, %s76
      %s91 = sphi 0, %s77
      %s95 = sphi 0, %s95
      %s97 = sphi 0, %s95
      %s98 = sphi 0, %s97
      %s112 = sphi 0, %s98
      %s116 = sphi 0, %s116
      %s118 = sphi 0, %s116
      %s119 = sphi 0, %s118
      %s133 = sphi 0, %s119
      %s137 = sphi 0, %s137
      %s139 = sphi 0, %s137
      %s140 = sphi 0, %s139
      %s154 = sphi 0, %s140
      %s158 = sphi 0, %s158
      %s160 = sphi 0, %s158
      %s161 = sphi 0, %s160
      %s175 = sphi 0, %s161
      %s181 = sphi 0, %s183
      %s184 = sphi 0, %s181
      %s185 = sphi 0, %s184
      %s201 = sphi 0, %s185
    $region4: #{tpu_custom_call.1} parent=1 // loop_header_branch
      %22 = sbr.rel (%p20) target = $region8
    $region5: #{tpu_custom_call.1} parent=1 // loop_body
      %s24 = ssub.s32 %s19, 1
      %s25 = ssub.s32 %s19, 2
      %s26 = sadd.s32 %s19, 1
      %s27 = ssub.s32 %s19, %s26
      %p28 = scmp.eq.s32.totalorder %s27, 0
      %s30 = sadd.s32 %s29, 1
      %s31 = scalar_select %p28, %s29, %s30
      %p34 = pneg %p28
      %p35 = scmp.eq.s32.totalorder %s19, 1
      %p36 = por %p34, %p35
      %p37 = scmp.ne.s32.totalorder %s29, %s32
      %p38 = scmp.eq.s32.totalorder %s19, 0
      %p39 = por %p37, %p38
      %p40 = scmp.ne.s32.totalorder %s29, %s32
      %p41 = scmp.eq.s32.totalorder %s24, 1
      %p42 = por %p40, %p41
      %p43 = scmp.ne.s32.totalorder %s32, %s33
      %p44 = scmp.eq.s32.totalorder %s24, 0
      %p45 = por %p43, %p44
      %p46 = scmp.ne.s32.totalorder %s32, %s33
      %p47 = scmp.eq.s32.totalorder %s25, 1
      %p48 = por %p46, %p47
      %p50 = scmp.ne.s32.totalorder %s33, %s49
      %p51 = scmp.eq.s32.totalorder %s25, 0
      %p52 = por %p50, %p51
      %s54 = sadd.s32 %s53, 1
      %p57 = scmp.eq.s32.totalorder %s19, 1
      %p58 = scmp.ne.s32.totalorder %s53, %s55
      %p59 = scmp.eq.s32.totalorder %s19, 0
      %p60 = por %p58, %p59
      %p61 = scmp.ne.s32.totalorder %s53, %s55
      %p62 = scmp.eq.s32.totalorder %s24, 1
      %p63 = por %p61, %p62
      %p64 = scmp.ne.s32.totalorder %s55, %s56
      %p65 = scmp.eq.s32.totalorder %s24, 0
      %p66 = por %p64, %p65
      %p67 = scmp.ne.s32.totalorder %s55, %s56
      %p68 = scmp.eq.s32.totalorder %s25, 1
      %p69 = por %p67, %p68
      %p71 = scmp.ne.s32.totalorder %s56, %s70
      %p72 = scmp.eq.s32.totalorder %s25, 0
      %p73 = por %p71, %p72
      %s75 = sadd.s32 %s74, 1
      %p78 = scmp.eq.s32.totalorder %s19, 1
      %p79 = scmp.ne.s32.totalorder %s74, %s76
      %p80 = scmp.eq.s32.totalorder %s19, 0
      %p81 = por %p79, %p80
      %p82 = scmp.ne.s32.totalorder %s74, %s76
      %p83 = scmp.eq.s32.totalorder %s24, 1
      %p84 = por %p82, %p83
      %p85 = scmp.ne.s32.totalorder %s76, %s77
      %p86 = scmp.eq.s32.totalorder %s24, 0
      %p87 = por %p85, %p86
      %p88 = scmp.ne.s32.totalorder %s76, %s77
      %p89 = scmp.eq.s32.totalorder %s25, 1
      %p90 = por %p88, %p89
      %p92 = scmp.ne.s32.totalorder %s77, %s91
      %p93 = scmp.eq.s32.totalorder %s25, 0
      %p94 = por %p92, %p93
      %s96 = sadd.s32 %s95, 1
      %p99 = scmp.eq.s32.totalorder %s19, 1
      %p100 = scmp.ne.s32.totalorder %s95, %s97
      %p101 = scmp.eq.s32.totalorder %s19, 0
      %p102 = por %p100, %p101
      %p103 = scmp.ne.s32.totalorder %s95, %s97
      %p104 = scmp.eq.s32.totalorder %s24, 1
      %p105 = por %p103, %p104
      %p106 = scmp.ne.s32.totalorder %s97, %s98
      %p107 = scmp.eq.s32.totalorder %s24, 0
      %p108 = por %p106, %p107
      %p109 = scmp.ne.s32.totalorder %s97, %s98
      %p110 = scmp.eq.s32.totalorder %s25, 1
      %p111 = por %p109, %p110
      %p113 = scmp.ne.s32.totalorder %s98, %s112
      %p114 = scmp.eq.s32.totalorder %s25, 0
      %p115 = por %p113, %p114
      %s117 = sadd.s32 %s116, 1
      %p120 = scmp.eq.s32.totalorder %s19, 1
      %p121 = scmp.ne.s32.totalorder %s116, %s118
      %p122 = scmp.eq.s32.totalorder %s19, 0
      %p123 = por %p121, %p122
      %p124 = scmp.ne.s32.totalorder %s116, %s118
      %p125 = scmp.eq.s32.totalorder %s24, 1
      %p126 = por %p124, %p125
      %p127 = scmp.ne.s32.totalorder %s118, %s119
      %p128 = scmp.eq.s32.totalorder %s24, 0
      %p129 = por %p127, %p128
      %p130 = scmp.ne.s32.totalorder %s118, %s119
      %p131 = scmp.eq.s32.totalorder %s25, 1
      %p132 = por %p130, %p131
      %p134 = scmp.ne.s32.totalorder %s119, %s133
      %p135 = scmp.eq.s32.totalorder %s25, 0
      %p136 = por %p134, %p135
      %s138 = sadd.s32 %s137, 1
      %p141 = scmp.eq.s32.totalorder %s19, 1
      %p142 = scmp.ne.s32.totalorder %s137, %s139
      %p143 = scmp.eq.s32.totalorder %s19, 0
      %p144 = por %p142, %p143
      %p145 = scmp.ne.s32.totalorder %s137, %s139
      %p146 = scmp.eq.s32.totalorder %s24, 1
      %p147 = por %p145, %p146
      %p148 = scmp.ne.s32.totalorder %s139, %s140
      %p149 = scmp.eq.s32.totalorder %s24, 0
      %p150 = por %p148, %p149
      %p151 = scmp.ne.s32.totalorder %s139, %s140
      %p152 = scmp.eq.s32.totalorder %s25, 1
      %p153 = por %p151, %p152
      %p155 = scmp.ne.s32.totalorder %s140, %s154
      %p156 = scmp.eq.s32.totalorder %s25, 0
      %p157 = por %p155, %p156
      %s159 = sadd.s32 %s158, 1
      %p162 = scmp.eq.s32.totalorder %s19, 1
      %p163 = scmp.ne.s32.totalorder %s158, %s160
      %p164 = scmp.eq.s32.totalorder %s19, 0
      %p165 = por %p163, %p164
      %p166 = scmp.ne.s32.totalorder %s158, %s160
      %p167 = scmp.eq.s32.totalorder %s24, 1
      %p168 = por %p166, %p167
      %p169 = scmp.ne.s32.totalorder %s160, %s161
      %p170 = scmp.eq.s32.totalorder %s24, 0
      %p171 = por %p169, %p170
      %p172 = scmp.ne.s32.totalorder %s160, %s161
      %p173 = scmp.eq.s32.totalorder %s25, 1
      %p174 = por %p172, %p173
      %p176 = scmp.ne.s32.totalorder %s161, %s175
      %p177 = scmp.eq.s32.totalorder %s25, 0
      %p178 = por %p176, %p177
      %s179 = ssub.s32 %s19, %s26
      %p180 = scmp.eq.s32.totalorder %s179, 0
      %s182 = sadd.s32 %s181, 1
      %s183 = scalar_select %p180, %s181, %s182
      %p186 = pneg %p180
      %p187 = scmp.eq.s32.totalorder %s19, 1
      %p188 = por %p186, %p187
      %p189 = scmp.ne.s32.totalorder %s181, %s184
      %p190 = scmp.eq.s32.totalorder %s19, 0
      %p191 = por %p189, %p190
      %p192 = scmp.ne.s32.totalorder %s181, %s184
      %p193 = scmp.eq.s32.totalorder %s24, 1
      %p194 = por %p192, %p193
      %p195 = scmp.ne.s32.totalorder %s184, %s185
      %p196 = scmp.eq.s32.totalorder %s24, 0
      %p197 = por %p195, %p196
      %p198 = scmp.ne.s32.totalorder %s184, %s185
      %p199 = scmp.eq.s32.totalorder %s25, 1
      %p200 = por %p198, %p199
      %p202 = scmp.ne.s32.totalorder %s185, %s201
      %p203 = scmp.eq.s32.totalorder %s25, 0
      %p204 = por %p202, %p203
      %p205 = scmp.le.s32.totalorder 1, %s19
      %p206 = scmp.lt.s32.totalorder %s19, 3
      %p207 = pnand %p205, %p206
      %p208 = pneg %p207
      // Predicated region
      $region9: #{tpu_custom_call.1} parent=5 // pred_check
        _
      $region10: #{tpu_custom_call.1} parent=5 // pred_check_branch
        %210 = sbr.rel (%p207) target = $region12
      $region11: #{tpu_custom_call.1} parent=5 // pred_region
        %s211 = ssub.s32 %s19, 1
        // Predicated region
        $region13: #{tpu_custom_call.1} parent=11 // pred_check
          %p212 = pneg %p66
        $region14: #{tpu_custom_call.1} parent=11 // pred_check_branch
          %214 = sbr.rel (%p212) target = $region16
        $region15: #{tpu_custom_call.1} parent=11 // pred_region
          _
        $region16: #{tpu_custom_call.1} parent=11 // pred_fallthru
          _
        // Predicated region
        $region17: #{tpu_custom_call.1} parent=11 // pred_check
          %p215 = pneg %p87
        $region18: #{tpu_custom_call.1} parent=11 // pred_check_branch
          %217 = sbr.rel (%p215) target = $region20
        $region19: #{tpu_custom_call.1} parent=11 // pred_region
          _
        $region20: #{tpu_custom_call.1} parent=11 // pred_fallthru
          _
        // Predicated region
        $region21: #{tpu_custom_call.1} parent=11 // pred_check
          %p218 = pneg %p108
        $region22: #{tpu_custom_call.1} parent=11 // pred_check_branch
          %220 = sbr.rel (%p218) target = $region24
        $region23: #{tpu_custom_call.1} parent=11 // pred_region
          _
        $region24: #{tpu_custom_call.1} parent=11 // pred_fallthru
          _
        // Predicated region
        $region25: #{tpu_custom_call.1} parent=11 // pred_check
          %p221 = pneg %p129
        $region26: #{tpu_custom_call.1} parent=11 // pred_check_branch
          %223 = sbr.rel (%p221) target = $region28
        $region27: #{tpu_custom_call.1} parent=11 // pred_region
          _
        $region28: #{tpu_custom_call.1} parent=11 // pred_fallthru
          _
        // Predicated region
        $region29: #{tpu_custom_call.1} parent=11 // pred_check
          %p224 = pneg %p150
        $region30: #{tpu_custom_call.1} parent=11 // pred_check_branch
          %226 = sbr.rel (%p224) target = $region32
        $region31: #{tpu_custom_call.1} parent=11 // pred_region
          _
        $region32: #{tpu_custom_call.1} parent=11 // pred_fallthru
          _
        // Predicated region
        $region33: #{tpu_custom_call.1} parent=11 // pred_check
          %p227 = pneg %p171
        $region34: #{tpu_custom_call.1} parent=11 // pred_check_branch
          %229 = sbr.rel (%p227) target = $region36
        $region35: #{tpu_custom_call.1} parent=11 // pred_region
          _
        $region36: #{tpu_custom_call.1} parent=11 // pred_fallthru
          _
      $region12: #{tpu_custom_call.1} parent=5 // pred_fallthru
        _
      %p230 = scmp.lt.s32.totalorder %s19, 2
      // Predicated region
      $region37: #{tpu_custom_call.1} parent=5 // pred_check
        %p231 = pneg %p230
      $region38: #{tpu_custom_call.1} parent=5 // pred_check_branch
        %233 = sbr.rel (%p231) target = $region40
      $region39: #{tpu_custom_call.1} parent=5 // pred_region
        // Predicated region
        $region41: #{tpu_custom_call.1} parent=39 // pred_check
          %p234 = pneg %p39
        $region42: #{tpu_custom_call.1} parent=39 // pred_check_branch
          %236 = sbr.rel (%p234) target = $region44
        $region43: #{tpu_custom_call.1} parent=39 // pred_region
          %s237 = sand.u32 %s29, 1
          %s238 = scalar_lea.sflag [#allocation4], %s237
          %s239 = sand.u32 %s29, 1
          %s240 = smul.addr %s239, 256
          %s241 = scalar_lea.vmem [#allocation3], %s240
          %s243 = ssub.s32 4096, 4096
          %244 = vsyncadd %s238, %s243
          %s245 = smul.addr %s19, 32
          %s246 = smul.addr %s245, 128
          %s247 = scalar_lea.hbm %s0, %s246
          %s248 = sshll.u32 %s241, 4
          %s249 = int_to_ptr.vmem [resolvable:$true] %s248
          %254 = dma.hbm_to_vmem [thread:$0]  %s247, 4096, %s249, %s238, 128, 128, 8
        $region44: #{tpu_custom_call.1} parent=39 // pred_fallthru
          _
      $region40: #{tpu_custom_call.1} parent=5 // pred_fallthru
        _
      %p255 = scmp.le.s32.totalorder 1, %s19
      %p256 = scmp.lt.s32.totalorder %s19, 3
      %p257 = pnand %p255, %p256
      %p258 = pneg %p257
      // Predicated region
      $region45: #{tpu_custom_call.1} parent=5 // pred_check
        _
      $region46: #{tpu_custom_call.1} parent=5 // pred_check_branch
        %260 = sbr.rel (%p257) target = $region48
      $region47: #{tpu_custom_call.1} parent=5 // pred_region
        %s261 = ssub.s32 %s19, 1
        %s262 = sand.u32 %s32, 1
        %s263 = scalar_lea.sflag [#allocation4], %s262
        %s264 = sand.u32 %s32, 1
        %s265 = smul.addr %s264, 256
        %s266 = scalar_lea.vmem [#allocation3], %s265
        // Predicated region
        $region49: #{tpu_custom_call.1} parent=47 // pred_check
          %p267 = pneg %p45
        $region50: #{tpu_custom_call.1} parent=47 // pred_check_branch
          %269 = sbr.rel (%p267) target = $region52
        $region51: #{tpu_custom_call.1} parent=47 // pred_region
          %270 = dma.done %s263, 4096
        $region52: #{tpu_custom_call.1} parent=47 // pred_fallthru
          _
        %s271 = sand.u32 %s32, 1
        %s272 = scalar_lea.sflag [#allocation4], %s271
        %s273 = sand.u32 %s32, 1
        %s274 = smul.addr %s273, 256
        %s275 = scalar_lea.vmem [#allocation3], %s274
        %p276 = pneg %p45
        %p277 = pneg %p42
        %p278 = pneg %p66
        %p279 = pneg %p63
        %p280 = pneg %p87
        %p281 = pneg %p84
        %p282 = pneg %p108
        %p283 = pneg %p105
        %p284 = pneg %p129
        %p285 = pneg %p126
        %p286 = pneg %p150
        %p287 = pneg %p147
        %p288 = pneg %p171
        %p289 = pneg %p168
        %p290 = pneg %p197
        %p291 = pneg %p194
        %s292 = sand.u32 %s184, 1
        %s293 = scalar_lea.sflag [#allocation5], %s292
        %s294 = sand.u32 %s184, 1
        %s295 = smul.addr %s294, 256
        %s296 = scalar_lea.vmem [#allocation6], %s295
        %vm297 = vcmask 261120
        %298 = vst.msk [vmem:[#allocation2] sm:$0xff] %vm297, 0.0
        %299 = vst.msk [vmem:[#allocation2 + $0x8] sm:$0xff] %vm297, 0.0
        %300 = vst.msk [vmem:[#allocation2 + $0x10] sm:$0xff] %vm297, 0.0
        %301 = vst.msk [vmem:[#allocation2 + $0x28] sm:$0xff] %vm297, 0.0
        %302 = vst.msk [vmem:[#allocation2 + $0x30] sm:$0xff] %vm297, 0.0
        %303 = vst.msk [vmem:[#allocation2 + $0x38] sm:$0xff] %vm297, 0.0
        %s304 = scalar_lea.vmem [#allocation2], 720
        %305 = vst.msk [vmem:[%s304] sm:$0xff] %vm297, 0.0
        %306 = vst.msk [vmem:[%s304 + $0x8] sm:$0xff] %vm297, 0.0
        %307 = vst.msk [vmem:[%s304 + $0x10] sm:$0xff] %vm297, 0.0
        %308 = vst.msk [vmem:[%s304 + $0x28] sm:$0xff] %vm297, 0.0
        %309 = vst.msk [vmem:[%s304 + $0x30] sm:$0xff] %vm297, 0.0
        %310 = vst.msk [vmem:[%s304 + $0x38] sm:$0xff] %vm297, 0.0
        %s311 = scalar_lea.vmem [#allocation2], 80
        %312 = vst.msk [vmem:[%s311] sm:$0xff] %vm297, 0.0
        %313 = vst.msk [vmem:[%s311 + $0x28] sm:$0xff] %vm297, 0.0
        %314 = vst.msk [vmem:[%s311 + $0x50] sm:$0xff] %vm297, 0.0
        %315 = vst.msk [vmem:[%s311 + $0x78] sm:$0xff] %vm297, 0.0
        %316 = vst.msk [vmem:[%s311 + $0xa0] sm:$0xff] %vm297, 0.0
        %317 = vst.msk [vmem:[%s311 + $0xc8] sm:$0xff] %vm297, 0.0
        %318 = vst.msk [vmem:[%s311 + $0xf0] sm:$0xff] %vm297, 0.0
        %319 = vst.msk [vmem:[%s311 + $0x118] sm:$0xff] %vm297, 0.0
        %320 = vst.msk [vmem:[%s311 + $0x140] sm:$0xff] %vm297, 0.0
        %321 = vst.msk [vmem:[%s311 + $0x168] sm:$0xff] %vm297, 0.0
        %322 = vst.msk [vmem:[%s311 + $0x190] sm:$0xff] %vm297, 0.0
        %323 = vst.msk [vmem:[%s311 + $0x1b8] sm:$0xff] %vm297, 0.0
        %324 = vst.msk [vmem:[%s311 + $0x1e0] sm:$0xff] %vm297, 0.0
        %325 = vst.msk [vmem:[%s311 + $0x208] sm:$0xff] %vm297, 0.0
        %326 = vst.msk [vmem:[%s311 + $0x230] sm:$0xff] %vm297, 0.0
        %327 = vst.msk [vmem:[%s311 + $0x258] sm:$0xff] %vm297, 0.0
        %328 = vst.msk [vmem:[%s311 + $0x10] sm:$0xff] %vm297, 0.0
        %329 = vst.msk [vmem:[%s311 + $0x38] sm:$0xff] %vm297, 0.0
        %330 = vst.msk [vmem:[%s311 + $0x60] sm:$0xff] %vm297, 0.0
        %331 = vst.msk [vmem:[%s311 + $0x88] sm:$0xff] %vm297, 0.0
        %332 = vst.msk [vmem:[%s311 + $0xb0] sm:$0xff] %vm297, 0.0
        %333 = vst.msk [vmem:[%s311 + $0xd8] sm:$0xff] %vm297, 0.0
        %334 = vst.msk [vmem:[%s311 + $0x100] sm:$0xff] %vm297, 0.0
        %335 = vst.msk [vmem:[%s311 + $0x128] sm:$0xff] %vm297, 0.0
        %336 = vst.msk [vmem:[%s311 + $0x150] sm:$0xff] %vm297, 0.0
        %337 = vst.msk [vmem:[%s311 + $0x178] sm:$0xff] %vm297, 0.0
        %338 = vst.msk [vmem:[%s311 + $0x1a0] sm:$0xff] %vm297, 0.0
        %339 = vst.msk [vmem:[%s311 + $0x1c8] sm:$0xff] %vm297, 0.0
        %340 = vst.msk [vmem:[%s311 + $0x1f0] sm:$0xff] %vm297, 0.0
        %341 = vst.msk [vmem:[%s311 + $0x218] sm:$0xff] %vm297, 0.0
        %342 = vst.msk [vmem:[%s311 + $0x240] sm:$0xff] %vm297, 0.0
        %343 = vst.msk [vmem:[%s311 + $0x268] sm:$0xff] %vm297, 0.0
        %v344 = vld [vmem:[%s266] sm:$0xff]
        %v345 = vld [vmem:[%s266 + $0x8] sm:$0xff]
        %v346 = vld [vmem:[%s266 + $0x10] sm:$0xff]
        %v347 = vld [vmem:[%s266 + $0x18] sm:$0xff]
        %v348 = vld [vmem:[%s266 + $0x20] sm:$0xff]
        %v349 = vld [vmem:[%s266 + $0x28] sm:$0xff]
        %v350 = vld [vmem:[%s266 + $0x30] sm:$0xff]
        %v351 = vld [vmem:[%s266 + $0x38] sm:$0xff]
        %v352 = vld [vmem:[%s266 + $0x40] sm:$0xff]
        %v353 = vld [vmem:[%s266 + $0x48] sm:$0xff]
        %v354 = vld [vmem:[%s266 + $0x50] sm:$0xff]
        %v355 = vld [vmem:[%s266 + $0x58] sm:$0xff]
        %v356 = vld [vmem:[%s266 + $0x60] sm:$0xff]
        %v357 = vld [vmem:[%s266 + $0x68] sm:$0xff]
        %v358 = vld [vmem:[%s266 + $0x70] sm:$0xff]
        %v359 = vld [vmem:[%s266 + $0x78] sm:$0xff]
        %v360 = vld [vmem:[%s266 + $0x80] sm:$0xff]
        %v361 = vld [vmem:[%s266 + $0x88] sm:$0xff]
        %v362 = vld [vmem:[%s266 + $0x90] sm:$0xff]
        %v363 = vld [vmem:[%s266 + $0x98] sm:$0xff]
        %v364 = vld [vmem:[%s266 + $0xa0] sm:$0xff]
        %v365 = vld [vmem:[%s266 + $0xa8] sm:$0xff]
        %v366 = vld [vmem:[%s266 + $0xb0] sm:$0xff]
        %v367 = vld [vmem:[%s266 + $0xb8] sm:$0xff]
        %v368 = vld [vmem:[%s266 + $0xc0] sm:$0xff]
        %v369 = vld [vmem:[%s266 + $0xc8] sm:$0xff]
        %v370 = vld [vmem:[%s266 + $0xd0] sm:$0xff]
        %v371 = vld [vmem:[%s266 + $0xd8] sm:$0xff]
        %v372 = vld [vmem:[%s266 + $0xe0] sm:$0xff]
        %v373 = vld [vmem:[%s266 + $0xe8] sm:$0xff]
        %v374 = vld [vmem:[%s266 + $0xf0] sm:$0xff]
        %v375 = vld [vmem:[%s266 + $0xf8] sm:$0xff]
        %376 = vst.msk [vmem:[%s311 + $0x2] sm:$0xff] %vm297, %v344
        %377 = vst.msk [vmem:[%s311 + $0xa] sm:$0xff] %vm297, %v345
        %378 = vst.msk [vmem:[%s311 + $0x2a] sm:$0xff] %vm297, %v346
        %379 = vst.msk [vmem:[%s311 + $0x32] sm:$0xff] %vm297, %v347
        %380 = vst.msk [vmem:[%s311 + $0x52] sm:$0xff] %vm297, %v348
        %381 = vst.msk [vmem:[%s311 + $0x5a] sm:$0xff] %vm297, %v349
        %382 = vst.msk [vmem:[%s311 + $0x7a] sm:$0xff] %vm297, %v350
        %383 = vst.msk [vmem:[%s311 + $0x82] sm:$0xff] %vm297, %v351
        %384 = vst.msk [vmem:[%s311 + $0xa2] sm:$0xff] %vm297, %v352
        %385 = vst.msk [vmem:[%s311 + $0xaa] sm:$0xff] %vm297, %v353
        %386 = vst.msk [vmem:[%s311 + $0xca] sm:$0xff] %vm297, %v354
        %387 = vst.msk [vmem:[%s311 + $0xd2] sm:$0xff] %vm297, %v355
        %388 = vst.msk [vmem:[%s311 + $0xf2] sm:$0xff] %vm297, %v356
        %389 = vst.msk [vmem:[%s311 + $0xfa] sm:$0xff] %vm297, %v357
        %390 = vst.msk [vmem:[%s311 + $0x11a] sm:$0xff] %vm297, %v358
        %391 = vst.msk [vmem:[%s311 + $0x122] sm:$0xff] %vm297, %v359
        %392 = vst.msk [vmem:[%s311 + $0x142] sm:$0xff] %vm297, %v360
        %393 = vst.msk [vmem:[%s311 + $0x14a] sm:$0xff] %vm297, %v361
        %394 = vst.msk [vmem:[%s311 + $0x16a] sm:$0xff] %vm297, %v362
        %395 = vst.msk [vmem:[%s311 + $0x172] sm:$0xff] %vm297, %v363
        %396 = vst.msk [vmem:[%s311 + $0x192] sm:$0xff] %vm297, %v364
        %397 = vst.msk [vmem:[%s311 + $0x19a] sm:$0xff] %vm297, %v365
        %398 = vst.msk [vmem:[%s311 + $0x1ba] sm:$0xff] %vm297, %v366
        %399 = vst.msk [vmem:[%s311 + $0x1c2] sm:$0xff] %vm297, %v367
        %400 = vst.msk [vmem:[%s311 + $0x1e2] sm:$0xff] %vm297, %v368
        %401 = vst.msk [vmem:[%s311 + $0x1ea] sm:$0xff] %vm297, %v369
        %402 = vst.msk [vmem:[%s311 + $0x20a] sm:$0xff] %vm297, %v370
        %403 = vst.msk [vmem:[%s311 + $0x212] sm:$0xff] %vm297, %v371
        %404 = vst.msk [vmem:[%s311 + $0x232] sm:$0xff] %vm297, %v372
        %405 = vst.msk [vmem:[%s311 + $0x23a] sm:$0xff] %vm297, %v373
        %406 = vst.msk [vmem:[%s311 + $0x25a] sm:$0xff] %vm297, %v374
        %407 = vst.msk [vmem:[%s311 + $0x262] sm:$0xff] %vm297, %v375
        %v408 = vld [vmem:[#allocation2] sm:$0xff]
        %v409 = vld [vmem:[#allocation2 + $0x8] sm:$0xff]
        %v410 = vld [vmem:[#allocation2 + $0x28] sm:$0xff]
        %v411 = vld [vmem:[#allocation2 + $0x30] sm:$0xff]
        %v412 = vld [vmem:[#allocation2 + $0x50] sm:$0xff]
        %v413 = vld [vmem:[#allocation2 + $0x58] sm:$0xff]
        %v414 = vld [vmem:[#allocation2 + $0x78] sm:$0xff]
        %v415 = vld [vmem:[#allocation2 + $0x80] sm:$0xff]
        %v416 = vld [vmem:[#allocation2 + $0xa0] sm:$0xff]
        %v417 = vld [vmem:[#allocation2 + $0xa8] sm:$0xff]
        %v418 = vld [vmem:[#allocation2 + $0xc8] sm:$0xff]
        %v419 = vld [vmem:[#allocation2 + $0xd0] sm:$0xff]
        %v420 = vld [vmem:[#allocation2 + $0xf0] sm:$0xff]
        %v421 = vld [vmem:[#allocation2 + $0xf8] sm:$0xff]
        %v422 = vld [vmem:[#allocation2 + $0x118] sm:$0xff]
        %v423 = vld [vmem:[#allocation2 + $0x120] sm:$0xff]
        %v424 = vld [vmem:[#allocation2 + $0x140] sm:$0xff]
        %v425 = vld [vmem:[#allocation2 + $0x148] sm:$0xff]
        %v426 = vld [vmem:[#allocation2 + $0x168] sm:$0xff]
        %v427 = vld [vmem:[#allocation2 + $0x170] sm:$0xff]
        %v428 = vld [vmem:[#allocation2 + $0x190] sm:$0xff]
        %v429 = vld [vmem:[#allocation2 + $0x198] sm:$0xff]
        %v430 = vld [vmem:[#allocation2 + $0x1b8] sm:$0xff]
        %v431 = vld [vmem:[#allocation2 + $0x1c0] sm:$0xff]
        %v432 = vld [vmem:[#allocation2 + $0x1e0] sm:$0xff]
        %v433 = vld [vmem:[#allocation2 + $0x1e8] sm:$0xff]
        %v434 = vld [vmem:[#allocation2 + $0x208] sm:$0xff]
        %v435 = vld [vmem:[#allocation2 + $0x210] sm:$0xff]
        %v436 = vld [vmem:[#allocation2 + $0x230] sm:$0xff]
        %v437 = vld [vmem:[#allocation2 + $0x238] sm:$0xff]
        %v438 = vld [vmem:[#allocation2 + $0x258] sm:$0xff]
        %v439 = vld [vmem:[#allocation2 + $0x260] sm:$0xff]
        %v440 = vld [vmem:[#allocation2 + $0x280] sm:$0xff]
        %v441 = vld [vmem:[#allocation2 + $0x288] sm:$0xff]
        %v442 = vld [vmem:[#allocation2 + $0x2a8] sm:$0xff]
        %v443 = vld [vmem:[#allocation2 + $0x2b0] sm:$0xff]
        %v444 = vld [vmem:[#allocation2 + $0x2d0] sm:$0xff]
        %v445 = vld [vmem:[#allocation2 + $0x2d8] sm:$0xff]
        %v446 = vld [vmem:[#allocation2 + $0x2f8] sm:$0xff]
        %v447 = vld [vmem:[#allocation2 + $0x300] sm:$0xff]
        %v448 = vld [vmem:[%s1] sm:$0x1]
        %v449 = vlaneseq
        %v450 = vshrl.u32 %v449, 7
        %v451 = vsub.s32 0, %v450
        %v452 = vrot.slane %v448, %v451
        %v453 = vmul.f32 %v408, %v452
        %v454 = vmul.f32 %v409, %v452
        %v455 = vmul.f32 %v410, %v452
        %v456 = vmul.f32 %v411, %v452
        %v457 = vmul.f32 %v412, %v452
        %v458 = vmul.f32 %v413, %v452
        %v459 = vmul.f32 %v414, %v452
        %v460 = vmul.f32 %v415, %v452
        %v461 = vmul.f32 %v416, %v452
        %v462 = vmul.f32 %v417, %v452
        %v463 = vmul.f32 %v418, %v452
        %v464 = vmul.f32 %v419, %v452
        %v465 = vmul.f32 %v420, %v452
        %v466 = vmul.f32 %v421, %v452
        %v467 = vmul.f32 %v422, %v452
        %v468 = vmul.f32 %v423, %v452
        %v469 = vmul.f32 %v424, %v452
        %v470 = vmul.f32 %v425, %v452
        %v471 = vmul.f32 %v426, %v452
        %v472 = vmul.f32 %v427, %v452
        %v473 = vmul.f32 %v428, %v452
        %v474 = vmul.f32 %v429, %v452
        %v475 = vmul.f32 %v430, %v452
        %v476 = vmul.f32 %v431, %v452
        %v477 = vmul.f32 %v432, %v452
        %v478 = vmul.f32 %v433, %v452
        %v479 = vmul.f32 %v434, %v452
        %v480 = vmul.f32 %v435, %v452
        %v481 = vmul.f32 %v436, %v452
        %v482 = vmul.f32 %v437, %v452
        %v483 = vmul.f32 %v438, %v452
        %v484 = vmul.f32 %v439, %v452
        %v485 = vadd.f32 %v453, 0.0
        %v486 = vadd.f32 %v454, 0.0
        %v487 = vadd.f32 %v455, 0.0
        %v488 = vadd.f32 %v456, 0.0
        %v489 = vadd.f32 %v457, 0.0
        %v490 = vadd.f32 %v458, 0.0
        %v491 = vadd.f32 %v459, 0.0
        %v492 = vadd.f32 %v460, 0.0
        %v493 = vadd.f32 %v461, 0.0
        %v494 = vadd.f32 %v462, 0.0
        %v495 = vadd.f32 %v463, 0.0
        %v496 = vadd.f32 %v464, 0.0
        %v497 = vadd.f32 %v465, 0.0
        %v498 = vadd.f32 %v466, 0.0
        %v499 = vadd.f32 %v467, 0.0
        %v500 = vadd.f32 %v468, 0.0
        %v501 = vadd.f32 %v469, 0.0
        %v502 = vadd.f32 %v470, 0.0
        %v503 = vadd.f32 %v471, 0.0
        %v504 = vadd.f32 %v472, 0.0
        %v505 = vadd.f32 %v473, 0.0
        %v506 = vadd.f32 %v474, 0.0
        %v507 = vadd.f32 %v475, 0.0
        %v508 = vadd.f32 %v476, 0.0
        %v509 = vadd.f32 %v477, 0.0
        %v510 = vadd.f32 %v478, 0.0
        %v511 = vadd.f32 %v479, 0.0
        %v512 = vadd.f32 %v480, 0.0
        %v513 = vadd.f32 %v481, 0.0
        %v514 = vadd.f32 %v482, 0.0
        %v515 = vadd.f32 %v483, 0.0
        %v516 = vadd.f32 %v484, 0.0
        %v517 = vld [vmem:[%s1 + $0x5] sm:$0x1]
        %v518 = vlaneseq
        %v519 = vshrl.u32 %v518, 7
        %v520 = vsub.s32 0, %v519
        %v521 = vrot.slane %v517, %v520
        %v522 = vmul.f32 %v410, %v521
        %v523 = vmul.f32 %v411, %v521
        %v524 = vmul.f32 %v412, %v521
        %v525 = vmul.f32 %v413, %v521
        %v526 = vmul.f32 %v414, %v521
        %v527 = vmul.f32 %v415, %v521
        %v528 = vmul.f32 %v416, %v521
        %v529 = vmul.f32 %v417, %v521
        %v530 = vmul.f32 %v418, %v521
        %v531 = vmul.f32 %v419, %v521
        %v532 = vmul.f32 %v420, %v521
        %v533 = vmul.f32 %v421, %v521
        %v534 = vmul.f32 %v422, %v521
        %v535 = vmul.f32 %v423, %v521
        %v536 = vmul.f32 %v424, %v521
        %v537 = vmul.f32 %v425, %v521
        %v538 = vmul.f32 %v426, %v521
        %v539 = vmul.f32 %v427, %v521
        %v540 = vmul.f32 %v428, %v521
        %v541 = vmul.f32 %v429, %v521
        %v542 = vmul.f32 %v430, %v521
        %v543 = vmul.f32 %v431, %v521
        %v544 = vmul.f32 %v432, %v521
        %v545 = vmul.f32 %v433, %v521
        %v546 = vmul.f32 %v434, %v521
        %v547 = vmul.f32 %v435, %v521
        %v548 = vmul.f32 %v436, %v521
        %v549 = vmul.f32 %v437, %v521
        %v550 = vmul.f32 %v438, %v521
        %v551 = vmul.f32 %v439, %v521
        %v552 = vmul.f32 %v440, %v521
        %v553 = vmul.f32 %v441, %v521
        %v554 = vadd.f32 %v485, %v522
        %v555 = vadd.f32 %v486, %v523
        %v556 = vadd.f32 %v487, %v524
        %v557 = vadd.f32 %v488, %v525
        %v558 = vadd.f32 %v489, %v526
        %v559 = vadd.f32 %v490, %v527
        %v560 = vadd.f32 %v491, %v528
        %v561 = vadd.f32 %v492, %v529
        %v562 = vadd.f32 %v493, %v530
        %v563 = vadd.f32 %v494, %v531
        %v564 = vadd.f32 %v495, %v532
        %v565 = vadd.f32 %v496, %v533
        %v566 = vadd.f32 %v497, %v534
        %v567 = vadd.f32 %v498, %v535
        %v568 = vadd.f32 %v499, %v536
        %v569 = vadd.f32 %v500, %v537
        %v570 = vadd.f32 %v501, %v538
        %v571 = vadd.f32 %v502, %v539
        %v572 = vadd.f32 %v503, %v540
        %v573 = vadd.f32 %v504, %v541
        %v574 = vadd.f32 %v505, %v542
        %v575 = vadd.f32 %v506, %v543
        %v576 = vadd.f32 %v507, %v544
        %v577 = vadd.f32 %v508, %v545
        %v578 = vadd.f32 %v509, %v546
        %v579 = vadd.f32 %v510, %v547
        %v580 = vadd.f32 %v511, %v548
        %v581 = vadd.f32 %v512, %v549
        %v582 = vadd.f32 %v513, %v550
        %v583 = vadd.f32 %v514, %v551
        %v584 = vadd.f32 %v515, %v552
        %v585 = vadd.f32 %v516, %v553
        %v586 = vld [vmem:[%s1 + $0xa] sm:$0x1]
        %v587 = vlaneseq
        %v588 = vshrl.u32 %v587, 7
        %v589 = vsub.s32 0, %v588
        %v590 = vrot.slane %v586, %v589
        %v591 = vmul.f32 %v412, %v590
        %v592 = vmul.f32 %v413, %v590
        %v593 = vmul.f32 %v414, %v590
        %v594 = vmul.f32 %v415, %v590
        %v595 = vmul.f32 %v416, %v590
        %v596 = vmul.f32 %v417, %v590
        %v597 = vmul.f32 %v418, %v590
        %v598 = vmul.f32 %v419, %v590
        %v599 = vmul.f32 %v420, %v590
        %v600 = vmul.f32 %v421, %v590
        %v601 = vmul.f32 %v422, %v590
        %v602 = vmul.f32 %v423, %v590
        %v603 = vmul.f32 %v424, %v590
        %v604 = vmul.f32 %v425, %v590
        %v605 = vmul.f32 %v426, %v590
        %v606 = vmul.f32 %v427, %v590
        %v607 = vmul.f32 %v428, %v590
        %v608 = vmul.f32 %v429, %v590
        %v609 = vmul.f32 %v430, %v590
        %v610 = vmul.f32 %v431, %v590
        %v611 = vmul.f32 %v432, %v590
        %v612 = vmul.f32 %v433, %v590
        %v613 = vmul.f32 %v434, %v590
        %v614 = vmul.f32 %v435, %v590
        %v615 = vmul.f32 %v436, %v590
        %v616 = vmul.f32 %v437, %v590
        %v617 = vmul.f32 %v438, %v590
        %v618 = vmul.f32 %v439, %v590
        %v619 = vmul.f32 %v440, %v590
        %v620 = vmul.f32 %v441, %v590
        %v621 = vmul.f32 %v442, %v590
        %v622 = vmul.f32 %v443, %v590
        %v623 = vadd.f32 %v554, %v591
        %v624 = vadd.f32 %v555, %v592
        %v625 = vadd.f32 %v556, %v593
        %v626 = vadd.f32 %v557, %v594
        %v627 = vadd.f32 %v558, %v595
        %v628 = vadd.f32 %v559, %v596
        %v629 = vadd.f32 %v560, %v597
        %v630 = vadd.f32 %v561, %v598
        %v631 = vadd.f32 %v562, %v599
        %v632 = vadd.f32 %v563, %v600
        %v633 = vadd.f32 %v564, %v601
        %v634 = vadd.f32 %v565, %v602
        %v635 = vadd.f32 %v566, %v603
        %v636 = vadd.f32 %v567, %v604
        %v637 = vadd.f32 %v568, %v605
        %v638 = vadd.f32 %v569, %v606
        %v639 = vadd.f32 %v570, %v607
        %v640 = vadd.f32 %v571, %v608
        %v641 = vadd.f32 %v572, %v609
        %v642 = vadd.f32 %v573, %v610
        %v643 = vadd.f32 %v574, %v611
        %v644 = vadd.f32 %v575, %v612
        %v645 = vadd.f32 %v576, %v613
        %v646 = vadd.f32 %v577, %v614
        %v647 = vadd.f32 %v578, %v615
        %v648 = vadd.f32 %v579, %v616
        %v649 = vadd.f32 %v580, %v617
        %v650 = vadd.f32 %v581, %v618
        %v651 = vadd.f32 %v582, %v619
        %v652 = vadd.f32 %v583, %v620
        %v653 = vadd.f32 %v584, %v621
        %v654 = vadd.f32 %v585, %v622
        %v655 = vld [vmem:[%s1 + $0xf] sm:$0x1]
        %v656 = vlaneseq
        %v657 = vshrl.u32 %v656, 7
        %v658 = vsub.s32 0, %v657
        %v659 = vrot.slane %v655, %v658
        %v660 = vmul.f32 %v414, %v659
        %v661 = vmul.f32 %v415, %v659
        %v662 = vmul.f32 %v416, %v659
        %v663 = vmul.f32 %v417, %v659
        %v664 = vmul.f32 %v418, %v659
        %v665 = vmul.f32 %v419, %v659
        %v666 = vmul.f32 %v420, %v659
        %v667 = vmul.f32 %v421, %v659
        %v668 = vmul.f32 %v422, %v659
        %v669 = vmul.f32 %v423, %v659
        %v670 = vmul.f32 %v424, %v659
        %v671 = vmul.f32 %v425, %v659
        %v672 = vmul.f32 %v426, %v659
        %v673 = vmul.f32 %v427, %v659
        %v674 = vmul.f32 %v428, %v659
        %v675 = vmul.f32 %v429, %v659
        %v676 = vmul.f32 %v430, %v659
        %v677 = vmul.f32 %v431, %v659
        %v678 = vmul.f32 %v432, %v659
        %v679 = vmul.f32 %v433, %v659
        %v680 = vmul.f32 %v434, %v659
        %v681 = vmul.f32 %v435, %v659
        %v682 = vmul.f32 %v436, %v659
        %v683 = vmul.f32 %v437, %v659
        %v684 = vmul.f32 %v438, %v659
        %v685 = vmul.f32 %v439, %v659
        %v686 = vmul.f32 %v440, %v659
        %v687 = vmul.f32 %v441, %v659
        %v688 = vmul.f32 %v442, %v659
        %v689 = vmul.f32 %v443, %v659
        %v690 = vmul.f32 %v444, %v659
        %v691 = vmul.f32 %v445, %v659
        %v692 = vadd.f32 %v623, %v660
        %v693 = vadd.f32 %v624, %v661
        %v694 = vadd.f32 %v625, %v662
        %v695 = vadd.f32 %v626, %v663
        %v696 = vadd.f32 %v627, %v664
        %v697 = vadd.f32 %v628, %v665
        %v698 = vadd.f32 %v629, %v666
        %v699 = vadd.f32 %v630, %v667
        %v700 = vadd.f32 %v631, %v668
        %v701 = vadd.f32 %v632, %v669
        %v702 = vadd.f32 %v633, %v670
        %v703 = vadd.f32 %v634, %v671
        %v704 = vadd.f32 %v635, %v672
        %v705 = vadd.f32 %v636, %v673
        %v706 = vadd.f32 %v637, %v674
        %v707 = vadd.f32 %v638, %v675
        %v708 = vadd.f32 %v639, %v676
        %v709 = vadd.f32 %v640, %v677
        %v710 = vadd.f32 %v641, %v678
        %v711 = vadd.f32 %v642, %v679
        %v712 = vadd.f32 %v643, %v680
        %v713 = vadd.f32 %v644, %v681
        %v714 = vadd.f32 %v645, %v682
        %v715 = vadd.f32 %v646, %v683
        %v716 = vadd.f32 %v647, %v684
        %v717 = vadd.f32 %v648, %v685
        %v718 = vadd.f32 %v649, %v686
        %v719 = vadd.f32 %v650, %v687
        %v720 = vadd.f32 %v651, %v688
        %v721 = vadd.f32 %v652, %v689
        %v722 = vadd.f32 %v653, %v690
        %v723 = vadd.f32 %v654, %v691
        %v724 = vld [vmem:[%s1 + $0x14] sm:$0x1]
        %v725 = vlaneseq
        %v726 = vshrl.u32 %v725, 7
        %v727 = vsub.s32 0, %v726
        %v728 = vrot.slane %v724, %v727
        %v729 = vmul.f32 %v416, %v728
        %v730 = vmul.f32 %v417, %v728
        %v731 = vmul.f32 %v418, %v728
        %v732 = vmul.f32 %v419, %v728
        %v733 = vmul.f32 %v420, %v728
        %v734 = vmul.f32 %v421, %v728
        %v735 = vmul.f32 %v422, %v728
        %v736 = vmul.f32 %v423, %v728
        %v737 = vmul.f32 %v424, %v728
        %v738 = vmul.f32 %v425, %v728
        %v739 = vmul.f32 %v426, %v728
        %v740 = vmul.f32 %v427, %v728
        %v741 = vmul.f32 %v428, %v728
        %v742 = vmul.f32 %v429, %v728
        %v743 = vmul.f32 %v430, %v728
        %v744 = vmul.f32 %v431, %v728
        %v745 = vmul.f32 %v432, %v728
        %v746 = vmul.f32 %v433, %v728
        %v747 = vmul.f32 %v434, %v728
        %v748 = vmul.f32 %v435, %v728
        %v749 = vmul.f32 %v436, %v728
        %v750 = vmul.f32 %v437, %v728
        %v751 = vmul.f32 %v438, %v728
        %v752 = vmul.f32 %v439, %v728
        %v753 = vmul.f32 %v440, %v728
        %v754 = vmul.f32 %v441, %v728
        %v755 = vmul.f32 %v442, %v728
        %v756 = vmul.f32 %v443, %v728
        %v757 = vmul.f32 %v444, %v728
        %v758 = vmul.f32 %v445, %v728
        %v759 = vmul.f32 %v446, %v728
        %v760 = vmul.f32 %v447, %v728
        %v761 = vadd.f32 %v692, %v729
        %v762 = vadd.f32 %v693, %v730
        %v763 = vadd.f32 %v694, %v731
        %v764 = vadd.f32 %v695, %v732
        %v765 = vadd.f32 %v696, %v733
        %v766 = vadd.f32 %v697, %v734
        %v767 = vadd.f32 %v698, %v735
        %v768 = vadd.f32 %v699, %v736
        %v769 = vadd.f32 %v700, %v737
        %v770 = vadd.f32 %v701, %v738
        %v771 = vadd.f32 %v702, %v739
        %v772 = vadd.f32 %v703, %v740
        %v773 = vadd.f32 %v704, %v741
        %v774 = vadd.f32 %v705, %v742
        %v775 = vadd.f32 %v706, %v743
        %v776 = vadd.f32 %v707, %v744
        %v777 = vadd.f32 %v708, %v745
        %v778 = vadd.f32 %v709, %v746
        %v779 = vadd.f32 %v710, %v747
        %v780 = vadd.f32 %v711, %v748
        %v781 = vadd.f32 %v712, %v749
        %v782 = vadd.f32 %v713, %v750
        %v783 = vadd.f32 %v714, %v751
        %v784 = vadd.f32 %v715, %v752
        %v785 = vadd.f32 %v716, %v753
        %v786 = vadd.f32 %v717, %v754
        %v787 = vadd.f32 %v718, %v755
        %v788 = vadd.f32 %v719, %v756
        %v789 = vadd.f32 %v720, %v757
        %v790 = vadd.f32 %v721, %v758
        %v791 = vadd.f32 %v722, %v759
        %v792 = vadd.f32 %v723, %v760
        %v793 = vld [vmem:[#allocation2 + $0x1] sm:$0xff]
        %v794 = vld [vmem:[#allocation2 + $0x9] sm:$0xff]
        %v795 = vld [vmem:[#allocation2 + $0x29] sm:$0xff]
        %v796 = vld [vmem:[#allocation2 + $0x31] sm:$0xff]
        %v797 = vld [vmem:[#allocation2 + $0x51] sm:$0xff]
        %v798 = vld [vmem:[#allocation2 + $0x59] sm:$0xff]
        %v799 = vld [vmem:[#allocation2 + $0x79] sm:$0xff]
        %v800 = vld [vmem:[#allocation2 + $0x81] sm:$0xff]
        %v801 = vld [vmem:[#allocation2 + $0xa1] sm:$0xff]
        %v802 = vld [vmem:[#allocation2 + $0xa9] sm:$0xff]
        %v803 = vld [vmem:[#allocation2 + $0xc9] sm:$0xff]
        %v804 = vld [vmem:[#allocation2 + $0xd1] sm:$0xff]
        %v805 = vld [vmem:[#allocation2 + $0xf1] sm:$0xff]
        %v806 = vld [vmem:[#allocation2 + $0xf9] sm:$0xff]
        %v807 = vld [vmem:[#allocation2 + $0x119] sm:$0xff]
        %v808 = vld [vmem:[#allocation2 + $0x121] sm:$0xff]
        %v809 = vld [vmem:[#allocation2 + $0x141] sm:$0xff]
        %v810 = vld [vmem:[#allocation2 + $0x149] sm:$0xff]
        %v811 = vld [vmem:[#allocation2 + $0x169] sm:$0xff]
        %v812 = vld [vmem:[#allocation2 + $0x171] sm:$0xff]
        %v813 = vld [vmem:[#allocation2 + $0x191] sm:$0xff]
        %v814 = vld [vmem:[#allocation2 + $0x199] sm:$0xff]
        %v815 = vld [vmem:[#allocation2 + $0x1b9] sm:$0xff]
        %v816 = vld [vmem:[#allocation2 + $0x1c1] sm:$0xff]
        %v817 = vld [vmem:[#allocation2 + $0x1e1] sm:$0xff]
        %v818 = vld [vmem:[#allocation2 + $0x1e9] sm:$0xff]
        %v819 = vld [vmem:[#allocation2 + $0x209] sm:$0xff]
        %v820 = vld [vmem:[#allocation2 + $0x211] sm:$0xff]
        %v821 = vld [vmem:[#allocation2 + $0x231] sm:$0xff]
        %v822 = vld [vmem:[#allocation2 + $0x239] sm:$0xff]
        %v823 = vld [vmem:[#allocation2 + $0x259] sm:$0xff]
        %v824 = vld [vmem:[#allocation2 + $0x261] sm:$0xff]
        %v825 = vld [vmem:[#allocation2 + $0x281] sm:$0xff]
        %v826 = vld [vmem:[#allocation2 + $0x289] sm:$0xff]
        %v827 = vld [vmem:[#allocation2 + $0x2a9] sm:$0xff]
        %v828 = vld [vmem:[#allocation2 + $0x2b1] sm:$0xff]
        %v829 = vld [vmem:[#allocation2 + $0x2d1] sm:$0xff]
        %v830 = vld [vmem:[#allocation2 + $0x2d9] sm:$0xff]
        %v831 = vld [vmem:[#allocation2 + $0x2f9] sm:$0xff]
        %v832 = vld [vmem:[#allocation2 + $0x301] sm:$0xff]
        %v833 = vld [vmem:[%s1 + $0x1] sm:$0x1]
        %v834 = vlaneseq
        %v835 = vshrl.u32 %v834, 7
        %v836 = vsub.s32 0, %v835
        %v837 = vrot.slane %v833, %v836
        %v838 = vmul.f32 %v793, %v837
        %v839 = vmul.f32 %v794, %v837
        %v840 = vmul.f32 %v795, %v837
        %v841 = vmul.f32 %v796, %v837
        %v842 = vmul.f32 %v797, %v837
        %v843 = vmul.f32 %v798, %v837
        %v844 = vmul.f32 %v799, %v837
        %v845 = vmul.f32 %v800, %v837
        %v846 = vmul.f32 %v801, %v837
        %v847 = vmul.f32 %v802, %v837
        %v848 = vmul.f32 %v803, %v837
        %v849 = vmul.f32 %v804, %v837
        %v850 = vmul.f32 %v805, %v837
        %v851 = vmul.f32 %v806, %v837
        %v852 = vmul.f32 %v807, %v837
        %v853 = vmul.f32 %v808, %v837
        %v854 = vmul.f32 %v809, %v837
        %v855 = vmul.f32 %v810, %v837
        %v856 = vmul.f32 %v811, %v837
        %v857 = vmul.f32 %v812, %v837
        %v858 = vmul.f32 %v813, %v837
        %v859 = vmul.f32 %v814, %v837
        %v860 = vmul.f32 %v815, %v837
        %v861 = vmul.f32 %v816, %v837
        %v862 = vmul.f32 %v817, %v837
        %v863 = vmul.f32 %v818, %v837
        %v864 = vmul.f32 %v819, %v837
        %v865 = vmul.f32 %v820, %v837
        %v866 = vmul.f32 %v821, %v837
        %v867 = vmul.f32 %v822, %v837
        %v868 = vmul.f32 %v823, %v837
        %v869 = vmul.f32 %v824, %v837
        %v870 = vadd.f32 %v761, %v838
        %v871 = vadd.f32 %v762, %v839
        %v872 = vadd.f32 %v763, %v840
        %v873 = vadd.f32 %v764, %v841
        %v874 = vadd.f32 %v765, %v842
        %v875 = vadd.f32 %v766, %v843
        %v876 = vadd.f32 %v767, %v844
        %v877 = vadd.f32 %v768, %v845
        %v878 = vadd.f32 %v769, %v846
        %v879 = vadd.f32 %v770, %v847
        %v880 = vadd.f32 %v771, %v848
        %v881 = vadd.f32 %v772, %v849
        %v882 = vadd.f32 %v773, %v850
        %v883 = vadd.f32 %v774, %v851
        %v884 = vadd.f32 %v775, %v852
        %v885 = vadd.f32 %v776, %v853
        %v886 = vadd.f32 %v777, %v854
        %v887 = vadd.f32 %v778, %v855
        %v888 = vadd.f32 %v779, %v856
        %v889 = vadd.f32 %v780, %v857
        %v890 = vadd.f32 %v781, %v858
        %v891 = vadd.f32 %v782, %v859
        %v892 = vadd.f32 %v783, %v860
        %v893 = vadd.f32 %v784, %v861
        %v894 = vadd.f32 %v785, %v862
        %v895 = vadd.f32 %v786, %v863
        %v896 = vadd.f32 %v787, %v864
        %v897 = vadd.f32 %v788, %v865
        %v898 = vadd.f32 %v789, %v866
        %v899 = vadd.f32 %v790, %v867
        %v900 = vadd.f32 %v791, %v868
        %v901 = vadd.f32 %v792, %v869
        %v902 = vld [vmem:[%s1 + $0x6] sm:$0x1]
        %v903 = vlaneseq
        %v904 = vshrl.u32 %v903, 7
        %v905 = vsub.s32 0, %v904
        %v906 = vrot.slane %v902, %v905
        %v907 = vmul.f32 %v795, %v906
        %v908 = vmul.f32 %v796, %v906
        %v909 = vmul.f32 %v797, %v906
        %v910 = vmul.f32 %v798, %v906
        %v911 = vmul.f32 %v799, %v906
        %v912 = vmul.f32 %v800, %v906
        %v913 = vmul.f32 %v801, %v906
        %v914 = vmul.f32 %v802, %v906
        %v915 = vmul.f32 %v803, %v906
        %v916 = vmul.f32 %v804, %v906
        %v917 = vmul.f32 %v805, %v906
        %v918 = vmul.f32 %v806, %v906
        %v919 = vmul.f32 %v807, %v906
        %v920 = vmul.f32 %v808, %v906
        %v921 = vmul.f32 %v809, %v906
        %v922 = vmul.f32 %v810, %v906
        %v923 = vmul.f32 %v811, %v906
        %v924 = vmul.f32 %v812, %v906
        %v925 = vmul.f32 %v813, %v906
        %v926 = vmul.f32 %v814, %v906
        %v927 = vmul.f32 %v815, %v906
        %v928 = vmul.f32 %v816, %v906
        %v929 = vmul.f32 %v817, %v906
        %v930 = vmul.f32 %v818, %v906
        %v931 = vmul.f32 %v819, %v906
        %v932 = vmul.f32 %v820, %v906
        %v933 = vmul.f32 %v821, %v906
        %v934 = vmul.f32 %v822, %v906
        %v935 = vmul.f32 %v823, %v906
        %v936 = vmul.f32 %v824, %v906
        %v937 = vmul.f32 %v825, %v906
        %v938 = vmul.f32 %v826, %v906
        %v939 = vadd.f32 %v870, %v907
        %v940 = vadd.f32 %v871, %v908
        %v941 = vadd.f32 %v872, %v909
        %v942 = vadd.f32 %v873, %v910
        %v943 = vadd.f32 %v874, %v911
        %v944 = vadd.f32 %v875, %v912
        %v945 = vadd.f32 %v876, %v913
        %v946 = vadd.f32 %v877, %v914
        %v947 = vadd.f32 %v878, %v915
        %v948 = vadd.f32 %v879, %v916
        %v949 = vadd.f32 %v880, %v917
        %v950 = vadd.f32 %v881, %v918
        %v951 = vadd.f32 %v882, %v919
        %v952 = vadd.f32 %v883, %v920
        %v953 = vadd.f32 %v884, %v921
        %v954 = vadd.f32 %v885, %v922
        %v955 = vadd.f32 %v886, %v923
        %v956 = vadd.f32 %v887, %v924
        %v957 = vadd.f32 %v888, %v925
        %v958 = vadd.f32 %v889, %v926
        %v959 = vadd.f32 %v890, %v927
        %v960 = vadd.f32 %v891, %v928
        %v961 = vadd.f32 %v892, %v929
        %v962 = vadd.f32 %v893, %v930
        %v963 = vadd.f32 %v894, %v931
        %v964 = vadd.f32 %v895, %v932
        %v965 = vadd.f32 %v896, %v933
        %v966 = vadd.f32 %v897, %v934
        %v967 = vadd.f32 %v898, %v935
        %v968 = vadd.f32 %v899, %v936
        %v969 = vadd.f32 %v900, %v937
        %v970 = vadd.f32 %v901, %v938
        %v971 = vld [vmem:[%s1 + $0xb] sm:$0x1]
        %v972 = vlaneseq
        %v973 = vshrl.u32 %v972, 7
        %v974 = vsub.s32 0, %v973
        %v975 = vrot.slane %v971, %v974
        %v976 = vmul.f32 %v797, %v975
        %v977 = vmul.f32 %v798, %v975
        %v978 = vmul.f32 %v799, %v975
        %v979 = vmul.f32 %v800, %v975
        %v980 = vmul.f32 %v801, %v975
        %v981 = vmul.f32 %v802, %v975
        %v982 = vmul.f32 %v803, %v975
        %v983 = vmul.f32 %v804, %v975
        %v984 = vmul.f32 %v805, %v975
        %v985 = vmul.f32 %v806, %v975
        %v986 = vmul.f32 %v807, %v975
        %v987 = vmul.f32 %v808, %v975
        %v988 = vmul.f32 %v809, %v975
        %v989 = vmul.f32 %v810, %v975
        %v990 = vmul.f32 %v811, %v975
        %v991 = vmul.f32 %v812, %v975
        %v992 = vmul.f32 %v813, %v975
        %v993 = vmul.f32 %v814, %v975
        %v994 = vmul.f32 %v815, %v975
        %v995 = vmul.f32 %v816, %v975
        %v996 = vmul.f32 %v817, %v975
        %v997 = vmul.f32 %v818, %v975
        %v998 = vmul.f32 %v819, %v975
        %v999 = vmul.f32 %v820, %v975
        %v1000 = vmul.f32 %v821, %v975
        %v1001 = vmul.f32 %v822, %v975
        %v1002 = vmul.f32 %v823, %v975
        %v1003 = vmul.f32 %v824, %v975
        %v1004 = vmul.f32 %v825, %v975
        %v1005 = vmul.f32 %v826, %v975
        %v1006 = vmul.f32 %v827, %v975
        %v1007 = vmul.f32 %v828, %v975
        %v1008 = vadd.f32 %v939, %v976
        %v1009 = vadd.f32 %v940, %v977
        %v1010 = vadd.f32 %v941, %v978
        %v1011 = vadd.f32 %v942, %v979
        %v1012 = vadd.f32 %v943, %v980
        %v1013 = vadd.f32 %v944, %v981
        %v1014 = vadd.f32 %v945, %v982
        %v1015 = vadd.f32 %v946, %v983
        %v1016 = vadd.f32 %v947, %v984
        %v1017 = vadd.f32 %v948, %v985
        %v1018 = vadd.f32 %v949, %v986
        %v1019 = vadd.f32 %v950, %v987
        %v1020 = vadd.f32 %v951, %v988
        %v1021 = vadd.f32 %v952, %v989
        %v1022 = vadd.f32 %v953, %v990
        %v1023 = vadd.f32 %v954, %v991
        %v1024 = vadd.f32 %v955, %v992
        %v1025 = vadd.f32 %v956, %v993
        %v1026 = vadd.f32 %v957, %v994
        %v1027 = vadd.f32 %v958, %v995
        %v1028 = vadd.f32 %v959, %v996
        %v1029 = vadd.f32 %v960, %v997
        %v1030 = vadd.f32 %v961, %v998
        %v1031 = vadd.f32 %v962, %v999
        %v1032 = vadd.f32 %v963, %v1000
        %v1033 = vadd.f32 %v964, %v1001
        %v1034 = vadd.f32 %v965, %v1002
        %v1035 = vadd.f32 %v966, %v1003
        %v1036 = vadd.f32 %v967, %v1004
        %v1037 = vadd.f32 %v968, %v1005
        %v1038 = vadd.f32 %v969, %v1006
        %v1039 = vadd.f32 %v970, %v1007
        %v1040 = vld [vmem:[%s1 + $0x10] sm:$0x1]
        %v1041 = vlaneseq
        %v1042 = vshrl.u32 %v1041, 7
        %v1043 = vsub.s32 0, %v1042
        %v1044 = vrot.slane %v1040, %v1043
        %v1045 = vmul.f32 %v799, %v1044
        %v1046 = vmul.f32 %v800, %v1044
        %v1047 = vmul.f32 %v801, %v1044
        %v1048 = vmul.f32 %v802, %v1044
        %v1049 = vmul.f32 %v803, %v1044
        %v1050 = vmul.f32 %v804, %v1044
        %v1051 = vmul.f32 %v805, %v1044
        %v1052 = vmul.f32 %v806, %v1044
        %v1053 = vmul.f32 %v807, %v1044
        %v1054 = vmul.f32 %v808, %v1044
        %v1055 = vmul.f32 %v809, %v1044
        %v1056 = vmul.f32 %v810, %v1044
        %v1057 = vmul.f32 %v811, %v1044
        %v1058 = vmul.f32 %v812, %v1044
        %v1059 = vmul.f32 %v813, %v1044
        %v1060 = vmul.f32 %v814, %v1044
        %v1061 = vmul.f32 %v815, %v1044
        %v1062 = vmul.f32 %v816, %v1044
        %v1063 = vmul.f32 %v817, %v1044
        %v1064 = vmul.f32 %v818, %v1044
        %v1065 = vmul.f32 %v819, %v1044
        %v1066 = vmul.f32 %v820, %v1044
        %v1067 = vmul.f32 %v821, %v1044
        %v1068 = vmul.f32 %v822, %v1044
        %v1069 = vmul.f32 %v823, %v1044
        %v1070 = vmul.f32 %v824, %v1044
        %v1071 = vmul.f32 %v825, %v1044
        %v1072 = vmul.f32 %v826, %v1044
        %v1073 = vmul.f32 %v827, %v1044
        %v1074 = vmul.f32 %v828, %v1044
        %v1075 = vmul.f32 %v829, %v1044
        %v1076 = vmul.f32 %v830, %v1044
        %v1077 = vadd.f32 %v1008, %v1045
        %v1078 = vadd.f32 %v1009, %v1046
        %v1079 = vadd.f32 %v1010, %v1047
        %v1080 = vadd.f32 %v1011, %v1048
        %v1081 = vadd.f32 %v1012, %v1049
        %v1082 = vadd.f32 %v1013, %v1050
        %v1083 = vadd.f32 %v1014, %v1051
        %v1084 = vadd.f32 %v1015, %v1052
        %v1085 = vadd.f32 %v1016, %v1053
        %v1086 = vadd.f32 %v1017, %v1054
        %v1087 = vadd.f32 %v1018, %v1055
        %v1088 = vadd.f32 %v1019, %v1056
        %v1089 = vadd.f32 %v1020, %v1057
        %v1090 = vadd.f32 %v1021, %v1058
        %v1091 = vadd.f32 %v1022, %v1059
        %v1092 = vadd.f32 %v1023, %v1060
        %v1093 = vadd.f32 %v1024, %v1061
        %v1094 = vadd.f32 %v1025, %v1062
        %v1095 = vadd.f32 %v1026, %v1063
        %v1096 = vadd.f32 %v1027, %v1064
        %v1097 = vadd.f32 %v1028, %v1065
        %v1098 = vadd.f32 %v1029, %v1066
        %v1099 = vadd.f32 %v1030, %v1067
        %v1100 = vadd.f32 %v1031, %v1068
        %v1101 = vadd.f32 %v1032, %v1069
        %v1102 = vadd.f32 %v1033, %v1070
        %v1103 = vadd.f32 %v1034, %v1071
        %v1104 = vadd.f32 %v1035, %v1072
        %v1105 = vadd.f32 %v1036, %v1073
        %v1106 = vadd.f32 %v1037, %v1074
        %v1107 = vadd.f32 %v1038, %v1075
        %v1108 = vadd.f32 %v1039, %v1076
        %v1109 = vld [vmem:[%s1 + $0x15] sm:$0x1]
        %v1110 = vlaneseq
        %v1111 = vshrl.u32 %v1110, 7
        %v1112 = vsub.s32 0, %v1111
        %v1113 = vrot.slane %v1109, %v1112
        %v1114 = vmul.f32 %v801, %v1113
        %v1115 = vmul.f32 %v802, %v1113
        %v1116 = vmul.f32 %v803, %v1113
        %v1117 = vmul.f32 %v804, %v1113
        %v1118 = vmul.f32 %v805, %v1113
        %v1119 = vmul.f32 %v806, %v1113
        %v1120 = vmul.f32 %v807, %v1113
        %v1121 = vmul.f32 %v808, %v1113
        %v1122 = vmul.f32 %v809, %v1113
        %v1123 = vmul.f32 %v810, %v1113
        %v1124 = vmul.f32 %v811, %v1113
        %v1125 = vmul.f32 %v812, %v1113
        %v1126 = vmul.f32 %v813, %v1113
        %v1127 = vmul.f32 %v814, %v1113
        %v1128 = vmul.f32 %v815, %v1113
        %v1129 = vmul.f32 %v816, %v1113
        %v1130 = vmul.f32 %v817, %v1113
        %v1131 = vmul.f32 %v818, %v1113
        %v1132 = vmul.f32 %v819, %v1113
        %v1133 = vmul.f32 %v820, %v1113
        %v1134 = vmul.f32 %v821, %v1113
        %v1135 = vmul.f32 %v822, %v1113
        %v1136 = vmul.f32 %v823, %v1113
        %v1137 = vmul.f32 %v824, %v1113
        %v1138 = vmul.f32 %v825, %v1113
        %v1139 = vmul.f32 %v826, %v1113
        %v1140 = vmul.f32 %v827, %v1113
        %v1141 = vmul.f32 %v828, %v1113
        %v1142 = vmul.f32 %v829, %v1113
        %v1143 = vmul.f32 %v830, %v1113
        %v1144 = vmul.f32 %v831, %v1113
        %v1145 = vmul.f32 %v832, %v1113
        %v1146 = vadd.f32 %v1077, %v1114
        %v1147 = vadd.f32 %v1078, %v1115
        %v1148 = vadd.f32 %v1079, %v1116
        %v1149 = vadd.f32 %v1080, %v1117
        %v1150 = vadd.f32 %v1081, %v1118
        %v1151 = vadd.f32 %v1082, %v1119
        %v1152 = vadd.f32 %v1083, %v1120
        %v1153 = vadd.f32 %v1084, %v1121
        %v1154 = vadd.f32 %v1085, %v1122
        %v1155 = vadd.f32 %v1086, %v1123
        %v1156 = vadd.f32 %v1087, %v1124
        %v1157 = vadd.f32 %v1088, %v1125
        %v1158 = vadd.f32 %v1089, %v1126
        %v1159 = vadd.f32 %v1090, %v1127
        %v1160 = vadd.f32 %v1091, %v1128
        %v1161 = vadd.f32 %v1092, %v1129
        %v1162 = vadd.f32 %v1093, %v1130
        %v1163 = vadd.f32 %v1094, %v1131
        %v1164 = vadd.f32 %v1095, %v1132
        %v1165 = vadd.f32 %v1096, %v1133
        %v1166 = vadd.f32 %v1097, %v1134
        %v1167 = vadd.f32 %v1098, %v1135
        %v1168 = vadd.f32 %v1099, %v1136
        %v1169 = vadd.f32 %v1100, %v1137
        %v1170 = vadd.f32 %v1101, %v1138
        %v1171 = vadd.f32 %v1102, %v1139
        %v1172 = vadd.f32 %v1103, %v1140
        %v1173 = vadd.f32 %v1104, %v1141
        %v1174 = vadd.f32 %v1105, %v1142
        %v1175 = vadd.f32 %v1106, %v1143
        %v1176 = vadd.f32 %v1107, %v1144
        %v1177 = vadd.f32 %v1108, %v1145
        %v1178 = vld [vmem:[#allocation2 + $0x2] sm:$0xff]
        %v1179 = vld [vmem:[#allocation2 + $0xa] sm:$0xff]
        %v1180 = vld [vmem:[#allocation2 + $0x2a] sm:$0xff]
        %v1181 = vld [vmem:[#allocation2 + $0x32] sm:$0xff]
        %v1182 = vld [vmem:[#allocation2 + $0x52] sm:$0xff]
        %v1183 = vld [vmem:[#allocation2 + $0x5a] sm:$0xff]
        %v1184 = vld [vmem:[#allocation2 + $0x7a] sm:$0xff]
        %v1185 = vld [vmem:[#allocation2 + $0x82] sm:$0xff]
        %v1186 = vld [vmem:[#allocation2 + $0xa2] sm:$0xff]
        %v1187 = vld [vmem:[#allocation2 + $0xaa] sm:$0xff]
        %v1188 = vld [vmem:[#allocation2 + $0xca] sm:$0xff]
        %v1189 = vld [vmem:[#allocation2 + $0xd2] sm:$0xff]
        %v1190 = vld [vmem:[#allocation2 + $0xf2] sm:$0xff]
        %v1191 = vld [vmem:[#allocation2 + $0xfa] sm:$0xff]
        %v1192 = vld [vmem:[#allocation2 + $0x11a] sm:$0xff]
        %v1193 = vld [vmem:[#allocation2 + $0x122] sm:$0xff]
        %v1194 = vld [vmem:[#allocation2 + $0x142] sm:$0xff]
        %v1195 = vld [vmem:[#allocation2 + $0x14a] sm:$0xff]
        %v1196 = vld [vmem:[#allocation2 + $0x16a] sm:$0xff]
        %v1197 = vld [vmem:[#allocation2 + $0x172] sm:$0xff]
        %v1198 = vld [vmem:[#allocation2 + $0x192] sm:$0xff]
        %v1199 = vld [vmem:[#allocation2 + $0x19a] sm:$0xff]
        %v1200 = vld [vmem:[#allocation2 + $0x1ba] sm:$0xff]
        %v1201 = vld [vmem:[#allocation2 + $0x1c2] sm:$0xff]
        %v1202 = vld [vmem:[#allocation2 + $0x1e2] sm:$0xff]
        %v1203 = vld [vmem:[#allocation2 + $0x1ea] sm:$0xff]
        %v1204 = vld [vmem:[#allocation2 + $0x20a] sm:$0xff]
        %v1205 = vld [vmem:[#allocation2 + $0x212] sm:$0xff]
        %v1206 = vld [vmem:[#allocation2 + $0x232] sm:$0xff]
        %v1207 = vld [vmem:[#allocation2 + $0x23a] sm:$0xff]
        %v1208 = vld [vmem:[#allocation2 + $0x25a] sm:$0xff]
        %v1209 = vld [vmem:[#allocation2 + $0x262] sm:$0xff]
        %v1210 = vld [vmem:[#allocation2 + $0x282] sm:$0xff]
        %v1211 = vld [vmem:[#allocation2 + $0x28a] sm:$0xff]
        %v1212 = vld [vmem:[#allocation2 + $0x2aa] sm:$0xff]
        %v1213 = vld [vmem:[#allocation2 + $0x2b2] sm:$0xff]
        %v1214 = vld [vmem:[#allocation2 + $0x2d2] sm:$0xff]
        %v1215 = vld [vmem:[#allocation2 + $0x2da] sm:$0xff]
        %v1216 = vld [vmem:[#allocation2 + $0x2fa] sm:$0xff]
        %v1217 = vld [vmem:[#allocation2 + $0x302] sm:$0xff]
        %v1218 = vld [vmem:[%s1 + $0x2] sm:$0x1]
        %v1219 = vlaneseq
        %v1220 = vshrl.u32 %v1219, 7
        %v1221 = vsub.s32 0, %v1220
        %v1222 = vrot.slane %v1218, %v1221
        %v1223 = vmul.f32 %v1178, %v1222
        %v1224 = vmul.f32 %v1179, %v1222
        %v1225 = vmul.f32 %v1180, %v1222
        %v1226 = vmul.f32 %v1181, %v1222
        %v1227 = vmul.f32 %v1182, %v1222
        %v1228 = vmul.f32 %v1183, %v1222
        %v1229 = vmul.f32 %v1184, %v1222
        %v1230 = vmul.f32 %v1185, %v1222
        %v1231 = vmul.f32 %v1186, %v1222
        %v1232 = vmul.f32 %v1187, %v1222
        %v1233 = vmul.f32 %v1188, %v1222
        %v1234 = vmul.f32 %v1189, %v1222
        %v1235 = vmul.f32 %v1190, %v1222
        %v1236 = vmul.f32 %v1191, %v1222
        %v1237 = vmul.f32 %v1192, %v1222
        %v1238 = vmul.f32 %v1193, %v1222
        %v1239 = vmul.f32 %v1194, %v1222
        %v1240 = vmul.f32 %v1195, %v1222
        %v1241 = vmul.f32 %v1196, %v1222
        %v1242 = vmul.f32 %v1197, %v1222
        %v1243 = vmul.f32 %v1198, %v1222
        %v1244 = vmul.f32 %v1199, %v1222
        %v1245 = vmul.f32 %v1200, %v1222
        %v1246 = vmul.f32 %v1201, %v1222
        %v1247 = vmul.f32 %v1202, %v1222
        %v1248 = vmul.f32 %v1203, %v1222
        %v1249 = vmul.f32 %v1204, %v1222
        %v1250 = vmul.f32 %v1205, %v1222
        %v1251 = vmul.f32 %v1206, %v1222
        %v1252 = vmul.f32 %v1207, %v1222
        %v1253 = vmul.f32 %v1208, %v1222
        %v1254 = vmul.f32 %v1209, %v1222
        %v1255 = vadd.f32 %v1146, %v1223
        %v1256 = vadd.f32 %v1147, %v1224
        %v1257 = vadd.f32 %v1148, %v1225
        %v1258 = vadd.f32 %v1149, %v1226
        %v1259 = vadd.f32 %v1150, %v1227
        %v1260 = vadd.f32 %v1151, %v1228
        %v1261 = vadd.f32 %v1152, %v1229
        %v1262 = vadd.f32 %v1153, %v1230
        %v1263 = vadd.f32 %v1154, %v1231
        %v1264 = vadd.f32 %v1155, %v1232
        %v1265 = vadd.f32 %v1156, %v1233
        %v1266 = vadd.f32 %v1157, %v1234
        %v1267 = vadd.f32 %v1158, %v1235
        %v1268 = vadd.f32 %v1159, %v1236
        %v1269 = vadd.f32 %v1160, %v1237
        %v1270 = vadd.f32 %v1161, %v1238
        %v1271 = vadd.f32 %v1162, %v1239
        %v1272 = vadd.f32 %v1163, %v1240
        %v1273 = vadd.f32 %v1164, %v1241
        %v1274 = vadd.f32 %v1165, %v1242
        %v1275 = vadd.f32 %v1166, %v1243
        %v1276 = vadd.f32 %v1167, %v1244
        %v1277 = vadd.f32 %v1168, %v1245
        %v1278 = vadd.f32 %v1169, %v1246
        %v1279 = vadd.f32 %v1170, %v1247
        %v1280 = vadd.f32 %v1171, %v1248
        %v1281 = vadd.f32 %v1172, %v1249
        %v1282 = vadd.f32 %v1173, %v1250
        %v1283 = vadd.f32 %v1174, %v1251
        %v1284 = vadd.f32 %v1175, %v1252
        %v1285 = vadd.f32 %v1176, %v1253
        %v1286 = vadd.f32 %v1177, %v1254
        %v1287 = vld [vmem:[%s1 + $0x7] sm:$0x1]
        %v1288 = vlaneseq
        %v1289 = vshrl.u32 %v1288, 7
        %v1290 = vsub.s32 0, %v1289
        %v1291 = vrot.slane %v1287, %v1290
        %v1292 = vmul.f32 %v1180, %v1291
        %v1293 = vmul.f32 %v1181, %v1291
        %v1294 = vmul.f32 %v1182, %v1291
        %v1295 = vmul.f32 %v1183, %v1291
        %v1296 = vmul.f32 %v1184, %v1291
        %v1297 = vmul.f32 %v1185, %v1291
        %v1298 = vmul.f32 %v1186, %v1291
        %v1299 = vmul.f32 %v1187, %v1291
        %v1300 = vmul.f32 %v1188, %v1291
        %v1301 = vmul.f32 %v1189, %v1291
        %v1302 = vmul.f32 %v1190, %v1291
        %v1303 = vmul.f32 %v1191, %v1291
        %v1304 = vmul.f32 %v1192, %v1291
        %v1305 = vmul.f32 %v1193, %v1291
        %v1306 = vmul.f32 %v1194, %v1291
        %v1307 = vmul.f32 %v1195, %v1291
        %v1308 = vmul.f32 %v1196, %v1291
        %v1309 = vmul.f32 %v1197, %v1291
        %v1310 = vmul.f32 %v1198, %v1291
        %v1311 = vmul.f32 %v1199, %v1291
        %v1312 = vmul.f32 %v1200, %v1291
        %v1313 = vmul.f32 %v1201, %v1291
        %v1314 = vmul.f32 %v1202, %v1291
        %v1315 = vmul.f32 %v1203, %v1291
        %v1316 = vmul.f32 %v1204, %v1291
        %v1317 = vmul.f32 %v1205, %v1291
        %v1318 = vmul.f32 %v1206, %v1291
        %v1319 = vmul.f32 %v1207, %v1291
        %v1320 = vmul.f32 %v1208, %v1291
        %v1321 = vmul.f32 %v1209, %v1291
        %v1322 = vmul.f32 %v1210, %v1291
        %v1323 = vmul.f32 %v1211, %v1291
        %v1324 = vadd.f32 %v1255, %v1292
        %v1325 = vadd.f32 %v1256, %v1293
        %v1326 = vadd.f32 %v1257, %v1294
        %v1327 = vadd.f32 %v1258, %v1295
        %v1328 = vadd.f32 %v1259, %v1296
        %v1329 = vadd.f32 %v1260, %v1297
        %v1330 = vadd.f32 %v1261, %v1298
        %v1331 = vadd.f32 %v1262, %v1299
        %v1332 = vadd.f32 %v1263, %v1300
        %v1333 = vadd.f32 %v1264, %v1301
        %v1334 = vadd.f32 %v1265, %v1302
        %v1335 = vadd.f32 %v1266, %v1303
        %v1336 = vadd.f32 %v1267, %v1304
        %v1337 = vadd.f32 %v1268, %v1305
        %v1338 = vadd.f32 %v1269, %v1306
        %v1339 = vadd.f32 %v1270, %v1307
        %v1340 = vadd.f32 %v1271, %v1308
        %v1341 = vadd.f32 %v1272, %v1309
        %v1342 = vadd.f32 %v1273, %v1310
        %v1343 = vadd.f32 %v1274, %v1311
        %v1344 = vadd.f32 %v1275, %v1312
        %v1345 = vadd.f32 %v1276, %v1313
        %v1346 = vadd.f32 %v1277, %v1314
        %v1347 = vadd.f32 %v1278, %v1315
        %v1348 = vadd.f32 %v1279, %v1316
        %v1349 = vadd.f32 %v1280, %v1317
        %v1350 = vadd.f32 %v1281, %v1318
        %v1351 = vadd.f32 %v1282, %v1319
        %v1352 = vadd.f32 %v1283, %v1320
        %v1353 = vadd.f32 %v1284, %v1321
        %v1354 = vadd.f32 %v1285, %v1322
        %v1355 = vadd.f32 %v1286, %v1323
        %v1356 = vld [vmem:[%s1 + $0xc] sm:$0x1]
        %v1357 = vlaneseq
        %v1358 = vshrl.u32 %v1357, 7
        %v1359 = vsub.s32 0, %v1358
        %v1360 = vrot.slane %v1356, %v1359
        %v1361 = vmul.f32 %v1182, %v1360
        %v1362 = vmul.f32 %v1183, %v1360
        %v1363 = vmul.f32 %v1184, %v1360
        %v1364 = vmul.f32 %v1185, %v1360
        %v1365 = vmul.f32 %v1186, %v1360
        %v1366 = vmul.f32 %v1187, %v1360
        %v1367 = vmul.f32 %v1188, %v1360
        %v1368 = vmul.f32 %v1189, %v1360
        %v1369 = vmul.f32 %v1190, %v1360
        %v1370 = vmul.f32 %v1191, %v1360
        %v1371 = vmul.f32 %v1192, %v1360
        %v1372 = vmul.f32 %v1193, %v1360
        %v1373 = vmul.f32 %v1194, %v1360
        %v1374 = vmul.f32 %v1195, %v1360
        %v1375 = vmul.f32 %v1196, %v1360
        %v1376 = vmul.f32 %v1197, %v1360
        %v1377 = vmul.f32 %v1198, %v1360
        %v1378 = vmul.f32 %v1199, %v1360
        %v1379 = vmul.f32 %v1200, %v1360
        %v1380 = vmul.f32 %v1201, %v1360
        %v1381 = vmul.f32 %v1202, %v1360
        %v1382 = vmul.f32 %v1203, %v1360
        %v1383 = vmul.f32 %v1204, %v1360
        %v1384 = vmul.f32 %v1205, %v1360
        %v1385 = vmul.f32 %v1206, %v1360
        %v1386 = vmul.f32 %v1207, %v1360
        %v1387 = vmul.f32 %v1208, %v1360
        %v1388 = vmul.f32 %v1209, %v1360
        %v1389 = vmul.f32 %v1210, %v1360
        %v1390 = vmul.f32 %v1211, %v1360
        %v1391 = vmul.f32 %v1212, %v1360
        %v1392 = vmul.f32 %v1213, %v1360
        %v1393 = vadd.f32 %v1324, %v1361
        %v1394 = vadd.f32 %v1325, %v1362
        %v1395 = vadd.f32 %v1326, %v1363
        %v1396 = vadd.f32 %v1327, %v1364
        %v1397 = vadd.f32 %v1328, %v1365
        %v1398 = vadd.f32 %v1329, %v1366
        %v1399 = vadd.f32 %v1330, %v1367
        %v1400 = vadd.f32 %v1331, %v1368
        %v1401 = vadd.f32 %v1332, %v1369
        %v1402 = vadd.f32 %v1333, %v1370
        %v1403 = vadd.f32 %v1334, %v1371
        %v1404 = vadd.f32 %v1335, %v1372
        %v1405 = vadd.f32 %v1336, %v1373
        %v1406 = vadd.f32 %v1337, %v1374
        %v1407 = vadd.f32 %v1338, %v1375
        %v1408 = vadd.f32 %v1339, %v1376
        %v1409 = vadd.f32 %v1340, %v1377
        %v1410 = vadd.f32 %v1341, %v1378
        %v1411 = vadd.f32 %v1342, %v1379
        %v1412 = vadd.f32 %v1343, %v1380
        %v1413 = vadd.f32 %v1344, %v1381
        %v1414 = vadd.f32 %v1345, %v1382
        %v1415 = vadd.f32 %v1346, %v1383
        %v1416 = vadd.f32 %v1347, %v1384
        %v1417 = vadd.f32 %v1348, %v1385
        %v1418 = vadd.f32 %v1349, %v1386
        %v1419 = vadd.f32 %v1350, %v1387
        %v1420 = vadd.f32 %v1351, %v1388
        %v1421 = vadd.f32 %v1352, %v1389
        %v1422 = vadd.f32 %v1353, %v1390
        %v1423 = vadd.f32 %v1354, %v1391
        %v1424 = vadd.f32 %v1355, %v1392
        %v1425 = vld [vmem:[%s1 + $0x11] sm:$0x1]
        %v1426 = vlaneseq
        %v1427 = vshrl.u32 %v1426, 7
        %v1428 = vsub.s32 0, %v1427
        %v1429 = vrot.slane %v1425, %v1428
        %v1430 = vmul.f32 %v1184, %v1429
        %v1431 = vmul.f32 %v1185, %v1429
        %v1432 = vmul.f32 %v1186, %v1429
        %v1433 = vmul.f32 %v1187, %v1429
        %v1434 = vmul.f32 %v1188, %v1429
        %v1435 = vmul.f32 %v1189, %v1429
        %v1436 = vmul.f32 %v1190, %v1429
        %v1437 = vmul.f32 %v1191, %v1429
        %v1438 = vmul.f32 %v1192, %v1429
        %v1439 = vmul.f32 %v1193, %v1429
        %v1440 = vmul.f32 %v1194, %v1429
        %v1441 = vmul.f32 %v1195, %v1429
        %v1442 = vmul.f32 %v1196, %v1429
        %v1443 = vmul.f32 %v1197, %v1429
        %v1444 = vmul.f32 %v1198, %v1429
        %v1445 = vmul.f32 %v1199, %v1429
        %v1446 = vmul.f32 %v1200, %v1429
        %v1447 = vmul.f32 %v1201, %v1429
        %v1448 = vmul.f32 %v1202, %v1429
        %v1449 = vmul.f32 %v1203, %v1429
        %v1450 = vmul.f32 %v1204, %v1429
        %v1451 = vmul.f32 %v1205, %v1429
        %v1452 = vmul.f32 %v1206, %v1429
        %v1453 = vmul.f32 %v1207, %v1429
        %v1454 = vmul.f32 %v1208, %v1429
        %v1455 = vmul.f32 %v1209, %v1429
        %v1456 = vmul.f32 %v1210, %v1429
        %v1457 = vmul.f32 %v1211, %v1429
        %v1458 = vmul.f32 %v1212, %v1429
        %v1459 = vmul.f32 %v1213, %v1429
        %v1460 = vmul.f32 %v1214, %v1429
        %v1461 = vmul.f32 %v1215, %v1429
        %v1462 = vadd.f32 %v1393, %v1430
        %v1463 = vadd.f32 %v1394, %v1431
        %v1464 = vadd.f32 %v1395, %v1432
        %v1465 = vadd.f32 %v1396, %v1433
        %v1466 = vadd.f32 %v1397, %v1434
        %v1467 = vadd.f32 %v1398, %v1435
        %v1468 = vadd.f32 %v1399, %v1436
        %v1469 = vadd.f32 %v1400, %v1437
        %v1470 = vadd.f32 %v1401, %v1438
        %v1471 = vadd.f32 %v1402, %v1439
        %v1472 = vadd.f32 %v1403, %v1440
        %v1473 = vadd.f32 %v1404, %v1441
        %v1474 = vadd.f32 %v1405, %v1442
        %v1475 = vadd.f32 %v1406, %v1443
        %v1476 = vadd.f32 %v1407, %v1444
        %v1477 = vadd.f32 %v1408, %v1445
        %v1478 = vadd.f32 %v1409, %v1446
        %v1479 = vadd.f32 %v1410, %v1447
        %v1480 = vadd.f32 %v1411, %v1448
        %v1481 = vadd.f32 %v1412, %v1449
        %v1482 = vadd.f32 %v1413, %v1450
        %v1483 = vadd.f32 %v1414, %v1451
        %v1484 = vadd.f32 %v1415, %v1452
        %v1485 = vadd.f32 %v1416, %v1453
        %v1486 = vadd.f32 %v1417, %v1454
        %v1487 = vadd.f32 %v1418, %v1455
        %v1488 = vadd.f32 %v1419, %v1456
        %v1489 = vadd.f32 %v1420, %v1457
        %v1490 = vadd.f32 %v1421, %v1458
        %v1491 = vadd.f32 %v1422, %v1459
        %v1492 = vadd.f32 %v1423, %v1460
        %v1493 = vadd.f32 %v1424, %v1461
        %v1494 = vld [vmem:[%s1 + $0x16] sm:$0x1]
        %v1495 = vlaneseq
        %v1496 = vshrl.u32 %v1495, 7
        %v1497 = vsub.s32 0, %v1496
        %v1498 = vrot.slane %v1494, %v1497
        %v1499 = vmul.f32 %v1186, %v1498
        %v1500 = vmul.f32 %v1187, %v1498
        %v1501 = vmul.f32 %v1188, %v1498
        %v1502 = vmul.f32 %v1189, %v1498
        %v1503 = vmul.f32 %v1190, %v1498
        %v1504 = vmul.f32 %v1191, %v1498
        %v1505 = vmul.f32 %v1192, %v1498
        %v1506 = vmul.f32 %v1193, %v1498
        %v1507 = vmul.f32 %v1194, %v1498
        %v1508 = vmul.f32 %v1195, %v1498
        %v1509 = vmul.f32 %v1196, %v1498
        %v1510 = vmul.f32 %v1197, %v1498
        %v1511 = vmul.f32 %v1198, %v1498
        %v1512 = vmul.f32 %v1199, %v1498
        %v1513 = vmul.f32 %v1200, %v1498
        %v1514 = vmul.f32 %v1201, %v1498
        %v1515 = vmul.f32 %v1202, %v1498
        %v1516 = vmul.f32 %v1203, %v1498
        %v1517 = vmul.f32 %v1204, %v1498
        %v1518 = vmul.f32 %v1205, %v1498
        %v1519 = vmul.f32 %v1206, %v1498
        %v1520 = vmul.f32 %v1207, %v1498
        %v1521 = vmul.f32 %v1208, %v1498
        %v1522 = vmul.f32 %v1209, %v1498
        %v1523 = vmul.f32 %v1210, %v1498
        %v1524 = vmul.f32 %v1211, %v1498
        %v1525 = vmul.f32 %v1212, %v1498
        %v1526 = vmul.f32 %v1213, %v1498
        %v1527 = vmul.f32 %v1214, %v1498
        %v1528 = vmul.f32 %v1215, %v1498
        %v1529 = vmul.f32 %v1216, %v1498
        %v1530 = vmul.f32 %v1217, %v1498
        %v1531 = vadd.f32 %v1462, %v1499
        %v1532 = vadd.f32 %v1463, %v1500
        %v1533 = vadd.f32 %v1464, %v1501
        %v1534 = vadd.f32 %v1465, %v1502
        %v1535 = vadd.f32 %v1466, %v1503
        %v1536 = vadd.f32 %v1467, %v1504
        %v1537 = vadd.f32 %v1468, %v1505
        %v1538 = vadd.f32 %v1469, %v1506
        %v1539 = vadd.f32 %v1470, %v1507
        %v1540 = vadd.f32 %v1471, %v1508
        %v1541 = vadd.f32 %v1472, %v1509
        %v1542 = vadd.f32 %v1473, %v1510
        %v1543 = vadd.f32 %v1474, %v1511
        %v1544 = vadd.f32 %v1475, %v1512
        %v1545 = vadd.f32 %v1476, %v1513
        %v1546 = vadd.f32 %v1477, %v1514
        %v1547 = vadd.f32 %v1478, %v1515
        %v1548 = vadd.f32 %v1479, %v1516
        %v1549 = vadd.f32 %v1480, %v1517
        %v1550 = vadd.f32 %v1481, %v1518
        %v1551 = vadd.f32 %v1482, %v1519
        %v1552 = vadd.f32 %v1483, %v1520
        %v1553 = vadd.f32 %v1484, %v1521
        %v1554 = vadd.f32 %v1485, %v1522
        %v1555 = vadd.f32 %v1486, %v1523
        %v1556 = vadd.f32 %v1487, %v1524
        %v1557 = vadd.f32 %v1488, %v1525
        %v1558 = vadd.f32 %v1489, %v1526
        %v1559 = vadd.f32 %v1490, %v1527
        %v1560 = vadd.f32 %v1491, %v1528
        %v1561 = vadd.f32 %v1492, %v1529
        %v1562 = vadd.f32 %v1493, %v1530
        %v1563 = vld [vmem:[#allocation2 + $0x3] sm:$0xff]
        %v1564 = vld [vmem:[#allocation2 + $0xb] sm:$0xff]
        %v1565 = vld [vmem:[#allocation2 + $0x2b] sm:$0xff]
        %v1566 = vld [vmem:[#allocation2 + $0x33] sm:$0xff]
        %v1567 = vld [vmem:[#allocation2 + $0x53] sm:$0xff]
        %v1568 = vld [vmem:[#allocation2 + $0x5b] sm:$0xff]
        %v1569 = vld [vmem:[#allocation2 + $0x7b] sm:$0xff]
        %v1570 = vld [vmem:[#allocation2 + $0x83] sm:$0xff]
        %v1571 = vld [vmem:[#allocation2 + $0xa3] sm:$0xff]
        %v1572 = vld [vmem:[#allocation2 + $0xab] sm:$0xff]
        %v1573 = vld [vmem:[#allocation2 + $0xcb] sm:$0xff]
        %v1574 = vld [vmem:[#allocation2 + $0xd3] sm:$0xff]
        %v1575 = vld [vmem:[#allocation2 + $0xf3] sm:$0xff]
        %v1576 = vld [vmem:[#allocation2 + $0xfb] sm:$0xff]
        %v1577 = vld [vmem:[#allocation2 + $0x11b] sm:$0xff]
        %v1578 = vld [vmem:[#allocation2 + $0x123] sm:$0xff]
        %v1579 = vld [vmem:[#allocation2 + $0x143] sm:$0xff]
        %v1580 = vld [vmem:[#allocation2 + $0x14b] sm:$0xff]
        %v1581 = vld [vmem:[#allocation2 + $0x16b] sm:$0xff]
        %v1582 = vld [vmem:[#allocation2 + $0x173] sm:$0xff]
        %v1583 = vld [vmem:[#allocation2 + $0x193] sm:$0xff]
        %v1584 = vld [vmem:[#allocation2 + $0x19b] sm:$0xff]
        %v1585 = vld [vmem:[#allocation2 + $0x1bb] sm:$0xff]
        %v1586 = vld [vmem:[#allocation2 + $0x1c3] sm:$0xff]
        %v1587 = vld [vmem:[#allocation2 + $0x1e3] sm:$0xff]
        %v1588 = vld [vmem:[#allocation2 + $0x1eb] sm:$0xff]
        %v1589 = vld [vmem:[#allocation2 + $0x20b] sm:$0xff]
        %v1590 = vld [vmem:[#allocation2 + $0x213] sm:$0xff]
        %v1591 = vld [vmem:[#allocation2 + $0x233] sm:$0xff]
        %v1592 = vld [vmem:[#allocation2 + $0x23b] sm:$0xff]
        %v1593 = vld [vmem:[#allocation2 + $0x25b] sm:$0xff]
        %v1594 = vld [vmem:[#allocation2 + $0x263] sm:$0xff]
        %v1595 = vld [vmem:[#allocation2 + $0x283] sm:$0xff]
        %v1596 = vld [vmem:[#allocation2 + $0x28b] sm:$0xff]
        %v1597 = vld [vmem:[#allocation2 + $0x2ab] sm:$0xff]
        %v1598 = vld [vmem:[#allocation2 + $0x2b3] sm:$0xff]
        %v1599 = vld [vmem:[#allocation2 + $0x2d3] sm:$0xff]
        %v1600 = vld [vmem:[#allocation2 + $0x2db] sm:$0xff]
        %v1601 = vld [vmem:[#allocation2 + $0x2fb] sm:$0xff]
        %v1602 = vld [vmem:[#allocation2 + $0x303] sm:$0xff]
        %v1603 = vld [vmem:[%s1 + $0x3] sm:$0x1]
        %v1604 = vlaneseq
        %v1605 = vshrl.u32 %v1604, 7
        %v1606 = vsub.s32 0, %v1605
        %v1607 = vrot.slane %v1603, %v1606
        %v1608 = vmul.f32 %v1563, %v1607
        %v1609 = vmul.f32 %v1564, %v1607
        %v1610 = vmul.f32 %v1565, %v1607
        %v1611 = vmul.f32 %v1566, %v1607
        %v1612 = vmul.f32 %v1567, %v1607
        %v1613 = vmul.f32 %v1568, %v1607
        %v1614 = vmul.f32 %v1569, %v1607
        %v1615 = vmul.f32 %v1570, %v1607
        %v1616 = vmul.f32 %v1571, %v1607
        %v1617 = vmul.f32 %v1572, %v1607
        %v1618 = vmul.f32 %v1573, %v1607
        %v1619 = vmul.f32 %v1574, %v1607
        %v1620 = vmul.f32 %v1575, %v1607
        %v1621 = vmul.f32 %v1576, %v1607
        %v1622 = vmul.f32 %v1577, %v1607
        %v1623 = vmul.f32 %v1578, %v1607
        %v1624 = vmul.f32 %v1579, %v1607
        %v1625 = vmul.f32 %v1580, %v1607
        %v1626 = vmul.f32 %v1581, %v1607
        %v1627 = vmul.f32 %v1582, %v1607
        %v1628 = vmul.f32 %v1583, %v1607
        %v1629 = vmul.f32 %v1584, %v1607
        %v1630 = vmul.f32 %v1585, %v1607
        %v1631 = vmul.f32 %v1586, %v1607
        %v1632 = vmul.f32 %v1587, %v1607
        %v1633 = vmul.f32 %v1588, %v1607
        %v1634 = vmul.f32 %v1589, %v1607
        %v1635 = vmul.f32 %v1590, %v1607
        %v1636 = vmul.f32 %v1591, %v1607
        %v1637 = vmul.f32 %v1592, %v1607
        %v1638 = vmul.f32 %v1593, %v1607
        %v1639 = vmul.f32 %v1594, %v1607
        %v1640 = vadd.f32 %v1531, %v1608
        %v1641 = vadd.f32 %v1532, %v1609
        %v1642 = vadd.f32 %v1533, %v1610
        %v1643 = vadd.f32 %v1534, %v1611
        %v1644 = vadd.f32 %v1535, %v1612
        %v1645 = vadd.f32 %v1536, %v1613
        %v1646 = vadd.f32 %v1537, %v1614
        %v1647 = vadd.f32 %v1538, %v1615
        %v1648 = vadd.f32 %v1539, %v1616
        %v1649 = vadd.f32 %v1540, %v1617
        %v1650 = vadd.f32 %v1541, %v1618
        %v1651 = vadd.f32 %v1542, %v1619
        %v1652 = vadd.f32 %v1543, %v1620
        %v1653 = vadd.f32 %v1544, %v1621
        %v1654 = vadd.f32 %v1545, %v1622
        %v1655 = vadd.f32 %v1546, %v1623
        %v1656 = vadd.f32 %v1547, %v1624
        %v1657 = vadd.f32 %v1548, %v1625
        %v1658 = vadd.f32 %v1549, %v1626
        %v1659 = vadd.f32 %v1550, %v1627
        %v1660 = vadd.f32 %v1551, %v1628
        %v1661 = vadd.f32 %v1552, %v1629
        %v1662 = vadd.f32 %v1553, %v1630
        %v1663 = vadd.f32 %v1554, %v1631
        %v1664 = vadd.f32 %v1555, %v1632
        %v1665 = vadd.f32 %v1556, %v1633
        %v1666 = vadd.f32 %v1557, %v1634
        %v1667 = vadd.f32 %v1558, %v1635
        %v1668 = vadd.f32 %v1559, %v1636
        %v1669 = vadd.f32 %v1560, %v1637
        %v1670 = vadd.f32 %v1561, %v1638
        %v1671 = vadd.f32 %v1562, %v1639
        %v1672 = vld [vmem:[%s1 + $0x8] sm:$0x1]
        %v1673 = vlaneseq
        %v1674 = vshrl.u32 %v1673, 7
        %v1675 = vsub.s32 0, %v1674
        %v1676 = vrot.slane %v1672, %v1675
        %v1677 = vmul.f32 %v1565, %v1676
        %v1678 = vmul.f32 %v1566, %v1676
        %v1679 = vmul.f32 %v1567, %v1676
        %v1680 = vmul.f32 %v1568, %v1676
        %v1681 = vmul.f32 %v1569, %v1676
        %v1682 = vmul.f32 %v1570, %v1676
        %v1683 = vmul.f32 %v1571, %v1676
        %v1684 = vmul.f32 %v1572, %v1676
        %v1685 = vmul.f32 %v1573, %v1676
        %v1686 = vmul.f32 %v1574, %v1676
        %v1687 = vmul.f32 %v1575, %v1676
        %v1688 = vmul.f32 %v1576, %v1676
        %v1689 = vmul.f32 %v1577, %v1676
        %v1690 = vmul.f32 %v1578, %v1676
        %v1691 = vmul.f32 %v1579, %v1676
        %v1692 = vmul.f32 %v1580, %v1676
        %v1693 = vmul.f32 %v1581, %v1676
        %v1694 = vmul.f32 %v1582, %v1676
        %v1695 = vmul.f32 %v1583, %v1676
        %v1696 = vmul.f32 %v1584, %v1676
        %v1697 = vmul.f32 %v1585, %v1676
        %v1698 = vmul.f32 %v1586, %v1676
        %v1699 = vmul.f32 %v1587, %v1676
        %v1700 = vmul.f32 %v1588, %v1676
        %v1701 = vmul.f32 %v1589, %v1676
        %v1702 = vmul.f32 %v1590, %v1676
        %v1703 = vmul.f32 %v1591, %v1676
        %v1704 = vmul.f32 %v1592, %v1676
        %v1705 = vmul.f32 %v1593, %v1676
        %v1706 = vmul.f32 %v1594, %v1676
        %v1707 = vmul.f32 %v1595, %v1676
        %v1708 = vmul.f32 %v1596, %v1676
        %v1709 = vadd.f32 %v1640, %v1677
        %v1710 = vadd.f32 %v1641, %v1678
        %v1711 = vadd.f32 %v1642, %v1679
        %v1712 = vadd.f32 %v1643, %v1680
        %v1713 = vadd.f32 %v1644, %v1681
        %v1714 = vadd.f32 %v1645, %v1682
        %v1715 = vadd.f32 %v1646, %v1683
        %v1716 = vadd.f32 %v1647, %v1684
        %v1717 = vadd.f32 %v1648, %v1685
        %v1718 = vadd.f32 %v1649, %v1686
        %v1719 = vadd.f32 %v1650, %v1687
        %v1720 = vadd.f32 %v1651, %v1688
        %v1721 = vadd.f32 %v1652, %v1689
        %v1722 = vadd.f32 %v1653, %v1690
        %v1723 = vadd.f32 %v1654, %v1691
        %v1724 = vadd.f32 %v1655, %v1692
        %v1725 = vadd.f32 %v1656, %v1693
        %v1726 = vadd.f32 %v1657, %v1694
        %v1727 = vadd.f32 %v1658, %v1695
        %v1728 = vadd.f32 %v1659, %v1696
        %v1729 = vadd.f32 %v1660, %v1697
        %v1730 = vadd.f32 %v1661, %v1698
        %v1731 = vadd.f32 %v1662, %v1699
        %v1732 = vadd.f32 %v1663, %v1700
        %v1733 = vadd.f32 %v1664, %v1701
        %v1734 = vadd.f32 %v1665, %v1702
        %v1735 = vadd.f32 %v1666, %v1703
        %v1736 = vadd.f32 %v1667, %v1704
        %v1737 = vadd.f32 %v1668, %v1705
        %v1738 = vadd.f32 %v1669, %v1706
        %v1739 = vadd.f32 %v1670, %v1707
        %v1740 = vadd.f32 %v1671, %v1708
        %v1741 = vld [vmem:[%s1 + $0xd] sm:$0x1]
        %v1742 = vlaneseq
        %v1743 = vshrl.u32 %v1742, 7
        %v1744 = vsub.s32 0, %v1743
        %v1745 = vrot.slane %v1741, %v1744
        %v1746 = vmul.f32 %v1567, %v1745
        %v1747 = vmul.f32 %v1568, %v1745
        %v1748 = vmul.f32 %v1569, %v1745
        %v1749 = vmul.f32 %v1570, %v1745
        %v1750 = vmul.f32 %v1571, %v1745
        %v1751 = vmul.f32 %v1572, %v1745
        %v1752 = vmul.f32 %v1573, %v1745
        %v1753 = vmul.f32 %v1574, %v1745
        %v1754 = vmul.f32 %v1575, %v1745
        %v1755 = vmul.f32 %v1576, %v1745
        %v1756 = vmul.f32 %v1577, %v1745
        %v1757 = vmul.f32 %v1578, %v1745
        %v1758 = vmul.f32 %v1579, %v1745
        %v1759 = vmul.f32 %v1580, %v1745
        %v1760 = vmul.f32 %v1581, %v1745
        %v1761 = vmul.f32 %v1582, %v1745
        %v1762 = vmul.f32 %v1583, %v1745
        %v1763 = vmul.f32 %v1584, %v1745
        %v1764 = vmul.f32 %v1585, %v1745
        %v1765 = vmul.f32 %v1586, %v1745
        %v1766 = vmul.f32 %v1587, %v1745
        %v1767 = vmul.f32 %v1588, %v1745
        %v1768 = vmul.f32 %v1589, %v1745
        %v1769 = vmul.f32 %v1590, %v1745
        %v1770 = vmul.f32 %v1591, %v1745
        %v1771 = vmul.f32 %v1592, %v1745
        %v1772 = vmul.f32 %v1593, %v1745
        %v1773 = vmul.f32 %v1594, %v1745
        %v1774 = vmul.f32 %v1595, %v1745
        %v1775 = vmul.f32 %v1596, %v1745
        %v1776 = vmul.f32 %v1597, %v1745
        %v1777 = vmul.f32 %v1598, %v1745
        %v1778 = vadd.f32 %v1709, %v1746
        %v1779 = vadd.f32 %v1710, %v1747
        %v1780 = vadd.f32 %v1711, %v1748
        %v1781 = vadd.f32 %v1712, %v1749
        %v1782 = vadd.f32 %v1713, %v1750
        %v1783 = vadd.f32 %v1714, %v1751
        %v1784 = vadd.f32 %v1715, %v1752
        %v1785 = vadd.f32 %v1716, %v1753
        %v1786 = vadd.f32 %v1717, %v1754
        %v1787 = vadd.f32 %v1718, %v1755
        %v1788 = vadd.f32 %v1719, %v1756
        %v1789 = vadd.f32 %v1720, %v1757
        %v1790 = vadd.f32 %v1721, %v1758
        %v1791 = vadd.f32 %v1722, %v1759
        %v1792 = vadd.f32 %v1723, %v1760
        %v1793 = vadd.f32 %v1724, %v1761
        %v1794 = vadd.f32 %v1725, %v1762
        %v1795 = vadd.f32 %v1726, %v1763
        %v1796 = vadd.f32 %v1727, %v1764
        %v1797 = vadd.f32 %v1728, %v1765
        %v1798 = vadd.f32 %v1729, %v1766
        %v1799 = vadd.f32 %v1730, %v1767
        %v1800 = vadd.f32 %v1731, %v1768
        %v1801 = vadd.f32 %v1732, %v1769
        %v1802 = vadd.f32 %v1733, %v1770
        %v1803 = vadd.f32 %v1734, %v1771
        %v1804 = vadd.f32 %v1735, %v1772
        %v1805 = vadd.f32 %v1736, %v1773
        %v1806 = vadd.f32 %v1737, %v1774
        %v1807 = vadd.f32 %v1738, %v1775
        %v1808 = vadd.f32 %v1739, %v1776
        %v1809 = vadd.f32 %v1740, %v1777
        %v1810 = vld [vmem:[%s1 + $0x12] sm:$0x1]
        %v1811 = vlaneseq
        %v1812 = vshrl.u32 %v1811, 7
        %v1813 = vsub.s32 0, %v1812
        %v1814 = vrot.slane %v1810, %v1813
        %v1815 = vmul.f32 %v1569, %v1814
        %v1816 = vmul.f32 %v1570, %v1814
        %v1817 = vmul.f32 %v1571, %v1814
        %v1818 = vmul.f32 %v1572, %v1814
        %v1819 = vmul.f32 %v1573, %v1814
        %v1820 = vmul.f32 %v1574, %v1814
        %v1821 = vmul.f32 %v1575, %v1814
        %v1822 = vmul.f32 %v1576, %v1814
        %v1823 = vmul.f32 %v1577, %v1814
        %v1824 = vmul.f32 %v1578, %v1814
        %v1825 = vmul.f32 %v1579, %v1814
        %v1826 = vmul.f32 %v1580, %v1814
        %v1827 = vmul.f32 %v1581, %v1814
        %v1828 = vmul.f32 %v1582, %v1814
        %v1829 = vmul.f32 %v1583, %v1814
        %v1830 = vmul.f32 %v1584, %v1814
        %v1831 = vmul.f32 %v1585, %v1814
        %v1832 = vmul.f32 %v1586, %v1814
        %v1833 = vmul.f32 %v1587, %v1814
        %v1834 = vmul.f32 %v1588, %v1814
        %v1835 = vmul.f32 %v1589, %v1814
        %v1836 = vmul.f32 %v1590, %v1814
        %v1837 = vmul.f32 %v1591, %v1814
        %v1838 = vmul.f32 %v1592, %v1814
        %v1839 = vmul.f32 %v1593, %v1814
        %v1840 = vmul.f32 %v1594, %v1814
        %v1841 = vmul.f32 %v1595, %v1814
        %v1842 = vmul.f32 %v1596, %v1814
        %v1843 = vmul.f32 %v1597, %v1814
        %v1844 = vmul.f32 %v1598, %v1814
        %v1845 = vmul.f32 %v1599, %v1814
        %v1846 = vmul.f32 %v1600, %v1814
        %v1847 = vadd.f32 %v1778, %v1815
        %v1848 = vadd.f32 %v1779, %v1816
        %v1849 = vadd.f32 %v1780, %v1817
        %v1850 = vadd.f32 %v1781, %v1818
        %v1851 = vadd.f32 %v1782, %v1819
        %v1852 = vadd.f32 %v1783, %v1820
        %v1853 = vadd.f32 %v1784, %v1821
        %v1854 = vadd.f32 %v1785, %v1822
        %v1855 = vadd.f32 %v1786, %v1823
        %v1856 = vadd.f32 %v1787, %v1824
        %v1857 = vadd.f32 %v1788, %v1825
        %v1858 = vadd.f32 %v1789, %v1826
        %v1859 = vadd.f32 %v1790, %v1827
        %v1860 = vadd.f32 %v1791, %v1828
        %v1861 = vadd.f32 %v1792, %v1829
        %v1862 = vadd.f32 %v1793, %v1830
        %v1863 = vadd.f32 %v1794, %v1831
        %v1864 = vadd.f32 %v1795, %v1832
        %v1865 = vadd.f32 %v1796, %v1833
        %v1866 = vadd.f32 %v1797, %v1834
        %v1867 = vadd.f32 %v1798, %v1835
        %v1868 = vadd.f32 %v1799, %v1836
        %v1869 = vadd.f32 %v1800, %v1837
        %v1870 = vadd.f32 %v1801, %v1838
        %v1871 = vadd.f32 %v1802, %v1839
        %v1872 = vadd.f32 %v1803, %v1840
        %v1873 = vadd.f32 %v1804, %v1841
        %v1874 = vadd.f32 %v1805, %v1842
        %v1875 = vadd.f32 %v1806, %v1843
        %v1876 = vadd.f32 %v1807, %v1844
        %v1877 = vadd.f32 %v1808, %v1845
        %v1878 = vadd.f32 %v1809, %v1846
        %v1879 = vld [vmem:[%s1 + $0x17] sm:$0x1]
        %v1880 = vlaneseq
        %v1881 = vshrl.u32 %v1880, 7
        %v1882 = vsub.s32 0, %v1881
        %v1883 = vrot.slane %v1879, %v1882
        %v1884 = vmul.f32 %v1571, %v1883
        %v1885 = vmul.f32 %v1572, %v1883
        %v1886 = vmul.f32 %v1573, %v1883
        %v1887 = vmul.f32 %v1574, %v1883
        %v1888 = vmul.f32 %v1575, %v1883
        %v1889 = vmul.f32 %v1576, %v1883
        %v1890 = vmul.f32 %v1577, %v1883
        %v1891 = vmul.f32 %v1578, %v1883
        %v1892 = vmul.f32 %v1579, %v1883
        %v1893 = vmul.f32 %v1580, %v1883
        %v1894 = vmul.f32 %v1581, %v1883
        %v1895 = vmul.f32 %v1582, %v1883
        %v1896 = vmul.f32 %v1583, %v1883
        %v1897 = vmul.f32 %v1584, %v1883
        %v1898 = vmul.f32 %v1585, %v1883
        %v1899 = vmul.f32 %v1586, %v1883
        %v1900 = vmul.f32 %v1587, %v1883
        %v1901 = vmul.f32 %v1588, %v1883
        %v1902 = vmul.f32 %v1589, %v1883
        %v1903 = vmul.f32 %v1590, %v1883
        %v1904 = vmul.f32 %v1591, %v1883
        %v1905 = vmul.f32 %v1592, %v1883
        %v1906 = vmul.f32 %v1593, %v1883
        %v1907 = vmul.f32 %v1594, %v1883
        %v1908 = vmul.f32 %v1595, %v1883
        %v1909 = vmul.f32 %v1596, %v1883
        %v1910 = vmul.f32 %v1597, %v1883
        %v1911 = vmul.f32 %v1598, %v1883
        %v1912 = vmul.f32 %v1599, %v1883
        %v1913 = vmul.f32 %v1600, %v1883
        %v1914 = vmul.f32 %v1601, %v1883
        %v1915 = vmul.f32 %v1602, %v1883
        %v1916 = vadd.f32 %v1847, %v1884
        %v1917 = vadd.f32 %v1848, %v1885
        %v1918 = vadd.f32 %v1849, %v1886
        %v1919 = vadd.f32 %v1850, %v1887
        %v1920 = vadd.f32 %v1851, %v1888
        %v1921 = vadd.f32 %v1852, %v1889
        %v1922 = vadd.f32 %v1853, %v1890
        %v1923 = vadd.f32 %v1854, %v1891
        %v1924 = vadd.f32 %v1855, %v1892
        %v1925 = vadd.f32 %v1856, %v1893
        %v1926 = vadd.f32 %v1857, %v1894
        %v1927 = vadd.f32 %v1858, %v1895
        %v1928 = vadd.f32 %v1859, %v1896
        %v1929 = vadd.f32 %v1860, %v1897
        %v1930 = vadd.f32 %v1861, %v1898
        %v1931 = vadd.f32 %v1862, %v1899
        %v1932 = vadd.f32 %v1863, %v1900
        %v1933 = vadd.f32 %v1864, %v1901
        %v1934 = vadd.f32 %v1865, %v1902
        %v1935 = vadd.f32 %v1866, %v1903
        %v1936 = vadd.f32 %v1867, %v1904
        %v1937 = vadd.f32 %v1868, %v1905
        %v1938 = vadd.f32 %v1869, %v1906
        %v1939 = vadd.f32 %v1870, %v1907
        %v1940 = vadd.f32 %v1871, %v1908
        %v1941 = vadd.f32 %v1872, %v1909
        %v1942 = vadd.f32 %v1873, %v1910
        %v1943 = vadd.f32 %v1874, %v1911
        %v1944 = vadd.f32 %v1875, %v1912
        %v1945 = vadd.f32 %v1876, %v1913
        %v1946 = vadd.f32 %v1877, %v1914
        %v1947 = vadd.f32 %v1878, %v1915
        %v1948 = vld [vmem:[#allocation2 + $0x4] sm:$0xff]
        %v1949 = vld [vmem:[#allocation2 + $0xc] sm:$0xff]
        %v1950 = vld [vmem:[#allocation2 + $0x2c] sm:$0xff]
        %v1951 = vld [vmem:[#allocation2 + $0x34] sm:$0xff]
        %v1952 = vld [vmem:[#allocation2 + $0x54] sm:$0xff]
        %v1953 = vld [vmem:[#allocation2 + $0x5c] sm:$0xff]
        %v1954 = vld [vmem:[#allocation2 + $0x7c] sm:$0xff]
        %v1955 = vld [vmem:[#allocation2 + $0x84] sm:$0xff]
        %v1956 = vld [vmem:[#allocation2 + $0xa4] sm:$0xff]
        %v1957 = vld [vmem:[#allocation2 + $0xac] sm:$0xff]
        %v1958 = vld [vmem:[#allocation2 + $0xcc] sm:$0xff]
        %v1959 = vld [vmem:[#allocation2 + $0xd4] sm:$0xff]
        %v1960 = vld [vmem:[#allocation2 + $0xf4] sm:$0xff]
        %v1961 = vld [vmem:[#allocation2 + $0xfc] sm:$0xff]
        %v1962 = vld [vmem:[#allocation2 + $0x11c] sm:$0xff]
        %v1963 = vld [vmem:[#allocation2 + $0x124] sm:$0xff]
        %v1964 = vld [vmem:[#allocation2 + $0x144] sm:$0xff]
        %v1965 = vld [vmem:[#allocation2 + $0x14c] sm:$0xff]
        %v1966 = vld [vmem:[#allocation2 + $0x16c] sm:$0xff]
        %v1967 = vld [vmem:[#allocation2 + $0x174] sm:$0xff]
        %v1968 = vld [vmem:[#allocation2 + $0x194] sm:$0xff]
        %v1969 = vld [vmem:[#allocation2 + $0x19c] sm:$0xff]
        %v1970 = vld [vmem:[#allocation2 + $0x1bc] sm:$0xff]
        %v1971 = vld [vmem:[#allocation2 + $0x1c4] sm:$0xff]
        %v1972 = vld [vmem:[#allocation2 + $0x1e4] sm:$0xff]
        %v1973 = vld [vmem:[#allocation2 + $0x1ec] sm:$0xff]
        %v1974 = vld [vmem:[#allocation2 + $0x20c] sm:$0xff]
        %v1975 = vld [vmem:[#allocation2 + $0x214] sm:$0xff]
        %v1976 = vld [vmem:[#allocation2 + $0x234] sm:$0xff]
        %v1977 = vld [vmem:[#allocation2 + $0x23c] sm:$0xff]
        %v1978 = vld [vmem:[#allocation2 + $0x25c] sm:$0xff]
        %v1979 = vld [vmem:[#allocation2 + $0x264] sm:$0xff]
        %v1980 = vld [vmem:[#allocation2 + $0x284] sm:$0xff]
        %v1981 = vld [vmem:[#allocation2 + $0x28c] sm:$0xff]
        %v1982 = vld [vmem:[#allocation2 + $0x2ac] sm:$0xff]
        %v1983 = vld [vmem:[#allocation2 + $0x2b4] sm:$0xff]
        %v1984 = vld [vmem:[#allocation2 + $0x2d4] sm:$0xff]
        %v1985 = vld [vmem:[#allocation2 + $0x2dc] sm:$0xff]
        %v1986 = vld [vmem:[#allocation2 + $0x2fc] sm:$0xff]
        %v1987 = vld [vmem:[#allocation2 + $0x304] sm:$0xff]
        %v1988 = vld [vmem:[%s1 + $0x4] sm:$0x1]
        %v1989 = vlaneseq
        %v1990 = vshrl.u32 %v1989, 7
        %v1991 = vsub.s32 0, %v1990
        %v1992 = vrot.slane %v1988, %v1991
        %v1993 = vmul.f32 %v1948, %v1992
        %v1994 = vmul.f32 %v1949, %v1992
        %v1995 = vmul.f32 %v1950, %v1992
        %v1996 = vmul.f32 %v1951, %v1992
        %v1997 = vmul.f32 %v1952, %v1992
        %v1998 = vmul.f32 %v1953, %v1992
        %v1999 = vmul.f32 %v1954, %v1992
        %v2000 = vmul.f32 %v1955, %v1992
        %v2001 = vmul.f32 %v1956, %v1992
        %v2002 = vmul.f32 %v1957, %v1992
        %v2003 = vmul.f32 %v1958, %v1992
        %v2004 = vmul.f32 %v1959, %v1992
        %v2005 = vmul.f32 %v1960, %v1992
        %v2006 = vmul.f32 %v1961, %v1992
        %v2007 = vmul.f32 %v1962, %v1992
        %v2008 = vmul.f32 %v1963, %v1992
        %v2009 = vmul.f32 %v1964, %v1992
        %v2010 = vmul.f32 %v1965, %v1992
        %v2011 = vmul.f32 %v1966, %v1992
        %v2012 = vmul.f32 %v1967, %v1992
        %v2013 = vmul.f32 %v1968, %v1992
        %v2014 = vmul.f32 %v1969, %v1992
        %v2015 = vmul.f32 %v1970, %v1992
        %v2016 = vmul.f32 %v1971, %v1992
        %v2017 = vmul.f32 %v1972, %v1992
        %v2018 = vmul.f32 %v1973, %v1992
        %v2019 = vmul.f32 %v1974, %v1992
        %v2020 = vmul.f32 %v1975, %v1992
        %v2021 = vmul.f32 %v1976, %v1992
        %v2022 = vmul.f32 %v1977, %v1992
        %v2023 = vmul.f32 %v1978, %v1992
        %v2024 = vmul.f32 %v1979, %v1992
        %v2025 = vadd.f32 %v1916, %v1993
        %v2026 = vadd.f32 %v1917, %v1994
        %v2027 = vadd.f32 %v1918, %v1995
        %v2028 = vadd.f32 %v1919, %v1996
        %v2029 = vadd.f32 %v1920, %v1997
        %v2030 = vadd.f32 %v1921, %v1998
        %v2031 = vadd.f32 %v1922, %v1999
        %v2032 = vadd.f32 %v1923, %v2000
        %v2033 = vadd.f32 %v1924, %v2001
        %v2034 = vadd.f32 %v1925, %v2002
        %v2035 = vadd.f32 %v1926, %v2003
        %v2036 = vadd.f32 %v1927, %v2004
        %v2037 = vadd.f32 %v1928, %v2005
        %v2038 = vadd.f32 %v1929, %v2006
        %v2039 = vadd.f32 %v1930, %v2007
        %v2040 = vadd.f32 %v1931, %v2008
        %v2041 = vadd.f32 %v1932, %v2009
        %v2042 = vadd.f32 %v1933, %v2010
        %v2043 = vadd.f32 %v1934, %v2011
        %v2044 = vadd.f32 %v1935, %v2012
        %v2045 = vadd.f32 %v1936, %v2013
        %v2046 = vadd.f32 %v1937, %v2014
        %v2047 = vadd.f32 %v1938, %v2015
        %v2048 = vadd.f32 %v1939, %v2016
        %v2049 = vadd.f32 %v1940, %v2017
        %v2050 = vadd.f32 %v1941, %v2018
        %v2051 = vadd.f32 %v1942, %v2019
        %v2052 = vadd.f32 %v1943, %v2020
        %v2053 = vadd.f32 %v1944, %v2021
        %v2054 = vadd.f32 %v1945, %v2022
        %v2055 = vadd.f32 %v1946, %v2023
        %v2056 = vadd.f32 %v1947, %v2024
        %v2057 = vld [vmem:[%s1 + $0x9] sm:$0x1]
        %v2058 = vlaneseq
        %v2059 = vshrl.u32 %v2058, 7
        %v2060 = vsub.s32 0, %v2059
        %v2061 = vrot.slane %v2057, %v2060
        %v2062 = vmul.f32 %v1950, %v2061
        %v2063 = vmul.f32 %v1951, %v2061
        %v2064 = vmul.f32 %v1952, %v2061
        %v2065 = vmul.f32 %v1953, %v2061
        %v2066 = vmul.f32 %v1954, %v2061
        %v2067 = vmul.f32 %v1955, %v2061
        %v2068 = vmul.f32 %v1956, %v2061
        %v2069 = vmul.f32 %v1957, %v2061
        %v2070 = vmul.f32 %v1958, %v2061
        %v2071 = vmul.f32 %v1959, %v2061
        %v2072 = vmul.f32 %v1960, %v2061
        %v2073 = vmul.f32 %v1961, %v2061
        %v2074 = vmul.f32 %v1962, %v2061
        %v2075 = vmul.f32 %v1963, %v2061
        %v2076 = vmul.f32 %v1964, %v2061
        %v2077 = vmul.f32 %v1965, %v2061
        %v2078 = vmul.f32 %v1966, %v2061
        %v2079 = vmul.f32 %v1967, %v2061
        %v2080 = vmul.f32 %v1968, %v2061
        %v2081 = vmul.f32 %v1969, %v2061
        %v2082 = vmul.f32 %v1970, %v2061
        %v2083 = vmul.f32 %v1971, %v2061
        %v2084 = vmul.f32 %v1972, %v2061
        %v2085 = vmul.f32 %v1973, %v2061
        %v2086 = vmul.f32 %v1974, %v2061
        %v2087 = vmul.f32 %v1975, %v2061
        %v2088 = vmul.f32 %v1976, %v2061
        %v2089 = vmul.f32 %v1977, %v2061
        %v2090 = vmul.f32 %v1978, %v2061
        %v2091 = vmul.f32 %v1979, %v2061
        %v2092 = vmul.f32 %v1980, %v2061
        %v2093 = vmul.f32 %v1981, %v2061
        %v2094 = vadd.f32 %v2025, %v2062
        %v2095 = vadd.f32 %v2026, %v2063
        %v2096 = vadd.f32 %v2027, %v2064
        %v2097 = vadd.f32 %v2028, %v2065
        %v2098 = vadd.f32 %v2029, %v2066
        %v2099 = vadd.f32 %v2030, %v2067
        %v2100 = vadd.f32 %v2031, %v2068
        %v2101 = vadd.f32 %v2032, %v2069
        %v2102 = vadd.f32 %v2033, %v2070
        %v2103 = vadd.f32 %v2034, %v2071
        %v2104 = vadd.f32 %v2035, %v2072
        %v2105 = vadd.f32 %v2036, %v2073
        %v2106 = vadd.f32 %v2037, %v2074
        %v2107 = vadd.f32 %v2038, %v2075
        %v2108 = vadd.f32 %v2039, %v2076
        %v2109 = vadd.f32 %v2040, %v2077
        %v2110 = vadd.f32 %v2041, %v2078
        %v2111 = vadd.f32 %v2042, %v2079
        %v2112 = vadd.f32 %v2043, %v2080
        %v2113 = vadd.f32 %v2044, %v2081
        %v2114 = vadd.f32 %v2045, %v2082
        %v2115 = vadd.f32 %v2046, %v2083
        %v2116 = vadd.f32 %v2047, %v2084
        %v2117 = vadd.f32 %v2048, %v2085
        %v2118 = vadd.f32 %v2049, %v2086
        %v2119 = vadd.f32 %v2050, %v2087
        %v2120 = vadd.f32 %v2051, %v2088
        %v2121 = vadd.f32 %v2052, %v2089
        %v2122 = vadd.f32 %v2053, %v2090
        %v2123 = vadd.f32 %v2054, %v2091
        %v2124 = vadd.f32 %v2055, %v2092
        %v2125 = vadd.f32 %v2056, %v2093
        %v2126 = vld [vmem:[%s1 + $0xe] sm:$0x1]
        %v2127 = vlaneseq
        %v2128 = vshrl.u32 %v2127, 7
        %v2129 = vsub.s32 0, %v2128
        %v2130 = vrot.slane %v2126, %v2129
        %v2131 = vmul.f32 %v1952, %v2130
        %v2132 = vmul.f32 %v1953, %v2130
        %v2133 = vmul.f32 %v1954, %v2130
        %v2134 = vmul.f32 %v1955, %v2130
        %v2135 = vmul.f32 %v1956, %v2130
        %v2136 = vmul.f32 %v1957, %v2130
        %v2137 = vmul.f32 %v1958, %v2130
        %v2138 = vmul.f32 %v1959, %v2130
        %v2139 = vmul.f32 %v1960, %v2130
        %v2140 = vmul.f32 %v1961, %v2130
        %v2141 = vmul.f32 %v1962, %v2130
        %v2142 = vmul.f32 %v1963, %v2130
        %v2143 = vmul.f32 %v1964, %v2130
        %v2144 = vmul.f32 %v1965, %v2130
        %v2145 = vmul.f32 %v1966, %v2130
        %v2146 = vmul.f32 %v1967, %v2130
        %v2147 = vmul.f32 %v1968, %v2130
        %v2148 = vmul.f32 %v1969, %v2130
        %v2149 = vmul.f32 %v1970, %v2130
        %v2150 = vmul.f32 %v1971, %v2130
        %v2151 = vmul.f32 %v1972, %v2130
        %v2152 = vmul.f32 %v1973, %v2130
        %v2153 = vmul.f32 %v1974, %v2130
        %v2154 = vmul.f32 %v1975, %v2130
        %v2155 = vmul.f32 %v1976, %v2130
        %v2156 = vmul.f32 %v1977, %v2130
        %v2157 = vmul.f32 %v1978, %v2130
        %v2158 = vmul.f32 %v1979, %v2130
        %v2159 = vmul.f32 %v1980, %v2130
        %v2160 = vmul.f32 %v1981, %v2130
        %v2161 = vmul.f32 %v1982, %v2130
        %v2162 = vmul.f32 %v1983, %v2130
        %v2163 = vadd.f32 %v2094, %v2131
        %v2164 = vadd.f32 %v2095, %v2132
        %v2165 = vadd.f32 %v2096, %v2133
        %v2166 = vadd.f32 %v2097, %v2134
        %v2167 = vadd.f32 %v2098, %v2135
        %v2168 = vadd.f32 %v2099, %v2136
        %v2169 = vadd.f32 %v2100, %v2137
        %v2170 = vadd.f32 %v2101, %v2138
        %v2171 = vadd.f32 %v2102, %v2139
        %v2172 = vadd.f32 %v2103, %v2140
        %v2173 = vadd.f32 %v2104, %v2141
        %v2174 = vadd.f32 %v2105, %v2142
        %v2175 = vadd.f32 %v2106, %v2143
        %v2176 = vadd.f32 %v2107, %v2144
        %v2177 = vadd.f32 %v2108, %v2145
        %v2178 = vadd.f32 %v2109, %v2146
        %v2179 = vadd.f32 %v2110, %v2147
        %v2180 = vadd.f32 %v2111, %v2148
        %v2181 = vadd.f32 %v2112, %v2149
        %v2182 = vadd.f32 %v2113, %v2150
        %v2183 = vadd.f32 %v2114, %v2151
        %v2184 = vadd.f32 %v2115, %v2152
        %v2185 = vadd.f32 %v2116, %v2153
        %v2186 = vadd.f32 %v2117, %v2154
        %v2187 = vadd.f32 %v2118, %v2155
        %v2188 = vadd.f32 %v2119, %v2156
        %v2189 = vadd.f32 %v2120, %v2157
        %v2190 = vadd.f32 %v2121, %v2158
        %v2191 = vadd.f32 %v2122, %v2159
        %v2192 = vadd.f32 %v2123, %v2160
        %v2193 = vadd.f32 %v2124, %v2161
        %v2194 = vadd.f32 %v2125, %v2162
        %v2195 = vld [vmem:[%s1 + $0x13] sm:$0x1]
        %v2196 = vlaneseq
        %v2197 = vshrl.u32 %v2196, 7
        %v2198 = vsub.s32 0, %v2197
        %v2199 = vrot.slane %v2195, %v2198
        %v2200 = vmul.f32 %v1954, %v2199
        %v2201 = vmul.f32 %v1955, %v2199
        %v2202 = vmul.f32 %v1956, %v2199
        %v2203 = vmul.f32 %v1957, %v2199
        %v2204 = vmul.f32 %v1958, %v2199
        %v2205 = vmul.f32 %v1959, %v2199
        %v2206 = vmul.f32 %v1960, %v2199
        %v2207 = vmul.f32 %v1961, %v2199
        %v2208 = vmul.f32 %v1962, %v2199
        %v2209 = vmul.f32 %v1963, %v2199
        %v2210 = vmul.f32 %v1964, %v2199
        %v2211 = vmul.f32 %v1965, %v2199
        %v2212 = vmul.f32 %v1966, %v2199
        %v2213 = vmul.f32 %v1967, %v2199
        %v2214 = vmul.f32 %v1968, %v2199
        %v2215 = vmul.f32 %v1969, %v2199
        %v2216 = vmul.f32 %v1970, %v2199
        %v2217 = vmul.f32 %v1971, %v2199
        %v2218 = vmul.f32 %v1972, %v2199
        %v2219 = vmul.f32 %v1973, %v2199
        %v2220 = vmul.f32 %v1974, %v2199
        %v2221 = vmul.f32 %v1975, %v2199
        %v2222 = vmul.f32 %v1976, %v2199
        %v2223 = vmul.f32 %v1977, %v2199
        %v2224 = vmul.f32 %v1978, %v2199
        %v2225 = vmul.f32 %v1979, %v2199
        %v2226 = vmul.f32 %v1980, %v2199
        %v2227 = vmul.f32 %v1981, %v2199
        %v2228 = vmul.f32 %v1982, %v2199
        %v2229 = vmul.f32 %v1983, %v2199
        %v2230 = vmul.f32 %v1984, %v2199
        %v2231 = vmul.f32 %v1985, %v2199
        %v2232 = vadd.f32 %v2163, %v2200
        %v2233 = vadd.f32 %v2164, %v2201
        %v2234 = vadd.f32 %v2165, %v2202
        %v2235 = vadd.f32 %v2166, %v2203
        %v2236 = vadd.f32 %v2167, %v2204
        %v2237 = vadd.f32 %v2168, %v2205
        %v2238 = vadd.f32 %v2169, %v2206
        %v2239 = vadd.f32 %v2170, %v2207
        %v2240 = vadd.f32 %v2171, %v2208
        %v2241 = vadd.f32 %v2172, %v2209
        %v2242 = vadd.f32 %v2173, %v2210
        %v2243 = vadd.f32 %v2174, %v2211
        %v2244 = vadd.f32 %v2175, %v2212
        %v2245 = vadd.f32 %v2176, %v2213
        %v2246 = vadd.f32 %v2177, %v2214
        %v2247 = vadd.f32 %v2178, %v2215
        %v2248 = vadd.f32 %v2179, %v2216
        %v2249 = vadd.f32 %v2180, %v2217
        %v2250 = vadd.f32 %v2181, %v2218
        %v2251 = vadd.f32 %v2182, %v2219
        %v2252 = vadd.f32 %v2183, %v2220
        %v2253 = vadd.f32 %v2184, %v2221
        %v2254 = vadd.f32 %v2185, %v2222
        %v2255 = vadd.f32 %v2186, %v2223
        %v2256 = vadd.f32 %v2187, %v2224
        %v2257 = vadd.f32 %v2188, %v2225
        %v2258 = vadd.f32 %v2189, %v2226
        %v2259 = vadd.f32 %v2190, %v2227
        %v2260 = vadd.f32 %v2191, %v2228
        %v2261 = vadd.f32 %v2192, %v2229
        %v2262 = vadd.f32 %v2193, %v2230
        %v2263 = vadd.f32 %v2194, %v2231
        %v2264 = vld [vmem:[%s1 + $0x18] sm:$0x1]
        %v2265 = vlaneseq
        %v2266 = vshrl.u32 %v2265, 7
        %v2267 = vsub.s32 0, %v2266
        %v2268 = vrot.slane %v2264, %v2267
        %v2269 = vmul.f32 %v1956, %v2268
        %v2270 = vmul.f32 %v1957, %v2268
        %v2271 = vmul.f32 %v1958, %v2268
        %v2272 = vmul.f32 %v1959, %v2268
        %v2273 = vmul.f32 %v1960, %v2268
        %v2274 = vmul.f32 %v1961, %v2268
        %v2275 = vmul.f32 %v1962, %v2268
        %v2276 = vmul.f32 %v1963, %v2268
        %v2277 = vmul.f32 %v1964, %v2268
        %v2278 = vmul.f32 %v1965, %v2268
        %v2279 = vmul.f32 %v1966, %v2268
        %v2280 = vmul.f32 %v1967, %v2268
        %v2281 = vmul.f32 %v1968, %v2268
        %v2282 = vmul.f32 %v1969, %v2268
        %v2283 = vmul.f32 %v1970, %v2268
        %v2284 = vmul.f32 %v1971, %v2268
        %v2285 = vmul.f32 %v1972, %v2268
        %v2286 = vmul.f32 %v1973, %v2268
        %v2287 = vmul.f32 %v1974, %v2268
        %v2288 = vmul.f32 %v1975, %v2268
        %v2289 = vmul.f32 %v1976, %v2268
        %v2290 = vmul.f32 %v1977, %v2268
        %v2291 = vmul.f32 %v1978, %v2268
        %v2292 = vmul.f32 %v1979, %v2268
        %v2293 = vmul.f32 %v1980, %v2268
        %v2294 = vmul.f32 %v1981, %v2268
        %v2295 = vmul.f32 %v1982, %v2268
        %v2296 = vmul.f32 %v1983, %v2268
        %v2297 = vmul.f32 %v1984, %v2268
        %v2298 = vmul.f32 %v1985, %v2268
        %v2299 = vmul.f32 %v1986, %v2268
        %v2300 = vmul.f32 %v1987, %v2268
        %v2301 = vadd.f32 %v2232, %v2269
        %v2302 = vadd.f32 %v2233, %v2270
        %v2303 = vadd.f32 %v2234, %v2271
        %v2304 = vadd.f32 %v2235, %v2272
        %v2305 = vadd.f32 %v2236, %v2273
        %v2306 = vadd.f32 %v2237, %v2274
        %v2307 = vadd.f32 %v2238, %v2275
        %v2308 = vadd.f32 %v2239, %v2276
        %v2309 = vadd.f32 %v2240, %v2277
        %v2310 = vadd.f32 %v2241, %v2278
        %v2311 = vadd.f32 %v2242, %v2279
        %v2312 = vadd.f32 %v2243, %v2280
        %v2313 = vadd.f32 %v2244, %v2281
        %v2314 = vadd.f32 %v2245, %v2282
        %v2315 = vadd.f32 %v2246, %v2283
        %v2316 = vadd.f32 %v2247, %v2284
        %v2317 = vadd.f32 %v2248, %v2285
        %v2318 = vadd.f32 %v2249, %v2286
        %v2319 = vadd.f32 %v2250, %v2287
        %v2320 = vadd.f32 %v2251, %v2288
        %v2321 = vadd.f32 %v2252, %v2289
        %v2322 = vadd.f32 %v2253, %v2290
        %v2323 = vadd.f32 %v2254, %v2291
        %v2324 = vadd.f32 %v2255, %v2292
        %v2325 = vadd.f32 %v2256, %v2293
        %v2326 = vadd.f32 %v2257, %v2294
        %v2327 = vadd.f32 %v2258, %v2295
        %v2328 = vadd.f32 %v2259, %v2296
        %v2329 = vadd.f32 %v2260, %v2297
        %v2330 = vadd.f32 %v2261, %v2298
        %v2331 = vadd.f32 %v2262, %v2299
        %v2332 = vadd.f32 %v2263, %v2300
        %v2333 = vld [vmem:[%s2] sm:$0x1]
        %v2335 = vlaneseq
        %v2336 = vshrl.u32 %v2335, 7
        %v2337 = vsub.s32 0, %v2336
        %v2338 = vrot.slane %v2333, %v2337
        %v2340 = vadd.f32 %v2301, %v2338
        %v2341 = vadd.f32 %v2302, %v2338
        %v2342 = vadd.f32 %v2303, %v2338
        %v2343 = vadd.f32 %v2304, %v2338
        %v2344 = vadd.f32 %v2305, %v2338
        %v2345 = vadd.f32 %v2306, %v2338
        %v2346 = vadd.f32 %v2307, %v2338
        %v2347 = vadd.f32 %v2308, %v2338
        %v2348 = vadd.f32 %v2309, %v2338
        %v2349 = vadd.f32 %v2310, %v2338
        %v2350 = vadd.f32 %v2311, %v2338
        %v2351 = vadd.f32 %v2312, %v2338
        %v2352 = vadd.f32 %v2313, %v2338
        %v2353 = vadd.f32 %v2314, %v2338
        %v2354 = vadd.f32 %v2315, %v2338
        %v2355 = vadd.f32 %v2316, %v2338
        %v2356 = vadd.f32 %v2317, %v2338
        %v2357 = vadd.f32 %v2318, %v2338
        %v2358 = vadd.f32 %v2319, %v2338
        %v2359 = vadd.f32 %v2320, %v2338
        %v2360 = vadd.f32 %v2321, %v2338
        %v2361 = vadd.f32 %v2322, %v2338
        %v2362 = vadd.f32 %v2323, %v2338
        %v2363 = vadd.f32 %v2324, %v2338
        %v2364 = vadd.f32 %v2325, %v2338
        %v2365 = vadd.f32 %v2326, %v2338
        %v2366 = vadd.f32 %v2327, %v2338
        %v2367 = vadd.f32 %v2328, %v2338
        %v2368 = vadd.f32 %v2329, %v2338
        %v2369 = vadd.f32 %v2330, %v2338
        %v2370 = vadd.f32 %v2331, %v2338
        %v2371 = vadd.f32 %v2332, %v2338
        %2372 = vst.msk [vmem:[#allocation2] sm:$0xff] %vm297, 0.0
        %2373 = vst.msk [vmem:[#allocation2 + $0x8] sm:$0xff] %vm297, 0.0
        %2374 = vst.msk [vmem:[#allocation2 + $0x10] sm:$0xff] %vm297, 0.0
        %2375 = vst.msk [vmem:[#allocation2 + $0x18] sm:$0xff] %vm297, 0.0
        %2376 = vst.msk [vmem:[#allocation2 + $0x20] sm:$0xff] %vm297, 0.0
        %2377 = vst.msk [vmem:[#allocation2 + $0x28] sm:$0xff] %vm297, 0.0
        %2378 = vst.msk [vmem:[#allocation2 + $0x30] sm:$0xff] %vm297, 0.0
        %2379 = vst.msk [vmem:[#allocation2 + $0x38] sm:$0xff] %vm297, 0.0
        %2380 = vst.msk [vmem:[#allocation2 + $0x40] sm:$0xff] %vm297, 0.0
        %2381 = vst.msk [vmem:[#allocation2 + $0x48] sm:$0xff] %vm297, 0.0
        %2382 = vst.msk [vmem:[#allocation2 + $0x50] sm:$0xff] %vm297, 0.0
        %2383 = vst.msk [vmem:[#allocation2 + $0x58] sm:$0xff] %vm297, 0.0
        %2384 = vst.msk [vmem:[#allocation2 + $0x60] sm:$0xff] %vm297, 0.0
        %2385 = vst.msk [vmem:[#allocation2 + $0x68] sm:$0xff] %vm297, 0.0
        %2386 = vst.msk [vmem:[#allocation2 + $0x70] sm:$0xff] %vm297, 0.0
        %2387 = vst.msk [vmem:[#allocation2 + $0x78] sm:$0xff] %vm297, 0.0
        %2388 = vst.msk [vmem:[#allocation2 + $0x80] sm:$0xff] %vm297, 0.0
        %2389 = vst.msk [vmem:[#allocation2 + $0x88] sm:$0xff] %vm297, 0.0
        %2390 = vst.msk [vmem:[#allocation2 + $0x90] sm:$0xff] %vm297, 0.0
        %2391 = vst.msk [vmem:[#allocation2 + $0x98] sm:$0xff] %vm297, 0.0
        %2392 = vst.msk [vmem:[#allocation2 + $0xa0] sm:$0xff] %vm297, 0.0
        %2393 = vst.msk [vmem:[#allocation2 + $0xa8] sm:$0xff] %vm297, 0.0
        %2394 = vst.msk [vmem:[#allocation2 + $0xb0] sm:$0xff] %vm297, 0.0
        %2395 = vst.msk [vmem:[#allocation2 + $0xb8] sm:$0xff] %vm297, 0.0
        %2396 = vst.msk [vmem:[#allocation2 + $0xc0] sm:$0xff] %vm297, 0.0
        %2397 = vst.msk [vmem:[#allocation2 + $0xc8] sm:$0xff] %vm297, 0.0
        %2398 = vst.msk [vmem:[#allocation2 + $0xd0] sm:$0xff] %vm297, 0.0
        %2399 = vst.msk [vmem:[#allocation2 + $0xd8] sm:$0xff] %vm297, 0.0
        %2400 = vst.msk [vmem:[#allocation2 + $0xe0] sm:$0xff] %vm297, 0.0
        %2401 = vst.msk [vmem:[#allocation2 + $0xe8] sm:$0xff] %vm297, 0.0
        %2402 = vst.msk [vmem:[#allocation2 + $0xf0] sm:$0xff] %vm297, 0.0
        %2403 = vst.msk [vmem:[#allocation2 + $0xf8] sm:$0xff] %vm297, 0.0
        %2404 = vst.msk [vmem:[#allocation2 + $0x100] sm:$0xff] %vm297, 0.0
        %2405 = vst.msk [vmem:[#allocation2 + $0x108] sm:$0xff] %vm297, 0.0
        %2406 = vst.msk [vmem:[#allocation2 + $0x110] sm:$0xff] %vm297, 0.0
        %2407 = vst.msk [vmem:[#allocation2 + $0x118] sm:$0xff] %vm297, 0.0
        %2408 = vst.msk [vmem:[#allocation2 + $0x120] sm:$0xff] %vm297, 0.0
        %2409 = vst.msk [vmem:[#allocation2 + $0x128] sm:$0xff] %vm297, 0.0
        %2410 = vst.msk [vmem:[#allocation2 + $0x130] sm:$0xff] %vm297, 0.0
        %2411 = vst.msk [vmem:[#allocation2 + $0x138] sm:$0xff] %vm297, 0.0
        %2412 = vst.msk [vmem:[#allocation2 + $0x140] sm:$0xff] %vm297, 0.0
        %2413 = vst.msk [vmem:[#allocation2 + $0x148] sm:$0xff] %vm297, 0.0
        %2414 = vst.msk [vmem:[#allocation2 + $0x150] sm:$0xff] %vm297, 0.0
        %2415 = vst.msk [vmem:[#allocation2 + $0x158] sm:$0xff] %vm297, 0.0
        %2416 = vst.msk [vmem:[#allocation2 + $0x160] sm:$0xff] %vm297, 0.0
        %s2417 = scalar_lea.vmem [#allocation2], 1000
        %2418 = vst.msk [vmem:[%s2417] sm:$0xff] %vm297, 0.0
        %2419 = vst.msk [vmem:[%s2417 + $0x8] sm:$0xff] %vm297, 0.0
        %2420 = vst.msk [vmem:[%s2417 + $0x10] sm:$0xff] %vm297, 0.0
        %2421 = vst.msk [vmem:[%s2417 + $0x18] sm:$0xff] %vm297, 0.0
        %2422 = vst.msk [vmem:[%s2417 + $0x20] sm:$0xff] %vm297, 0.0
        %2423 = vst.msk [vmem:[%s2417 + $0x28] sm:$0xff] %vm297, 0.0
        %2424 = vst.msk [vmem:[%s2417 + $0x30] sm:$0xff] %vm297, 0.0
        %2425 = vst.msk [vmem:[%s2417 + $0x38] sm:$0xff] %vm297, 0.0
        %2426 = vst.msk [vmem:[%s2417 + $0x40] sm:$0xff] %vm297, 0.0
        %2427 = vst.msk [vmem:[%s2417 + $0x48] sm:$0xff] %vm297, 0.0
        %2428 = vst.msk [vmem:[%s2417 + $0x50] sm:$0xff] %vm297, 0.0
        %2429 = vst.msk [vmem:[%s2417 + $0x58] sm:$0xff] %vm297, 0.0
        %2430 = vst.msk [vmem:[%s2417 + $0x60] sm:$0xff] %vm297, 0.0
        %2431 = vst.msk [vmem:[%s2417 + $0x68] sm:$0xff] %vm297, 0.0
        %2432 = vst.msk [vmem:[%s2417 + $0x70] sm:$0xff] %vm297, 0.0
        %2433 = vst.msk [vmem:[%s2417 + $0x78] sm:$0xff] %vm297, 0.0
        %2434 = vst.msk [vmem:[%s2417 + $0x80] sm:$0xff] %vm297, 0.0
        %2435 = vst.msk [vmem:[%s2417 + $0x88] sm:$0xff] %vm297, 0.0
        %2436 = vst.msk [vmem:[%s2417 + $0x90] sm:$0xff] %vm297, 0.0
        %2437 = vst.msk [vmem:[%s2417 + $0x98] sm:$0xff] %vm297, 0.0
        %2438 = vst.msk [vmem:[%s2417 + $0xa0] sm:$0xff] %vm297, 0.0
        %2439 = vst.msk [vmem:[%s2417 + $0xa8] sm:$0xff] %vm297, 0.0
        %2440 = vst.msk [vmem:[%s2417 + $0xb0] sm:$0xff] %vm297, 0.0
        %2441 = vst.msk [vmem:[%s2417 + $0xb8] sm:$0xff] %vm297, 0.0
        %2442 = vst.msk [vmem:[%s2417 + $0xc0] sm:$0xff] %vm297, 0.0
        %2443 = vst.msk [vmem:[%s2417 + $0xc8] sm:$0xff] %vm297, 0.0
        %2444 = vst.msk [vmem:[%s2417 + $0xd0] sm:$0xff] %vm297, 0.0
        %2445 = vst.msk [vmem:[%s2417 + $0xd8] sm:$0xff] %vm297, 0.0
        %2446 = vst.msk [vmem:[%s2417 + $0xe0] sm:$0xff] %vm297, 0.0
        %2447 = vst.msk [vmem:[%s2417 + $0xe8] sm:$0xff] %vm297, 0.0
        %2448 = vst.msk [vmem:[%s2417 + $0xf0] sm:$0xff] %vm297, 0.0
        %2449 = vst.msk [vmem:[%s2417 + $0xf8] sm:$0xff] %vm297, 0.0
        %2450 = vst.msk [vmem:[%s2417 + $0x100] sm:$0xff] %vm297, 0.0
        %2451 = vst.msk [vmem:[%s2417 + $0x108] sm:$0xff] %vm297, 0.0
        %2452 = vst.msk [vmem:[%s2417 + $0x110] sm:$0xff] %vm297, 0.0
        %2453 = vst.msk [vmem:[%s2417 + $0x118] sm:$0xff] %vm297, 0.0
        %2454 = vst.msk [vmem:[%s2417 + $0x120] sm:$0xff] %vm297, 0.0
        %2455 = vst.msk [vmem:[%s2417 + $0x128] sm:$0xff] %vm297, 0.0
        %2456 = vst.msk [vmem:[%s2417 + $0x130] sm:$0xff] %vm297, 0.0
        %2457 = vst.msk [vmem:[%s2417 + $0x138] sm:$0xff] %vm297, 0.0
        %2458 = vst.msk [vmem:[%s2417 + $0x140] sm:$0xff] %vm297, 0.0
        %2459 = vst.msk [vmem:[%s2417 + $0x148] sm:$0xff] %vm297, 0.0
        %2460 = vst.msk [vmem:[%s2417 + $0x150] sm:$0xff] %vm297, 0.0
        %2461 = vst.msk [vmem:[%s2417 + $0x158] sm:$0xff] %vm297, 0.0
        %2462 = vst.msk [vmem:[%s2417 + $0x160] sm:$0xff] %vm297, 0.0
        %s2463 = scalar_lea.vmem [#allocation2], 360
        %2464 = vst.msk [vmem:[%s2463] sm:$0xff] %vm297, 0.0
        %2465 = vst.msk [vmem:[%s2463 + $0x8] sm:$0xff] %vm297, 0.0
        %2466 = vst.msk [vmem:[%s2463 + $0x28] sm:$0xff] %vm297, 0.0
        %2467 = vst.msk [vmem:[%s2463 + $0x30] sm:$0xff] %vm297, 0.0
        %2468 = vst.msk [vmem:[%s2463 + $0x50] sm:$0xff] %vm297, 0.0
        %2469 = vst.msk [vmem:[%s2463 + $0x58] sm:$0xff] %vm297, 0.0
        %2470 = vst.msk [vmem:[%s2463 + $0x78] sm:$0xff] %vm297, 0.0
        %2471 = vst.msk [vmem:[%s2463 + $0x80] sm:$0xff] %vm297, 0.0
        %2472 = vst.msk [vmem:[%s2463 + $0xa0] sm:$0xff] %vm297, 0.0
        %2473 = vst.msk [vmem:[%s2463 + $0xa8] sm:$0xff] %vm297, 0.0
        %2474 = vst.msk [vmem:[%s2463 + $0xc8] sm:$0xff] %vm297, 0.0
        %2475 = vst.msk [vmem:[%s2463 + $0xd0] sm:$0xff] %vm297, 0.0
        %2476 = vst.msk [vmem:[%s2463 + $0xf0] sm:$0xff] %vm297, 0.0
        %2477 = vst.msk [vmem:[%s2463 + $0xf8] sm:$0xff] %vm297, 0.0
        %2478 = vst.msk [vmem:[%s2463 + $0x118] sm:$0xff] %vm297, 0.0
        %2479 = vst.msk [vmem:[%s2463 + $0x120] sm:$0xff] %vm297, 0.0
        %2480 = vst.msk [vmem:[%s2463 + $0x140] sm:$0xff] %vm297, 0.0
        %2481 = vst.msk [vmem:[%s2463 + $0x148] sm:$0xff] %vm297, 0.0
        %2482 = vst.msk [vmem:[%s2463 + $0x168] sm:$0xff] %vm297, 0.0
        %2483 = vst.msk [vmem:[%s2463 + $0x170] sm:$0xff] %vm297, 0.0
        %2484 = vst.msk [vmem:[%s2463 + $0x190] sm:$0xff] %vm297, 0.0
        %2485 = vst.msk [vmem:[%s2463 + $0x198] sm:$0xff] %vm297, 0.0
        %2486 = vst.msk [vmem:[%s2463 + $0x1b8] sm:$0xff] %vm297, 0.0
        %2487 = vst.msk [vmem:[%s2463 + $0x1c0] sm:$0xff] %vm297, 0.0
        %2488 = vst.msk [vmem:[%s2463 + $0x1e0] sm:$0xff] %vm297, 0.0
        %2489 = vst.msk [vmem:[%s2463 + $0x1e8] sm:$0xff] %vm297, 0.0
        %2490 = vst.msk [vmem:[%s2463 + $0x208] sm:$0xff] %vm297, 0.0
        %2491 = vst.msk [vmem:[%s2463 + $0x210] sm:$0xff] %vm297, 0.0
        %2492 = vst.msk [vmem:[%s2463 + $0x230] sm:$0xff] %vm297, 0.0
        %2493 = vst.msk [vmem:[%s2463 + $0x238] sm:$0xff] %vm297, 0.0
        %2494 = vst.msk [vmem:[%s2463 + $0x258] sm:$0xff] %vm297, 0.0
        %2495 = vst.msk [vmem:[%s2463 + $0x260] sm:$0xff] %vm297, 0.0
        %2496 = vst.msk [vmem:[%s2463 + $0x18] sm:$0xff] %vm297, 0.0
        %2497 = vst.msk [vmem:[%s2463 + $0x20] sm:$0xff] %vm297, 0.0
        %2498 = vst.msk [vmem:[%s2463 + $0x40] sm:$0xff] %vm297, 0.0
        %2499 = vst.msk [vmem:[%s2463 + $0x48] sm:$0xff] %vm297, 0.0
        %2500 = vst.msk [vmem:[%s2463 + $0x68] sm:$0xff] %vm297, 0.0
        %2501 = vst.msk [vmem:[%s2463 + $0x70] sm:$0xff] %vm297, 0.0
        %2502 = vst.msk [vmem:[%s2463 + $0x90] sm:$0xff] %vm297, 0.0
        %2503 = vst.msk [vmem:[%s2463 + $0x98] sm:$0xff] %vm297, 0.0
        %2504 = vst.msk [vmem:[%s2463 + $0xb8] sm:$0xff] %vm297, 0.0
        %2505 = vst.msk [vmem:[%s2463 + $0xc0] sm:$0xff] %vm297, 0.0
        %2506 = vst.msk [vmem:[%s2463 + $0xe0] sm:$0xff] %vm297, 0.0
        %2507 = vst.msk [vmem:[%s2463 + $0xe8] sm:$0xff] %vm297, 0.0
        %2508 = vst.msk [vmem:[%s2463 + $0x108] sm:$0xff] %vm297, 0.0
        %2509 = vst.msk [vmem:[%s2463 + $0x110] sm:$0xff] %vm297, 0.0
        %2510 = vst.msk [vmem:[%s2463 + $0x130] sm:$0xff] %vm297, 0.0
        %2511 = vst.msk [vmem:[%s2463 + $0x138] sm:$0xff] %vm297, 0.0
        %2512 = vst.msk [vmem:[%s2463 + $0x158] sm:$0xff] %vm297, 0.0
        %2513 = vst.msk [vmem:[%s2463 + $0x160] sm:$0xff] %vm297, 0.0
        %2514 = vst.msk [vmem:[%s2463 + $0x180] sm:$0xff] %vm297, 0.0
        %2515 = vst.msk [vmem:[%s2463 + $0x188] sm:$0xff] %vm297, 0.0
        %2516 = vst.msk [vmem:[%s2463 + $0x1a8] sm:$0xff] %vm297, 0.0
        %2517 = vst.msk [vmem:[%s2463 + $0x1b0] sm:$0xff] %vm297, 0.0
        %2518 = vst.msk [vmem:[%s2463 + $0x1d0] sm:$0xff] %vm297, 0.0
        %2519 = vst.msk [vmem:[%s2463 + $0x1d8] sm:$0xff] %vm297, 0.0
        %2520 = vst.msk [vmem:[%s2463 + $0x1f8] sm:$0xff] %vm297, 0.0
        %2521 = vst.msk [vmem:[%s2463 + $0x200] sm:$0xff] %vm297, 0.0
        %2522 = vst.msk [vmem:[%s2463 + $0x220] sm:$0xff] %vm297, 0.0
        %2523 = vst.msk [vmem:[%s2463 + $0x228] sm:$0xff] %vm297, 0.0
        %2524 = vst.msk [vmem:[%s2463 + $0x248] sm:$0xff] %vm297, 0.0
        %2525 = vst.msk [vmem:[%s2463 + $0x250] sm:$0xff] %vm297, 0.0
        %2526 = vst.msk [vmem:[%s2463 + $0x270] sm:$0xff] %vm297, 0.0
        %2527 = vst.msk [vmem:[%s2463 + $0x278] sm:$0xff] %vm297, 0.0
        %2528 = vst.msk [vmem:[%s2463 + $0x9] sm:$0xff] %vm297, %v2340
        %2529 = vst.msk [vmem:[%s2463 + $0x11] sm:$0xff] %vm297, %v2341
        %2530 = vst.msk [vmem:[%s2463 + $0x31] sm:$0xff] %vm297, %v2342
        %2531 = vst.msk [vmem:[%s2463 + $0x39] sm:$0xff] %vm297, %v2343
        %2532 = vst.msk [vmem:[%s2463 + $0x59] sm:$0xff] %vm297, %v2344
        %2533 = vst.msk [vmem:[%s2463 + $0x61] sm:$0xff] %vm297, %v2345
        %2534 = vst.msk [vmem:[%s2463 + $0x81] sm:$0xff] %vm297, %v2346
        %2535 = vst.msk [vmem:[%s2463 + $0x89] sm:$0xff] %vm297, %v2347
        %2536 = vst.msk [vmem:[%s2463 + $0xa9] sm:$0xff] %vm297, %v2348
        %2537 = vst.msk [vmem:[%s2463 + $0xb1] sm:$0xff] %vm297, %v2349
        %2538 = vst.msk [vmem:[%s2463 + $0xd1] sm:$0xff] %vm297, %v2350
        %2539 = vst.msk [vmem:[%s2463 + $0xd9] sm:$0xff] %vm297, %v2351
        %2540 = vst.msk [vmem:[%s2463 + $0xf9] sm:$0xff] %vm297, %v2352
        %2541 = vst.msk [vmem:[%s2463 + $0x101] sm:$0xff] %vm297, %v2353
        %2542 = vst.msk [vmem:[%s2463 + $0x121] sm:$0xff] %vm297, %v2354
        %2543 = vst.msk [vmem:[%s2463 + $0x129] sm:$0xff] %vm297, %v2355
        %2544 = vst.msk [vmem:[%s2463 + $0x149] sm:$0xff] %vm297, %v2356
        %2545 = vst.msk [vmem:[%s2463 + $0x151] sm:$0xff] %vm297, %v2357
        %2546 = vst.msk [vmem:[%s2463 + $0x171] sm:$0xff] %vm297, %v2358
        %2547 = vst.msk [vmem:[%s2463 + $0x179] sm:$0xff] %vm297, %v2359
        %2548 = vst.msk [vmem:[%s2463 + $0x199] sm:$0xff] %vm297, %v2360
        %2549 = vst.msk [vmem:[%s2463 + $0x1a1] sm:$0xff] %vm297, %v2361
        %2550 = vst.msk [vmem:[%s2463 + $0x1c1] sm:$0xff] %vm297, %v2362
        %2551 = vst.msk [vmem:[%s2463 + $0x1c9] sm:$0xff] %vm297, %v2363
        %2552 = vst.msk [vmem:[%s2463 + $0x1e9] sm:$0xff] %vm297, %v2364
        %2553 = vst.msk [vmem:[%s2463 + $0x1f1] sm:$0xff] %vm297, %v2365
        %2554 = vst.msk [vmem:[%s2463 + $0x211] sm:$0xff] %vm297, %v2366
        %2555 = vst.msk [vmem:[%s2463 + $0x219] sm:$0xff] %vm297, %v2367
        %2556 = vst.msk [vmem:[%s2463 + $0x239] sm:$0xff] %vm297, %v2368
        %2557 = vst.msk [vmem:[%s2463 + $0x241] sm:$0xff] %vm297, %v2369
        %2558 = vst.msk [vmem:[%s2463 + $0x261] sm:$0xff] %vm297, %v2370
        %2559 = vst.msk [vmem:[%s2463 + $0x269] sm:$0xff] %vm297, %v2371
        %v2560 = vld [vmem:[#allocation2] sm:$0xff]
        %v2561 = vld [vmem:[#allocation2 + $0x8] sm:$0xff]
        %v2562 = vld [vmem:[#allocation2 + $0x28] sm:$0xff]
        %v2563 = vld [vmem:[#allocation2 + $0x30] sm:$0xff]
        %v2564 = vld [vmem:[#allocation2 + $0x50] sm:$0xff]
        %v2565 = vld [vmem:[#allocation2 + $0x58] sm:$0xff]
        %v2566 = vld [vmem:[#allocation2 + $0x78] sm:$0xff]
        %v2567 = vld [vmem:[#allocation2 + $0x80] sm:$0xff]
        %v2568 = vld [vmem:[#allocation2 + $0xa0] sm:$0xff]
        %v2569 = vld [vmem:[#allocation2 + $0xa8] sm:$0xff]
        %v2570 = vld [vmem:[#allocation2 + $0xc8] sm:$0xff]
        %v2571 = vld [vmem:[#allocation2 + $0xd0] sm:$0xff]
        %v2572 = vld [vmem:[#allocation2 + $0xf0] sm:$0xff]
        %v2573 = vld [vmem:[#allocation2 + $0xf8] sm:$0xff]
        %v2574 = vld [vmem:[#allocation2 + $0x118] sm:$0xff]
        %v2575 = vld [vmem:[#allocation2 + $0x120] sm:$0xff]
        %v2576 = vld [vmem:[#allocation2 + $0x140] sm:$0xff]
        %v2577 = vld [vmem:[#allocation2 + $0x148] sm:$0xff]
        %v2578 = vld [vmem:[#allocation2 + $0x168] sm:$0xff]
        %v2579 = vld [vmem:[#allocation2 + $0x170] sm:$0xff]
        %v2580 = vld [vmem:[#allocation2 + $0x190] sm:$0xff]
        %v2581 = vld [vmem:[#allocation2 + $0x198] sm:$0xff]
        %v2582 = vld [vmem:[#allocation2 + $0x1b8] sm:$0xff]
        %v2583 = vld [vmem:[#allocation2 + $0x1c0] sm:$0xff]
        %v2584 = vld [vmem:[#allocation2 + $0x1e0] sm:$0xff]
        %v2585 = vld [vmem:[#allocation2 + $0x1e8] sm:$0xff]
        %v2586 = vld [vmem:[#allocation2 + $0x208] sm:$0xff]
        %v2587 = vld [vmem:[#allocation2 + $0x210] sm:$0xff]
        %v2588 = vld [vmem:[#allocation2 + $0x230] sm:$0xff]
        %v2589 = vld [vmem:[#allocation2 + $0x238] sm:$0xff]
        %v2590 = vld [vmem:[#allocation2 + $0x258] sm:$0xff]
        %v2591 = vld [vmem:[#allocation2 + $0x260] sm:$0xff]
        %v2592 = vld [vmem:[#allocation2 + $0x280] sm:$0xff]
        %v2593 = vld [vmem:[#allocation2 + $0x288] sm:$0xff]
        %v2594 = vld [vmem:[#allocation2 + $0x2a8] sm:$0xff]
        %v2595 = vld [vmem:[#allocation2 + $0x2b0] sm:$0xff]
        %v2596 = vld [vmem:[#allocation2 + $0x2d0] sm:$0xff]
        %v2597 = vld [vmem:[#allocation2 + $0x2d8] sm:$0xff]
        %v2598 = vld [vmem:[#allocation2 + $0x2f8] sm:$0xff]
        %v2599 = vld [vmem:[#allocation2 + $0x300] sm:$0xff]
        %v2600 = vld [vmem:[#allocation2 + $0x320] sm:$0xff]
        %v2601 = vld [vmem:[#allocation2 + $0x328] sm:$0xff]
        %v2602 = vld [vmem:[#allocation2 + $0x348] sm:$0xff]
        %v2603 = vld [vmem:[#allocation2 + $0x350] sm:$0xff]
        %v2604 = vld [vmem:[#allocation2 + $0x370] sm:$0xff]
        %v2605 = vld [vmem:[#allocation2 + $0x378] sm:$0xff]
        %v2606 = vld [vmem:[#allocation2 + $0x398] sm:$0xff]
        %v2607 = vld [vmem:[#allocation2 + $0x3a0] sm:$0xff]
        %v2608 = vld [vmem:[#allocation2 + $0x3c0] sm:$0xff]
        %v2609 = vld [vmem:[#allocation2 + $0x3c8] sm:$0xff]
        %v2610 = vld [vmem:[#allocation2 + $0x3e8] sm:$0xff]
        %v2611 = vld [vmem:[#allocation2 + $0x3f0] sm:$0xff]
        %v2612 = vld [vmem:[#allocation2 + $0x410] sm:$0xff]
        %v2613 = vld [vmem:[#allocation2 + $0x418] sm:$0xff]
        %v2614 = vld [vmem:[#allocation2 + $0x438] sm:$0xff]
        %v2615 = vld [vmem:[#allocation2 + $0x440] sm:$0xff]
        %v2616 = vld [vmem:[#allocation2 + $0x460] sm:$0xff]
        %v2617 = vld [vmem:[#allocation2 + $0x468] sm:$0xff]
        %v2618 = vld [vmem:[#allocation2 + $0x488] sm:$0xff]
        %v2619 = vld [vmem:[#allocation2 + $0x490] sm:$0xff]
        %v2620 = vld [vmem:[#allocation2 + $0x4b0] sm:$0xff]
        %v2621 = vld [vmem:[#allocation2 + $0x4b8] sm:$0xff]
        %v2622 = vld [vmem:[#allocation2 + $0x4d8] sm:$0xff]
        %v2623 = vld [vmem:[#allocation2 + $0x4e0] sm:$0xff]
        %v2624 = vld [vmem:[#allocation2 + $0x500] sm:$0xff]
        %v2625 = vld [vmem:[#allocation2 + $0x508] sm:$0xff]
        %v2626 = vld [vmem:[#allocation2 + $0x528] sm:$0xff]
        %v2627 = vld [vmem:[#allocation2 + $0x530] sm:$0xff]
        %v2628 = vld [vmem:[%s3] sm:$0x1]
        %v2629 = vlaneseq
        %v2630 = vshrl.u32 %v2629, 7
        %v2631 = vsub.s32 0, %v2630
        %v2632 = vrot.slane %v2628, %v2631
        %v2633 = vmul.f32 %v2560, %v2632
        %v2634 = vmul.f32 %v2561, %v2632
        %v2635 = vmul.f32 %v2562, %v2632
        %v2636 = vmul.f32 %v2563, %v2632
        %v2637 = vmul.f32 %v2564, %v2632
        %v2638 = vmul.f32 %v2565, %v2632
        %v2639 = vmul.f32 %v2566, %v2632
        %v2640 = vmul.f32 %v2567, %v2632
        %v2641 = vmul.f32 %v2568, %v2632
        %v2642 = vmul.f32 %v2569, %v2632
        %v2643 = vmul.f32 %v2570, %v2632
        %v2644 = vmul.f32 %v2571, %v2632
        %v2645 = vmul.f32 %v2572, %v2632
        %v2646 = vmul.f32 %v2573, %v2632
        %v2647 = vmul.f32 %v2574, %v2632
        %v2648 = vmul.f32 %v2575, %v2632
        %v2649 = vmul.f32 %v2576, %v2632
        %v2650 = vmul.f32 %v2577, %v2632
        %v2651 = vmul.f32 %v2578, %v2632
        %v2652 = vmul.f32 %v2579, %v2632
        %v2653 = vmul.f32 %v2580, %v2632
        %v2654 = vmul.f32 %v2581, %v2632
        %v2655 = vmul.f32 %v2582, %v2632
        %v2656 = vmul.f32 %v2583, %v2632
        %v2657 = vmul.f32 %v2584, %v2632
        %v2658 = vmul.f32 %v2585, %v2632
        %v2659 = vmul.f32 %v2586, %v2632
        %v2660 = vmul.f32 %v2587, %v2632
        %v2661 = vmul.f32 %v2588, %v2632
        %v2662 = vmul.f32 %v2589, %v2632
        %v2663 = vmul.f32 %v2590, %v2632
        %v2664 = vmul.f32 %v2591, %v2632
        %v2665 = vadd.f32 %v2633, 0.0
        %v2666 = vadd.f32 %v2634, 0.0
        %v2667 = vadd.f32 %v2635, 0.0
        %v2668 = vadd.f32 %v2636, 0.0
        %v2669 = vadd.f32 %v2637, 0.0
        %v2670 = vadd.f32 %v2638, 0.0
        %v2671 = vadd.f32 %v2639, 0.0
        %v2672 = vadd.f32 %v2640, 0.0
        %v2673 = vadd.f32 %v2641, 0.0
        %v2674 = vadd.f32 %v2642, 0.0
        %v2675 = vadd.f32 %v2643, 0.0
        %v2676 = vadd.f32 %v2644, 0.0
        %v2677 = vadd.f32 %v2645, 0.0
        %v2678 = vadd.f32 %v2646, 0.0
        %v2679 = vadd.f32 %v2647, 0.0
        %v2680 = vadd.f32 %v2648, 0.0
        %v2681 = vadd.f32 %v2649, 0.0
        %v2682 = vadd.f32 %v2650, 0.0
        %v2683 = vadd.f32 %v2651, 0.0
        %v2684 = vadd.f32 %v2652, 0.0
        %v2685 = vadd.f32 %v2653, 0.0
        %v2686 = vadd.f32 %v2654, 0.0
        %v2687 = vadd.f32 %v2655, 0.0
        %v2688 = vadd.f32 %v2656, 0.0
        %v2689 = vadd.f32 %v2657, 0.0
        %v2690 = vadd.f32 %v2658, 0.0
        %v2691 = vadd.f32 %v2659, 0.0
        %v2692 = vadd.f32 %v2660, 0.0
        %v2693 = vadd.f32 %v2661, 0.0
        %v2694 = vadd.f32 %v2662, 0.0
        %v2695 = vadd.f32 %v2663, 0.0
        %v2696 = vadd.f32 %v2664, 0.0
        %v2697 = vld [vmem:[%s3 + $0x7] sm:$0x1]
        %v2698 = vlaneseq
        %v2699 = vshrl.u32 %v2698, 7
        %v2700 = vsub.s32 0, %v2699
        %v2701 = vrot.slane %v2697, %v2700
        %v2702 = vmul.f32 %v2566, %v2701
        %v2703 = vmul.f32 %v2567, %v2701
        %v2704 = vmul.f32 %v2568, %v2701
        %v2705 = vmul.f32 %v2569, %v2701
        %v2706 = vmul.f32 %v2570, %v2701
        %v2707 = vmul.f32 %v2571, %v2701
        %v2708 = vmul.f32 %v2572, %v2701
        %v2709 = vmul.f32 %v2573, %v2701
        %v2710 = vmul.f32 %v2574, %v2701
        %v2711 = vmul.f32 %v2575, %v2701
        %v2712 = vmul.f32 %v2576, %v2701
        %v2713 = vmul.f32 %v2577, %v2701
        %v2714 = vmul.f32 %v2578, %v2701
        %v2715 = vmul.f32 %v2579, %v2701
        %v2716 = vmul.f32 %v2580, %v2701
        %v2717 = vmul.f32 %v2581, %v2701
        %v2718 = vmul.f32 %v2582, %v2701
        %v2719 = vmul.f32 %v2583, %v2701
        %v2720 = vmul.f32 %v2584, %v2701
        %v2721 = vmul.f32 %v2585, %v2701
        %v2722 = vmul.f32 %v2586, %v2701
        %v2723 = vmul.f32 %v2587, %v2701
        %v2724 = vmul.f32 %v2588, %v2701
        %v2725 = vmul.f32 %v2589, %v2701
        %v2726 = vmul.f32 %v2590, %v2701
        %v2727 = vmul.f32 %v2591, %v2701
        %v2728 = vmul.f32 %v2592, %v2701
        %v2729 = vmul.f32 %v2593, %v2701
        %v2730 = vmul.f32 %v2594, %v2701
        %v2731 = vmul.f32 %v2595, %v2701
        %v2732 = vmul.f32 %v2596, %v2701
        %v2733 = vmul.f32 %v2597, %v2701
        %v2734 = vadd.f32 %v2665, %v2702
        %v2735 = vadd.f32 %v2666, %v2703
        %v2736 = vadd.f32 %v2667, %v2704
        %v2737 = vadd.f32 %v2668, %v2705
        %v2738 = vadd.f32 %v2669, %v2706
        %v2739 = vadd.f32 %v2670, %v2707
        %v2740 = vadd.f32 %v2671, %v2708
        %v2741 = vadd.f32 %v2672, %v2709
        %v2742 = vadd.f32 %v2673, %v2710
        %v2743 = vadd.f32 %v2674, %v2711
        %v2744 = vadd.f32 %v2675, %v2712
        %v2745 = vadd.f32 %v2676, %v2713
        %v2746 = vadd.f32 %v2677, %v2714
        %v2747 = vadd.f32 %v2678, %v2715
        %v2748 = vadd.f32 %v2679, %v2716
        %v2749 = vadd.f32 %v2680, %v2717
        %v2750 = vadd.f32 %v2681, %v2718
        %v2751 = vadd.f32 %v2682, %v2719
        %v2752 = vadd.f32 %v2683, %v2720
        %v2753 = vadd.f32 %v2684, %v2721
        %v2754 = vadd.f32 %v2685, %v2722
        %v2755 = vadd.f32 %v2686, %v2723
        %v2756 = vadd.f32 %v2687, %v2724
        %v2757 = vadd.f32 %v2688, %v2725
        %v2758 = vadd.f32 %v2689, %v2726
        %v2759 = vadd.f32 %v2690, %v2727
        %v2760 = vadd.f32 %v2691, %v2728
        %v2761 = vadd.f32 %v2692, %v2729
        %v2762 = vadd.f32 %v2693, %v2730
        %v2763 = vadd.f32 %v2694, %v2731
        %v2764 = vadd.f32 %v2695, %v2732
        %v2765 = vadd.f32 %v2696, %v2733
        %v2766 = vld [vmem:[%s3 + $0xe] sm:$0x1]
        %v2767 = vlaneseq
        %v2768 = vshrl.u32 %v2767, 7
        %v2769 = vsub.s32 0, %v2768
        %v2770 = vrot.slane %v2766, %v2769
        %v2771 = vmul.f32 %v2572, %v2770
        %v2772 = vmul.f32 %v2573, %v2770
        %v2773 = vmul.f32 %v2574, %v2770
        %v2774 = vmul.f32 %v2575, %v2770
        %v2775 = vmul.f32 %v2576, %v2770
        %v2776 = vmul.f32 %v2577, %v2770
        %v2777 = vmul.f32 %v2578, %v2770
        %v2778 = vmul.f32 %v2579, %v2770
        %v2779 = vmul.f32 %v2580, %v2770
        %v2780 = vmul.f32 %v2581, %v2770
        %v2781 = vmul.f32 %v2582, %v2770
        %v2782 = vmul.f32 %v2583, %v2770
        %v2783 = vmul.f32 %v2584, %v2770
        %v2784 = vmul.f32 %v2585, %v2770
        %v2785 = vmul.f32 %v2586, %v2770
        %v2786 = vmul.f32 %v2587, %v2770
        %v2787 = vmul.f32 %v2588, %v2770
        %v2788 = vmul.f32 %v2589, %v2770
        %v2789 = vmul.f32 %v2590, %v2770
        %v2790 = vmul.f32 %v2591, %v2770
        %v2791 = vmul.f32 %v2592, %v2770
        %v2792 = vmul.f32 %v2593, %v2770
        %v2793 = vmul.f32 %v2594, %v2770
        %v2794 = vmul.f32 %v2595, %v2770
        %v2795 = vmul.f32 %v2596, %v2770
        %v2796 = vmul.f32 %v2597, %v2770
        %v2797 = vmul.f32 %v2598, %v2770
        %v2798 = vmul.f32 %v2599, %v2770
        %v2799 = vmul.f32 %v2600, %v2770
        %v2800 = vmul.f32 %v2601, %v2770
        %v2801 = vmul.f32 %v2602, %v2770
        %v2802 = vmul.f32 %v2603, %v2770
        %v2803 = vadd.f32 %v2734, %v2771
        %v2804 = vadd.f32 %v2735, %v2772
        %v2805 = vadd.f32 %v2736, %v2773
        %v2806 = vadd.f32 %v2737, %v2774
        %v2807 = vadd.f32 %v2738, %v2775
        %v2808 = vadd.f32 %v2739, %v2776
        %v2809 = vadd.f32 %v2740, %v2777
        %v2810 = vadd.f32 %v2741, %v2778
        %v2811 = vadd.f32 %v2742, %v2779
        %v2812 = vadd.f32 %v2743, %v2780
        %v2813 = vadd.f32 %v2744, %v2781
        %v2814 = vadd.f32 %v2745, %v2782
        %v2815 = vadd.f32 %v2746, %v2783
        %v2816 = vadd.f32 %v2747, %v2784
        %v2817 = vadd.f32 %v2748, %v2785
        %v2818 = vadd.f32 %v2749, %v2786
        %v2819 = vadd.f32 %v2750, %v2787
        %v2820 = vadd.f32 %v2751, %v2788
        %v2821 = vadd.f32 %v2752, %v2789
        %v2822 = vadd.f32 %v2753, %v2790
        %v2823 = vadd.f32 %v2754, %v2791
        %v2824 = vadd.f32 %v2755, %v2792
        %v2825 = vadd.f32 %v2756, %v2793
        %v2826 = vadd.f32 %v2757, %v2794
        %v2827 = vadd.f32 %v2758, %v2795
        %v2828 = vadd.f32 %v2759, %v2796
        %v2829 = vadd.f32 %v2760, %v2797
        %v2830 = vadd.f32 %v2761, %v2798
        %v2831 = vadd.f32 %v2762, %v2799
        %v2832 = vadd.f32 %v2763, %v2800
        %v2833 = vadd.f32 %v2764, %v2801
        %v2834 = vadd.f32 %v2765, %v2802
        %v2835 = vld [vmem:[%s3 + $0x15] sm:$0x1]
        %v2836 = vlaneseq
        %v2837 = vshrl.u32 %v2836, 7
        %v2838 = vsub.s32 0, %v2837
        %v2839 = vrot.slane %v2835, %v2838
        %v2840 = vmul.f32 %v2578, %v2839
        %v2841 = vmul.f32 %v2579, %v2839
        %v2842 = vmul.f32 %v2580, %v2839
        %v2843 = vmul.f32 %v2581, %v2839
        %v2844 = vmul.f32 %v2582, %v2839
        %v2845 = vmul.f32 %v2583, %v2839
        %v2846 = vmul.f32 %v2584, %v2839
        %v2847 = vmul.f32 %v2585, %v2839
        %v2848 = vmul.f32 %v2586, %v2839
        %v2849 = vmul.f32 %v2587, %v2839
        %v2850 = vmul.f32 %v2588, %v2839
        %v2851 = vmul.f32 %v2589, %v2839
        %v2852 = vmul.f32 %v2590, %v2839
        %v2853 = vmul.f32 %v2591, %v2839
        %v2854 = vmul.f32 %v2592, %v2839
        %v2855 = vmul.f32 %v2593, %v2839
        %v2856 = vmul.f32 %v2594, %v2839
        %v2857 = vmul.f32 %v2595, %v2839
        %v2858 = vmul.f32 %v2596, %v2839
        %v2859 = vmul.f32 %v2597, %v2839
        %v2860 = vmul.f32 %v2598, %v2839
        %v2861 = vmul.f32 %v2599, %v2839
        %v2862 = vmul.f32 %v2600, %v2839
        %v2863 = vmul.f32 %v2601, %v2839
        %v2864 = vmul.f32 %v2602, %v2839
        %v2865 = vmul.f32 %v2603, %v2839
        %v2866 = vmul.f32 %v2604, %v2839
        %v2867 = vmul.f32 %v2605, %v2839
        %v2868 = vmul.f32 %v2606, %v2839
        %v2869 = vmul.f32 %v2607, %v2839
        %v2870 = vmul.f32 %v2608, %v2839
        %v2871 = vmul.f32 %v2609, %v2839
        %v2872 = vadd.f32 %v2803, %v2840
        %v2873 = vadd.f32 %v2804, %v2841
        %v2874 = vadd.f32 %v2805, %v2842
        %v2875 = vadd.f32 %v2806, %v2843
        %v2876 = vadd.f32 %v2807, %v2844
        %v2877 = vadd.f32 %v2808, %v2845
        %v2878 = vadd.f32 %v2809, %v2846
        %v2879 = vadd.f32 %v2810, %v2847
        %v2880 = vadd.f32 %v2811, %v2848
        %v2881 = vadd.f32 %v2812, %v2849
        %v2882 = vadd.f32 %v2813, %v2850
        %v2883 = vadd.f32 %v2814, %v2851
        %v2884 = vadd.f32 %v2815, %v2852
        %v2885 = vadd.f32 %v2816, %v2853
        %v2886 = vadd.f32 %v2817, %v2854
        %v2887 = vadd.f32 %v2818, %v2855
        %v2888 = vadd.f32 %v2819, %v2856
        %v2889 = vadd.f32 %v2820, %v2857
        %v2890 = vadd.f32 %v2821, %v2858
        %v2891 = vadd.f32 %v2822, %v2859
        %v2892 = vadd.f32 %v2823, %v2860
        %v2893 = vadd.f32 %v2824, %v2861
        %v2894 = vadd.f32 %v2825, %v2862
        %v2895 = vadd.f32 %v2826, %v2863
        %v2896 = vadd.f32 %v2827, %v2864
        %v2897 = vadd.f32 %v2828, %v2865
        %v2898 = vadd.f32 %v2829, %v2866
        %v2899 = vadd.f32 %v2830, %v2867
        %v2900 = vadd.f32 %v2831, %v2868
        %v2901 = vadd.f32 %v2832, %v2869
        %v2902 = vadd.f32 %v2833, %v2870
        %v2903 = vadd.f32 %v2834, %v2871
        %v2904 = vld [vmem:[%s3 + $0x1c] sm:$0x1]
        %v2905 = vlaneseq
        %v2906 = vshrl.u32 %v2905, 7
        %v2907 = vsub.s32 0, %v2906
        %v2908 = vrot.slane %v2904, %v2907
        %v2909 = vmul.f32 %v2584, %v2908
        %v2910 = vmul.f32 %v2585, %v2908
        %v2911 = vmul.f32 %v2586, %v2908
        %v2912 = vmul.f32 %v2587, %v2908
        %v2913 = vmul.f32 %v2588, %v2908
        %v2914 = vmul.f32 %v2589, %v2908
        %v2915 = vmul.f32 %v2590, %v2908
        %v2916 = vmul.f32 %v2591, %v2908
        %v2917 = vmul.f32 %v2592, %v2908
        %v2918 = vmul.f32 %v2593, %v2908
        %v2919 = vmul.f32 %v2594, %v2908
        %v2920 = vmul.f32 %v2595, %v2908
        %v2921 = vmul.f32 %v2596, %v2908
        %v2922 = vmul.f32 %v2597, %v2908
        %v2923 = vmul.f32 %v2598, %v2908
        %v2924 = vmul.f32 %v2599, %v2908
        %v2925 = vmul.f32 %v2600, %v2908
        %v2926 = vmul.f32 %v2601, %v2908
        %v2927 = vmul.f32 %v2602, %v2908
        %v2928 = vmul.f32 %v2603, %v2908
        %v2929 = vmul.f32 %v2604, %v2908
        %v2930 = vmul.f32 %v2605, %v2908
        %v2931 = vmul.f32 %v2606, %v2908
        %v2932 = vmul.f32 %v2607, %v2908
        %v2933 = vmul.f32 %v2608, %v2908
        %v2934 = vmul.f32 %v2609, %v2908
        %v2935 = vmul.f32 %v2610, %v2908
        %v2936 = vmul.f32 %v2611, %v2908
        %v2937 = vmul.f32 %v2612, %v2908
        %v2938 = vmul.f32 %v2613, %v2908
        %v2939 = vmul.f32 %v2614, %v2908
        %v2940 = vmul.f32 %v2615, %v2908
        %v2941 = vadd.f32 %v2872, %v2909
        %v2942 = vadd.f32 %v2873, %v2910
        %v2943 = vadd.f32 %v2874, %v2911
        %v2944 = vadd.f32 %v2875, %v2912
        %v2945 = vadd.f32 %v2876, %v2913
        %v2946 = vadd.f32 %v2877, %v2914
        %v2947 = vadd.f32 %v2878, %v2915
        %v2948 = vadd.f32 %v2879, %v2916
        %v2949 = vadd.f32 %v2880, %v2917
        %v2950 = vadd.f32 %v2881, %v2918
        %v2951 = vadd.f32 %v2882, %v2919
        %v2952 = vadd.f32 %v2883, %v2920
        %v2953 = vadd.f32 %v2884, %v2921
        %v2954 = vadd.f32 %v2885, %v2922
        %v2955 = vadd.f32 %v2886, %v2923
        %v2956 = vadd.f32 %v2887, %v2924
        %v2957 = vadd.f32 %v2888, %v2925
        %v2958 = vadd.f32 %v2889, %v2926
        %v2959 = vadd.f32 %v2890, %v2927
        %v2960 = vadd.f32 %v2891, %v2928
        %v2961 = vadd.f32 %v2892, %v2929
        %v2962 = vadd.f32 %v2893, %v2930
        %v2963 = vadd.f32 %v2894, %v2931
        %v2964 = vadd.f32 %v2895, %v2932
        %v2965 = vadd.f32 %v2896, %v2933
        %v2966 = vadd.f32 %v2897, %v2934
        %v2967 = vadd.f32 %v2898, %v2935
        %v2968 = vadd.f32 %v2899, %v2936
        %v2969 = vadd.f32 %v2900, %v2937
        %v2970 = vadd.f32 %v2901, %v2938
        %v2971 = vadd.f32 %v2902, %v2939
        %v2972 = vadd.f32 %v2903, %v2940
        %v2973 = vld [vmem:[%s3 + $0x23] sm:$0x1]
        %v2974 = vlaneseq
        %v2975 = vshrl.u32 %v2974, 7
        %v2976 = vsub.s32 0, %v2975
        %v2977 = vrot.slane %v2973, %v2976
        %v2978 = vmul.f32 %v2590, %v2977
        %v2979 = vmul.f32 %v2591, %v2977
        %v2980 = vmul.f32 %v2592, %v2977
        %v2981 = vmul.f32 %v2593, %v2977
        %v2982 = vmul.f32 %v2594, %v2977
        %v2983 = vmul.f32 %v2595, %v2977
        %v2984 = vmul.f32 %v2596, %v2977
        %v2985 = vmul.f32 %v2597, %v2977
        %v2986 = vmul.f32 %v2598, %v2977
        %v2987 = vmul.f32 %v2599, %v2977
        %v2988 = vmul.f32 %v2600, %v2977
        %v2989 = vmul.f32 %v2601, %v2977
        %v2990 = vmul.f32 %v2602, %v2977
        %v2991 = vmul.f32 %v2603, %v2977
        %v2992 = vmul.f32 %v2604, %v2977
        %v2993 = vmul.f32 %v2605, %v2977
        %v2994 = vmul.f32 %v2606, %v2977
        %v2995 = vmul.f32 %v2607, %v2977
        %v2996 = vmul.f32 %v2608, %v2977
        %v2997 = vmul.f32 %v2609, %v2977
        %v2998 = vmul.f32 %v2610, %v2977
        %v2999 = vmul.f32 %v2611, %v2977
        %v3000 = vmul.f32 %v2612, %v2977
        %v3001 = vmul.f32 %v2613, %v2977
        %v3002 = vmul.f32 %v2614, %v2977
        %v3003 = vmul.f32 %v2615, %v2977
        %v3004 = vmul.f32 %v2616, %v2977
        %v3005 = vmul.f32 %v2617, %v2977
        %v3006 = vmul.f32 %v2618, %v2977
        %v3007 = vmul.f32 %v2619, %v2977
        %v3008 = vmul.f32 %v2620, %v2977
        %v3009 = vmul.f32 %v2621, %v2977
        %v3010 = vadd.f32 %v2941, %v2978
        %v3011 = vadd.f32 %v2942, %v2979
        %v3012 = vadd.f32 %v2943, %v2980
        %v3013 = vadd.f32 %v2944, %v2981
        %v3014 = vadd.f32 %v2945, %v2982
        %v3015 = vadd.f32 %v2946, %v2983
        %v3016 = vadd.f32 %v2947, %v2984
        %v3017 = vadd.f32 %v2948, %v2985
        %v3018 = vadd.f32 %v2949, %v2986
        %v3019 = vadd.f32 %v2950, %v2987
        %v3020 = vadd.f32 %v2951, %v2988
        %v3021 = vadd.f32 %v2952, %v2989
        %v3022 = vadd.f32 %v2953, %v2990
        %v3023 = vadd.f32 %v2954, %v2991
        %v3024 = vadd.f32 %v2955, %v2992
        %v3025 = vadd.f32 %v2956, %v2993
        %v3026 = vadd.f32 %v2957, %v2994
        %v3027 = vadd.f32 %v2958, %v2995
        %v3028 = vadd.f32 %v2959, %v2996
        %v3029 = vadd.f32 %v2960, %v2997
        %v3030 = vadd.f32 %v2961, %v2998
        %v3031 = vadd.f32 %v2962, %v2999
        %v3032 = vadd.f32 %v2963, %v3000
        %v3033 = vadd.f32 %v2964, %v3001
        %v3034 = vadd.f32 %v2965, %v3002
        %v3035 = vadd.f32 %v2966, %v3003
        %v3036 = vadd.f32 %v2967, %v3004
        %v3037 = vadd.f32 %v2968, %v3005
        %v3038 = vadd.f32 %v2969, %v3006
        %v3039 = vadd.f32 %v2970, %v3007
        %v3040 = vadd.f32 %v2971, %v3008
        %v3041 = vadd.f32 %v2972, %v3009
        %v3042 = vld [vmem:[%s3 + $0x2a] sm:$0x1]
        %v3043 = vlaneseq
        %v3044 = vshrl.u32 %v3043, 7
        %v3045 = vsub.s32 0, %v3044
        %v3046 = vrot.slane %v3042, %v3045
        %v3047 = vmul.f32 %v2596, %v3046
        %v3048 = vmul.f32 %v2597, %v3046
        %v3049 = vmul.f32 %v2598, %v3046
        %v3050 = vmul.f32 %v2599, %v3046
        %v3051 = vmul.f32 %v2600, %v3046
        %v3052 = vmul.f32 %v2601, %v3046
        %v3053 = vmul.f32 %v2602, %v3046
        %v3054 = vmul.f32 %v2603, %v3046
        %v3055 = vmul.f32 %v2604, %v3046
        %v3056 = vmul.f32 %v2605, %v3046
        %v3057 = vmul.f32 %v2606, %v3046
        %v3058 = vmul.f32 %v2607, %v3046
        %v3059 = vmul.f32 %v2608, %v3046
        %v3060 = vmul.f32 %v2609, %v3046
        %v3061 = vmul.f32 %v2610, %v3046
        %v3062 = vmul.f32 %v2611, %v3046
        %v3063 = vmul.f32 %v2612, %v3046
        %v3064 = vmul.f32 %v2613, %v3046
        %v3065 = vmul.f32 %v2614, %v3046
        %v3066 = vmul.f32 %v2615, %v3046
        %v3067 = vmul.f32 %v2616, %v3046
        %v3068 = vmul.f32 %v2617, %v3046
        %v3069 = vmul.f32 %v2618, %v3046
        %v3070 = vmul.f32 %v2619, %v3046
        %v3071 = vmul.f32 %v2620, %v3046
        %v3072 = vmul.f32 %v2621, %v3046
        %v3073 = vmul.f32 %v2622, %v3046
        %v3074 = vmul.f32 %v2623, %v3046
        %v3075 = vmul.f32 %v2624, %v3046
        %v3076 = vmul.f32 %v2625, %v3046
        %v3077 = vmul.f32 %v2626, %v3046
        %v3078 = vmul.f32 %v2627, %v3046
        %v3079 = vadd.f32 %v3010, %v3047
        %v3080 = vadd.f32 %v3011, %v3048
        %v3081 = vadd.f32 %v3012, %v3049
        %v3082 = vadd.f32 %v3013, %v3050
        %v3083 = vadd.f32 %v3014, %v3051
        %v3084 = vadd.f32 %v3015, %v3052
        %v3085 = vadd.f32 %v3016, %v3053
        %v3086 = vadd.f32 %v3017, %v3054
        %v3087 = vadd.f32 %v3018, %v3055
        %v3088 = vadd.f32 %v3019, %v3056
        %v3089 = vadd.f32 %v3020, %v3057
        %v3090 = vadd.f32 %v3021, %v3058
        %v3091 = vadd.f32 %v3022, %v3059
        %v3092 = vadd.f32 %v3023, %v3060
        %v3093 = vadd.f32 %v3024, %v3061
        %v3094 = vadd.f32 %v3025, %v3062
        %v3095 = vadd.f32 %v3026, %v3063
        %v3096 = vadd.f32 %v3027, %v3064
        %v3097 = vadd.f32 %v3028, %v3065
        %v3098 = vadd.f32 %v3029, %v3066
        %v3099 = vadd.f32 %v3030, %v3067
        %v3100 = vadd.f32 %v3031, %v3068
        %v3101 = vadd.f32 %v3032, %v3069
        %v3102 = vadd.f32 %v3033, %v3070
        %v3103 = vadd.f32 %v3034, %v3071
        %v3104 = vadd.f32 %v3035, %v3072
        %v3105 = vadd.f32 %v3036, %v3073
        %v3106 = vadd.f32 %v3037, %v3074
        %v3107 = vadd.f32 %v3038, %v3075
        %v3108 = vadd.f32 %v3039, %v3076
        %v3109 = vadd.f32 %v3040, %v3077
        %v3110 = vadd.f32 %v3041, %v3078
        %v3111 = vld [vmem:[#allocation2 + $0x3] sm:$0xff]
        %v3112 = vld [vmem:[#allocation2 + $0xb] sm:$0xff]
        %v3113 = vld [vmem:[#allocation2 + $0x2b] sm:$0xff]
        %v3114 = vld [vmem:[#allocation2 + $0x33] sm:$0xff]
        %v3115 = vld [vmem:[#allocation2 + $0x53] sm:$0xff]
        %v3116 = vld [vmem:[#allocation2 + $0x5b] sm:$0xff]
        %v3117 = vld [vmem:[#allocation2 + $0x7b] sm:$0xff]
        %v3118 = vld [vmem:[#allocation2 + $0x83] sm:$0xff]
        %v3119 = vld [vmem:[#allocation2 + $0xa3] sm:$0xff]
        %v3120 = vld [vmem:[#allocation2 + $0xab] sm:$0xff]
        %v3121 = vld [vmem:[#allocation2 + $0xcb] sm:$0xff]
        %v3122 = vld [vmem:[#allocation2 + $0xd3] sm:$0xff]
        %v3123 = vld [vmem:[#allocation2 + $0xf3] sm:$0xff]
        %v3124 = vld [vmem:[#allocation2 + $0xfb] sm:$0xff]
        %v3125 = vld [vmem:[#allocation2 + $0x11b] sm:$0xff]
        %v3126 = vld [vmem:[#allocation2 + $0x123] sm:$0xff]
        %v3127 = vld [vmem:[#allocation2 + $0x143] sm:$0xff]
        %v3128 = vld [vmem:[#allocation2 + $0x14b] sm:$0xff]
        %v3129 = vld [vmem:[#allocation2 + $0x16b] sm:$0xff]
        %v3130 = vld [vmem:[#allocation2 + $0x173] sm:$0xff]
        %v3131 = vld [vmem:[#allocation2 + $0x193] sm:$0xff]
        %v3132 = vld [vmem:[#allocation2 + $0x19b] sm:$0xff]
        %v3133 = vld [vmem:[#allocation2 + $0x1bb] sm:$0xff]
        %v3134 = vld [vmem:[#allocation2 + $0x1c3] sm:$0xff]
        %v3135 = vld [vmem:[#allocation2 + $0x1e3] sm:$0xff]
        %v3136 = vld [vmem:[#allocation2 + $0x1eb] sm:$0xff]
        %v3137 = vld [vmem:[#allocation2 + $0x20b] sm:$0xff]
        %v3138 = vld [vmem:[#allocation2 + $0x213] sm:$0xff]
        %v3139 = vld [vmem:[#allocation2 + $0x233] sm:$0xff]
        %v3140 = vld [vmem:[#allocation2 + $0x23b] sm:$0xff]
        %v3141 = vld [vmem:[#allocation2 + $0x25b] sm:$0xff]
        %v3142 = vld [vmem:[#allocation2 + $0x263] sm:$0xff]
        %v3143 = vld [vmem:[#allocation2 + $0x283] sm:$0xff]
        %v3144 = vld [vmem:[#allocation2 + $0x28b] sm:$0xff]
        %v3145 = vld [vmem:[#allocation2 + $0x2ab] sm:$0xff]
        %v3146 = vld [vmem:[#allocation2 + $0x2b3] sm:$0xff]
        %v3147 = vld [vmem:[#allocation2 + $0x2d3] sm:$0xff]
        %v3148 = vld [vmem:[#allocation2 + $0x2db] sm:$0xff]
        %v3149 = vld [vmem:[#allocation2 + $0x2fb] sm:$0xff]
        %v3150 = vld [vmem:[#allocation2 + $0x303] sm:$0xff]
        %v3151 = vld [vmem:[#allocation2 + $0x323] sm:$0xff]
        %v3152 = vld [vmem:[#allocation2 + $0x32b] sm:$0xff]
        %v3153 = vld [vmem:[#allocation2 + $0x34b] sm:$0xff]
        %v3154 = vld [vmem:[#allocation2 + $0x353] sm:$0xff]
        %v3155 = vld [vmem:[#allocation2 + $0x373] sm:$0xff]
        %v3156 = vld [vmem:[#allocation2 + $0x37b] sm:$0xff]
        %v3157 = vld [vmem:[#allocation2 + $0x39b] sm:$0xff]
        %v3158 = vld [vmem:[#allocation2 + $0x3a3] sm:$0xff]
        %v3159 = vld [vmem:[#allocation2 + $0x3c3] sm:$0xff]
        %v3160 = vld [vmem:[#allocation2 + $0x3cb] sm:$0xff]
        %v3161 = vld [vmem:[#allocation2 + $0x3eb] sm:$0xff]
        %v3162 = vld [vmem:[#allocation2 + $0x3f3] sm:$0xff]
        %v3163 = vld [vmem:[#allocation2 + $0x413] sm:$0xff]
        %v3164 = vld [vmem:[#allocation2 + $0x41b] sm:$0xff]
        %v3165 = vld [vmem:[#allocation2 + $0x43b] sm:$0xff]
        %v3166 = vld [vmem:[#allocation2 + $0x443] sm:$0xff]
        %v3167 = vld [vmem:[#allocation2 + $0x463] sm:$0xff]
        %v3168 = vld [vmem:[#allocation2 + $0x46b] sm:$0xff]
        %v3169 = vld [vmem:[#allocation2 + $0x48b] sm:$0xff]
        %v3170 = vld [vmem:[#allocation2 + $0x493] sm:$0xff]
        %v3171 = vld [vmem:[#allocation2 + $0x4b3] sm:$0xff]
        %v3172 = vld [vmem:[#allocation2 + $0x4bb] sm:$0xff]
        %v3173 = vld [vmem:[#allocation2 + $0x4db] sm:$0xff]
        %v3174 = vld [vmem:[#allocation2 + $0x4e3] sm:$0xff]
        %v3175 = vld [vmem:[#allocation2 + $0x503] sm:$0xff]
        %v3176 = vld [vmem:[#allocation2 + $0x50b] sm:$0xff]
        %v3177 = vld [vmem:[#allocation2 + $0x52b] sm:$0xff]
        %v3178 = vld [vmem:[#allocation2 + $0x533] sm:$0xff]
        %v3179 = vld [vmem:[%s3 + $0x1] sm:$0x1]
        %v3180 = vlaneseq
        %v3181 = vshrl.u32 %v3180, 7
        %v3182 = vsub.s32 0, %v3181
        %v3183 = vrot.slane %v3179, %v3182
        %v3184 = vmul.f32 %v3111, %v3183
        %v3185 = vmul.f32 %v3112, %v3183
        %v3186 = vmul.f32 %v3113, %v3183
        %v3187 = vmul.f32 %v3114, %v3183
        %v3188 = vmul.f32 %v3115, %v3183
        %v3189 = vmul.f32 %v3116, %v3183
        %v3190 = vmul.f32 %v3117, %v3183
        %v3191 = vmul.f32 %v3118, %v3183
        %v3192 = vmul.f32 %v3119, %v3183
        %v3193 = vmul.f32 %v3120, %v3183
        %v3194 = vmul.f32 %v3121, %v3183
        %v3195 = vmul.f32 %v3122, %v3183
        %v3196 = vmul.f32 %v3123, %v3183
        %v3197 = vmul.f32 %v3124, %v3183
        %v3198 = vmul.f32 %v3125, %v3183
        %v3199 = vmul.f32 %v3126, %v3183
        %v3200 = vmul.f32 %v3127, %v3183
        %v3201 = vmul.f32 %v3128, %v3183
        %v3202 = vmul.f32 %v3129, %v3183
        %v3203 = vmul.f32 %v3130, %v3183
        %v3204 = vmul.f32 %v3131, %v3183
        %v3205 = vmul.f32 %v3132, %v3183
        %v3206 = vmul.f32 %v3133, %v3183
        %v3207 = vmul.f32 %v3134, %v3183
        %v3208 = vmul.f32 %v3135, %v3183
        %v3209 = vmul.f32 %v3136, %v3183
        %v3210 = vmul.f32 %v3137, %v3183
        %v3211 = vmul.f32 %v3138, %v3183
        %v3212 = vmul.f32 %v3139, %v3183
        %v3213 = vmul.f32 %v3140, %v3183
        %v3214 = vmul.f32 %v3141, %v3183
        %v3215 = vmul.f32 %v3142, %v3183
        %v3216 = vadd.f32 %v3079, %v3184
        %v3217 = vadd.f32 %v3080, %v3185
        %v3218 = vadd.f32 %v3081, %v3186
        %v3219 = vadd.f32 %v3082, %v3187
        %v3220 = vadd.f32 %v3083, %v3188
        %v3221 = vadd.f32 %v3084, %v3189
        %v3222 = vadd.f32 %v3085, %v3190
        %v3223 = vadd.f32 %v3086, %v3191
        %v3224 = vadd.f32 %v3087, %v3192
        %v3225 = vadd.f32 %v3088, %v3193
        %v3226 = vadd.f32 %v3089, %v3194
        %v3227 = vadd.f32 %v3090, %v3195
        %v3228 = vadd.f32 %v3091, %v3196
        %v3229 = vadd.f32 %v3092, %v3197
        %v3230 = vadd.f32 %v3093, %v3198
        %v3231 = vadd.f32 %v3094, %v3199
        %v3232 = vadd.f32 %v3095, %v3200
        %v3233 = vadd.f32 %v3096, %v3201
        %v3234 = vadd.f32 %v3097, %v3202
        %v3235 = vadd.f32 %v3098, %v3203
        %v3236 = vadd.f32 %v3099, %v3204
        %v3237 = vadd.f32 %v3100, %v3205
        %v3238 = vadd.f32 %v3101, %v3206
        %v3239 = vadd.f32 %v3102, %v3207
        %v3240 = vadd.f32 %v3103, %v3208
        %v3241 = vadd.f32 %v3104, %v3209
        %v3242 = vadd.f32 %v3105, %v3210
        %v3243 = vadd.f32 %v3106, %v3211
        %v3244 = vadd.f32 %v3107, %v3212
        %v3245 = vadd.f32 %v3108, %v3213
        %v3246 = vadd.f32 %v3109, %v3214
        %v3247 = vadd.f32 %v3110, %v3215
        %v3248 = vld [vmem:[%s3 + $0x8] sm:$0x1]
        %v3249 = vlaneseq
        %v3250 = vshrl.u32 %v3249, 7
        %v3251 = vsub.s32 0, %v3250
        %v3252 = vrot.slane %v3248, %v3251
        %v3253 = vmul.f32 %v3117, %v3252
        %v3254 = vmul.f32 %v3118, %v3252
        %v3255 = vmul.f32 %v3119, %v3252
        %v3256 = vmul.f32 %v3120, %v3252
        %v3257 = vmul.f32 %v3121, %v3252
        %v3258 = vmul.f32 %v3122, %v3252
        %v3259 = vmul.f32 %v3123, %v3252
        %v3260 = vmul.f32 %v3124, %v3252
        %v3261 = vmul.f32 %v3125, %v3252
        %v3262 = vmul.f32 %v3126, %v3252
        %v3263 = vmul.f32 %v3127, %v3252
        %v3264 = vmul.f32 %v3128, %v3252
        %v3265 = vmul.f32 %v3129, %v3252
        %v3266 = vmul.f32 %v3130, %v3252
        %v3267 = vmul.f32 %v3131, %v3252
        %v3268 = vmul.f32 %v3132, %v3252
        %v3269 = vmul.f32 %v3133, %v3252
        %v3270 = vmul.f32 %v3134, %v3252
        %v3271 = vmul.f32 %v3135, %v3252
        %v3272 = vmul.f32 %v3136, %v3252
        %v3273 = vmul.f32 %v3137, %v3252
        %v3274 = vmul.f32 %v3138, %v3252
        %v3275 = vmul.f32 %v3139, %v3252
        %v3276 = vmul.f32 %v3140, %v3252
        %v3277 = vmul.f32 %v3141, %v3252
        %v3278 = vmul.f32 %v3142, %v3252
        %v3279 = vmul.f32 %v3143, %v3252
        %v3280 = vmul.f32 %v3144, %v3252
        %v3281 = vmul.f32 %v3145, %v3252
        %v3282 = vmul.f32 %v3146, %v3252
        %v3283 = vmul.f32 %v3147, %v3252
        %v3284 = vmul.f32 %v3148, %v3252
        %v3285 = vadd.f32 %v3216, %v3253
        %v3286 = vadd.f32 %v3217, %v3254
        %v3287 = vadd.f32 %v3218, %v3255
        %v3288 = vadd.f32 %v3219, %v3256
        %v3289 = vadd.f32 %v3220, %v3257
        %v3290 = vadd.f32 %v3221, %v3258
        %v3291 = vadd.f32 %v3222, %v3259
        %v3292 = vadd.f32 %v3223, %v3260
        %v3293 = vadd.f32 %v3224, %v3261
        %v3294 = vadd.f32 %v3225, %v3262
        %v3295 = vadd.f32 %v3226, %v3263
        %v3296 = vadd.f32 %v3227, %v3264
        %v3297 = vadd.f32 %v3228, %v3265
        %v3298 = vadd.f32 %v3229, %v3266
        %v3299 = vadd.f32 %v3230, %v3267
        %v3300 = vadd.f32 %v3231, %v3268
        %v3301 = vadd.f32 %v3232, %v3269
        %v3302 = vadd.f32 %v3233, %v3270
        %v3303 = vadd.f32 %v3234, %v3271
        %v3304 = vadd.f32 %v3235, %v3272
        %v3305 = vadd.f32 %v3236, %v3273
        %v3306 = vadd.f32 %v3237, %v3274
        %v3307 = vadd.f32 %v3238, %v3275
        %v3308 = vadd.f32 %v3239, %v3276
        %v3309 = vadd.f32 %v3240, %v3277
        %v3310 = vadd.f32 %v3241, %v3278
        %v3311 = vadd.f32 %v3242, %v3279
        %v3312 = vadd.f32 %v3243, %v3280
        %v3313 = vadd.f32 %v3244, %v3281
        %v3314 = vadd.f32 %v3245, %v3282
        %v3315 = vadd.f32 %v3246, %v3283
        %v3316 = vadd.f32 %v3247, %v3284
        %v3317 = vld [vmem:[%s3 + $0xf] sm:$0x1]
        %v3318 = vlaneseq
        %v3319 = vshrl.u32 %v3318, 7
        %v3320 = vsub.s32 0, %v3319
        %v3321 = vrot.slane %v3317, %v3320
        %v3322 = vmul.f32 %v3123, %v3321
        %v3323 = vmul.f32 %v3124, %v3321
        %v3324 = vmul.f32 %v3125, %v3321
        %v3325 = vmul.f32 %v3126, %v3321
        %v3326 = vmul.f32 %v3127, %v3321
        %v3327 = vmul.f32 %v3128, %v3321
        %v3328 = vmul.f32 %v3129, %v3321
        %v3329 = vmul.f32 %v3130, %v3321
        %v3330 = vmul.f32 %v3131, %v3321
        %v3331 = vmul.f32 %v3132, %v3321
        %v3332 = vmul.f32 %v3133, %v3321
        %v3333 = vmul.f32 %v3134, %v3321
        %v3334 = vmul.f32 %v3135, %v3321
        %v3335 = vmul.f32 %v3136, %v3321
        %v3336 = vmul.f32 %v3137, %v3321
        %v3337 = vmul.f32 %v3138, %v3321
        %v3338 = vmul.f32 %v3139, %v3321
        %v3339 = vmul.f32 %v3140, %v3321
        %v3340 = vmul.f32 %v3141, %v3321
        %v3341 = vmul.f32 %v3142, %v3321
        %v3342 = vmul.f32 %v3143, %v3321
        %v3343 = vmul.f32 %v3144, %v3321
        %v3344 = vmul.f32 %v3145, %v3321
        %v3345 = vmul.f32 %v3146, %v3321
        %v3346 = vmul.f32 %v3147, %v3321
        %v3347 = vmul.f32 %v3148, %v3321
        %v3348 = vmul.f32 %v3149, %v3321
        %v3349 = vmul.f32 %v3150, %v3321
        %v3350 = vmul.f32 %v3151, %v3321
        %v3351 = vmul.f32 %v3152, %v3321
        %v3352 = vmul.f32 %v3153, %v3321
        %v3353 = vmul.f32 %v3154, %v3321
        %v3354 = vadd.f32 %v3285, %v3322
        %v3355 = vadd.f32 %v3286, %v3323
        %v3356 = vadd.f32 %v3287, %v3324
        %v3357 = vadd.f32 %v3288, %v3325
        %v3358 = vadd.f32 %v3289, %v3326
        %v3359 = vadd.f32 %v3290, %v3327
        %v3360 = vadd.f32 %v3291, %v3328
        %v3361 = vadd.f32 %v3292, %v3329
        %v3362 = vadd.f32 %v3293, %v3330
        %v3363 = vadd.f32 %v3294, %v3331
        %v3364 = vadd.f32 %v3295, %v3332
        %v3365 = vadd.f32 %v3296, %v3333
        %v3366 = vadd.f32 %v3297, %v3334
        %v3367 = vadd.f32 %v3298, %v3335
        %v3368 = vadd.f32 %v3299, %v3336
        %v3369 = vadd.f32 %v3300, %v3337
        %v3370 = vadd.f32 %v3301, %v3338
        %v3371 = vadd.f32 %v3302, %v3339
        %v3372 = vadd.f32 %v3303, %v3340
        %v3373 = vadd.f32 %v3304, %v3341
        %v3374 = vadd.f32 %v3305, %v3342
        %v3375 = vadd.f32 %v3306, %v3343
        %v3376 = vadd.f32 %v3307, %v3344
        %v3377 = vadd.f32 %v3308, %v3345
        %v3378 = vadd.f32 %v3309, %v3346
        %v3379 = vadd.f32 %v3310, %v3347
        %v3380 = vadd.f32 %v3311, %v3348
        %v3381 = vadd.f32 %v3312, %v3349
        %v3382 = vadd.f32 %v3313, %v3350
        %v3383 = vadd.f32 %v3314, %v3351
        %v3384 = vadd.f32 %v3315, %v3352
        %v3385 = vadd.f32 %v3316, %v3353
        %v3386 = vld [vmem:[%s3 + $0x16] sm:$0x1]
        %v3387 = vlaneseq
        %v3388 = vshrl.u32 %v3387, 7
        %v3389 = vsub.s32 0, %v3388
        %v3390 = vrot.slane %v3386, %v3389
        %v3391 = vmul.f32 %v3129, %v3390
        %v3392 = vmul.f32 %v3130, %v3390
        %v3393 = vmul.f32 %v3131, %v3390
        %v3394 = vmul.f32 %v3132, %v3390
        %v3395 = vmul.f32 %v3133, %v3390
        %v3396 = vmul.f32 %v3134, %v3390
        %v3397 = vmul.f32 %v3135, %v3390
        %v3398 = vmul.f32 %v3136, %v3390
        %v3399 = vmul.f32 %v3137, %v3390
        %v3400 = vmul.f32 %v3138, %v3390
        %v3401 = vmul.f32 %v3139, %v3390
        %v3402 = vmul.f32 %v3140, %v3390
        %v3403 = vmul.f32 %v3141, %v3390
        %v3404 = vmul.f32 %v3142, %v3390
        %v3405 = vmul.f32 %v3143, %v3390
        %v3406 = vmul.f32 %v3144, %v3390
        %v3407 = vmul.f32 %v3145, %v3390
        %v3408 = vmul.f32 %v3146, %v3390
        %v3409 = vmul.f32 %v3147, %v3390
        %v3410 = vmul.f32 %v3148, %v3390
        %v3411 = vmul.f32 %v3149, %v3390
        %v3412 = vmul.f32 %v3150, %v3390
        %v3413 = vmul.f32 %v3151, %v3390
        %v3414 = vmul.f32 %v3152, %v3390
        %v3415 = vmul.f32 %v3153, %v3390
        %v3416 = vmul.f32 %v3154, %v3390
        %v3417 = vmul.f32 %v3155, %v3390
        %v3418 = vmul.f32 %v3156, %v3390
        %v3419 = vmul.f32 %v3157, %v3390
        %v3420 = vmul.f32 %v3158, %v3390
        %v3421 = vmul.f32 %v3159, %v3390
        %v3422 = vmul.f32 %v3160, %v3390
        %v3423 = vadd.f32 %v3354, %v3391
        %v3424 = vadd.f32 %v3355, %v3392
        %v3425 = vadd.f32 %v3356, %v3393
        %v3426 = vadd.f32 %v3357, %v3394
        %v3427 = vadd.f32 %v3358, %v3395
        %v3428 = vadd.f32 %v3359, %v3396
        %v3429 = vadd.f32 %v3360, %v3397
        %v3430 = vadd.f32 %v3361, %v3398
        %v3431 = vadd.f32 %v3362, %v3399
        %v3432 = vadd.f32 %v3363, %v3400
        %v3433 = vadd.f32 %v3364, %v3401
        %v3434 = vadd.f32 %v3365, %v3402
        %v3435 = vadd.f32 %v3366, %v3403
        %v3436 = vadd.f32 %v3367, %v3404
        %v3437 = vadd.f32 %v3368, %v3405
        %v3438 = vadd.f32 %v3369, %v3406
        %v3439 = vadd.f32 %v3370, %v3407
        %v3440 = vadd.f32 %v3371, %v3408
        %v3441 = vadd.f32 %v3372, %v3409
        %v3442 = vadd.f32 %v3373, %v3410
        %v3443 = vadd.f32 %v3374, %v3411
        %v3444 = vadd.f32 %v3375, %v3412
        %v3445 = vadd.f32 %v3376, %v3413
        %v3446 = vadd.f32 %v3377, %v3414
        %v3447 = vadd.f32 %v3378, %v3415
        %v3448 = vadd.f32 %v3379, %v3416
        %v3449 = vadd.f32 %v3380, %v3417
        %v3450 = vadd.f32 %v3381, %v3418
        %v3451 = vadd.f32 %v3382, %v3419
        %v3452 = vadd.f32 %v3383, %v3420
        %v3453 = vadd.f32 %v3384, %v3421
        %v3454 = vadd.f32 %v3385, %v3422
        %v3455 = vld [vmem:[%s3 + $0x1d] sm:$0x1]
        %v3456 = vlaneseq
        %v3457 = vshrl.u32 %v3456, 7
        %v3458 = vsub.s32 0, %v3457
        %v3459 = vrot.slane %v3455, %v3458
        %v3460 = vmul.f32 %v3135, %v3459
        %v3461 = vmul.f32 %v3136, %v3459
        %v3462 = vmul.f32 %v3137, %v3459
        %v3463 = vmul.f32 %v3138, %v3459
        %v3464 = vmul.f32 %v3139, %v3459
        %v3465 = vmul.f32 %v3140, %v3459
        %v3466 = vmul.f32 %v3141, %v3459
        %v3467 = vmul.f32 %v3142, %v3459
        %v3468 = vmul.f32 %v3143, %v3459
        %v3469 = vmul.f32 %v3144, %v3459
        %v3470 = vmul.f32 %v3145, %v3459
        %v3471 = vmul.f32 %v3146, %v3459
        %v3472 = vmul.f32 %v3147, %v3459
        %v3473 = vmul.f32 %v3148, %v3459
        %v3474 = vmul.f32 %v3149, %v3459
        %v3475 = vmul.f32 %v3150, %v3459
        %v3476 = vmul.f32 %v3151, %v3459
        %v3477 = vmul.f32 %v3152, %v3459
        %v3478 = vmul.f32 %v3153, %v3459
        %v3479 = vmul.f32 %v3154, %v3459
        %v3480 = vmul.f32 %v3155, %v3459
        %v3481 = vmul.f32 %v3156, %v3459
        %v3482 = vmul.f32 %v3157, %v3459
        %v3483 = vmul.f32 %v3158, %v3459
        %v3484 = vmul.f32 %v3159, %v3459
        %v3485 = vmul.f32 %v3160, %v3459
        %v3486 = vmul.f32 %v3161, %v3459
        %v3487 = vmul.f32 %v3162, %v3459
        %v3488 = vmul.f32 %v3163, %v3459
        %v3489 = vmul.f32 %v3164, %v3459
        %v3490 = vmul.f32 %v3165, %v3459
        %v3491 = vmul.f32 %v3166, %v3459
        %v3492 = vadd.f32 %v3423, %v3460
        %v3493 = vadd.f32 %v3424, %v3461
        %v3494 = vadd.f32 %v3425, %v3462
        %v3495 = vadd.f32 %v3426, %v3463
        %v3496 = vadd.f32 %v3427, %v3464
        %v3497 = vadd.f32 %v3428, %v3465
        %v3498 = vadd.f32 %v3429, %v3466
        %v3499 = vadd.f32 %v3430, %v3467
        %v3500 = vadd.f32 %v3431, %v3468
        %v3501 = vadd.f32 %v3432, %v3469
        %v3502 = vadd.f32 %v3433, %v3470
        %v3503 = vadd.f32 %v3434, %v3471
        %v3504 = vadd.f32 %v3435, %v3472
        %v3505 = vadd.f32 %v3436, %v3473
        %v3506 = vadd.f32 %v3437, %v3474
        %v3507 = vadd.f32 %v3438, %v3475
        %v3508 = vadd.f32 %v3439, %v3476
        %v3509 = vadd.f32 %v3440, %v3477
        %v3510 = vadd.f32 %v3441, %v3478
        %v3511 = vadd.f32 %v3442, %v3479
        %v3512 = vadd.f32 %v3443, %v3480
        %v3513 = vadd.f32 %v3444, %v3481
        %v3514 = vadd.f32 %v3445, %v3482
        %v3515 = vadd.f32 %v3446, %v3483
        %v3516 = vadd.f32 %v3447, %v3484
        %v3517 = vadd.f32 %v3448, %v3485
        %v3518 = vadd.f32 %v3449, %v3486
        %v3519 = vadd.f32 %v3450, %v3487
        %v3520 = vadd.f32 %v3451, %v3488
        %v3521 = vadd.f32 %v3452, %v3489
        %v3522 = vadd.f32 %v3453, %v3490
        %v3523 = vadd.f32 %v3454, %v3491
        %v3524 = vld [vmem:[%s3 + $0x24] sm:$0x1]
        %v3525 = vlaneseq
        %v3526 = vshrl.u32 %v3525, 7
        %v3527 = vsub.s32 0, %v3526
        %v3528 = vrot.slane %v3524, %v3527
        %v3529 = vmul.f32 %v3141, %v3528
        %v3530 = vmul.f32 %v3142, %v3528
        %v3531 = vmul.f32 %v3143, %v3528
        %v3532 = vmul.f32 %v3144, %v3528
        %v3533 = vmul.f32 %v3145, %v3528
        %v3534 = vmul.f32 %v3146, %v3528
        %v3535 = vmul.f32 %v3147, %v3528
        %v3536 = vmul.f32 %v3148, %v3528
        %v3537 = vmul.f32 %v3149, %v3528
        %v3538 = vmul.f32 %v3150, %v3528
        %v3539 = vmul.f32 %v3151, %v3528
        %v3540 = vmul.f32 %v3152, %v3528
        %v3541 = vmul.f32 %v3153, %v3528
        %v3542 = vmul.f32 %v3154, %v3528
        %v3543 = vmul.f32 %v3155, %v3528
        %v3544 = vmul.f32 %v3156, %v3528
        %v3545 = vmul.f32 %v3157, %v3528
        %v3546 = vmul.f32 %v3158, %v3528
        %v3547 = vmul.f32 %v3159, %v3528
        %v3548 = vmul.f32 %v3160, %v3528
        %v3549 = vmul.f32 %v3161, %v3528
        %v3550 = vmul.f32 %v3162, %v3528
        %v3551 = vmul.f32 %v3163, %v3528
        %v3552 = vmul.f32 %v3164, %v3528
        %v3553 = vmul.f32 %v3165, %v3528
        %v3554 = vmul.f32 %v3166, %v3528
        %v3555 = vmul.f32 %v3167, %v3528
        %v3556 = vmul.f32 %v3168, %v3528
        %v3557 = vmul.f32 %v3169, %v3528
        %v3558 = vmul.f32 %v3170, %v3528
        %v3559 = vmul.f32 %v3171, %v3528
        %v3560 = vmul.f32 %v3172, %v3528
        %v3561 = vadd.f32 %v3492, %v3529
        %v3562 = vadd.f32 %v3493, %v3530
        %v3563 = vadd.f32 %v3494, %v3531
        %v3564 = vadd.f32 %v3495, %v3532
        %v3565 = vadd.f32 %v3496, %v3533
        %v3566 = vadd.f32 %v3497, %v3534
        %v3567 = vadd.f32 %v3498, %v3535
        %v3568 = vadd.f32 %v3499, %v3536
        %v3569 = vadd.f32 %v3500, %v3537
        %v3570 = vadd.f32 %v3501, %v3538
        %v3571 = vadd.f32 %v3502, %v3539
        %v3572 = vadd.f32 %v3503, %v3540
        %v3573 = vadd.f32 %v3504, %v3541
        %v3574 = vadd.f32 %v3505, %v3542
        %v3575 = vadd.f32 %v3506, %v3543
        %v3576 = vadd.f32 %v3507, %v3544
        %v3577 = vadd.f32 %v3508, %v3545
        %v3578 = vadd.f32 %v3509, %v3546
        %v3579 = vadd.f32 %v3510, %v3547
        %v3580 = vadd.f32 %v3511, %v3548
        %v3581 = vadd.f32 %v3512, %v3549
        %v3582 = vadd.f32 %v3513, %v3550
        %v3583 = vadd.f32 %v3514, %v3551
        %v3584 = vadd.f32 %v3515, %v3552
        %v3585 = vadd.f32 %v3516, %v3553
        %v3586 = vadd.f32 %v3517, %v3554
        %v3587 = vadd.f32 %v3518, %v3555
        %v3588 = vadd.f32 %v3519, %v3556
        %v3589 = vadd.f32 %v3520, %v3557
        %v3590 = vadd.f32 %v3521, %v3558
        %v3591 = vadd.f32 %v3522, %v3559
        %v3592 = vadd.f32 %v3523, %v3560
        %v3593 = vld [vmem:[%s3 + $0x2b] sm:$0x1]
        %v3594 = vlaneseq
        %v3595 = vshrl.u32 %v3594, 7
        %v3596 = vsub.s32 0, %v3595
        %v3597 = vrot.slane %v3593, %v3596
        %v3598 = vmul.f32 %v3147, %v3597
        %v3599 = vmul.f32 %v3148, %v3597
        %v3600 = vmul.f32 %v3149, %v3597
        %v3601 = vmul.f32 %v3150, %v3597
        %v3602 = vmul.f32 %v3151, %v3597
        %v3603 = vmul.f32 %v3152, %v3597
        %v3604 = vmul.f32 %v3153, %v3597
        %v3605 = vmul.f32 %v3154, %v3597
        %v3606 = vmul.f32 %v3155, %v3597
        %v3607 = vmul.f32 %v3156, %v3597
        %v3608 = vmul.f32 %v3157, %v3597
        %v3609 = vmul.f32 %v3158, %v3597
        %v3610 = vmul.f32 %v3159, %v3597
        %v3611 = vmul.f32 %v3160, %v3597
        %v3612 = vmul.f32 %v3161, %v3597
        %v3613 = vmul.f32 %v3162, %v3597
        %v3614 = vmul.f32 %v3163, %v3597
        %v3615 = vmul.f32 %v3164, %v3597
        %v3616 = vmul.f32 %v3165, %v3597
        %v3617 = vmul.f32 %v3166, %v3597
        %v3618 = vmul.f32 %v3167, %v3597
        %v3619 = vmul.f32 %v3168, %v3597
        %v3620 = vmul.f32 %v3169, %v3597
        %v3621 = vmul.f32 %v3170, %v3597
        %v3622 = vmul.f32 %v3171, %v3597
        %v3623 = vmul.f32 %v3172, %v3597
        %v3624 = vmul.f32 %v3173, %v3597
        %v3625 = vmul.f32 %v3174, %v3597
        %v3626 = vmul.f32 %v3175, %v3597
        %v3627 = vmul.f32 %v3176, %v3597
        %v3628 = vmul.f32 %v3177, %v3597
        %v3629 = vmul.f32 %v3178, %v3597
        %v3630 = vadd.f32 %v3561, %v3598
        %v3631 = vadd.f32 %v3562, %v3599
        %v3632 = vadd.f32 %v3563, %v3600
        %v3633 = vadd.f32 %v3564, %v3601
        %v3634 = vadd.f32 %v3565, %v3602
        %v3635 = vadd.f32 %v3566, %v3603
        %v3636 = vadd.f32 %v3567, %v3604
        %v3637 = vadd.f32 %v3568, %v3605
        %v3638 = vadd.f32 %v3569, %v3606
        %v3639 = vadd.f32 %v3570, %v3607
        %v3640 = vadd.f32 %v3571, %v3608
        %v3641 = vadd.f32 %v3572, %v3609
        %v3642 = vadd.f32 %v3573, %v3610
        %v3643 = vadd.f32 %v3574, %v3611
        %v3644 = vadd.f32 %v3575, %v3612
        %v3645 = vadd.f32 %v3576, %v3613
        %v3646 = vadd.f32 %v3577, %v3614
        %v3647 = vadd.f32 %v3578, %v3615
        %v3648 = vadd.f32 %v3579, %v3616
        %v3649 = vadd.f32 %v3580, %v3617
        %v3650 = vadd.f32 %v3581, %v3618
        %v3651 = vadd.f32 %v3582, %v3619
        %v3652 = vadd.f32 %v3583, %v3620
        %v3653 = vadd.f32 %v3584, %v3621
        %v3654 = vadd.f32 %v3585, %v3622
        %v3655 = vadd.f32 %v3586, %v3623
        %v3656 = vadd.f32 %v3587, %v3624
        %v3657 = vadd.f32 %v3588, %v3625
        %v3658 = vadd.f32 %v3589, %v3626
        %v3659 = vadd.f32 %v3590, %v3627
        %v3660 = vadd.f32 %v3591, %v3628
        %v3661 = vadd.f32 %v3592, %v3629
        %v3662 = vld [vmem:[#allocation2 + $0x6] sm:$0xff]
        %v3663 = vld [vmem:[#allocation2 + $0xe] sm:$0xff]
        %v3664 = vld [vmem:[#allocation2 + $0x2e] sm:$0xff]
        %v3665 = vld [vmem:[#allocation2 + $0x36] sm:$0xff]
        %v3666 = vld [vmem:[#allocation2 + $0x56] sm:$0xff]
        %v3667 = vld [vmem:[#allocation2 + $0x5e] sm:$0xff]
        %v3668 = vld [vmem:[#allocation2 + $0x7e] sm:$0xff]
        %v3669 = vld [vmem:[#allocation2 + $0x86] sm:$0xff]
        %v3670 = vld [vmem:[#allocation2 + $0xa6] sm:$0xff]
        %v3671 = vld [vmem:[#allocation2 + $0xae] sm:$0xff]
        %v3672 = vld [vmem:[#allocation2 + $0xce] sm:$0xff]
        %v3673 = vld [vmem:[#allocation2 + $0xd6] sm:$0xff]
        %v3674 = vld [vmem:[#allocation2 + $0xf6] sm:$0xff]
        %v3675 = vld [vmem:[#allocation2 + $0xfe] sm:$0xff]
        %v3676 = vld [vmem:[#allocation2 + $0x11e] sm:$0xff]
        %v3677 = vld [vmem:[#allocation2 + $0x126] sm:$0xff]
        %v3678 = vld [vmem:[#allocation2 + $0x146] sm:$0xff]
        %v3679 = vld [vmem:[#allocation2 + $0x14e] sm:$0xff]
        %v3680 = vld [vmem:[#allocation2 + $0x16e] sm:$0xff]
        %v3681 = vld [vmem:[#allocation2 + $0x176] sm:$0xff]
        %v3682 = vld [vmem:[#allocation2 + $0x196] sm:$0xff]
        %v3683 = vld [vmem:[#allocation2 + $0x19e] sm:$0xff]
        %v3684 = vld [vmem:[#allocation2 + $0x1be] sm:$0xff]
        %v3685 = vld [vmem:[#allocation2 + $0x1c6] sm:$0xff]
        %v3686 = vld [vmem:[#allocation2 + $0x1e6] sm:$0xff]
        %v3687 = vld [vmem:[#allocation2 + $0x1ee] sm:$0xff]
        %v3688 = vld [vmem:[#allocation2 + $0x20e] sm:$0xff]
        %v3689 = vld [vmem:[#allocation2 + $0x216] sm:$0xff]
        %v3690 = vld [vmem:[#allocation2 + $0x236] sm:$0xff]
        %v3691 = vld [vmem:[#allocation2 + $0x23e] sm:$0xff]
        %v3692 = vld [vmem:[#allocation2 + $0x25e] sm:$0xff]
        %v3693 = vld [vmem:[#allocation2 + $0x266] sm:$0xff]
        %v3694 = vld [vmem:[#allocation2 + $0x286] sm:$0xff]
        %v3695 = vld [vmem:[#allocation2 + $0x28e] sm:$0xff]
        %v3696 = vld [vmem:[#allocation2 + $0x2ae] sm:$0xff]
        %v3697 = vld [vmem:[#allocation2 + $0x2b6] sm:$0xff]
        %v3698 = vld [vmem:[#allocation2 + $0x2d6] sm:$0xff]
        %v3699 = vld [vmem:[#allocation2 + $0x2de] sm:$0xff]
        %v3700 = vld [vmem:[#allocation2 + $0x2fe] sm:$0xff]
        %v3701 = vld [vmem:[#allocation2 + $0x306] sm:$0xff]
        %v3702 = vld [vmem:[#allocation2 + $0x326] sm:$0xff]
        %v3703 = vld [vmem:[#allocation2 + $0x32e] sm:$0xff]
        %v3704 = vld [vmem:[#allocation2 + $0x34e] sm:$0xff]
        %v3705 = vld [vmem:[#allocation2 + $0x356] sm:$0xff]
        %v3706 = vld [vmem:[#allocation2 + $0x376] sm:$0xff]
        %v3707 = vld [vmem:[#allocation2 + $0x37e] sm:$0xff]
        %v3708 = vld [vmem:[#allocation2 + $0x39e] sm:$0xff]
        %v3709 = vld [vmem:[#allocation2 + $0x3a6] sm:$0xff]
        %v3710 = vld [vmem:[#allocation2 + $0x3c6] sm:$0xff]
        %v3711 = vld [vmem:[#allocation2 + $0x3ce] sm:$0xff]
        %v3712 = vld [vmem:[#allocation2 + $0x3ee] sm:$0xff]
        %v3713 = vld [vmem:[#allocation2 + $0x3f6] sm:$0xff]
        %v3714 = vld [vmem:[#allocation2 + $0x416] sm:$0xff]
        %v3715 = vld [vmem:[#allocation2 + $0x41e] sm:$0xff]
        %v3716 = vld [vmem:[#allocation2 + $0x43e] sm:$0xff]
        %v3717 = vld [vmem:[#allocation2 + $0x446] sm:$0xff]
        %v3718 = vld [vmem:[#allocation2 + $0x466] sm:$0xff]
        %v3719 = vld [vmem:[#allocation2 + $0x46e] sm:$0xff]
        %v3720 = vld [vmem:[#allocation2 + $0x48e] sm:$0xff]
        %v3721 = vld [vmem:[#allocation2 + $0x496] sm:$0xff]
        %v3722 = vld [vmem:[#allocation2 + $0x4b6] sm:$0xff]
        %v3723 = vld [vmem:[#allocation2 + $0x4be] sm:$0xff]
        %v3724 = vld [vmem:[#allocation2 + $0x4de] sm:$0xff]
        %v3725 = vld [vmem:[#allocation2 + $0x4e6] sm:$0xff]
        %v3726 = vld [vmem:[#allocation2 + $0x506] sm:$0xff]
        %v3727 = vld [vmem:[#allocation2 + $0x50e] sm:$0xff]
        %v3728 = vld [vmem:[#allocation2 + $0x52e] sm:$0xff]
        %v3729 = vld [vmem:[#allocation2 + $0x536] sm:$0xff]
        %v3730 = vld [vmem:[%s3 + $0x2] sm:$0x1]
        %v3731 = vlaneseq
        %v3732 = vshrl.u32 %v3731, 7
        %v3733 = vsub.s32 0, %v3732
        %v3734 = vrot.slane %v3730, %v3733
        %v3735 = vmul.f32 %v3662, %v3734
        %v3736 = vmul.f32 %v3663, %v3734
        %v3737 = vmul.f32 %v3664, %v3734
        %v3738 = vmul.f32 %v3665, %v3734
        %v3739 = vmul.f32 %v3666, %v3734
        %v3740 = vmul.f32 %v3667, %v3734
        %v3741 = vmul.f32 %v3668, %v3734
        %v3742 = vmul.f32 %v3669, %v3734
        %v3743 = vmul.f32 %v3670, %v3734
        %v3744 = vmul.f32 %v3671, %v3734
        %v3745 = vmul.f32 %v3672, %v3734
        %v3746 = vmul.f32 %v3673, %v3734
        %v3747 = vmul.f32 %v3674, %v3734
        %v3748 = vmul.f32 %v3675, %v3734
        %v3749 = vmul.f32 %v3676, %v3734
        %v3750 = vmul.f32 %v3677, %v3734
        %v3751 = vmul.f32 %v3678, %v3734
        %v3752 = vmul.f32 %v3679, %v3734
        %v3753 = vmul.f32 %v3680, %v3734
        %v3754 = vmul.f32 %v3681, %v3734
        %v3755 = vmul.f32 %v3682, %v3734
        %v3756 = vmul.f32 %v3683, %v3734
        %v3757 = vmul.f32 %v3684, %v3734
        %v3758 = vmul.f32 %v3685, %v3734
        %v3759 = vmul.f32 %v3686, %v3734
        %v3760 = vmul.f32 %v3687, %v3734
        %v3761 = vmul.f32 %v3688, %v3734
        %v3762 = vmul.f32 %v3689, %v3734
        %v3763 = vmul.f32 %v3690, %v3734
        %v3764 = vmul.f32 %v3691, %v3734
        %v3765 = vmul.f32 %v3692, %v3734
        %v3766 = vmul.f32 %v3693, %v3734
        %v3767 = vadd.f32 %v3630, %v3735
        %v3768 = vadd.f32 %v3631, %v3736
        %v3769 = vadd.f32 %v3632, %v3737
        %v3770 = vadd.f32 %v3633, %v3738
        %v3771 = vadd.f32 %v3634, %v3739
        %v3772 = vadd.f32 %v3635, %v3740
        %v3773 = vadd.f32 %v3636, %v3741
        %v3774 = vadd.f32 %v3637, %v3742
        %v3775 = vadd.f32 %v3638, %v3743
        %v3776 = vadd.f32 %v3639, %v3744
        %v3777 = vadd.f32 %v3640, %v3745
        %v3778 = vadd.f32 %v3641, %v3746
        %v3779 = vadd.f32 %v3642, %v3747
        %v3780 = vadd.f32 %v3643, %v3748
        %v3781 = vadd.f32 %v3644, %v3749
        %v3782 = vadd.f32 %v3645, %v3750
        %v3783 = vadd.f32 %v3646, %v3751
        %v3784 = vadd.f32 %v3647, %v3752
        %v3785 = vadd.f32 %v3648, %v3753
        %v3786 = vadd.f32 %v3649, %v3754
        %v3787 = vadd.f32 %v3650, %v3755
        %v3788 = vadd.f32 %v3651, %v3756
        %v3789 = vadd.f32 %v3652, %v3757
        %v3790 = vadd.f32 %v3653, %v3758
        %v3791 = vadd.f32 %v3654, %v3759
        %v3792 = vadd.f32 %v3655, %v3760
        %v3793 = vadd.f32 %v3656, %v3761
        %v3794 = vadd.f32 %v3657, %v3762
        %v3795 = vadd.f32 %v3658, %v3763
        %v3796 = vadd.f32 %v3659, %v3764
        %v3797 = vadd.f32 %v3660, %v3765
        %v3798 = vadd.f32 %v3661, %v3766
        %v3799 = vld [vmem:[%s3 + $0x9] sm:$0x1]
        %v3800 = vlaneseq
        %v3801 = vshrl.u32 %v3800, 7
        %v3802 = vsub.s32 0, %v3801
        %v3803 = vrot.slane %v3799, %v3802
        %v3804 = vmul.f32 %v3668, %v3803
        %v3805 = vmul.f32 %v3669, %v3803
        %v3806 = vmul.f32 %v3670, %v3803
        %v3807 = vmul.f32 %v3671, %v3803
        %v3808 = vmul.f32 %v3672, %v3803
        %v3809 = vmul.f32 %v3673, %v3803
        %v3810 = vmul.f32 %v3674, %v3803
        %v3811 = vmul.f32 %v3675, %v3803
        %v3812 = vmul.f32 %v3676, %v3803
        %v3813 = vmul.f32 %v3677, %v3803
        %v3814 = vmul.f32 %v3678, %v3803
        %v3815 = vmul.f32 %v3679, %v3803
        %v3816 = vmul.f32 %v3680, %v3803
        %v3817 = vmul.f32 %v3681, %v3803
        %v3818 = vmul.f32 %v3682, %v3803
        %v3819 = vmul.f32 %v3683, %v3803
        %v3820 = vmul.f32 %v3684, %v3803
        %v3821 = vmul.f32 %v3685, %v3803
        %v3822 = vmul.f32 %v3686, %v3803
        %v3823 = vmul.f32 %v3687, %v3803
        %v3824 = vmul.f32 %v3688, %v3803
        %v3825 = vmul.f32 %v3689, %v3803
        %v3826 = vmul.f32 %v3690, %v3803
        %v3827 = vmul.f32 %v3691, %v3803
        %v3828 = vmul.f32 %v3692, %v3803
        %v3829 = vmul.f32 %v3693, %v3803
        %v3830 = vmul.f32 %v3694, %v3803
        %v3831 = vmul.f32 %v3695, %v3803
        %v3832 = vmul.f32 %v3696, %v3803
        %v3833 = vmul.f32 %v3697, %v3803
        %v3834 = vmul.f32 %v3698, %v3803
        %v3835 = vmul.f32 %v3699, %v3803
        %v3836 = vadd.f32 %v3767, %v3804
        %v3837 = vadd.f32 %v3768, %v3805
        %v3838 = vadd.f32 %v3769, %v3806
        %v3839 = vadd.f32 %v3770, %v3807
        %v3840 = vadd.f32 %v3771, %v3808
        %v3841 = vadd.f32 %v3772, %v3809
        %v3842 = vadd.f32 %v3773, %v3810
        %v3843 = vadd.f32 %v3774, %v3811
        %v3844 = vadd.f32 %v3775, %v3812
        %v3845 = vadd.f32 %v3776, %v3813
        %v3846 = vadd.f32 %v3777, %v3814
        %v3847 = vadd.f32 %v3778, %v3815
        %v3848 = vadd.f32 %v3779, %v3816
        %v3849 = vadd.f32 %v3780, %v3817
        %v3850 = vadd.f32 %v3781, %v3818
        %v3851 = vadd.f32 %v3782, %v3819
        %v3852 = vadd.f32 %v3783, %v3820
        %v3853 = vadd.f32 %v3784, %v3821
        %v3854 = vadd.f32 %v3785, %v3822
        %v3855 = vadd.f32 %v3786, %v3823
        %v3856 = vadd.f32 %v3787, %v3824
        %v3857 = vadd.f32 %v3788, %v3825
        %v3858 = vadd.f32 %v3789, %v3826
        %v3859 = vadd.f32 %v3790, %v3827
        %v3860 = vadd.f32 %v3791, %v3828
        %v3861 = vadd.f32 %v3792, %v3829
        %v3862 = vadd.f32 %v3793, %v3830
        %v3863 = vadd.f32 %v3794, %v3831
        %v3864 = vadd.f32 %v3795, %v3832
        %v3865 = vadd.f32 %v3796, %v3833
        %v3866 = vadd.f32 %v3797, %v3834
        %v3867 = vadd.f32 %v3798, %v3835
        %v3868 = vld [vmem:[%s3 + $0x10] sm:$0x1]
        %v3869 = vlaneseq
        %v3870 = vshrl.u32 %v3869, 7
        %v3871 = vsub.s32 0, %v3870
        %v3872 = vrot.slane %v3868, %v3871
        %v3873 = vmul.f32 %v3674, %v3872
        %v3874 = vmul.f32 %v3675, %v3872
        %v3875 = vmul.f32 %v3676, %v3872
        %v3876 = vmul.f32 %v3677, %v3872
        %v3877 = vmul.f32 %v3678, %v3872
        %v3878 = vmul.f32 %v3679, %v3872
        %v3879 = vmul.f32 %v3680, %v3872
        %v3880 = vmul.f32 %v3681, %v3872
        %v3881 = vmul.f32 %v3682, %v3872
        %v3882 = vmul.f32 %v3683, %v3872
        %v3883 = vmul.f32 %v3684, %v3872
        %v3884 = vmul.f32 %v3685, %v3872
        %v3885 = vmul.f32 %v3686, %v3872
        %v3886 = vmul.f32 %v3687, %v3872
        %v3887 = vmul.f32 %v3688, %v3872
        %v3888 = vmul.f32 %v3689, %v3872
        %v3889 = vmul.f32 %v3690, %v3872
        %v3890 = vmul.f32 %v3691, %v3872
        %v3891 = vmul.f32 %v3692, %v3872
        %v3892 = vmul.f32 %v3693, %v3872
        %v3893 = vmul.f32 %v3694, %v3872
        %v3894 = vmul.f32 %v3695, %v3872
        %v3895 = vmul.f32 %v3696, %v3872
        %v3896 = vmul.f32 %v3697, %v3872
        %v3897 = vmul.f32 %v3698, %v3872
        %v3898 = vmul.f32 %v3699, %v3872
        %v3899 = vmul.f32 %v3700, %v3872
        %v3900 = vmul.f32 %v3701, %v3872
        %v3901 = vmul.f32 %v3702, %v3872
        %v3902 = vmul.f32 %v3703, %v3872
        %v3903 = vmul.f32 %v3704, %v3872
        %v3904 = vmul.f32 %v3705, %v3872
        %v3905 = vadd.f32 %v3836, %v3873
        %v3906 = vadd.f32 %v3837, %v3874
        %v3907 = vadd.f32 %v3838, %v3875
        %v3908 = vadd.f32 %v3839, %v3876
        %v3909 = vadd.f32 %v3840, %v3877
        %v3910 = vadd.f32 %v3841, %v3878
        %v3911 = vadd.f32 %v3842, %v3879
        %v3912 = vadd.f32 %v3843, %v3880
        %v3913 = vadd.f32 %v3844, %v3881
        %v3914 = vadd.f32 %v3845, %v3882
        %v3915 = vadd.f32 %v3846, %v3883
        %v3916 = vadd.f32 %v3847, %v3884
        %v3917 = vadd.f32 %v3848, %v3885
        %v3918 = vadd.f32 %v3849, %v3886
        %v3919 = vadd.f32 %v3850, %v3887
        %v3920 = vadd.f32 %v3851, %v3888
        %v3921 = vadd.f32 %v3852, %v3889
        %v3922 = vadd.f32 %v3853, %v3890
        %v3923 = vadd.f32 %v3854, %v3891
        %v3924 = vadd.f32 %v3855, %v3892
        %v3925 = vadd.f32 %v3856, %v3893
        %v3926 = vadd.f32 %v3857, %v3894
        %v3927 = vadd.f32 %v3858, %v3895
        %v3928 = vadd.f32 %v3859, %v3896
        %v3929 = vadd.f32 %v3860, %v3897
        %v3930 = vadd.f32 %v3861, %v3898
        %v3931 = vadd.f32 %v3862, %v3899
        %v3932 = vadd.f32 %v3863, %v3900
        %v3933 = vadd.f32 %v3864, %v3901
        %v3934 = vadd.f32 %v3865, %v3902
        %v3935 = vadd.f32 %v3866, %v3903
        %v3936 = vadd.f32 %v3867, %v3904
        %v3937 = vld [vmem:[%s3 + $0x17] sm:$0x1]
        %v3938 = vlaneseq
        %v3939 = vshrl.u32 %v3938, 7
        %v3940 = vsub.s32 0, %v3939
        %v3941 = vrot.slane %v3937, %v3940
        %v3942 = vmul.f32 %v3680, %v3941
        %v3943 = vmul.f32 %v3681, %v3941
        %v3944 = vmul.f32 %v3682, %v3941
        %v3945 = vmul.f32 %v3683, %v3941
        %v3946 = vmul.f32 %v3684, %v3941
        %v3947 = vmul.f32 %v3685, %v3941
        %v3948 = vmul.f32 %v3686, %v3941
        %v3949 = vmul.f32 %v3687, %v3941
        %v3950 = vmul.f32 %v3688, %v3941
        %v3951 = vmul.f32 %v3689, %v3941
        %v3952 = vmul.f32 %v3690, %v3941
        %v3953 = vmul.f32 %v3691, %v3941
        %v3954 = vmul.f32 %v3692, %v3941
        %v3955 = vmul.f32 %v3693, %v3941
        %v3956 = vmul.f32 %v3694, %v3941
        %v3957 = vmul.f32 %v3695, %v3941
        %v3958 = vmul.f32 %v3696, %v3941
        %v3959 = vmul.f32 %v3697, %v3941
        %v3960 = vmul.f32 %v3698, %v3941
        %v3961 = vmul.f32 %v3699, %v3941
        %v3962 = vmul.f32 %v3700, %v3941
        %v3963 = vmul.f32 %v3701, %v3941
        %v3964 = vmul.f32 %v3702, %v3941
        %v3965 = vmul.f32 %v3703, %v3941
        %v3966 = vmul.f32 %v3704, %v3941
        %v3967 = vmul.f32 %v3705, %v3941
        %v3968 = vmul.f32 %v3706, %v3941
        %v3969 = vmul.f32 %v3707, %v3941
        %v3970 = vmul.f32 %v3708, %v3941
        %v3971 = vmul.f32 %v3709, %v3941
        %v3972 = vmul.f32 %v3710, %v3941
        %v3973 = vmul.f32 %v3711, %v3941
        %v3974 = vadd.f32 %v3905, %v3942
        %v3975 = vadd.f32 %v3906, %v3943
        %v3976 = vadd.f32 %v3907, %v3944
        %v3977 = vadd.f32 %v3908, %v3945
        %v3978 = vadd.f32 %v3909, %v3946
        %v3979 = vadd.f32 %v3910, %v3947
        %v3980 = vadd.f32 %v3911, %v3948
        %v3981 = vadd.f32 %v3912, %v3949
        %v3982 = vadd.f32 %v3913, %v3950
        %v3983 = vadd.f32 %v3914, %v3951
        %v3984 = vadd.f32 %v3915, %v3952
        %v3985 = vadd.f32 %v3916, %v3953
        %v3986 = vadd.f32 %v3917, %v3954
        %v3987 = vadd.f32 %v3918, %v3955
        %v3988 = vadd.f32 %v3919, %v3956
        %v3989 = vadd.f32 %v3920, %v3957
        %v3990 = vadd.f32 %v3921, %v3958
        %v3991 = vadd.f32 %v3922, %v3959
        %v3992 = vadd.f32 %v3923, %v3960
        %v3993 = vadd.f32 %v3924, %v3961
        %v3994 = vadd.f32 %v3925, %v3962
        %v3995 = vadd.f32 %v3926, %v3963
        %v3996 = vadd.f32 %v3927, %v3964
        %v3997 = vadd.f32 %v3928, %v3965
        %v3998 = vadd.f32 %v3929, %v3966
        %v3999 = vadd.f32 %v3930, %v3967
        %v4000 = vadd.f32 %v3931, %v3968
        %v4001 = vadd.f32 %v3932, %v3969
        %v4002 = vadd.f32 %v3933, %v3970
        %v4003 = vadd.f32 %v3934, %v3971
        %v4004 = vadd.f32 %v3935, %v3972
        %v4005 = vadd.f32 %v3936, %v3973
        %v4006 = vld [vmem:[%s3 + $0x1e] sm:$0x1]
        %v4007 = vlaneseq
        %v4008 = vshrl.u32 %v4007, 7
        %v4009 = vsub.s32 0, %v4008
        %v4010 = vrot.slane %v4006, %v4009
        %v4011 = vmul.f32 %v3686, %v4010
        %v4012 = vmul.f32 %v3687, %v4010
        %v4013 = vmul.f32 %v3688, %v4010
        %v4014 = vmul.f32 %v3689, %v4010
        %v4015 = vmul.f32 %v3690, %v4010
        %v4016 = vmul.f32 %v3691, %v4010
        %v4017 = vmul.f32 %v3692, %v4010
        %v4018 = vmul.f32 %v3693, %v4010
        %v4019 = vmul.f32 %v3694, %v4010
        %v4020 = vmul.f32 %v3695, %v4010
        %v4021 = vmul.f32 %v3696, %v4010
        %v4022 = vmul.f32 %v3697, %v4010
        %v4023 = vmul.f32 %v3698, %v4010
        %v4024 = vmul.f32 %v3699, %v4010
        %v4025 = vmul.f32 %v3700, %v4010
        %v4026 = vmul.f32 %v3701, %v4010
        %v4027 = vmul.f32 %v3702, %v4010
        %v4028 = vmul.f32 %v3703, %v4010
        %v4029 = vmul.f32 %v3704, %v4010
        %v4030 = vmul.f32 %v3705, %v4010
        %v4031 = vmul.f32 %v3706, %v4010
        %v4032 = vmul.f32 %v3707, %v4010
        %v4033 = vmul.f32 %v3708, %v4010
        %v4034 = vmul.f32 %v3709, %v4010
        %v4035 = vmul.f32 %v3710, %v4010
        %v4036 = vmul.f32 %v3711, %v4010
        %v4037 = vmul.f32 %v3712, %v4010
        %v4038 = vmul.f32 %v3713, %v4010
        %v4039 = vmul.f32 %v3714, %v4010
        %v4040 = vmul.f32 %v3715, %v4010
        %v4041 = vmul.f32 %v3716, %v4010
        %v4042 = vmul.f32 %v3717, %v4010
        %v4043 = vadd.f32 %v3974, %v4011
        %v4044 = vadd.f32 %v3975, %v4012
        %v4045 = vadd.f32 %v3976, %v4013
        %v4046 = vadd.f32 %v3977, %v4014
        %v4047 = vadd.f32 %v3978, %v4015
        %v4048 = vadd.f32 %v3979, %v4016
        %v4049 = vadd.f32 %v3980, %v4017
        %v4050 = vadd.f32 %v3981, %v4018
        %v4051 = vadd.f32 %v3982, %v4019
        %v4052 = vadd.f32 %v3983, %v4020
        %v4053 = vadd.f32 %v3984, %v4021
        %v4054 = vadd.f32 %v3985, %v4022
        %v4055 = vadd.f32 %v3986, %v4023
        %v4056 = vadd.f32 %v3987, %v4024
        %v4057 = vadd.f32 %v3988, %v4025
        %v4058 = vadd.f32 %v3989, %v4026
        %v4059 = vadd.f32 %v3990, %v4027
        %v4060 = vadd.f32 %v3991, %v4028
        %v4061 = vadd.f32 %v3992, %v4029
        %v4062 = vadd.f32 %v3993, %v4030
        %v4063 = vadd.f32 %v3994, %v4031
        %v4064 = vadd.f32 %v3995, %v4032
        %v4065 = vadd.f32 %v3996, %v4033
        %v4066 = vadd.f32 %v3997, %v4034
        %v4067 = vadd.f32 %v3998, %v4035
        %v4068 = vadd.f32 %v3999, %v4036
        %v4069 = vadd.f32 %v4000, %v4037
        %v4070 = vadd.f32 %v4001, %v4038
        %v4071 = vadd.f32 %v4002, %v4039
        %v4072 = vadd.f32 %v4003, %v4040
        %v4073 = vadd.f32 %v4004, %v4041
        %v4074 = vadd.f32 %v4005, %v4042
        %v4075 = vld [vmem:[%s3 + $0x25] sm:$0x1]
        %v4076 = vlaneseq
        %v4077 = vshrl.u32 %v4076, 7
        %v4078 = vsub.s32 0, %v4077
        %v4079 = vrot.slane %v4075, %v4078
        %v4080 = vmul.f32 %v3692, %v4079
        %v4081 = vmul.f32 %v3693, %v4079
        %v4082 = vmul.f32 %v3694, %v4079
        %v4083 = vmul.f32 %v3695, %v4079
        %v4084 = vmul.f32 %v3696, %v4079
        %v4085 = vmul.f32 %v3697, %v4079
        %v4086 = vmul.f32 %v3698, %v4079
        %v4087 = vmul.f32 %v3699, %v4079
        %v4088 = vmul.f32 %v3700, %v4079
        %v4089 = vmul.f32 %v3701, %v4079
        %v4090 = vmul.f32 %v3702, %v4079
        %v4091 = vmul.f32 %v3703, %v4079
        %v4092 = vmul.f32 %v3704, %v4079
        %v4093 = vmul.f32 %v3705, %v4079
        %v4094 = vmul.f32 %v3706, %v4079
        %v4095 = vmul.f32 %v3707, %v4079
        %v4096 = vmul.f32 %v3708, %v4079
        %v4097 = vmul.f32 %v3709, %v4079
        %v4098 = vmul.f32 %v3710, %v4079
        %v4099 = vmul.f32 %v3711, %v4079
        %v4100 = vmul.f32 %v3712, %v4079
        %v4101 = vmul.f32 %v3713, %v4079
        %v4102 = vmul.f32 %v3714, %v4079
        %v4103 = vmul.f32 %v3715, %v4079
        %v4104 = vmul.f32 %v3716, %v4079
        %v4105 = vmul.f32 %v3717, %v4079
        %v4106 = vmul.f32 %v3718, %v4079
        %v4107 = vmul.f32 %v3719, %v4079
        %v4108 = vmul.f32 %v3720, %v4079
        %v4109 = vmul.f32 %v3721, %v4079
        %v4110 = vmul.f32 %v3722, %v4079
        %v4111 = vmul.f32 %v3723, %v4079
        %v4112 = vadd.f32 %v4043, %v4080
        %v4113 = vadd.f32 %v4044, %v4081
        %v4114 = vadd.f32 %v4045, %v4082
        %v4115 = vadd.f32 %v4046, %v4083
        %v4116 = vadd.f32 %v4047, %v4084
        %v4117 = vadd.f32 %v4048, %v4085
        %v4118 = vadd.f32 %v4049, %v4086
        %v4119 = vadd.f32 %v4050, %v4087
        %v4120 = vadd.f32 %v4051, %v4088
        %v4121 = vadd.f32 %v4052, %v4089
        %v4122 = vadd.f32 %v4053, %v4090
        %v4123 = vadd.f32 %v4054, %v4091
        %v4124 = vadd.f32 %v4055, %v4092
        %v4125 = vadd.f32 %v4056, %v4093
        %v4126 = vadd.f32 %v4057, %v4094
        %v4127 = vadd.f32 %v4058, %v4095
        %v4128 = vadd.f32 %v4059, %v4096
        %v4129 = vadd.f32 %v4060, %v4097
        %v4130 = vadd.f32 %v4061, %v4098
        %v4131 = vadd.f32 %v4062, %v4099
        %v4132 = vadd.f32 %v4063, %v4100
        %v4133 = vadd.f32 %v4064, %v4101
        %v4134 = vadd.f32 %v4065, %v4102
        %v4135 = vadd.f32 %v4066, %v4103
        %v4136 = vadd.f32 %v4067, %v4104
        %v4137 = vadd.f32 %v4068, %v4105
        %v4138 = vadd.f32 %v4069, %v4106
        %v4139 = vadd.f32 %v4070, %v4107
        %v4140 = vadd.f32 %v4071, %v4108
        %v4141 = vadd.f32 %v4072, %v4109
        %v4142 = vadd.f32 %v4073, %v4110
        %v4143 = vadd.f32 %v4074, %v4111
        %v4144 = vld [vmem:[%s3 + $0x2c] sm:$0x1]
        %v4145 = vlaneseq
        %v4146 = vshrl.u32 %v4145, 7
        %v4147 = vsub.s32 0, %v4146
        %v4148 = vrot.slane %v4144, %v4147
        %v4149 = vmul.f32 %v3698, %v4148
        %v4150 = vmul.f32 %v3699, %v4148
        %v4151 = vmul.f32 %v3700, %v4148
        %v4152 = vmul.f32 %v3701, %v4148
        %v4153 = vmul.f32 %v3702, %v4148
        %v4154 = vmul.f32 %v3703, %v4148
        %v4155 = vmul.f32 %v3704, %v4148
        %v4156 = vmul.f32 %v3705, %v4148
        %v4157 = vmul.f32 %v3706, %v4148
        %v4158 = vmul.f32 %v3707, %v4148
        %v4159 = vmul.f32 %v3708, %v4148
        %v4160 = vmul.f32 %v3709, %v4148
        %v4161 = vmul.f32 %v3710, %v4148
        %v4162 = vmul.f32 %v3711, %v4148
        %v4163 = vmul.f32 %v3712, %v4148
        %v4164 = vmul.f32 %v3713, %v4148
        %v4165 = vmul.f32 %v3714, %v4148
        %v4166 = vmul.f32 %v3715, %v4148
        %v4167 = vmul.f32 %v3716, %v4148
        %v4168 = vmul.f32 %v3717, %v4148
        %v4169 = vmul.f32 %v3718, %v4148
        %v4170 = vmul.f32 %v3719, %v4148
        %v4171 = vmul.f32 %v3720, %v4148
        %v4172 = vmul.f32 %v3721, %v4148
        %v4173 = vmul.f32 %v3722, %v4148
        %v4174 = vmul.f32 %v3723, %v4148
        %v4175 = vmul.f32 %v3724, %v4148
        %v4176 = vmul.f32 %v3725, %v4148
        %v4177 = vmul.f32 %v3726, %v4148
        %v4178 = vmul.f32 %v3727, %v4148
        %v4179 = vmul.f32 %v3728, %v4148
        %v4180 = vmul.f32 %v3729, %v4148
        %v4181 = vadd.f32 %v4112, %v4149
        %v4182 = vadd.f32 %v4113, %v4150
        %v4183 = vadd.f32 %v4114, %v4151
        %v4184 = vadd.f32 %v4115, %v4152
        %v4185 = vadd.f32 %v4116, %v4153
        %v4186 = vadd.f32 %v4117, %v4154
        %v4187 = vadd.f32 %v4118, %v4155
        %v4188 = vadd.f32 %v4119, %v4156
        %v4189 = vadd.f32 %v4120, %v4157
        %v4190 = vadd.f32 %v4121, %v4158
        %v4191 = vadd.f32 %v4122, %v4159
        %v4192 = vadd.f32 %v4123, %v4160
        %v4193 = vadd.f32 %v4124, %v4161
        %v4194 = vadd.f32 %v4125, %v4162
        %v4195 = vadd.f32 %v4126, %v4163
        %v4196 = vadd.f32 %v4127, %v4164
        %v4197 = vadd.f32 %v4128, %v4165
        %v4198 = vadd.f32 %v4129, %v4166
        %v4199 = vadd.f32 %v4130, %v4167
        %v4200 = vadd.f32 %v4131, %v4168
        %v4201 = vadd.f32 %v4132, %v4169
        %v4202 = vadd.f32 %v4133, %v4170
        %v4203 = vadd.f32 %v4134, %v4171
        %v4204 = vadd.f32 %v4135, %v4172
        %v4205 = vadd.f32 %v4136, %v4173
        %v4206 = vadd.f32 %v4137, %v4174
        %v4207 = vadd.f32 %v4138, %v4175
        %v4208 = vadd.f32 %v4139, %v4176
        %v4209 = vadd.f32 %v4140, %v4177
        %v4210 = vadd.f32 %v4141, %v4178
        %v4211 = vadd.f32 %v4142, %v4179
        %v4212 = vadd.f32 %v4143, %v4180
        %v4213 = vld [vmem:[#allocation2 + $0x9] sm:$0xff]
        %v4214 = vld [vmem:[#allocation2 + $0x11] sm:$0xff]
        %v4215 = vld [vmem:[#allocation2 + $0x31] sm:$0xff]
        %v4216 = vld [vmem:[#allocation2 + $0x39] sm:$0xff]
        %v4217 = vld [vmem:[#allocation2 + $0x59] sm:$0xff]
        %v4218 = vld [vmem:[#allocation2 + $0x61] sm:$0xff]
        %v4219 = vld [vmem:[#allocation2 + $0x81] sm:$0xff]
        %v4220 = vld [vmem:[#allocation2 + $0x89] sm:$0xff]
        %v4221 = vld [vmem:[#allocation2 + $0xa9] sm:$0xff]
        %v4222 = vld [vmem:[#allocation2 + $0xb1] sm:$0xff]
        %v4223 = vld [vmem:[#allocation2 + $0xd1] sm:$0xff]
        %v4224 = vld [vmem:[#allocation2 + $0xd9] sm:$0xff]
        %v4225 = vld [vmem:[#allocation2 + $0xf9] sm:$0xff]
        %v4226 = vld [vmem:[#allocation2 + $0x101] sm:$0xff]
        %v4227 = vld [vmem:[#allocation2 + $0x121] sm:$0xff]
        %v4228 = vld [vmem:[#allocation2 + $0x129] sm:$0xff]
        %v4229 = vld [vmem:[#allocation2 + $0x149] sm:$0xff]
        %v4230 = vld [vmem:[#allocation2 + $0x151] sm:$0xff]
        %v4231 = vld [vmem:[#allocation2 + $0x171] sm:$0xff]
        %v4232 = vld [vmem:[#allocation2 + $0x179] sm:$0xff]
        %v4233 = vld [vmem:[#allocation2 + $0x199] sm:$0xff]
        %v4234 = vld [vmem:[#allocation2 + $0x1a1] sm:$0xff]
        %v4235 = vld [vmem:[#allocation2 + $0x1c1] sm:$0xff]
        %v4236 = vld [vmem:[#allocation2 + $0x1c9] sm:$0xff]
        %v4237 = vld [vmem:[#allocation2 + $0x1e9] sm:$0xff]
        %v4238 = vld [vmem:[#allocation2 + $0x1f1] sm:$0xff]
        %v4239 = vld [vmem:[#allocation2 + $0x211] sm:$0xff]
        %v4240 = vld [vmem:[#allocation2 + $0x219] sm:$0xff]
        %v4241 = vld [vmem:[#allocation2 + $0x239] sm:$0xff]
        %v4242 = vld [vmem:[#allocation2 + $0x241] sm:$0xff]
        %v4243 = vld [vmem:[#allocation2 + $0x261] sm:$0xff]
        %v4244 = vld [vmem:[#allocation2 + $0x269] sm:$0xff]
        %v4245 = vld [vmem:[#allocation2 + $0x289] sm:$0xff]
        %v4246 = vld [vmem:[#allocation2 + $0x291] sm:$0xff]
        %v4247 = vld [vmem:[#allocation2 + $0x2b1] sm:$0xff]
        %v4248 = vld [vmem:[#allocation2 + $0x2b9] sm:$0xff]
        %v4249 = vld [vmem:[#allocation2 + $0x2d9] sm:$0xff]
        %v4250 = vld [vmem:[#allocation2 + $0x2e1] sm:$0xff]
        %v4251 = vld [vmem:[#allocation2 + $0x301] sm:$0xff]
        %v4252 = vld [vmem:[#allocation2 + $0x309] sm:$0xff]
        %v4253 = vld [vmem:[#allocation2 + $0x329] sm:$0xff]
        %v4254 = vld [vmem:[#allocation2 + $0x331] sm:$0xff]
        %v4255 = vld [vmem:[#allocation2 + $0x351] sm:$0xff]
        %v4256 = vld [vmem:[#allocation2 + $0x359] sm:$0xff]
        %v4257 = vld [vmem:[#allocation2 + $0x379] sm:$0xff]
        %v4258 = vld [vmem:[#allocation2 + $0x381] sm:$0xff]
        %v4259 = vld [vmem:[#allocation2 + $0x3a1] sm:$0xff]
        %v4260 = vld [vmem:[#allocation2 + $0x3a9] sm:$0xff]
        %v4261 = vld [vmem:[#allocation2 + $0x3c9] sm:$0xff]
        %v4262 = vld [vmem:[#allocation2 + $0x3d1] sm:$0xff]
        %v4263 = vld [vmem:[#allocation2 + $0x3f1] sm:$0xff]
        %v4264 = vld [vmem:[#allocation2 + $0x3f9] sm:$0xff]
        %v4265 = vld [vmem:[#allocation2 + $0x419] sm:$0xff]
        %v4266 = vld [vmem:[#allocation2 + $0x421] sm:$0xff]
        %v4267 = vld [vmem:[#allocation2 + $0x441] sm:$0xff]
        %v4268 = vld [vmem:[#allocation2 + $0x449] sm:$0xff]
        %v4269 = vld [vmem:[#allocation2 + $0x469] sm:$0xff]
        %v4270 = vld [vmem:[#allocation2 + $0x471] sm:$0xff]
        %v4271 = vld [vmem:[#allocation2 + $0x491] sm:$0xff]
        %v4272 = vld [vmem:[#allocation2 + $0x499] sm:$0xff]
        %v4273 = vld [vmem:[#allocation2 + $0x4b9] sm:$0xff]
        %v4274 = vld [vmem:[#allocation2 + $0x4c1] sm:$0xff]
        %v4275 = vld [vmem:[#allocation2 + $0x4e1] sm:$0xff]
        %v4276 = vld [vmem:[#allocation2 + $0x4e9] sm:$0xff]
        %v4277 = vld [vmem:[#allocation2 + $0x509] sm:$0xff]
        %v4278 = vld [vmem:[#allocation2 + $0x511] sm:$0xff]
        %v4279 = vld [vmem:[#allocation2 + $0x531] sm:$0xff]
        %v4280 = vld [vmem:[#allocation2 + $0x539] sm:$0xff]
        %v4281 = vld [vmem:[%s3 + $0x3] sm:$0x1]
        %v4282 = vlaneseq
        %v4283 = vshrl.u32 %v4282, 7
        %v4284 = vsub.s32 0, %v4283
        %v4285 = vrot.slane %v4281, %v4284
        %v4286 = vmul.f32 %v4213, %v4285
        %v4287 = vmul.f32 %v4214, %v4285
        %v4288 = vmul.f32 %v4215, %v4285
        %v4289 = vmul.f32 %v4216, %v4285
        %v4290 = vmul.f32 %v4217, %v4285
        %v4291 = vmul.f32 %v4218, %v4285
        %v4292 = vmul.f32 %v4219, %v4285
        %v4293 = vmul.f32 %v4220, %v4285
        %v4294 = vmul.f32 %v4221, %v4285
        %v4295 = vmul.f32 %v4222, %v4285
        %v4296 = vmul.f32 %v4223, %v4285
        %v4297 = vmul.f32 %v4224, %v4285
        %v4298 = vmul.f32 %v4225, %v4285
        %v4299 = vmul.f32 %v4226, %v4285
        %v4300 = vmul.f32 %v4227, %v4285
        %v4301 = vmul.f32 %v4228, %v4285
        %v4302 = vmul.f32 %v4229, %v4285
        %v4303 = vmul.f32 %v4230, %v4285
        %v4304 = vmul.f32 %v4231, %v4285
        %v4305 = vmul.f32 %v4232, %v4285
        %v4306 = vmul.f32 %v4233, %v4285
        %v4307 = vmul.f32 %v4234, %v4285
        %v4308 = vmul.f32 %v4235, %v4285
        %v4309 = vmul.f32 %v4236, %v4285
        %v4310 = vmul.f32 %v4237, %v4285
        %v4311 = vmul.f32 %v4238, %v4285
        %v4312 = vmul.f32 %v4239, %v4285
        %v4313 = vmul.f32 %v4240, %v4285
        %v4314 = vmul.f32 %v4241, %v4285
        %v4315 = vmul.f32 %v4242, %v4285
        %v4316 = vmul.f32 %v4243, %v4285
        %v4317 = vmul.f32 %v4244, %v4285
        %v4318 = vadd.f32 %v4181, %v4286
        %v4319 = vadd.f32 %v4182, %v4287
        %v4320 = vadd.f32 %v4183, %v4288
        %v4321 = vadd.f32 %v4184, %v4289
        %v4322 = vadd.f32 %v4185, %v4290
        %v4323 = vadd.f32 %v4186, %v4291
        %v4324 = vadd.f32 %v4187, %v4292
        %v4325 = vadd.f32 %v4188, %v4293
        %v4326 = vadd.f32 %v4189, %v4294
        %v4327 = vadd.f32 %v4190, %v4295
        %v4328 = vadd.f32 %v4191, %v4296
        %v4329 = vadd.f32 %v4192, %v4297
        %v4330 = vadd.f32 %v4193, %v4298
        %v4331 = vadd.f32 %v4194, %v4299
        %v4332 = vadd.f32 %v4195, %v4300
        %v4333 = vadd.f32 %v4196, %v4301
        %v4334 = vadd.f32 %v4197, %v4302
        %v4335 = vadd.f32 %v4198, %v4303
        %v4336 = vadd.f32 %v4199, %v4304
        %v4337 = vadd.f32 %v4200, %v4305
        %v4338 = vadd.f32 %v4201, %v4306
        %v4339 = vadd.f32 %v4202, %v4307
        %v4340 = vadd.f32 %v4203, %v4308
        %v4341 = vadd.f32 %v4204, %v4309
        %v4342 = vadd.f32 %v4205, %v4310
        %v4343 = vadd.f32 %v4206, %v4311
        %v4344 = vadd.f32 %v4207, %v4312
        %v4345 = vadd.f32 %v4208, %v4313
        %v4346 = vadd.f32 %v4209, %v4314
        %v4347 = vadd.f32 %v4210, %v4315
        %v4348 = vadd.f32 %v4211, %v4316
        %v4349 = vadd.f32 %v4212, %v4317
        %v4350 = vld [vmem:[%s3 + $0xa] sm:$0x1]
        %v4351 = vlaneseq
        %v4352 = vshrl.u32 %v4351, 7
        %v4353 = vsub.s32 0, %v4352
        %v4354 = vrot.slane %v4350, %v4353
        %v4355 = vmul.f32 %v4219, %v4354
        %v4356 = vmul.f32 %v4220, %v4354
        %v4357 = vmul.f32 %v4221, %v4354
        %v4358 = vmul.f32 %v4222, %v4354
        %v4359 = vmul.f32 %v4223, %v4354
        %v4360 = vmul.f32 %v4224, %v4354
        %v4361 = vmul.f32 %v4225, %v4354
        %v4362 = vmul.f32 %v4226, %v4354
        %v4363 = vmul.f32 %v4227, %v4354
        %v4364 = vmul.f32 %v4228, %v4354
        %v4365 = vmul.f32 %v4229, %v4354
        %v4366 = vmul.f32 %v4230, %v4354
        %v4367 = vmul.f32 %v4231, %v4354
        %v4368 = vmul.f32 %v4232, %v4354
        %v4369 = vmul.f32 %v4233, %v4354
        %v4370 = vmul.f32 %v4234, %v4354
        %v4371 = vmul.f32 %v4235, %v4354
        %v4372 = vmul.f32 %v4236, %v4354
        %v4373 = vmul.f32 %v4237, %v4354
        %v4374 = vmul.f32 %v4238, %v4354
        %v4375 = vmul.f32 %v4239, %v4354
        %v4376 = vmul.f32 %v4240, %v4354
        %v4377 = vmul.f32 %v4241, %v4354
        %v4378 = vmul.f32 %v4242, %v4354
        %v4379 = vmul.f32 %v4243, %v4354
        %v4380 = vmul.f32 %v4244, %v4354
        %v4381 = vmul.f32 %v4245, %v4354
        %v4382 = vmul.f32 %v4246, %v4354
        %v4383 = vmul.f32 %v4247, %v4354
        %v4384 = vmul.f32 %v4248, %v4354
        %v4385 = vmul.f32 %v4249, %v4354
        %v4386 = vmul.f32 %v4250, %v4354
        %v4387 = vadd.f32 %v4318, %v4355
        %v4388 = vadd.f32 %v4319, %v4356
        %v4389 = vadd.f32 %v4320, %v4357
        %v4390 = vadd.f32 %v4321, %v4358
        %v4391 = vadd.f32 %v4322, %v4359
        %v4392 = vadd.f32 %v4323, %v4360
        %v4393 = vadd.f32 %v4324, %v4361
        %v4394 = vadd.f32 %v4325, %v4362
        %v4395 = vadd.f32 %v4326, %v4363
        %v4396 = vadd.f32 %v4327, %v4364
        %v4397 = vadd.f32 %v4328, %v4365
        %v4398 = vadd.f32 %v4329, %v4366
        %v4399 = vadd.f32 %v4330, %v4367
        %v4400 = vadd.f32 %v4331, %v4368
        %v4401 = vadd.f32 %v4332, %v4369
        %v4402 = vadd.f32 %v4333, %v4370
        %v4403 = vadd.f32 %v4334, %v4371
        %v4404 = vadd.f32 %v4335, %v4372
        %v4405 = vadd.f32 %v4336, %v4373
        %v4406 = vadd.f32 %v4337, %v4374
        %v4407 = vadd.f32 %v4338, %v4375
        %v4408 = vadd.f32 %v4339, %v4376
        %v4409 = vadd.f32 %v4340, %v4377
        %v4410 = vadd.f32 %v4341, %v4378
        %v4411 = vadd.f32 %v4342, %v4379
        %v4412 = vadd.f32 %v4343, %v4380
        %v4413 = vadd.f32 %v4344, %v4381
        %v4414 = vadd.f32 %v4345, %v4382
        %v4415 = vadd.f32 %v4346, %v4383
        %v4416 = vadd.f32 %v4347, %v4384
        %v4417 = vadd.f32 %v4348, %v4385
        %v4418 = vadd.f32 %v4349, %v4386
        %v4419 = vld [vmem:[%s3 + $0x11] sm:$0x1]
        %v4420 = vlaneseq
        %v4421 = vshrl.u32 %v4420, 7
        %v4422 = vsub.s32 0, %v4421
        %v4423 = vrot.slane %v4419, %v4422
        %v4424 = vmul.f32 %v4225, %v4423
        %v4425 = vmul.f32 %v4226, %v4423
        %v4426 = vmul.f32 %v4227, %v4423
        %v4427 = vmul.f32 %v4228, %v4423
        %v4428 = vmul.f32 %v4229, %v4423
        %v4429 = vmul.f32 %v4230, %v4423
        %v4430 = vmul.f32 %v4231, %v4423
        %v4431 = vmul.f32 %v4232, %v4423
        %v4432 = vmul.f32 %v4233, %v4423
        %v4433 = vmul.f32 %v4234, %v4423
        %v4434 = vmul.f32 %v4235, %v4423
        %v4435 = vmul.f32 %v4236, %v4423
        %v4436 = vmul.f32 %v4237, %v4423
        %v4437 = vmul.f32 %v4238, %v4423
        %v4438 = vmul.f32 %v4239, %v4423
        %v4439 = vmul.f32 %v4240, %v4423
        %v4440 = vmul.f32 %v4241, %v4423
        %v4441 = vmul.f32 %v4242, %v4423
        %v4442 = vmul.f32 %v4243, %v4423
        %v4443 = vmul.f32 %v4244, %v4423
        %v4444 = vmul.f32 %v4245, %v4423
        %v4445 = vmul.f32 %v4246, %v4423
        %v4446 = vmul.f32 %v4247, %v4423
        %v4447 = vmul.f32 %v4248, %v4423
        %v4448 = vmul.f32 %v4249, %v4423
        %v4449 = vmul.f32 %v4250, %v4423
        %v4450 = vmul.f32 %v4251, %v4423
        %v4451 = vmul.f32 %v4252, %v4423
        %v4452 = vmul.f32 %v4253, %v4423
        %v4453 = vmul.f32 %v4254, %v4423
        %v4454 = vmul.f32 %v4255, %v4423
        %v4455 = vmul.f32 %v4256, %v4423
        %v4456 = vadd.f32 %v4387, %v4424
        %v4457 = vadd.f32 %v4388, %v4425
        %v4458 = vadd.f32 %v4389, %v4426
        %v4459 = vadd.f32 %v4390, %v4427
        %v4460 = vadd.f32 %v4391, %v4428
        %v4461 = vadd.f32 %v4392, %v4429
        %v4462 = vadd.f32 %v4393, %v4430
        %v4463 = vadd.f32 %v4394, %v4431
        %v4464 = vadd.f32 %v4395, %v4432
        %v4465 = vadd.f32 %v4396, %v4433
        %v4466 = vadd.f32 %v4397, %v4434
        %v4467 = vadd.f32 %v4398, %v4435
        %v4468 = vadd.f32 %v4399, %v4436
        %v4469 = vadd.f32 %v4400, %v4437
        %v4470 = vadd.f32 %v4401, %v4438
        %v4471 = vadd.f32 %v4402, %v4439
        %v4472 = vadd.f32 %v4403, %v4440
        %v4473 = vadd.f32 %v4404, %v4441
        %v4474 = vadd.f32 %v4405, %v4442
        %v4475 = vadd.f32 %v4406, %v4443
        %v4476 = vadd.f32 %v4407, %v4444
        %v4477 = vadd.f32 %v4408, %v4445
        %v4478 = vadd.f32 %v4409, %v4446
        %v4479 = vadd.f32 %v4410, %v4447
        %v4480 = vadd.f32 %v4411, %v4448
        %v4481 = vadd.f32 %v4412, %v4449
        %v4482 = vadd.f32 %v4413, %v4450
        %v4483 = vadd.f32 %v4414, %v4451
        %v4484 = vadd.f32 %v4415, %v4452
        %v4485 = vadd.f32 %v4416, %v4453
        %v4486 = vadd.f32 %v4417, %v4454
        %v4487 = vadd.f32 %v4418, %v4455
        %v4488 = vld [vmem:[%s3 + $0x18] sm:$0x1]
        %v4489 = vlaneseq
        %v4490 = vshrl.u32 %v4489, 7
        %v4491 = vsub.s32 0, %v4490
        %v4492 = vrot.slane %v4488, %v4491
        %v4493 = vmul.f32 %v4231, %v4492
        %v4494 = vmul.f32 %v4232, %v4492
        %v4495 = vmul.f32 %v4233, %v4492
        %v4496 = vmul.f32 %v4234, %v4492
        %v4497 = vmul.f32 %v4235, %v4492
        %v4498 = vmul.f32 %v4236, %v4492
        %v4499 = vmul.f32 %v4237, %v4492
        %v4500 = vmul.f32 %v4238, %v4492
        %v4501 = vmul.f32 %v4239, %v4492
        %v4502 = vmul.f32 %v4240, %v4492
        %v4503 = vmul.f32 %v4241, %v4492
        %v4504 = vmul.f32 %v4242, %v4492
        %v4505 = vmul.f32 %v4243, %v4492
        %v4506 = vmul.f32 %v4244, %v4492
        %v4507 = vmul.f32 %v4245, %v4492
        %v4508 = vmul.f32 %v4246, %v4492
        %v4509 = vmul.f32 %v4247, %v4492
        %v4510 = vmul.f32 %v4248, %v4492
        %v4511 = vmul.f32 %v4249, %v4492
        %v4512 = vmul.f32 %v4250, %v4492
        %v4513 = vmul.f32 %v4251, %v4492
        %v4514 = vmul.f32 %v4252, %v4492
        %v4515 = vmul.f32 %v4253, %v4492
        %v4516 = vmul.f32 %v4254, %v4492
        %v4517 = vmul.f32 %v4255, %v4492
        %v4518 = vmul.f32 %v4256, %v4492
        %v4519 = vmul.f32 %v4257, %v4492
        %v4520 = vmul.f32 %v4258, %v4492
        %v4521 = vmul.f32 %v4259, %v4492
        %v4522 = vmul.f32 %v4260, %v4492
        %v4523 = vmul.f32 %v4261, %v4492
        %v4524 = vmul.f32 %v4262, %v4492
        %v4525 = vadd.f32 %v4456, %v4493
        %v4526 = vadd.f32 %v4457, %v4494
        %v4527 = vadd.f32 %v4458, %v4495
        %v4528 = vadd.f32 %v4459, %v4496
        %v4529 = vadd.f32 %v4460, %v4497
        %v4530 = vadd.f32 %v4461, %v4498
        %v4531 = vadd.f32 %v4462, %v4499
        %v4532 = vadd.f32 %v4463, %v4500
        %v4533 = vadd.f32 %v4464, %v4501
        %v4534 = vadd.f32 %v4465, %v4502
        %v4535 = vadd.f32 %v4466, %v4503
        %v4536 = vadd.f32 %v4467, %v4504
        %v4537 = vadd.f32 %v4468, %v4505
        %v4538 = vadd.f32 %v4469, %v4506
        %v4539 = vadd.f32 %v4470, %v4507
        %v4540 = vadd.f32 %v4471, %v4508
        %v4541 = vadd.f32 %v4472, %v4509
        %v4542 = vadd.f32 %v4473, %v4510
        %v4543 = vadd.f32 %v4474, %v4511
        %v4544 = vadd.f32 %v4475, %v4512
        %v4545 = vadd.f32 %v4476, %v4513
        %v4546 = vadd.f32 %v4477, %v4514
        %v4547 = vadd.f32 %v4478, %v4515
        %v4548 = vadd.f32 %v4479, %v4516
        %v4549 = vadd.f32 %v4480, %v4517
        %v4550 = vadd.f32 %v4481, %v4518
        %v4551 = vadd.f32 %v4482, %v4519
        %v4552 = vadd.f32 %v4483, %v4520
        %v4553 = vadd.f32 %v4484, %v4521
        %v4554 = vadd.f32 %v4485, %v4522
        %v4555 = vadd.f32 %v4486, %v4523
        %v4556 = vadd.f32 %v4487, %v4524
        %v4557 = vld [vmem:[%s3 + $0x1f] sm:$0x1]
        %v4558 = vlaneseq
        %v4559 = vshrl.u32 %v4558, 7
        %v4560 = vsub.s32 0, %v4559
        %v4561 = vrot.slane %v4557, %v4560
        %v4562 = vmul.f32 %v4237, %v4561
        %v4563 = vmul.f32 %v4238, %v4561
        %v4564 = vmul.f32 %v4239, %v4561
        %v4565 = vmul.f32 %v4240, %v4561
        %v4566 = vmul.f32 %v4241, %v4561
        %v4567 = vmul.f32 %v4242, %v4561
        %v4568 = vmul.f32 %v4243, %v4561
        %v4569 = vmul.f32 %v4244, %v4561
        %v4570 = vmul.f32 %v4245, %v4561
        %v4571 = vmul.f32 %v4246, %v4561
        %v4572 = vmul.f32 %v4247, %v4561
        %v4573 = vmul.f32 %v4248, %v4561
        %v4574 = vmul.f32 %v4249, %v4561
        %v4575 = vmul.f32 %v4250, %v4561
        %v4576 = vmul.f32 %v4251, %v4561
        %v4577 = vmul.f32 %v4252, %v4561
        %v4578 = vmul.f32 %v4253, %v4561
        %v4579 = vmul.f32 %v4254, %v4561
        %v4580 = vmul.f32 %v4255, %v4561
        %v4581 = vmul.f32 %v4256, %v4561
        %v4582 = vmul.f32 %v4257, %v4561
        %v4583 = vmul.f32 %v4258, %v4561
        %v4584 = vmul.f32 %v4259, %v4561
        %v4585 = vmul.f32 %v4260, %v4561
        %v4586 = vmul.f32 %v4261, %v4561
        %v4587 = vmul.f32 %v4262, %v4561
        %v4588 = vmul.f32 %v4263, %v4561
        %v4589 = vmul.f32 %v4264, %v4561
        %v4590 = vmul.f32 %v4265, %v4561
        %v4591 = vmul.f32 %v4266, %v4561
        %v4592 = vmul.f32 %v4267, %v4561
        %v4593 = vmul.f32 %v4268, %v4561
        %v4594 = vadd.f32 %v4525, %v4562
        %v4595 = vadd.f32 %v4526, %v4563
        %v4596 = vadd.f32 %v4527, %v4564
        %v4597 = vadd.f32 %v4528, %v4565
        %v4598 = vadd.f32 %v4529, %v4566
        %v4599 = vadd.f32 %v4530, %v4567
        %v4600 = vadd.f32 %v4531, %v4568
        %v4601 = vadd.f32 %v4532, %v4569
        %v4602 = vadd.f32 %v4533, %v4570
        %v4603 = vadd.f32 %v4534, %v4571
        %v4604 = vadd.f32 %v4535, %v4572
        %v4605 = vadd.f32 %v4536, %v4573
        %v4606 = vadd.f32 %v4537, %v4574
        %v4607 = vadd.f32 %v4538, %v4575
        %v4608 = vadd.f32 %v4539, %v4576
        %v4609 = vadd.f32 %v4540, %v4577
        %v4610 = vadd.f32 %v4541, %v4578
        %v4611 = vadd.f32 %v4542, %v4579
        %v4612 = vadd.f32 %v4543, %v4580
        %v4613 = vadd.f32 %v4544, %v4581
        %v4614 = vadd.f32 %v4545, %v4582
        %v4615 = vadd.f32 %v4546, %v4583
        %v4616 = vadd.f32 %v4547, %v4584
        %v4617 = vadd.f32 %v4548, %v4585
        %v4618 = vadd.f32 %v4549, %v4586
        %v4619 = vadd.f32 %v4550, %v4587
        %v4620 = vadd.f32 %v4551, %v4588
        %v4621 = vadd.f32 %v4552, %v4589
        %v4622 = vadd.f32 %v4553, %v4590
        %v4623 = vadd.f32 %v4554, %v4591
        %v4624 = vadd.f32 %v4555, %v4592
        %v4625 = vadd.f32 %v4556, %v4593
        %v4626 = vld [vmem:[%s3 + $0x26] sm:$0x1]
        %v4627 = vlaneseq
        %v4628 = vshrl.u32 %v4627, 7
        %v4629 = vsub.s32 0, %v4628
        %v4630 = vrot.slane %v4626, %v4629
        %v4631 = vmul.f32 %v4243, %v4630
        %v4632 = vmul.f32 %v4244, %v4630
        %v4633 = vmul.f32 %v4245, %v4630
        %v4634 = vmul.f32 %v4246, %v4630
        %v4635 = vmul.f32 %v4247, %v4630
        %v4636 = vmul.f32 %v4248, %v4630
        %v4637 = vmul.f32 %v4249, %v4630
        %v4638 = vmul.f32 %v4250, %v4630
        %v4639 = vmul.f32 %v4251, %v4630
        %v4640 = vmul.f32 %v4252, %v4630
        %v4641 = vmul.f32 %v4253, %v4630
        %v4642 = vmul.f32 %v4254, %v4630
        %v4643 = vmul.f32 %v4255, %v4630
        %v4644 = vmul.f32 %v4256, %v4630
        %v4645 = vmul.f32 %v4257, %v4630
        %v4646 = vmul.f32 %v4258, %v4630
        %v4647 = vmul.f32 %v4259, %v4630
        %v4648 = vmul.f32 %v4260, %v4630
        %v4649 = vmul.f32 %v4261, %v4630
        %v4650 = vmul.f32 %v4262, %v4630
        %v4651 = vmul.f32 %v4263, %v4630
        %v4652 = vmul.f32 %v4264, %v4630
        %v4653 = vmul.f32 %v4265, %v4630
        %v4654 = vmul.f32 %v4266, %v4630
        %v4655 = vmul.f32 %v4267, %v4630
        %v4656 = vmul.f32 %v4268, %v4630
        %v4657 = vmul.f32 %v4269, %v4630
        %v4658 = vmul.f32 %v4270, %v4630
        %v4659 = vmul.f32 %v4271, %v4630
        %v4660 = vmul.f32 %v4272, %v4630
        %v4661 = vmul.f32 %v4273, %v4630
        %v4662 = vmul.f32 %v4274, %v4630
        %v4663 = vadd.f32 %v4594, %v4631
        %v4664 = vadd.f32 %v4595, %v4632
        %v4665 = vadd.f32 %v4596, %v4633
        %v4666 = vadd.f32 %v4597, %v4634
        %v4667 = vadd.f32 %v4598, %v4635
        %v4668 = vadd.f32 %v4599, %v4636
        %v4669 = vadd.f32 %v4600, %v4637
        %v4670 = vadd.f32 %v4601, %v4638
        %v4671 = vadd.f32 %v4602, %v4639
        %v4672 = vadd.f32 %v4603, %v4640
        %v4673 = vadd.f32 %v4604, %v4641
        %v4674 = vadd.f32 %v4605, %v4642
        %v4675 = vadd.f32 %v4606, %v4643
        %v4676 = vadd.f32 %v4607, %v4644
        %v4677 = vadd.f32 %v4608, %v4645
        %v4678 = vadd.f32 %v4609, %v4646
        %v4679 = vadd.f32 %v4610, %v4647
        %v4680 = vadd.f32 %v4611, %v4648
        %v4681 = vadd.f32 %v4612, %v4649
        %v4682 = vadd.f32 %v4613, %v4650
        %v4683 = vadd.f32 %v4614, %v4651
        %v4684 = vadd.f32 %v4615, %v4652
        %v4685 = vadd.f32 %v4616, %v4653
        %v4686 = vadd.f32 %v4617, %v4654
        %v4687 = vadd.f32 %v4618, %v4655
        %v4688 = vadd.f32 %v4619, %v4656
        %v4689 = vadd.f32 %v4620, %v4657
        %v4690 = vadd.f32 %v4621, %v4658
        %v4691 = vadd.f32 %v4622, %v4659
        %v4692 = vadd.f32 %v4623, %v4660
        %v4693 = vadd.f32 %v4624, %v4661
        %v4694 = vadd.f32 %v4625, %v4662
        %v4695 = vld [vmem:[%s3 + $0x2d] sm:$0x1]
        %v4696 = vlaneseq
        %v4697 = vshrl.u32 %v4696, 7
        %v4698 = vsub.s32 0, %v4697
        %v4699 = vrot.slane %v4695, %v4698
        %v4700 = vmul.f32 %v4249, %v4699
        %v4701 = vmul.f32 %v4250, %v4699
        %v4702 = vmul.f32 %v4251, %v4699
        %v4703 = vmul.f32 %v4252, %v4699
        %v4704 = vmul.f32 %v4253, %v4699
        %v4705 = vmul.f32 %v4254, %v4699
        %v4706 = vmul.f32 %v4255, %v4699
        %v4707 = vmul.f32 %v4256, %v4699
        %v4708 = vmul.f32 %v4257, %v4699
        %v4709 = vmul.f32 %v4258, %v4699
        %v4710 = vmul.f32 %v4259, %v4699
        %v4711 = vmul.f32 %v4260, %v4699
        %v4712 = vmul.f32 %v4261, %v4699
        %v4713 = vmul.f32 %v4262, %v4699
        %v4714 = vmul.f32 %v4263, %v4699
        %v4715 = vmul.f32 %v4264, %v4699
        %v4716 = vmul.f32 %v4265, %v4699
        %v4717 = vmul.f32 %v4266, %v4699
        %v4718 = vmul.f32 %v4267, %v4699
        %v4719 = vmul.f32 %v4268, %v4699
        %v4720 = vmul.f32 %v4269, %v4699
        %v4721 = vmul.f32 %v4270, %v4699
        %v4722 = vmul.f32 %v4271, %v4699
        %v4723 = vmul.f32 %v4272, %v4699
        %v4724 = vmul.f32 %v4273, %v4699
        %v4725 = vmul.f32 %v4274, %v4699
        %v4726 = vmul.f32 %v4275, %v4699
        %v4727 = vmul.f32 %v4276, %v4699
        %v4728 = vmul.f32 %v4277, %v4699
        %v4729 = vmul.f32 %v4278, %v4699
        %v4730 = vmul.f32 %v4279, %v4699
        %v4731 = vmul.f32 %v4280, %v4699
        %v4732 = vadd.f32 %v4663, %v4700
        %v4733 = vadd.f32 %v4664, %v4701
        %v4734 = vadd.f32 %v4665, %v4702
        %v4735 = vadd.f32 %v4666, %v4703
        %v4736 = vadd.f32 %v4667, %v4704
        %v4737 = vadd.f32 %v4668, %v4705
        %v4738 = vadd.f32 %v4669, %v4706
        %v4739 = vadd.f32 %v4670, %v4707
        %v4740 = vadd.f32 %v4671, %v4708
        %v4741 = vadd.f32 %v4672, %v4709
        %v4742 = vadd.f32 %v4673, %v4710
        %v4743 = vadd.f32 %v4674, %v4711
        %v4744 = vadd.f32 %v4675, %v4712
        %v4745 = vadd.f32 %v4676, %v4713
        %v4746 = vadd.f32 %v4677, %v4714
        %v4747 = vadd.f32 %v4678, %v4715
        %v4748 = vadd.f32 %v4679, %v4716
        %v4749 = vadd.f32 %v4680, %v4717
        %v4750 = vadd.f32 %v4681, %v4718
        %v4751 = vadd.f32 %v4682, %v4719
        %v4752 = vadd.f32 %v4683, %v4720
        %v4753 = vadd.f32 %v4684, %v4721
        %v4754 = vadd.f32 %v4685, %v4722
        %v4755 = vadd.f32 %v4686, %v4723
        %v4756 = vadd.f32 %v4687, %v4724
        %v4757 = vadd.f32 %v4688, %v4725
        %v4758 = vadd.f32 %v4689, %v4726
        %v4759 = vadd.f32 %v4690, %v4727
        %v4760 = vadd.f32 %v4691, %v4728
        %v4761 = vadd.f32 %v4692, %v4729
        %v4762 = vadd.f32 %v4693, %v4730
        %v4763 = vadd.f32 %v4694, %v4731
        %v4764 = vld [vmem:[#allocation2 + $0xc] sm:$0xff]
        %v4765 = vld [vmem:[#allocation2 + $0x14] sm:$0xff]
        %v4766 = vld [vmem:[#allocation2 + $0x34] sm:$0xff]
        %v4767 = vld [vmem:[#allocation2 + $0x3c] sm:$0xff]
        %v4768 = vld [vmem:[#allocation2 + $0x5c] sm:$0xff]
        %v4769 = vld [vmem:[#allocation2 + $0x64] sm:$0xff]
        %v4770 = vld [vmem:[#allocation2 + $0x84] sm:$0xff]
        %v4771 = vld [vmem:[#allocation2 + $0x8c] sm:$0xff]
        %v4772 = vld [vmem:[#allocation2 + $0xac] sm:$0xff]
        %v4773 = vld [vmem:[#allocation2 + $0xb4] sm:$0xff]
        %v4774 = vld [vmem:[#allocation2 + $0xd4] sm:$0xff]
        %v4775 = vld [vmem:[#allocation2 + $0xdc] sm:$0xff]
        %v4776 = vld [vmem:[#allocation2 + $0xfc] sm:$0xff]
        %v4777 = vld [vmem:[#allocation2 + $0x104] sm:$0xff]
        %v4778 = vld [vmem:[#allocation2 + $0x124] sm:$0xff]
        %v4779 = vld [vmem:[#allocation2 + $0x12c] sm:$0xff]
        %v4780 = vld [vmem:[#allocation2 + $0x14c] sm:$0xff]
        %v4781 = vld [vmem:[#allocation2 + $0x154] sm:$0xff]
        %v4782 = vld [vmem:[#allocation2 + $0x174] sm:$0xff]
        %v4783 = vld [vmem:[#allocation2 + $0x17c] sm:$0xff]
        %v4784 = vld [vmem:[#allocation2 + $0x19c] sm:$0xff]
        %v4785 = vld [vmem:[#allocation2 + $0x1a4] sm:$0xff]
        %v4786 = vld [vmem:[#allocation2 + $0x1c4] sm:$0xff]
        %v4787 = vld [vmem:[#allocation2 + $0x1cc] sm:$0xff]
        %v4788 = vld [vmem:[#allocation2 + $0x1ec] sm:$0xff]
        %v4789 = vld [vmem:[#allocation2 + $0x1f4] sm:$0xff]
        %v4790 = vld [vmem:[#allocation2 + $0x214] sm:$0xff]
        %v4791 = vld [vmem:[#allocation2 + $0x21c] sm:$0xff]
        %v4792 = vld [vmem:[#allocation2 + $0x23c] sm:$0xff]
        %v4793 = vld [vmem:[#allocation2 + $0x244] sm:$0xff]
        %v4794 = vld [vmem:[#allocation2 + $0x264] sm:$0xff]
        %v4795 = vld [vmem:[#allocation2 + $0x26c] sm:$0xff]
        %v4796 = vld [vmem:[#allocation2 + $0x28c] sm:$0xff]
        %v4797 = vld [vmem:[#allocation2 + $0x294] sm:$0xff]
        %v4798 = vld [vmem:[#allocation2 + $0x2b4] sm:$0xff]
        %v4799 = vld [vmem:[#allocation2 + $0x2bc] sm:$0xff]
        %v4800 = vld [vmem:[#allocation2 + $0x2dc] sm:$0xff]
        %v4801 = vld [vmem:[#allocation2 + $0x2e4] sm:$0xff]
        %v4802 = vld [vmem:[#allocation2 + $0x304] sm:$0xff]
        %v4803 = vld [vmem:[#allocation2 + $0x30c] sm:$0xff]
        %v4804 = vld [vmem:[#allocation2 + $0x32c] sm:$0xff]
        %v4805 = vld [vmem:[#allocation2 + $0x334] sm:$0xff]
        %v4806 = vld [vmem:[#allocation2 + $0x354] sm:$0xff]
        %v4807 = vld [vmem:[#allocation2 + $0x35c] sm:$0xff]
        %v4808 = vld [vmem:[#allocation2 + $0x37c] sm:$0xff]
        %v4809 = vld [vmem:[#allocation2 + $0x384] sm:$0xff]
        %v4810 = vld [vmem:[#allocation2 + $0x3a4] sm:$0xff]
        %v4811 = vld [vmem:[#allocation2 + $0x3ac] sm:$0xff]
        %v4812 = vld [vmem:[#allocation2 + $0x3cc] sm:$0xff]
        %v4813 = vld [vmem:[#allocation2 + $0x3d4] sm:$0xff]
        %v4814 = vld [vmem:[#allocation2 + $0x3f4] sm:$0xff]
        %v4815 = vld [vmem:[#allocation2 + $0x3fc] sm:$0xff]
        %v4816 = vld [vmem:[#allocation2 + $0x41c] sm:$0xff]
        %v4817 = vld [vmem:[#allocation2 + $0x424] sm:$0xff]
        %v4818 = vld [vmem:[#allocation2 + $0x444] sm:$0xff]
        %v4819 = vld [vmem:[#allocation2 + $0x44c] sm:$0xff]
        %v4820 = vld [vmem:[#allocation2 + $0x46c] sm:$0xff]
        %v4821 = vld [vmem:[#allocation2 + $0x474] sm:$0xff]
        %v4822 = vld [vmem:[#allocation2 + $0x494] sm:$0xff]
        %v4823 = vld [vmem:[#allocation2 + $0x49c] sm:$0xff]
        %v4824 = vld [vmem:[#allocation2 + $0x4bc] sm:$0xff]
        %v4825 = vld [vmem:[#allocation2 + $0x4c4] sm:$0xff]
        %v4826 = vld [vmem:[#allocation2 + $0x4e4] sm:$0xff]
        %v4827 = vld [vmem:[#allocation2 + $0x4ec] sm:$0xff]
        %v4828 = vld [vmem:[#allocation2 + $0x50c] sm:$0xff]
        %v4829 = vld [vmem:[#allocation2 + $0x514] sm:$0xff]
        %v4830 = vld [vmem:[#allocation2 + $0x534] sm:$0xff]
        %v4831 = vld [vmem:[#allocation2 + $0x53c] sm:$0xff]
        %v4832 = vld [vmem:[%s3 + $0x4] sm:$0x1]
        %v4833 = vlaneseq
        %v4834 = vshrl.u32 %v4833, 7
        %v4835 = vsub.s32 0, %v4834
        %v4836 = vrot.slane %v4832, %v4835
        %v4837 = vmul.f32 %v4764, %v4836
        %v4838 = vmul.f32 %v4765, %v4836
        %v4839 = vmul.f32 %v4766, %v4836
        %v4840 = vmul.f32 %v4767, %v4836
        %v4841 = vmul.f32 %v4768, %v4836
        %v4842 = vmul.f32 %v4769, %v4836
        %v4843 = vmul.f32 %v4770, %v4836
        %v4844 = vmul.f32 %v4771, %v4836
        %v4845 = vmul.f32 %v4772, %v4836
        %v4846 = vmul.f32 %v4773, %v4836
        %v4847 = vmul.f32 %v4774, %v4836
        %v4848 = vmul.f32 %v4775, %v4836
        %v4849 = vmul.f32 %v4776, %v4836
        %v4850 = vmul.f32 %v4777, %v4836
        %v4851 = vmul.f32 %v4778, %v4836
        %v4852 = vmul.f32 %v4779, %v4836
        %v4853 = vmul.f32 %v4780, %v4836
        %v4854 = vmul.f32 %v4781, %v4836
        %v4855 = vmul.f32 %v4782, %v4836
        %v4856 = vmul.f32 %v4783, %v4836
        %v4857 = vmul.f32 %v4784, %v4836
        %v4858 = vmul.f32 %v4785, %v4836
        %v4859 = vmul.f32 %v4786, %v4836
        %v4860 = vmul.f32 %v4787, %v4836
        %v4861 = vmul.f32 %v4788, %v4836
        %v4862 = vmul.f32 %v4789, %v4836
        %v4863 = vmul.f32 %v4790, %v4836
        %v4864 = vmul.f32 %v4791, %v4836
        %v4865 = vmul.f32 %v4792, %v4836
        %v4866 = vmul.f32 %v4793, %v4836
        %v4867 = vmul.f32 %v4794, %v4836
        %v4868 = vmul.f32 %v4795, %v4836
        %v4869 = vadd.f32 %v4732, %v4837
        %v4870 = vadd.f32 %v4733, %v4838
        %v4871 = vadd.f32 %v4734, %v4839
        %v4872 = vadd.f32 %v4735, %v4840
        %v4873 = vadd.f32 %v4736, %v4841
        %v4874 = vadd.f32 %v4737, %v4842
        %v4875 = vadd.f32 %v4738, %v4843
        %v4876 = vadd.f32 %v4739, %v4844
        %v4877 = vadd.f32 %v4740, %v4845
        %v4878 = vadd.f32 %v4741, %v4846
        %v4879 = vadd.f32 %v4742, %v4847
        %v4880 = vadd.f32 %v4743, %v4848
        %v4881 = vadd.f32 %v4744, %v4849
        %v4882 = vadd.f32 %v4745, %v4850
        %v4883 = vadd.f32 %v4746, %v4851
        %v4884 = vadd.f32 %v4747, %v4852
        %v4885 = vadd.f32 %v4748, %v4853
        %v4886 = vadd.f32 %v4749, %v4854
        %v4887 = vadd.f32 %v4750, %v4855
        %v4888 = vadd.f32 %v4751, %v4856
        %v4889 = vadd.f32 %v4752, %v4857
        %v4890 = vadd.f32 %v4753, %v4858
        %v4891 = vadd.f32 %v4754, %v4859
        %v4892 = vadd.f32 %v4755, %v4860
        %v4893 = vadd.f32 %v4756, %v4861
        %v4894 = vadd.f32 %v4757, %v4862
        %v4895 = vadd.f32 %v4758, %v4863
        %v4896 = vadd.f32 %v4759, %v4864
        %v4897 = vadd.f32 %v4760, %v4865
        %v4898 = vadd.f32 %v4761, %v4866
        %v4899 = vadd.f32 %v4762, %v4867
        %v4900 = vadd.f32 %v4763, %v4868
        %v4901 = vld [vmem:[%s3 + $0xb] sm:$0x1]
        %v4902 = vlaneseq
        %v4903 = vshrl.u32 %v4902, 7
        %v4904 = vsub.s32 0, %v4903
        %v4905 = vrot.slane %v4901, %v4904
        %v4906 = vmul.f32 %v4770, %v4905
        %v4907 = vmul.f32 %v4771, %v4905
        %v4908 = vmul.f32 %v4772, %v4905
        %v4909 = vmul.f32 %v4773, %v4905
        %v4910 = vmul.f32 %v4774, %v4905
        %v4911 = vmul.f32 %v4775, %v4905
        %v4912 = vmul.f32 %v4776, %v4905
        %v4913 = vmul.f32 %v4777, %v4905
        %v4914 = vmul.f32 %v4778, %v4905
        %v4915 = vmul.f32 %v4779, %v4905
        %v4916 = vmul.f32 %v4780, %v4905
        %v4917 = vmul.f32 %v4781, %v4905
        %v4918 = vmul.f32 %v4782, %v4905
        %v4919 = vmul.f32 %v4783, %v4905
        %v4920 = vmul.f32 %v4784, %v4905
        %v4921 = vmul.f32 %v4785, %v4905
        %v4922 = vmul.f32 %v4786, %v4905
        %v4923 = vmul.f32 %v4787, %v4905
        %v4924 = vmul.f32 %v4788, %v4905
        %v4925 = vmul.f32 %v4789, %v4905
        %v4926 = vmul.f32 %v4790, %v4905
        %v4927 = vmul.f32 %v4791, %v4905
        %v4928 = vmul.f32 %v4792, %v4905
        %v4929 = vmul.f32 %v4793, %v4905
        %v4930 = vmul.f32 %v4794, %v4905
        %v4931 = vmul.f32 %v4795, %v4905
        %v4932 = vmul.f32 %v4796, %v4905
        %v4933 = vmul.f32 %v4797, %v4905
        %v4934 = vmul.f32 %v4798, %v4905
        %v4935 = vmul.f32 %v4799, %v4905
        %v4936 = vmul.f32 %v4800, %v4905
        %v4937 = vmul.f32 %v4801, %v4905
        %v4938 = vadd.f32 %v4869, %v4906
        %v4939 = vadd.f32 %v4870, %v4907
        %v4940 = vadd.f32 %v4871, %v4908
        %v4941 = vadd.f32 %v4872, %v4909
        %v4942 = vadd.f32 %v4873, %v4910
        %v4943 = vadd.f32 %v4874, %v4911
        %v4944 = vadd.f32 %v4875, %v4912
        %v4945 = vadd.f32 %v4876, %v4913
        %v4946 = vadd.f32 %v4877, %v4914
        %v4947 = vadd.f32 %v4878, %v4915
        %v4948 = vadd.f32 %v4879, %v4916
        %v4949 = vadd.f32 %v4880, %v4917
        %v4950 = vadd.f32 %v4881, %v4918
        %v4951 = vadd.f32 %v4882, %v4919
        %v4952 = vadd.f32 %v4883, %v4920
        %v4953 = vadd.f32 %v4884, %v4921
        %v4954 = vadd.f32 %v4885, %v4922
        %v4955 = vadd.f32 %v4886, %v4923
        %v4956 = vadd.f32 %v4887, %v4924
        %v4957 = vadd.f32 %v4888, %v4925
        %v4958 = vadd.f32 %v4889, %v4926
        %v4959 = vadd.f32 %v4890, %v4927
        %v4960 = vadd.f32 %v4891, %v4928
        %v4961 = vadd.f32 %v4892, %v4929
        %v4962 = vadd.f32 %v4893, %v4930
        %v4963 = vadd.f32 %v4894, %v4931
        %v4964 = vadd.f32 %v4895, %v4932
        %v4965 = vadd.f32 %v4896, %v4933
        %v4966 = vadd.f32 %v4897, %v4934
        %v4967 = vadd.f32 %v4898, %v4935
        %v4968 = vadd.f32 %v4899, %v4936
        %v4969 = vadd.f32 %v4900, %v4937
        %v4970 = vld [vmem:[%s3 + $0x12] sm:$0x1]
        %v4971 = vlaneseq
        %v4972 = vshrl.u32 %v4971, 7
        %v4973 = vsub.s32 0, %v4972
        %v4974 = vrot.slane %v4970, %v4973
        %v4975 = vmul.f32 %v4776, %v4974
        %v4976 = vmul.f32 %v4777, %v4974
        %v4977 = vmul.f32 %v4778, %v4974
        %v4978 = vmul.f32 %v4779, %v4974
        %v4979 = vmul.f32 %v4780, %v4974
        %v4980 = vmul.f32 %v4781, %v4974
        %v4981 = vmul.f32 %v4782, %v4974
        %v4982 = vmul.f32 %v4783, %v4974
        %v4983 = vmul.f32 %v4784, %v4974
        %v4984 = vmul.f32 %v4785, %v4974
        %v4985 = vmul.f32 %v4786, %v4974
        %v4986 = vmul.f32 %v4787, %v4974
        %v4987 = vmul.f32 %v4788, %v4974
        %v4988 = vmul.f32 %v4789, %v4974
        %v4989 = vmul.f32 %v4790, %v4974
        %v4990 = vmul.f32 %v4791, %v4974
        %v4991 = vmul.f32 %v4792, %v4974
        %v4992 = vmul.f32 %v4793, %v4974
        %v4993 = vmul.f32 %v4794, %v4974
        %v4994 = vmul.f32 %v4795, %v4974
        %v4995 = vmul.f32 %v4796, %v4974
        %v4996 = vmul.f32 %v4797, %v4974
        %v4997 = vmul.f32 %v4798, %v4974
        %v4998 = vmul.f32 %v4799, %v4974
        %v4999 = vmul.f32 %v4800, %v4974
        %v5000 = vmul.f32 %v4801, %v4974
        %v5001 = vmul.f32 %v4802, %v4974
        %v5002 = vmul.f32 %v4803, %v4974
        %v5003 = vmul.f32 %v4804, %v4974
        %v5004 = vmul.f32 %v4805, %v4974
        %v5005 = vmul.f32 %v4806, %v4974
        %v5006 = vmul.f32 %v4807, %v4974
        %v5007 = vadd.f32 %v4938, %v4975
        %v5008 = vadd.f32 %v4939, %v4976
        %v5009 = vadd.f32 %v4940, %v4977
        %v5010 = vadd.f32 %v4941, %v4978
        %v5011 = vadd.f32 %v4942, %v4979
        %v5012 = vadd.f32 %v4943, %v4980
        %v5013 = vadd.f32 %v4944, %v4981
        %v5014 = vadd.f32 %v4945, %v4982
        %v5015 = vadd.f32 %v4946, %v4983
        %v5016 = vadd.f32 %v4947, %v4984
        %v5017 = vadd.f32 %v4948, %v4985
        %v5018 = vadd.f32 %v4949, %v4986
        %v5019 = vadd.f32 %v4950, %v4987
        %v5020 = vadd.f32 %v4951, %v4988
        %v5021 = vadd.f32 %v4952, %v4989
        %v5022 = vadd.f32 %v4953, %v4990
        %v5023 = vadd.f32 %v4954, %v4991
        %v5024 = vadd.f32 %v4955, %v4992
        %v5025 = vadd.f32 %v4956, %v4993
        %v5026 = vadd.f32 %v4957, %v4994
        %v5027 = vadd.f32 %v4958, %v4995
        %v5028 = vadd.f32 %v4959, %v4996
        %v5029 = vadd.f32 %v4960, %v4997
        %v5030 = vadd.f32 %v4961, %v4998
        %v5031 = vadd.f32 %v4962, %v4999
        %v5032 = vadd.f32 %v4963, %v5000
        %v5033 = vadd.f32 %v4964, %v5001
        %v5034 = vadd.f32 %v4965, %v5002
        %v5035 = vadd.f32 %v4966, %v5003
        %v5036 = vadd.f32 %v4967, %v5004
        %v5037 = vadd.f32 %v4968, %v5005
        %v5038 = vadd.f32 %v4969, %v5006
        %v5039 = vld [vmem:[%s3 + $0x19] sm:$0x1]
        %v5040 = vlaneseq
        %v5041 = vshrl.u32 %v5040, 7
        %v5042 = vsub.s32 0, %v5041
        %v5043 = vrot.slane %v5039, %v5042
        %v5044 = vmul.f32 %v4782, %v5043
        %v5045 = vmul.f32 %v4783, %v5043
        %v5046 = vmul.f32 %v4784, %v5043
        %v5047 = vmul.f32 %v4785, %v5043
        %v5048 = vmul.f32 %v4786, %v5043
        %v5049 = vmul.f32 %v4787, %v5043
        %v5050 = vmul.f32 %v4788, %v5043
        %v5051 = vmul.f32 %v4789, %v5043
        %v5052 = vmul.f32 %v4790, %v5043
        %v5053 = vmul.f32 %v4791, %v5043
        %v5054 = vmul.f32 %v4792, %v5043
        %v5055 = vmul.f32 %v4793, %v5043
        %v5056 = vmul.f32 %v4794, %v5043
        %v5057 = vmul.f32 %v4795, %v5043
        %v5058 = vmul.f32 %v4796, %v5043
        %v5059 = vmul.f32 %v4797, %v5043
        %v5060 = vmul.f32 %v4798, %v5043
        %v5061 = vmul.f32 %v4799, %v5043
        %v5062 = vmul.f32 %v4800, %v5043
        %v5063 = vmul.f32 %v4801, %v5043
        %v5064 = vmul.f32 %v4802, %v5043
        %v5065 = vmul.f32 %v4803, %v5043
        %v5066 = vmul.f32 %v4804, %v5043
        %v5067 = vmul.f32 %v4805, %v5043
        %v5068 = vmul.f32 %v4806, %v5043
        %v5069 = vmul.f32 %v4807, %v5043
        %v5070 = vmul.f32 %v4808, %v5043
        %v5071 = vmul.f32 %v4809, %v5043
        %v5072 = vmul.f32 %v4810, %v5043
        %v5073 = vmul.f32 %v4811, %v5043
        %v5074 = vmul.f32 %v4812, %v5043
        %v5075 = vmul.f32 %v4813, %v5043
        %v5076 = vadd.f32 %v5007, %v5044
        %v5077 = vadd.f32 %v5008, %v5045
        %v5078 = vadd.f32 %v5009, %v5046
        %v5079 = vadd.f32 %v5010, %v5047
        %v5080 = vadd.f32 %v5011, %v5048
        %v5081 = vadd.f32 %v5012, %v5049
        %v5082 = vadd.f32 %v5013, %v5050
        %v5083 = vadd.f32 %v5014, %v5051
        %v5084 = vadd.f32 %v5015, %v5052
        %v5085 = vadd.f32 %v5016, %v5053
        %v5086 = vadd.f32 %v5017, %v5054
        %v5087 = vadd.f32 %v5018, %v5055
        %v5088 = vadd.f32 %v5019, %v5056
        %v5089 = vadd.f32 %v5020, %v5057
        %v5090 = vadd.f32 %v5021, %v5058
        %v5091 = vadd.f32 %v5022, %v5059
        %v5092 = vadd.f32 %v5023, %v5060
        %v5093 = vadd.f32 %v5024, %v5061
        %v5094 = vadd.f32 %v5025, %v5062
        %v5095 = vadd.f32 %v5026, %v5063
        %v5096 = vadd.f32 %v5027, %v5064
        %v5097 = vadd.f32 %v5028, %v5065
        %v5098 = vadd.f32 %v5029, %v5066
        %v5099 = vadd.f32 %v5030, %v5067
        %v5100 = vadd.f32 %v5031, %v5068
        %v5101 = vadd.f32 %v5032, %v5069
        %v5102 = vadd.f32 %v5033, %v5070
        %v5103 = vadd.f32 %v5034, %v5071
        %v5104 = vadd.f32 %v5035, %v5072
        %v5105 = vadd.f32 %v5036, %v5073
        %v5106 = vadd.f32 %v5037, %v5074
        %v5107 = vadd.f32 %v5038, %v5075
        %v5108 = vld [vmem:[%s3 + $0x20] sm:$0x1]
        %v5109 = vlaneseq
        %v5110 = vshrl.u32 %v5109, 7
        %v5111 = vsub.s32 0, %v5110
        %v5112 = vrot.slane %v5108, %v5111
        %v5113 = vmul.f32 %v4788, %v5112
        %v5114 = vmul.f32 %v4789, %v5112
        %v5115 = vmul.f32 %v4790, %v5112
        %v5116 = vmul.f32 %v4791, %v5112
        %v5117 = vmul.f32 %v4792, %v5112
        %v5118 = vmul.f32 %v4793, %v5112
        %v5119 = vmul.f32 %v4794, %v5112
        %v5120 = vmul.f32 %v4795, %v5112
        %v5121 = vmul.f32 %v4796, %v5112
        %v5122 = vmul.f32 %v4797, %v5112
        %v5123 = vmul.f32 %v4798, %v5112
        %v5124 = vmul.f32 %v4799, %v5112
        %v5125 = vmul.f32 %v4800, %v5112
        %v5126 = vmul.f32 %v4801, %v5112
        %v5127 = vmul.f32 %v4802, %v5112
        %v5128 = vmul.f32 %v4803, %v5112
        %v5129 = vmul.f32 %v4804, %v5112
        %v5130 = vmul.f32 %v4805, %v5112
        %v5131 = vmul.f32 %v4806, %v5112
        %v5132 = vmul.f32 %v4807, %v5112
        %v5133 = vmul.f32 %v4808, %v5112
        %v5134 = vmul.f32 %v4809, %v5112
        %v5135 = vmul.f32 %v4810, %v5112
        %v5136 = vmul.f32 %v4811, %v5112
        %v5137 = vmul.f32 %v4812, %v5112
        %v5138 = vmul.f32 %v4813, %v5112
        %v5139 = vmul.f32 %v4814, %v5112
        %v5140 = vmul.f32 %v4815, %v5112
        %v5141 = vmul.f32 %v4816, %v5112
        %v5142 = vmul.f32 %v4817, %v5112
        %v5143 = vmul.f32 %v4818, %v5112
        %v5144 = vmul.f32 %v4819, %v5112
        %v5145 = vadd.f32 %v5076, %v5113
        %v5146 = vadd.f32 %v5077, %v5114
        %v5147 = vadd.f32 %v5078, %v5115
        %v5148 = vadd.f32 %v5079, %v5116
        %v5149 = vadd.f32 %v5080, %v5117
        %v5150 = vadd.f32 %v5081, %v5118
        %v5151 = vadd.f32 %v5082, %v5119
        %v5152 = vadd.f32 %v5083, %v5120
        %v5153 = vadd.f32 %v5084, %v5121
        %v5154 = vadd.f32 %v5085, %v5122
        %v5155 = vadd.f32 %v5086, %v5123
        %v5156 = vadd.f32 %v5087, %v5124
        %v5157 = vadd.f32 %v5088, %v5125
        %v5158 = vadd.f32 %v5089, %v5126
        %v5159 = vadd.f32 %v5090, %v5127
        %v5160 = vadd.f32 %v5091, %v5128
        %v5161 = vadd.f32 %v5092, %v5129
        %v5162 = vadd.f32 %v5093, %v5130
        %v5163 = vadd.f32 %v5094, %v5131
        %v5164 = vadd.f32 %v5095, %v5132
        %v5165 = vadd.f32 %v5096, %v5133
        %v5166 = vadd.f32 %v5097, %v5134
        %v5167 = vadd.f32 %v5098, %v5135
        %v5168 = vadd.f32 %v5099, %v5136
        %v5169 = vadd.f32 %v5100, %v5137
        %v5170 = vadd.f32 %v5101, %v5138
        %v5171 = vadd.f32 %v5102, %v5139
        %v5172 = vadd.f32 %v5103, %v5140
        %v5173 = vadd.f32 %v5104, %v5141
        %v5174 = vadd.f32 %v5105, %v5142
        %v5175 = vadd.f32 %v5106, %v5143
        %v5176 = vadd.f32 %v5107, %v5144
        %v5177 = vld [vmem:[%s3 + $0x27] sm:$0x1]
        %v5178 = vlaneseq
        %v5179 = vshrl.u32 %v5178, 7
        %v5180 = vsub.s32 0, %v5179
        %v5181 = vrot.slane %v5177, %v5180
        %v5182 = vmul.f32 %v4794, %v5181
        %v5183 = vmul.f32 %v4795, %v5181
        %v5184 = vmul.f32 %v4796, %v5181
        %v5185 = vmul.f32 %v4797, %v5181
        %v5186 = vmul.f32 %v4798, %v5181
        %v5187 = vmul.f32 %v4799, %v5181
        %v5188 = vmul.f32 %v4800, %v5181
        %v5189 = vmul.f32 %v4801, %v5181
        %v5190 = vmul.f32 %v4802, %v5181
        %v5191 = vmul.f32 %v4803, %v5181
        %v5192 = vmul.f32 %v4804, %v5181
        %v5193 = vmul.f32 %v4805, %v5181
        %v5194 = vmul.f32 %v4806, %v5181
        %v5195 = vmul.f32 %v4807, %v5181
        %v5196 = vmul.f32 %v4808, %v5181
        %v5197 = vmul.f32 %v4809, %v5181
        %v5198 = vmul.f32 %v4810, %v5181
        %v5199 = vmul.f32 %v4811, %v5181
        %v5200 = vmul.f32 %v4812, %v5181
        %v5201 = vmul.f32 %v4813, %v5181
        %v5202 = vmul.f32 %v4814, %v5181
        %v5203 = vmul.f32 %v4815, %v5181
        %v5204 = vmul.f32 %v4816, %v5181
        %v5205 = vmul.f32 %v4817, %v5181
        %v5206 = vmul.f32 %v4818, %v5181
        %v5207 = vmul.f32 %v4819, %v5181
        %v5208 = vmul.f32 %v4820, %v5181
        %v5209 = vmul.f32 %v4821, %v5181
        %v5210 = vmul.f32 %v4822, %v5181
        %v5211 = vmul.f32 %v4823, %v5181
        %v5212 = vmul.f32 %v4824, %v5181
        %v5213 = vmul.f32 %v4825, %v5181
        %v5214 = vadd.f32 %v5145, %v5182
        %v5215 = vadd.f32 %v5146, %v5183
        %v5216 = vadd.f32 %v5147, %v5184
        %v5217 = vadd.f32 %v5148, %v5185
        %v5218 = vadd.f32 %v5149, %v5186
        %v5219 = vadd.f32 %v5150, %v5187
        %v5220 = vadd.f32 %v5151, %v5188
        %v5221 = vadd.f32 %v5152, %v5189
        %v5222 = vadd.f32 %v5153, %v5190
        %v5223 = vadd.f32 %v5154, %v5191
        %v5224 = vadd.f32 %v5155, %v5192
        %v5225 = vadd.f32 %v5156, %v5193
        %v5226 = vadd.f32 %v5157, %v5194
        %v5227 = vadd.f32 %v5158, %v5195
        %v5228 = vadd.f32 %v5159, %v5196
        %v5229 = vadd.f32 %v5160, %v5197
        %v5230 = vadd.f32 %v5161, %v5198
        %v5231 = vadd.f32 %v5162, %v5199
        %v5232 = vadd.f32 %v5163, %v5200
        %v5233 = vadd.f32 %v5164, %v5201
        %v5234 = vadd.f32 %v5165, %v5202
        %v5235 = vadd.f32 %v5166, %v5203
        %v5236 = vadd.f32 %v5167, %v5204
        %v5237 = vadd.f32 %v5168, %v5205
        %v5238 = vadd.f32 %v5169, %v5206
        %v5239 = vadd.f32 %v5170, %v5207
        %v5240 = vadd.f32 %v5171, %v5208
        %v5241 = vadd.f32 %v5172, %v5209
        %v5242 = vadd.f32 %v5173, %v5210
        %v5243 = vadd.f32 %v5174, %v5211
        %v5244 = vadd.f32 %v5175, %v5212
        %v5245 = vadd.f32 %v5176, %v5213
        %v5246 = vld [vmem:[%s3 + $0x2e] sm:$0x1]
        %v5247 = vlaneseq
        %v5248 = vshrl.u32 %v5247, 7
        %v5249 = vsub.s32 0, %v5248
        %v5250 = vrot.slane %v5246, %v5249
        %v5251 = vmul.f32 %v4800, %v5250
        %v5252 = vmul.f32 %v4801, %v5250
        %v5253 = vmul.f32 %v4802, %v5250
        %v5254 = vmul.f32 %v4803, %v5250
        %v5255 = vmul.f32 %v4804, %v5250
        %v5256 = vmul.f32 %v4805, %v5250
        %v5257 = vmul.f32 %v4806, %v5250
        %v5258 = vmul.f32 %v4807, %v5250
        %v5259 = vmul.f32 %v4808, %v5250
        %v5260 = vmul.f32 %v4809, %v5250
        %v5261 = vmul.f32 %v4810, %v5250
        %v5262 = vmul.f32 %v4811, %v5250
        %v5263 = vmul.f32 %v4812, %v5250
        %v5264 = vmul.f32 %v4813, %v5250
        %v5265 = vmul.f32 %v4814, %v5250
        %v5266 = vmul.f32 %v4815, %v5250
        %v5267 = vmul.f32 %v4816, %v5250
        %v5268 = vmul.f32 %v4817, %v5250
        %v5269 = vmul.f32 %v4818, %v5250
        %v5270 = vmul.f32 %v4819, %v5250
        %v5271 = vmul.f32 %v4820, %v5250
        %v5272 = vmul.f32 %v4821, %v5250
        %v5273 = vmul.f32 %v4822, %v5250
        %v5274 = vmul.f32 %v4823, %v5250
        %v5275 = vmul.f32 %v4824, %v5250
        %v5276 = vmul.f32 %v4825, %v5250
        %v5277 = vmul.f32 %v4826, %v5250
        %v5278 = vmul.f32 %v4827, %v5250
        %v5279 = vmul.f32 %v4828, %v5250
        %v5280 = vmul.f32 %v4829, %v5250
        %v5281 = vmul.f32 %v4830, %v5250
        %v5282 = vmul.f32 %v4831, %v5250
        %v5283 = vadd.f32 %v5214, %v5251
        %v5284 = vadd.f32 %v5215, %v5252
        %v5285 = vadd.f32 %v5216, %v5253
        %v5286 = vadd.f32 %v5217, %v5254
        %v5287 = vadd.f32 %v5218, %v5255
        %v5288 = vadd.f32 %v5219, %v5256
        %v5289 = vadd.f32 %v5220, %v5257
        %v5290 = vadd.f32 %v5221, %v5258
        %v5291 = vadd.f32 %v5222, %v5259
        %v5292 = vadd.f32 %v5223, %v5260
        %v5293 = vadd.f32 %v5224, %v5261
        %v5294 = vadd.f32 %v5225, %v5262
        %v5295 = vadd.f32 %v5226, %v5263
        %v5296 = vadd.f32 %v5227, %v5264
        %v5297 = vadd.f32 %v5228, %v5265
        %v5298 = vadd.f32 %v5229, %v5266
        %v5299 = vadd.f32 %v5230, %v5267
        %v5300 = vadd.f32 %v5231, %v5268
        %v5301 = vadd.f32 %v5232, %v5269
        %v5302 = vadd.f32 %v5233, %v5270
        %v5303 = vadd.f32 %v5234, %v5271
        %v5304 = vadd.f32 %v5235, %v5272
        %v5305 = vadd.f32 %v5236, %v5273
        %v5306 = vadd.f32 %v5237, %v5274
        %v5307 = vadd.f32 %v5238, %v5275
        %v5308 = vadd.f32 %v5239, %v5276
        %v5309 = vadd.f32 %v5240, %v5277
        %v5310 = vadd.f32 %v5241, %v5278
        %v5311 = vadd.f32 %v5242, %v5279
        %v5312 = vadd.f32 %v5243, %v5280
        %v5313 = vadd.f32 %v5244, %v5281
        %v5314 = vadd.f32 %v5245, %v5282
        %v5315 = vld [vmem:[#allocation2 + $0xf] sm:$0xff]
        %v5316 = vld [vmem:[#allocation2 + $0x17] sm:$0xff]
        %v5317 = vld [vmem:[#allocation2 + $0x37] sm:$0xff]
        %v5318 = vld [vmem:[#allocation2 + $0x3f] sm:$0xff]
        %v5319 = vld [vmem:[#allocation2 + $0x5f] sm:$0xff]
        %v5320 = vld [vmem:[#allocation2 + $0x67] sm:$0xff]
        %v5321 = vld [vmem:[#allocation2 + $0x87] sm:$0xff]
        %v5322 = vld [vmem:[#allocation2 + $0x8f] sm:$0xff]
        %v5323 = vld [vmem:[#allocation2 + $0xaf] sm:$0xff]
        %v5324 = vld [vmem:[#allocation2 + $0xb7] sm:$0xff]
        %v5325 = vld [vmem:[#allocation2 + $0xd7] sm:$0xff]
        %v5326 = vld [vmem:[#allocation2 + $0xdf] sm:$0xff]
        %v5327 = vld [vmem:[#allocation2 + $0xff] sm:$0xff]
        %v5328 = vld [vmem:[#allocation2 + $0x107] sm:$0xff]
        %v5329 = vld [vmem:[#allocation2 + $0x127] sm:$0xff]
        %v5330 = vld [vmem:[#allocation2 + $0x12f] sm:$0xff]
        %v5331 = vld [vmem:[#allocation2 + $0x14f] sm:$0xff]
        %v5332 = vld [vmem:[#allocation2 + $0x157] sm:$0xff]
        %v5333 = vld [vmem:[#allocation2 + $0x177] sm:$0xff]
        %v5334 = vld [vmem:[#allocation2 + $0x17f] sm:$0xff]
        %v5335 = vld [vmem:[#allocation2 + $0x19f] sm:$0xff]
        %v5336 = vld [vmem:[#allocation2 + $0x1a7] sm:$0xff]
        %v5337 = vld [vmem:[#allocation2 + $0x1c7] sm:$0xff]
        %v5338 = vld [vmem:[#allocation2 + $0x1cf] sm:$0xff]
        %v5339 = vld [vmem:[#allocation2 + $0x1ef] sm:$0xff]
        %v5340 = vld [vmem:[#allocation2 + $0x1f7] sm:$0xff]
        %v5341 = vld [vmem:[#allocation2 + $0x217] sm:$0xff]
        %v5342 = vld [vmem:[#allocation2 + $0x21f] sm:$0xff]
        %v5343 = vld [vmem:[#allocation2 + $0x23f] sm:$0xff]
        %v5344 = vld [vmem:[#allocation2 + $0x247] sm:$0xff]
        %v5345 = vld [vmem:[#allocation2 + $0x267] sm:$0xff]
        %v5346 = vld [vmem:[#allocation2 + $0x26f] sm:$0xff]
        %v5347 = vld [vmem:[#allocation2 + $0x28f] sm:$0xff]
        %v5348 = vld [vmem:[#allocation2 + $0x297] sm:$0xff]
        %v5349 = vld [vmem:[#allocation2 + $0x2b7] sm:$0xff]
        %v5350 = vld [vmem:[#allocation2 + $0x2bf] sm:$0xff]
        %v5351 = vld [vmem:[#allocation2 + $0x2df] sm:$0xff]
        %v5352 = vld [vmem:[#allocation2 + $0x2e7] sm:$0xff]
        %v5353 = vld [vmem:[#allocation2 + $0x307] sm:$0xff]
        %v5354 = vld [vmem:[#allocation2 + $0x30f] sm:$0xff]
        %v5355 = vld [vmem:[#allocation2 + $0x32f] sm:$0xff]
        %v5356 = vld [vmem:[#allocation2 + $0x337] sm:$0xff]
        %v5357 = vld [vmem:[#allocation2 + $0x357] sm:$0xff]
        %v5358 = vld [vmem:[#allocation2 + $0x35f] sm:$0xff]
        %v5359 = vld [vmem:[#allocation2 + $0x37f] sm:$0xff]
        %v5360 = vld [vmem:[#allocation2 + $0x387] sm:$0xff]
        %v5361 = vld [vmem:[#allocation2 + $0x3a7] sm:$0xff]
        %v5362 = vld [vmem:[#allocation2 + $0x3af] sm:$0xff]
        %v5363 = vld [vmem:[#allocation2 + $0x3cf] sm:$0xff]
        %v5364 = vld [vmem:[#allocation2 + $0x3d7] sm:$0xff]
        %v5365 = vld [vmem:[#allocation2 + $0x3f7] sm:$0xff]
        %v5366 = vld [vmem:[#allocation2 + $0x3ff] sm:$0xff]
        %v5367 = vld [vmem:[#allocation2 + $0x41f] sm:$0xff]
        %v5368 = vld [vmem:[#allocation2 + $0x427] sm:$0xff]
        %v5369 = vld [vmem:[#allocation2 + $0x447] sm:$0xff]
        %v5370 = vld [vmem:[#allocation2 + $0x44f] sm:$0xff]
        %v5371 = vld [vmem:[#allocation2 + $0x46f] sm:$0xff]
        %v5372 = vld [vmem:[#allocation2 + $0x477] sm:$0xff]
        %v5373 = vld [vmem:[#allocation2 + $0x497] sm:$0xff]
        %v5374 = vld [vmem:[#allocation2 + $0x49f] sm:$0xff]
        %v5375 = vld [vmem:[#allocation2 + $0x4bf] sm:$0xff]
        %v5376 = vld [vmem:[#allocation2 + $0x4c7] sm:$0xff]
        %v5377 = vld [vmem:[#allocation2 + $0x4e7] sm:$0xff]
        %v5378 = vld [vmem:[#allocation2 + $0x4ef] sm:$0xff]
        %v5379 = vld [vmem:[#allocation2 + $0x50f] sm:$0xff]
        %v5380 = vld [vmem:[#allocation2 + $0x517] sm:$0xff]
        %v5381 = vld [vmem:[#allocation2 + $0x537] sm:$0xff]
        %v5382 = vld [vmem:[#allocation2 + $0x53f] sm:$0xff]
        %v5383 = vld [vmem:[%s3 + $0x5] sm:$0x1]
        %v5384 = vlaneseq
        %v5385 = vshrl.u32 %v5384, 7
        %v5386 = vsub.s32 0, %v5385
        %v5387 = vrot.slane %v5383, %v5386
        %v5388 = vmul.f32 %v5315, %v5387
        %v5389 = vmul.f32 %v5316, %v5387
        %v5390 = vmul.f32 %v5317, %v5387
        %v5391 = vmul.f32 %v5318, %v5387
        %v5392 = vmul.f32 %v5319, %v5387
        %v5393 = vmul.f32 %v5320, %v5387
        %v5394 = vmul.f32 %v5321, %v5387
        %v5395 = vmul.f32 %v5322, %v5387
        %v5396 = vmul.f32 %v5323, %v5387
        %v5397 = vmul.f32 %v5324, %v5387
        %v5398 = vmul.f32 %v5325, %v5387
        %v5399 = vmul.f32 %v5326, %v5387
        %v5400 = vmul.f32 %v5327, %v5387
        %v5401 = vmul.f32 %v5328, %v5387
        %v5402 = vmul.f32 %v5329, %v5387
        %v5403 = vmul.f32 %v5330, %v5387
        %v5404 = vmul.f32 %v5331, %v5387
        %v5405 = vmul.f32 %v5332, %v5387
        %v5406 = vmul.f32 %v5333, %v5387
        %v5407 = vmul.f32 %v5334, %v5387
        %v5408 = vmul.f32 %v5335, %v5387
        %v5409 = vmul.f32 %v5336, %v5387
        %v5410 = vmul.f32 %v5337, %v5387
        %v5411 = vmul.f32 %v5338, %v5387
        %v5412 = vmul.f32 %v5339, %v5387
        %v5413 = vmul.f32 %v5340, %v5387
        %v5414 = vmul.f32 %v5341, %v5387
        %v5415 = vmul.f32 %v5342, %v5387
        %v5416 = vmul.f32 %v5343, %v5387
        %v5417 = vmul.f32 %v5344, %v5387
        %v5418 = vmul.f32 %v5345, %v5387
        %v5419 = vmul.f32 %v5346, %v5387
        %v5420 = vadd.f32 %v5283, %v5388
        %v5421 = vadd.f32 %v5284, %v5389
        %v5422 = vadd.f32 %v5285, %v5390
        %v5423 = vadd.f32 %v5286, %v5391
        %v5424 = vadd.f32 %v5287, %v5392
        %v5425 = vadd.f32 %v5288, %v5393
        %v5426 = vadd.f32 %v5289, %v5394
        %v5427 = vadd.f32 %v5290, %v5395
        %v5428 = vadd.f32 %v5291, %v5396
        %v5429 = vadd.f32 %v5292, %v5397
        %v5430 = vadd.f32 %v5293, %v5398
        %v5431 = vadd.f32 %v5294, %v5399
        %v5432 = vadd.f32 %v5295, %v5400
        %v5433 = vadd.f32 %v5296, %v5401
        %v5434 = vadd.f32 %v5297, %v5402
        %v5435 = vadd.f32 %v5298, %v5403
        %v5436 = vadd.f32 %v5299, %v5404
        %v5437 = vadd.f32 %v5300, %v5405
        %v5438 = vadd.f32 %v5301, %v5406
        %v5439 = vadd.f32 %v5302, %v5407
        %v5440 = vadd.f32 %v5303, %v5408
        %v5441 = vadd.f32 %v5304, %v5409
        %v5442 = vadd.f32 %v5305, %v5410
        %v5443 = vadd.f32 %v5306, %v5411
        %v5444 = vadd.f32 %v5307, %v5412
        %v5445 = vadd.f32 %v5308, %v5413
        %v5446 = vadd.f32 %v5309, %v5414
        %v5447 = vadd.f32 %v5310, %v5415
        %v5448 = vadd.f32 %v5311, %v5416
        %v5449 = vadd.f32 %v5312, %v5417
        %v5450 = vadd.f32 %v5313, %v5418
        %v5451 = vadd.f32 %v5314, %v5419
        %v5452 = vld [vmem:[%s3 + $0xc] sm:$0x1]
        %v5453 = vlaneseq
        %v5454 = vshrl.u32 %v5453, 7
        %v5455 = vsub.s32 0, %v5454
        %v5456 = vrot.slane %v5452, %v5455
        %v5457 = vmul.f32 %v5321, %v5456
        %v5458 = vmul.f32 %v5322, %v5456
        %v5459 = vmul.f32 %v5323, %v5456
        %v5460 = vmul.f32 %v5324, %v5456
        %v5461 = vmul.f32 %v5325, %v5456
        %v5462 = vmul.f32 %v5326, %v5456
        %v5463 = vmul.f32 %v5327, %v5456
        %v5464 = vmul.f32 %v5328, %v5456
        %v5465 = vmul.f32 %v5329, %v5456
        %v5466 = vmul.f32 %v5330, %v5456
        %v5467 = vmul.f32 %v5331, %v5456
        %v5468 = vmul.f32 %v5332, %v5456
        %v5469 = vmul.f32 %v5333, %v5456
        %v5470 = vmul.f32 %v5334, %v5456
        %v5471 = vmul.f32 %v5335, %v5456
        %v5472 = vmul.f32 %v5336, %v5456
        %v5473 = vmul.f32 %v5337, %v5456
        %v5474 = vmul.f32 %v5338, %v5456
        %v5475 = vmul.f32 %v5339, %v5456
        %v5476 = vmul.f32 %v5340, %v5456
        %v5477 = vmul.f32 %v5341, %v5456
        %v5478 = vmul.f32 %v5342, %v5456
        %v5479 = vmul.f32 %v5343, %v5456
        %v5480 = vmul.f32 %v5344, %v5456
        %v5481 = vmul.f32 %v5345, %v5456
        %v5482 = vmul.f32 %v5346, %v5456
        %v5483 = vmul.f32 %v5347, %v5456
        %v5484 = vmul.f32 %v5348, %v5456
        %v5485 = vmul.f32 %v5349, %v5456
        %v5486 = vmul.f32 %v5350, %v5456
        %v5487 = vmul.f32 %v5351, %v5456
        %v5488 = vmul.f32 %v5352, %v5456
        %v5489 = vadd.f32 %v5420, %v5457
        %v5490 = vadd.f32 %v5421, %v5458
        %v5491 = vadd.f32 %v5422, %v5459
        %v5492 = vadd.f32 %v5423, %v5460
        %v5493 = vadd.f32 %v5424, %v5461
        %v5494 = vadd.f32 %v5425, %v5462
        %v5495 = vadd.f32 %v5426, %v5463
        %v5496 = vadd.f32 %v5427, %v5464
        %v5497 = vadd.f32 %v5428, %v5465
        %v5498 = vadd.f32 %v5429, %v5466
        %v5499 = vadd.f32 %v5430, %v5467
        %v5500 = vadd.f32 %v5431, %v5468
        %v5501 = vadd.f32 %v5432, %v5469
        %v5502 = vadd.f32 %v5433, %v5470
        %v5503 = vadd.f32 %v5434, %v5471
        %v5504 = vadd.f32 %v5435, %v5472
        %v5505 = vadd.f32 %v5436, %v5473
        %v5506 = vadd.f32 %v5437, %v5474
        %v5507 = vadd.f32 %v5438, %v5475
        %v5508 = vadd.f32 %v5439, %v5476
        %v5509 = vadd.f32 %v5440, %v5477
        %v5510 = vadd.f32 %v5441, %v5478
        %v5511 = vadd.f32 %v5442, %v5479
        %v5512 = vadd.f32 %v5443, %v5480
        %v5513 = vadd.f32 %v5444, %v5481
        %v5514 = vadd.f32 %v5445, %v5482
        %v5515 = vadd.f32 %v5446, %v5483
        %v5516 = vadd.f32 %v5447, %v5484
        %v5517 = vadd.f32 %v5448, %v5485
        %v5518 = vadd.f32 %v5449, %v5486
        %v5519 = vadd.f32 %v5450, %v5487
        %v5520 = vadd.f32 %v5451, %v5488
        %v5521 = vld [vmem:[%s3 + $0x13] sm:$0x1]
        %v5522 = vlaneseq
        %v5523 = vshrl.u32 %v5522, 7
        %v5524 = vsub.s32 0, %v5523
        %v5525 = vrot.slane %v5521, %v5524
        %v5526 = vmul.f32 %v5327, %v5525
        %v5527 = vmul.f32 %v5328, %v5525
        %v5528 = vmul.f32 %v5329, %v5525
        %v5529 = vmul.f32 %v5330, %v5525
        %v5530 = vmul.f32 %v5331, %v5525
        %v5531 = vmul.f32 %v5332, %v5525
        %v5532 = vmul.f32 %v5333, %v5525
        %v5533 = vmul.f32 %v5334, %v5525
        %v5534 = vmul.f32 %v5335, %v5525
        %v5535 = vmul.f32 %v5336, %v5525
        %v5536 = vmul.f32 %v5337, %v5525
        %v5537 = vmul.f32 %v5338, %v5525
        %v5538 = vmul.f32 %v5339, %v5525
        %v5539 = vmul.f32 %v5340, %v5525
        %v5540 = vmul.f32 %v5341, %v5525
        %v5541 = vmul.f32 %v5342, %v5525
        %v5542 = vmul.f32 %v5343, %v5525
        %v5543 = vmul.f32 %v5344, %v5525
        %v5544 = vmul.f32 %v5345, %v5525
        %v5545 = vmul.f32 %v5346, %v5525
        %v5546 = vmul.f32 %v5347, %v5525
        %v5547 = vmul.f32 %v5348, %v5525
        %v5548 = vmul.f32 %v5349, %v5525
        %v5549 = vmul.f32 %v5350, %v5525
        %v5550 = vmul.f32 %v5351, %v5525
        %v5551 = vmul.f32 %v5352, %v5525
        %v5552 = vmul.f32 %v5353, %v5525
        %v5553 = vmul.f32 %v5354, %v5525
        %v5554 = vmul.f32 %v5355, %v5525
        %v5555 = vmul.f32 %v5356, %v5525
        %v5556 = vmul.f32 %v5357, %v5525
        %v5557 = vmul.f32 %v5358, %v5525
        %v5558 = vadd.f32 %v5489, %v5526
        %v5559 = vadd.f32 %v5490, %v5527
        %v5560 = vadd.f32 %v5491, %v5528
        %v5561 = vadd.f32 %v5492, %v5529
        %v5562 = vadd.f32 %v5493, %v5530
        %v5563 = vadd.f32 %v5494, %v5531
        %v5564 = vadd.f32 %v5495, %v5532
        %v5565 = vadd.f32 %v5496, %v5533
        %v5566 = vadd.f32 %v5497, %v5534
        %v5567 = vadd.f32 %v5498, %v5535
        %v5568 = vadd.f32 %v5499, %v5536
        %v5569 = vadd.f32 %v5500, %v5537
        %v5570 = vadd.f32 %v5501, %v5538
        %v5571 = vadd.f32 %v5502, %v5539
        %v5572 = vadd.f32 %v5503, %v5540
        %v5573 = vadd.f32 %v5504, %v5541
        %v5574 = vadd.f32 %v5505, %v5542
        %v5575 = vadd.f32 %v5506, %v5543
        %v5576 = vadd.f32 %v5507, %v5544
        %v5577 = vadd.f32 %v5508, %v5545
        %v5578 = vadd.f32 %v5509, %v5546
        %v5579 = vadd.f32 %v5510, %v5547
        %v5580 = vadd.f32 %v5511, %v5548
        %v5581 = vadd.f32 %v5512, %v5549
        %v5582 = vadd.f32 %v5513, %v5550
        %v5583 = vadd.f32 %v5514, %v5551
        %v5584 = vadd.f32 %v5515, %v5552
        %v5585 = vadd.f32 %v5516, %v5553
        %v5586 = vadd.f32 %v5517, %v5554
        %v5587 = vadd.f32 %v5518, %v5555
        %v5588 = vadd.f32 %v5519, %v5556
        %v5589 = vadd.f32 %v5520, %v5557
        %v5590 = vld [vmem:[%s3 + $0x1a] sm:$0x1]
        %v5591 = vlaneseq
        %v5592 = vshrl.u32 %v5591, 7
        %v5593 = vsub.s32 0, %v5592
        %v5594 = vrot.slane %v5590, %v5593
        %v5595 = vmul.f32 %v5333, %v5594
        %v5596 = vmul.f32 %v5334, %v5594
        %v5597 = vmul.f32 %v5335, %v5594
        %v5598 = vmul.f32 %v5336, %v5594
        %v5599 = vmul.f32 %v5337, %v5594
        %v5600 = vmul.f32 %v5338, %v5594
        %v5601 = vmul.f32 %v5339, %v5594
        %v5602 = vmul.f32 %v5340, %v5594
        %v5603 = vmul.f32 %v5341, %v5594
        %v5604 = vmul.f32 %v5342, %v5594
        %v5605 = vmul.f32 %v5343, %v5594
        %v5606 = vmul.f32 %v5344, %v5594
        %v5607 = vmul.f32 %v5345, %v5594
        %v5608 = vmul.f32 %v5346, %v5594
        %v5609 = vmul.f32 %v5347, %v5594
        %v5610 = vmul.f32 %v5348, %v5594
        %v5611 = vmul.f32 %v5349, %v5594
        %v5612 = vmul.f32 %v5350, %v5594
        %v5613 = vmul.f32 %v5351, %v5594
        %v5614 = vmul.f32 %v5352, %v5594
        %v5615 = vmul.f32 %v5353, %v5594
        %v5616 = vmul.f32 %v5354, %v5594
        %v5617 = vmul.f32 %v5355, %v5594
        %v5618 = vmul.f32 %v5356, %v5594
        %v5619 = vmul.f32 %v5357, %v5594
        %v5620 = vmul.f32 %v5358, %v5594
        %v5621 = vmul.f32 %v5359, %v5594
        %v5622 = vmul.f32 %v5360, %v5594
        %v5623 = vmul.f32 %v5361, %v5594
        %v5624 = vmul.f32 %v5362, %v5594
        %v5625 = vmul.f32 %v5363, %v5594
        %v5626 = vmul.f32 %v5364, %v5594
        %v5627 = vadd.f32 %v5558, %v5595
        %v5628 = vadd.f32 %v5559, %v5596
        %v5629 = vadd.f32 %v5560, %v5597
        %v5630 = vadd.f32 %v5561, %v5598
        %v5631 = vadd.f32 %v5562, %v5599
        %v5632 = vadd.f32 %v5563, %v5600
        %v5633 = vadd.f32 %v5564, %v5601
        %v5634 = vadd.f32 %v5565, %v5602
        %v5635 = vadd.f32 %v5566, %v5603
        %v5636 = vadd.f32 %v5567, %v5604
        %v5637 = vadd.f32 %v5568, %v5605
        %v5638 = vadd.f32 %v5569, %v5606
        %v5639 = vadd.f32 %v5570, %v5607
        %v5640 = vadd.f32 %v5571, %v5608
        %v5641 = vadd.f32 %v5572, %v5609
        %v5642 = vadd.f32 %v5573, %v5610
        %v5643 = vadd.f32 %v5574, %v5611
        %v5644 = vadd.f32 %v5575, %v5612
        %v5645 = vadd.f32 %v5576, %v5613
        %v5646 = vadd.f32 %v5577, %v5614
        %v5647 = vadd.f32 %v5578, %v5615
        %v5648 = vadd.f32 %v5579, %v5616
        %v5649 = vadd.f32 %v5580, %v5617
        %v5650 = vadd.f32 %v5581, %v5618
        %v5651 = vadd.f32 %v5582, %v5619
        %v5652 = vadd.f32 %v5583, %v5620
        %v5653 = vadd.f32 %v5584, %v5621
        %v5654 = vadd.f32 %v5585, %v5622
        %v5655 = vadd.f32 %v5586, %v5623
        %v5656 = vadd.f32 %v5587, %v5624
        %v5657 = vadd.f32 %v5588, %v5625
        %v5658 = vadd.f32 %v5589, %v5626
        %v5659 = vld [vmem:[%s3 + $0x21] sm:$0x1]
        %v5660 = vlaneseq
        %v5661 = vshrl.u32 %v5660, 7
        %v5662 = vsub.s32 0, %v5661
        %v5663 = vrot.slane %v5659, %v5662
        %v5664 = vmul.f32 %v5339, %v5663
        %v5665 = vmul.f32 %v5340, %v5663
        %v5666 = vmul.f32 %v5341, %v5663
        %v5667 = vmul.f32 %v5342, %v5663
        %v5668 = vmul.f32 %v5343, %v5663
        %v5669 = vmul.f32 %v5344, %v5663
        %v5670 = vmul.f32 %v5345, %v5663
        %v5671 = vmul.f32 %v5346, %v5663
        %v5672 = vmul.f32 %v5347, %v5663
        %v5673 = vmul.f32 %v5348, %v5663
        %v5674 = vmul.f32 %v5349, %v5663
        %v5675 = vmul.f32 %v5350, %v5663
        %v5676 = vmul.f32 %v5351, %v5663
        %v5677 = vmul.f32 %v5352, %v5663
        %v5678 = vmul.f32 %v5353, %v5663
        %v5679 = vmul.f32 %v5354, %v5663
        %v5680 = vmul.f32 %v5355, %v5663
        %v5681 = vmul.f32 %v5356, %v5663
        %v5682 = vmul.f32 %v5357, %v5663
        %v5683 = vmul.f32 %v5358, %v5663
        %v5684 = vmul.f32 %v5359, %v5663
        %v5685 = vmul.f32 %v5360, %v5663
        %v5686 = vmul.f32 %v5361, %v5663
        %v5687 = vmul.f32 %v5362, %v5663
        %v5688 = vmul.f32 %v5363, %v5663
        %v5689 = vmul.f32 %v5364, %v5663
        %v5690 = vmul.f32 %v5365, %v5663
        %v5691 = vmul.f32 %v5366, %v5663
        %v5692 = vmul.f32 %v5367, %v5663
        %v5693 = vmul.f32 %v5368, %v5663
        %v5694 = vmul.f32 %v5369, %v5663
        %v5695 = vmul.f32 %v5370, %v5663
        %v5696 = vadd.f32 %v5627, %v5664
        %v5697 = vadd.f32 %v5628, %v5665
        %v5698 = vadd.f32 %v5629, %v5666
        %v5699 = vadd.f32 %v5630, %v5667
        %v5700 = vadd.f32 %v5631, %v5668
        %v5701 = vadd.f32 %v5632, %v5669
        %v5702 = vadd.f32 %v5633, %v5670
        %v5703 = vadd.f32 %v5634, %v5671
        %v5704 = vadd.f32 %v5635, %v5672
        %v5705 = vadd.f32 %v5636, %v5673
        %v5706 = vadd.f32 %v5637, %v5674
        %v5707 = vadd.f32 %v5638, %v5675
        %v5708 = vadd.f32 %v5639, %v5676
        %v5709 = vadd.f32 %v5640, %v5677
        %v5710 = vadd.f32 %v5641, %v5678
        %v5711 = vadd.f32 %v5642, %v5679
        %v5712 = vadd.f32 %v5643, %v5680
        %v5713 = vadd.f32 %v5644, %v5681
        %v5714 = vadd.f32 %v5645, %v5682
        %v5715 = vadd.f32 %v5646, %v5683
        %v5716 = vadd.f32 %v5647, %v5684
        %v5717 = vadd.f32 %v5648, %v5685
        %v5718 = vadd.f32 %v5649, %v5686
        %v5719 = vadd.f32 %v5650, %v5687
        %v5720 = vadd.f32 %v5651, %v5688
        %v5721 = vadd.f32 %v5652, %v5689
        %v5722 = vadd.f32 %v5653, %v5690
        %v5723 = vadd.f32 %v5654, %v5691
        %v5724 = vadd.f32 %v5655, %v5692
        %v5725 = vadd.f32 %v5656, %v5693
        %v5726 = vadd.f32 %v5657, %v5694
        %v5727 = vadd.f32 %v5658, %v5695
        %v5728 = vld [vmem:[%s3 + $0x28] sm:$0x1]
        %v5729 = vlaneseq
        %v5730 = vshrl.u32 %v5729, 7
        %v5731 = vsub.s32 0, %v5730
        %v5732 = vrot.slane %v5728, %v5731
        %v5733 = vmul.f32 %v5345, %v5732
        %v5734 = vmul.f32 %v5346, %v5732
        %v5735 = vmul.f32 %v5347, %v5732
        %v5736 = vmul.f32 %v5348, %v5732
        %v5737 = vmul.f32 %v5349, %v5732
        %v5738 = vmul.f32 %v5350, %v5732
        %v5739 = vmul.f32 %v5351, %v5732
        %v5740 = vmul.f32 %v5352, %v5732
        %v5741 = vmul.f32 %v5353, %v5732
        %v5742 = vmul.f32 %v5354, %v5732
        %v5743 = vmul.f32 %v5355, %v5732
        %v5744 = vmul.f32 %v5356, %v5732
        %v5745 = vmul.f32 %v5357, %v5732
        %v5746 = vmul.f32 %v5358, %v5732
        %v5747 = vmul.f32 %v5359, %v5732
        %v5748 = vmul.f32 %v5360, %v5732
        %v5749 = vmul.f32 %v5361, %v5732
        %v5750 = vmul.f32 %v5362, %v5732
        %v5751 = vmul.f32 %v5363, %v5732
        %v5752 = vmul.f32 %v5364, %v5732
        %v5753 = vmul.f32 %v5365, %v5732
        %v5754 = vmul.f32 %v5366, %v5732
        %v5755 = vmul.f32 %v5367, %v5732
        %v5756 = vmul.f32 %v5368, %v5732
        %v5757 = vmul.f32 %v5369, %v5732
        %v5758 = vmul.f32 %v5370, %v5732
        %v5759 = vmul.f32 %v5371, %v5732
        %v5760 = vmul.f32 %v5372, %v5732
        %v5761 = vmul.f32 %v5373, %v5732
        %v5762 = vmul.f32 %v5374, %v5732
        %v5763 = vmul.f32 %v5375, %v5732
        %v5764 = vmul.f32 %v5376, %v5732
        %v5765 = vadd.f32 %v5696, %v5733
        %v5766 = vadd.f32 %v5697, %v5734
        %v5767 = vadd.f32 %v5698, %v5735
        %v5768 = vadd.f32 %v5699, %v5736
        %v5769 = vadd.f32 %v5700, %v5737
        %v5770 = vadd.f32 %v5701, %v5738
        %v5771 = vadd.f32 %v5702, %v5739
        %v5772 = vadd.f32 %v5703, %v5740
        %v5773 = vadd.f32 %v5704, %v5741
        %v5774 = vadd.f32 %v5705, %v5742
        %v5775 = vadd.f32 %v5706, %v5743
        %v5776 = vadd.f32 %v5707, %v5744
        %v5777 = vadd.f32 %v5708, %v5745
        %v5778 = vadd.f32 %v5709, %v5746
        %v5779 = vadd.f32 %v5710, %v5747
        %v5780 = vadd.f32 %v5711, %v5748
        %v5781 = vadd.f32 %v5712, %v5749
        %v5782 = vadd.f32 %v5713, %v5750
        %v5783 = vadd.f32 %v5714, %v5751
        %v5784 = vadd.f32 %v5715, %v5752
        %v5785 = vadd.f32 %v5716, %v5753
        %v5786 = vadd.f32 %v5717, %v5754
        %v5787 = vadd.f32 %v5718, %v5755
        %v5788 = vadd.f32 %v5719, %v5756
        %v5789 = vadd.f32 %v5720, %v5757
        %v5790 = vadd.f32 %v5721, %v5758
        %v5791 = vadd.f32 %v5722, %v5759
        %v5792 = vadd.f32 %v5723, %v5760
        %v5793 = vadd.f32 %v5724, %v5761
        %v5794 = vadd.f32 %v5725, %v5762
        %v5795 = vadd.f32 %v5726, %v5763
        %v5796 = vadd.f32 %v5727, %v5764
        %v5797 = vld [vmem:[%s3 + $0x2f] sm:$0x1]
        %v5798 = vlaneseq
        %v5799 = vshrl.u32 %v5798, 7
        %v5800 = vsub.s32 0, %v5799
        %v5801 = vrot.slane %v5797, %v5800
        %v5802 = vmul.f32 %v5351, %v5801
        %v5803 = vmul.f32 %v5352, %v5801
        %v5804 = vmul.f32 %v5353, %v5801
        %v5805 = vmul.f32 %v5354, %v5801
        %v5806 = vmul.f32 %v5355, %v5801
        %v5807 = vmul.f32 %v5356, %v5801
        %v5808 = vmul.f32 %v5357, %v5801
        %v5809 = vmul.f32 %v5358, %v5801
        %v5810 = vmul.f32 %v5359, %v5801
        %v5811 = vmul.f32 %v5360, %v5801
        %v5812 = vmul.f32 %v5361, %v5801
        %v5813 = vmul.f32 %v5362, %v5801
        %v5814 = vmul.f32 %v5363, %v5801
        %v5815 = vmul.f32 %v5364, %v5801
        %v5816 = vmul.f32 %v5365, %v5801
        %v5817 = vmul.f32 %v5366, %v5801
        %v5818 = vmul.f32 %v5367, %v5801
        %v5819 = vmul.f32 %v5368, %v5801
        %v5820 = vmul.f32 %v5369, %v5801
        %v5821 = vmul.f32 %v5370, %v5801
        %v5822 = vmul.f32 %v5371, %v5801
        %v5823 = vmul.f32 %v5372, %v5801
        %v5824 = vmul.f32 %v5373, %v5801
        %v5825 = vmul.f32 %v5374, %v5801
        %v5826 = vmul.f32 %v5375, %v5801
        %v5827 = vmul.f32 %v5376, %v5801
        %v5828 = vmul.f32 %v5377, %v5801
        %v5829 = vmul.f32 %v5378, %v5801
        %v5830 = vmul.f32 %v5379, %v5801
        %v5831 = vmul.f32 %v5380, %v5801
        %v5832 = vmul.f32 %v5381, %v5801
        %v5833 = vmul.f32 %v5382, %v5801
        %v5834 = vadd.f32 %v5765, %v5802
        %v5835 = vadd.f32 %v5766, %v5803
        %v5836 = vadd.f32 %v5767, %v5804
        %v5837 = vadd.f32 %v5768, %v5805
        %v5838 = vadd.f32 %v5769, %v5806
        %v5839 = vadd.f32 %v5770, %v5807
        %v5840 = vadd.f32 %v5771, %v5808
        %v5841 = vadd.f32 %v5772, %v5809
        %v5842 = vadd.f32 %v5773, %v5810
        %v5843 = vadd.f32 %v5774, %v5811
        %v5844 = vadd.f32 %v5775, %v5812
        %v5845 = vadd.f32 %v5776, %v5813
        %v5846 = vadd.f32 %v5777, %v5814
        %v5847 = vadd.f32 %v5778, %v5815
        %v5848 = vadd.f32 %v5779, %v5816
        %v5849 = vadd.f32 %v5780, %v5817
        %v5850 = vadd.f32 %v5781, %v5818
        %v5851 = vadd.f32 %v5782, %v5819
        %v5852 = vadd.f32 %v5783, %v5820
        %v5853 = vadd.f32 %v5784, %v5821
        %v5854 = vadd.f32 %v5785, %v5822
        %v5855 = vadd.f32 %v5786, %v5823
        %v5856 = vadd.f32 %v5787, %v5824
        %v5857 = vadd.f32 %v5788, %v5825
        %v5858 = vadd.f32 %v5789, %v5826
        %v5859 = vadd.f32 %v5790, %v5827
        %v5860 = vadd.f32 %v5791, %v5828
        %v5861 = vadd.f32 %v5792, %v5829
        %v5862 = vadd.f32 %v5793, %v5830
        %v5863 = vadd.f32 %v5794, %v5831
        %v5864 = vadd.f32 %v5795, %v5832
        %v5865 = vadd.f32 %v5796, %v5833
        %v5866 = vld [vmem:[#allocation2 + $0x12] sm:$0xff]
        %v5867 = vld [vmem:[#allocation2 + $0x1a] sm:$0xff]
        %v5868 = vld [vmem:[#allocation2 + $0x3a] sm:$0xff]
        %v5869 = vld [vmem:[#allocation2 + $0x42] sm:$0xff]
        %v5870 = vld [vmem:[#allocation2 + $0x62] sm:$0xff]
        %v5871 = vld [vmem:[#allocation2 + $0x6a] sm:$0xff]
        %v5872 = vld [vmem:[#allocation2 + $0x8a] sm:$0xff]
        %v5873 = vld [vmem:[#allocation2 + $0x92] sm:$0xff]
        %v5874 = vld [vmem:[#allocation2 + $0xb2] sm:$0xff]
        %v5875 = vld [vmem:[#allocation2 + $0xba] sm:$0xff]
        %v5876 = vld [vmem:[#allocation2 + $0xda] sm:$0xff]
        %v5877 = vld [vmem:[#allocation2 + $0xe2] sm:$0xff]
        %v5878 = vld [vmem:[#allocation2 + $0x102] sm:$0xff]
        %v5879 = vld [vmem:[#allocation2 + $0x10a] sm:$0xff]
        %v5880 = vld [vmem:[#allocation2 + $0x12a] sm:$0xff]
        %v5881 = vld [vmem:[#allocation2 + $0x132] sm:$0xff]
        %v5882 = vld [vmem:[#allocation2 + $0x152] sm:$0xff]
        %v5883 = vld [vmem:[#allocation2 + $0x15a] sm:$0xff]
        %v5884 = vld [vmem:[#allocation2 + $0x17a] sm:$0xff]
        %v5885 = vld [vmem:[#allocation2 + $0x182] sm:$0xff]
        %v5886 = vld [vmem:[#allocation2 + $0x1a2] sm:$0xff]
        %v5887 = vld [vmem:[#allocation2 + $0x1aa] sm:$0xff]
        %v5888 = vld [vmem:[#allocation2 + $0x1ca] sm:$0xff]
        %v5889 = vld [vmem:[#allocation2 + $0x1d2] sm:$0xff]
        %v5890 = vld [vmem:[#allocation2 + $0x1f2] sm:$0xff]
        %v5891 = vld [vmem:[#allocation2 + $0x1fa] sm:$0xff]
        %v5892 = vld [vmem:[#allocation2 + $0x21a] sm:$0xff]
        %v5893 = vld [vmem:[#allocation2 + $0x222] sm:$0xff]
        %v5894 = vld [vmem:[#allocation2 + $0x242] sm:$0xff]
        %v5895 = vld [vmem:[#allocation2 + $0x24a] sm:$0xff]
        %v5896 = vld [vmem:[#allocation2 + $0x26a] sm:$0xff]
        %v5897 = vld [vmem:[#allocation2 + $0x272] sm:$0xff]
        %v5898 = vld [vmem:[#allocation2 + $0x292] sm:$0xff]
        %v5899 = vld [vmem:[#allocation2 + $0x29a] sm:$0xff]
        %v5900 = vld [vmem:[#allocation2 + $0x2ba] sm:$0xff]
        %v5901 = vld [vmem:[#allocation2 + $0x2c2] sm:$0xff]
        %v5902 = vld [vmem:[#allocation2 + $0x2e2] sm:$0xff]
        %v5903 = vld [vmem:[#allocation2 + $0x2ea] sm:$0xff]
        %v5904 = vld [vmem:[#allocation2 + $0x30a] sm:$0xff]
        %v5905 = vld [vmem:[#allocation2 + $0x312] sm:$0xff]
        %v5906 = vld [vmem:[#allocation2 + $0x332] sm:$0xff]
        %v5907 = vld [vmem:[#allocation2 + $0x33a] sm:$0xff]
        %v5908 = vld [vmem:[#allocation2 + $0x35a] sm:$0xff]
        %v5909 = vld [vmem:[#allocation2 + $0x362] sm:$0xff]
        %v5910 = vld [vmem:[#allocation2 + $0x382] sm:$0xff]
        %v5911 = vld [vmem:[#allocation2 + $0x38a] sm:$0xff]
        %v5912 = vld [vmem:[#allocation2 + $0x3aa] sm:$0xff]
        %v5913 = vld [vmem:[#allocation2 + $0x3b2] sm:$0xff]
        %v5914 = vld [vmem:[#allocation2 + $0x3d2] sm:$0xff]
        %v5915 = vld [vmem:[#allocation2 + $0x3da] sm:$0xff]
        %v5916 = vld [vmem:[#allocation2 + $0x3fa] sm:$0xff]
        %v5917 = vld [vmem:[#allocation2 + $0x402] sm:$0xff]
        %v5918 = vld [vmem:[#allocation2 + $0x422] sm:$0xff]
        %v5919 = vld [vmem:[#allocation2 + $0x42a] sm:$0xff]
        %v5920 = vld [vmem:[#allocation2 + $0x44a] sm:$0xff]
        %v5921 = vld [vmem:[#allocation2 + $0x452] sm:$0xff]
        %v5922 = vld [vmem:[#allocation2 + $0x472] sm:$0xff]
        %v5923 = vld [vmem:[#allocation2 + $0x47a] sm:$0xff]
        %v5924 = vld [vmem:[#allocation2 + $0x49a] sm:$0xff]
        %v5925 = vld [vmem:[#allocation2 + $0x4a2] sm:$0xff]
        %v5926 = vld [vmem:[#allocation2 + $0x4c2] sm:$0xff]
        %v5927 = vld [vmem:[#allocation2 + $0x4ca] sm:$0xff]
        %v5928 = vld [vmem:[#allocation2 + $0x4ea] sm:$0xff]
        %v5929 = vld [vmem:[#allocation2 + $0x4f2] sm:$0xff]
        %v5930 = vld [vmem:[#allocation2 + $0x512] sm:$0xff]
        %v5931 = vld [vmem:[#allocation2 + $0x51a] sm:$0xff]
        %v5932 = vld [vmem:[#allocation2 + $0x53a] sm:$0xff]
        %v5933 = vld [vmem:[#allocation2 + $0x542] sm:$0xff]
        %v5934 = vld [vmem:[%s3 + $0x6] sm:$0x1]
        %v5935 = vlaneseq
        %v5936 = vshrl.u32 %v5935, 7
        %v5937 = vsub.s32 0, %v5936
        %v5938 = vrot.slane %v5934, %v5937
        %v5939 = vmul.f32 %v5866, %v5938
        %v5940 = vmul.f32 %v5867, %v5938
        %v5941 = vmul.f32 %v5868, %v5938
        %v5942 = vmul.f32 %v5869, %v5938
        %v5943 = vmul.f32 %v5870, %v5938
        %v5944 = vmul.f32 %v5871, %v5938
        %v5945 = vmul.f32 %v5872, %v5938
        %v5946 = vmul.f32 %v5873, %v5938
        %v5947 = vmul.f32 %v5874, %v5938
        %v5948 = vmul.f32 %v5875, %v5938
        %v5949 = vmul.f32 %v5876, %v5938
        %v5950 = vmul.f32 %v5877, %v5938
        %v5951 = vmul.f32 %v5878, %v5938
        %v5952 = vmul.f32 %v5879, %v5938
        %v5953 = vmul.f32 %v5880, %v5938
        %v5954 = vmul.f32 %v5881, %v5938
        %v5955 = vmul.f32 %v5882, %v5938
        %v5956 = vmul.f32 %v5883, %v5938
        %v5957 = vmul.f32 %v5884, %v5938
        %v5958 = vmul.f32 %v5885, %v5938
        %v5959 = vmul.f32 %v5886, %v5938
        %v5960 = vmul.f32 %v5887, %v5938
        %v5961 = vmul.f32 %v5888, %v5938
        %v5962 = vmul.f32 %v5889, %v5938
        %v5963 = vmul.f32 %v5890, %v5938
        %v5964 = vmul.f32 %v5891, %v5938
        %v5965 = vmul.f32 %v5892, %v5938
        %v5966 = vmul.f32 %v5893, %v5938
        %v5967 = vmul.f32 %v5894, %v5938
        %v5968 = vmul.f32 %v5895, %v5938
        %v5969 = vmul.f32 %v5896, %v5938
        %v5970 = vmul.f32 %v5897, %v5938
        %v5971 = vadd.f32 %v5834, %v5939
        %v5972 = vadd.f32 %v5835, %v5940
        %v5973 = vadd.f32 %v5836, %v5941
        %v5974 = vadd.f32 %v5837, %v5942
        %v5975 = vadd.f32 %v5838, %v5943
        %v5976 = vadd.f32 %v5839, %v5944
        %v5977 = vadd.f32 %v5840, %v5945
        %v5978 = vadd.f32 %v5841, %v5946
        %v5979 = vadd.f32 %v5842, %v5947
        %v5980 = vadd.f32 %v5843, %v5948
        %v5981 = vadd.f32 %v5844, %v5949
        %v5982 = vadd.f32 %v5845, %v5950
        %v5983 = vadd.f32 %v5846, %v5951
        %v5984 = vadd.f32 %v5847, %v5952
        %v5985 = vadd.f32 %v5848, %v5953
        %v5986 = vadd.f32 %v5849, %v5954
        %v5987 = vadd.f32 %v5850, %v5955
        %v5988 = vadd.f32 %v5851, %v5956
        %v5989 = vadd.f32 %v5852, %v5957
        %v5990 = vadd.f32 %v5853, %v5958
        %v5991 = vadd.f32 %v5854, %v5959
        %v5992 = vadd.f32 %v5855, %v5960
        %v5993 = vadd.f32 %v5856, %v5961
        %v5994 = vadd.f32 %v5857, %v5962
        %v5995 = vadd.f32 %v5858, %v5963
        %v5996 = vadd.f32 %v5859, %v5964
        %v5997 = vadd.f32 %v5860, %v5965
        %v5998 = vadd.f32 %v5861, %v5966
        %v5999 = vadd.f32 %v5862, %v5967
        %v6000 = vadd.f32 %v5863, %v5968
        %v6001 = vadd.f32 %v5864, %v5969
        %v6002 = vadd.f32 %v5865, %v5970
        %v6003 = vld [vmem:[%s3 + $0xd] sm:$0x1]
        %v6004 = vlaneseq
        %v6005 = vshrl.u32 %v6004, 7
        %v6006 = vsub.s32 0, %v6005
        %v6007 = vrot.slane %v6003, %v6006
        %v6008 = vmul.f32 %v5872, %v6007
        %v6009 = vmul.f32 %v5873, %v6007
        %v6010 = vmul.f32 %v5874, %v6007
        %v6011 = vmul.f32 %v5875, %v6007
        %v6012 = vmul.f32 %v5876, %v6007
        %v6013 = vmul.f32 %v5877, %v6007
        %v6014 = vmul.f32 %v5878, %v6007
        %v6015 = vmul.f32 %v5879, %v6007
        %v6016 = vmul.f32 %v5880, %v6007
        %v6017 = vmul.f32 %v5881, %v6007
        %v6018 = vmul.f32 %v5882, %v6007
        %v6019 = vmul.f32 %v5883, %v6007
        %v6020 = vmul.f32 %v5884, %v6007
        %v6021 = vmul.f32 %v5885, %v6007
        %v6022 = vmul.f32 %v5886, %v6007
        %v6023 = vmul.f32 %v5887, %v6007
        %v6024 = vmul.f32 %v5888, %v6007
        %v6025 = vmul.f32 %v5889, %v6007
        %v6026 = vmul.f32 %v5890, %v6007
        %v6027 = vmul.f32 %v5891, %v6007
        %v6028 = vmul.f32 %v5892, %v6007
        %v6029 = vmul.f32 %v5893, %v6007
        %v6030 = vmul.f32 %v5894, %v6007
        %v6031 = vmul.f32 %v5895, %v6007
        %v6032 = vmul.f32 %v5896, %v6007
        %v6033 = vmul.f32 %v5897, %v6007
        %v6034 = vmul.f32 %v5898, %v6007
        %v6035 = vmul.f32 %v5899, %v6007
        %v6036 = vmul.f32 %v5900, %v6007
        %v6037 = vmul.f32 %v5901, %v6007
        %v6038 = vmul.f32 %v5902, %v6007
        %v6039 = vmul.f32 %v5903, %v6007
        %v6040 = vadd.f32 %v5971, %v6008
        %v6041 = vadd.f32 %v5972, %v6009
        %v6042 = vadd.f32 %v5973, %v6010
        %v6043 = vadd.f32 %v5974, %v6011
        %v6044 = vadd.f32 %v5975, %v6012
        %v6045 = vadd.f32 %v5976, %v6013
        %v6046 = vadd.f32 %v5977, %v6014
        %v6047 = vadd.f32 %v5978, %v6015
        %v6048 = vadd.f32 %v5979, %v6016
        %v6049 = vadd.f32 %v5980, %v6017
        %v6050 = vadd.f32 %v5981, %v6018
        %v6051 = vadd.f32 %v5982, %v6019
        %v6052 = vadd.f32 %v5983, %v6020
        %v6053 = vadd.f32 %v5984, %v6021
        %v6054 = vadd.f32 %v5985, %v6022
        %v6055 = vadd.f32 %v5986, %v6023
        %v6056 = vadd.f32 %v5987, %v6024
        %v6057 = vadd.f32 %v5988, %v6025
        %v6058 = vadd.f32 %v5989, %v6026
        %v6059 = vadd.f32 %v5990, %v6027
        %v6060 = vadd.f32 %v5991, %v6028
        %v6061 = vadd.f32 %v5992, %v6029
        %v6062 = vadd.f32 %v5993, %v6030
        %v6063 = vadd.f32 %v5994, %v6031
        %v6064 = vadd.f32 %v5995, %v6032
        %v6065 = vadd.f32 %v5996, %v6033
        %v6066 = vadd.f32 %v5997, %v6034
        %v6067 = vadd.f32 %v5998, %v6035
        %v6068 = vadd.f32 %v5999, %v6036
        %v6069 = vadd.f32 %v6000, %v6037
        %v6070 = vadd.f32 %v6001, %v6038
        %v6071 = vadd.f32 %v6002, %v6039
        %v6072 = vld [vmem:[%s3 + $0x14] sm:$0x1]
        %v6073 = vlaneseq
        %v6074 = vshrl.u32 %v6073, 7
        %v6075 = vsub.s32 0, %v6074
        %v6076 = vrot.slane %v6072, %v6075
        %v6077 = vmul.f32 %v5878, %v6076
        %v6078 = vmul.f32 %v5879, %v6076
        %v6079 = vmul.f32 %v5880, %v6076
        %v6080 = vmul.f32 %v5881, %v6076
        %v6081 = vmul.f32 %v5882, %v6076
        %v6082 = vmul.f32 %v5883, %v6076
        %v6083 = vmul.f32 %v5884, %v6076
        %v6084 = vmul.f32 %v5885, %v6076
        %v6085 = vmul.f32 %v5886, %v6076
        %v6086 = vmul.f32 %v5887, %v6076
        %v6087 = vmul.f32 %v5888, %v6076
        %v6088 = vmul.f32 %v5889, %v6076
        %v6089 = vmul.f32 %v5890, %v6076
        %v6090 = vmul.f32 %v5891, %v6076
        %v6091 = vmul.f32 %v5892, %v6076
        %v6092 = vmul.f32 %v5893, %v6076
        %v6093 = vmul.f32 %v5894, %v6076
        %v6094 = vmul.f32 %v5895, %v6076
        %v6095 = vmul.f32 %v5896, %v6076
        %v6096 = vmul.f32 %v5897, %v6076
        %v6097 = vmul.f32 %v5898, %v6076
        %v6098 = vmul.f32 %v5899, %v6076
        %v6099 = vmul.f32 %v5900, %v6076
        %v6100 = vmul.f32 %v5901, %v6076
        %v6101 = vmul.f32 %v5902, %v6076
        %v6102 = vmul.f32 %v5903, %v6076
        %v6103 = vmul.f32 %v5904, %v6076
        %v6104 = vmul.f32 %v5905, %v6076
        %v6105 = vmul.f32 %v5906, %v6076
        %v6106 = vmul.f32 %v5907, %v6076
        %v6107 = vmul.f32 %v5908, %v6076
        %v6108 = vmul.f32 %v5909, %v6076
        %v6109 = vadd.f32 %v6040, %v6077
        %v6110 = vadd.f32 %v6041, %v6078
        %v6111 = vadd.f32 %v6042, %v6079
        %v6112 = vadd.f32 %v6043, %v6080
        %v6113 = vadd.f32 %v6044, %v6081
        %v6114 = vadd.f32 %v6045, %v6082
        %v6115 = vadd.f32 %v6046, %v6083
        %v6116 = vadd.f32 %v6047, %v6084
        %v6117 = vadd.f32 %v6048, %v6085
        %v6118 = vadd.f32 %v6049, %v6086
        %v6119 = vadd.f32 %v6050, %v6087
        %v6120 = vadd.f32 %v6051, %v6088
        %v6121 = vadd.f32 %v6052, %v6089
        %v6122 = vadd.f32 %v6053, %v6090
        %v6123 = vadd.f32 %v6054, %v6091
        %v6124 = vadd.f32 %v6055, %v6092
        %v6125 = vadd.f32 %v6056, %v6093
        %v6126 = vadd.f32 %v6057, %v6094
        %v6127 = vadd.f32 %v6058, %v6095
        %v6128 = vadd.f32 %v6059, %v6096
        %v6129 = vadd.f32 %v6060, %v6097
        %v6130 = vadd.f32 %v6061, %v6098
        %v6131 = vadd.f32 %v6062, %v6099
        %v6132 = vadd.f32 %v6063, %v6100
        %v6133 = vadd.f32 %v6064, %v6101
        %v6134 = vadd.f32 %v6065, %v6102
        %v6135 = vadd.f32 %v6066, %v6103
        %v6136 = vadd.f32 %v6067, %v6104
        %v6137 = vadd.f32 %v6068, %v6105
        %v6138 = vadd.f32 %v6069, %v6106
        %v6139 = vadd.f32 %v6070, %v6107
        %v6140 = vadd.f32 %v6071, %v6108
        %v6141 = vld [vmem:[%s3 + $0x1b] sm:$0x1]
        %v6142 = vlaneseq
        %v6143 = vshrl.u32 %v6142, 7
        %v6144 = vsub.s32 0, %v6143
        %v6145 = vrot.slane %v6141, %v6144
        %v6146 = vmul.f32 %v5884, %v6145
        %v6147 = vmul.f32 %v5885, %v6145
        %v6148 = vmul.f32 %v5886, %v6145
        %v6149 = vmul.f32 %v5887, %v6145
        %v6150 = vmul.f32 %v5888, %v6145
        %v6151 = vmul.f32 %v5889, %v6145
        %v6152 = vmul.f32 %v5890, %v6145
        %v6153 = vmul.f32 %v5891, %v6145
        %v6154 = vmul.f32 %v5892, %v6145
        %v6155 = vmul.f32 %v5893, %v6145
        %v6156 = vmul.f32 %v5894, %v6145
        %v6157 = vmul.f32 %v5895, %v6145
        %v6158 = vmul.f32 %v5896, %v6145
        %v6159 = vmul.f32 %v5897, %v6145
        %v6160 = vmul.f32 %v5898, %v6145
        %v6161 = vmul.f32 %v5899, %v6145
        %v6162 = vmul.f32 %v5900, %v6145
        %v6163 = vmul.f32 %v5901, %v6145
        %v6164 = vmul.f32 %v5902, %v6145
        %v6165 = vmul.f32 %v5903, %v6145
        %v6166 = vmul.f32 %v5904, %v6145
        %v6167 = vmul.f32 %v5905, %v6145
        %v6168 = vmul.f32 %v5906, %v6145
        %v6169 = vmul.f32 %v5907, %v6145
        %v6170 = vmul.f32 %v5908, %v6145
        %v6171 = vmul.f32 %v5909, %v6145
        %v6172 = vmul.f32 %v5910, %v6145
        %v6173 = vmul.f32 %v5911, %v6145
        %v6174 = vmul.f32 %v5912, %v6145
        %v6175 = vmul.f32 %v5913, %v6145
        %v6176 = vmul.f32 %v5914, %v6145
        %v6177 = vmul.f32 %v5915, %v6145
        %v6178 = vadd.f32 %v6109, %v6146
        %v6179 = vadd.f32 %v6110, %v6147
        %v6180 = vadd.f32 %v6111, %v6148
        %v6181 = vadd.f32 %v6112, %v6149
        %v6182 = vadd.f32 %v6113, %v6150
        %v6183 = vadd.f32 %v6114, %v6151
        %v6184 = vadd.f32 %v6115, %v6152
        %v6185 = vadd.f32 %v6116, %v6153
        %v6186 = vadd.f32 %v6117, %v6154
        %v6187 = vadd.f32 %v6118, %v6155
        %v6188 = vadd.f32 %v6119, %v6156
        %v6189 = vadd.f32 %v6120, %v6157
        %v6190 = vadd.f32 %v6121, %v6158
        %v6191 = vadd.f32 %v6122, %v6159
        %v6192 = vadd.f32 %v6123, %v6160
        %v6193 = vadd.f32 %v6124, %v6161
        %v6194 = vadd.f32 %v6125, %v6162
        %v6195 = vadd.f32 %v6126, %v6163
        %v6196 = vadd.f32 %v6127, %v6164
        %v6197 = vadd.f32 %v6128, %v6165
        %v6198 = vadd.f32 %v6129, %v6166
        %v6199 = vadd.f32 %v6130, %v6167
        %v6200 = vadd.f32 %v6131, %v6168
        %v6201 = vadd.f32 %v6132, %v6169
        %v6202 = vadd.f32 %v6133, %v6170
        %v6203 = vadd.f32 %v6134, %v6171
        %v6204 = vadd.f32 %v6135, %v6172
        %v6205 = vadd.f32 %v6136, %v6173
        %v6206 = vadd.f32 %v6137, %v6174
        %v6207 = vadd.f32 %v6138, %v6175
        %v6208 = vadd.f32 %v6139, %v6176
        %v6209 = vadd.f32 %v6140, %v6177
        %v6210 = vld [vmem:[%s3 + $0x22] sm:$0x1]
        %v6211 = vlaneseq
        %v6212 = vshrl.u32 %v6211, 7
        %v6213 = vsub.s32 0, %v6212
        %v6214 = vrot.slane %v6210, %v6213
        %v6215 = vmul.f32 %v5890, %v6214
        %v6216 = vmul.f32 %v5891, %v6214
        %v6217 = vmul.f32 %v5892, %v6214
        %v6218 = vmul.f32 %v5893, %v6214
        %v6219 = vmul.f32 %v5894, %v6214
        %v6220 = vmul.f32 %v5895, %v6214
        %v6221 = vmul.f32 %v5896, %v6214
        %v6222 = vmul.f32 %v5897, %v6214
        %v6223 = vmul.f32 %v5898, %v6214
        %v6224 = vmul.f32 %v5899, %v6214
        %v6225 = vmul.f32 %v5900, %v6214
        %v6226 = vmul.f32 %v5901, %v6214
        %v6227 = vmul.f32 %v5902, %v6214
        %v6228 = vmul.f32 %v5903, %v6214
        %v6229 = vmul.f32 %v5904, %v6214
        %v6230 = vmul.f32 %v5905, %v6214
        %v6231 = vmul.f32 %v5906, %v6214
        %v6232 = vmul.f32 %v5907, %v6214
        %v6233 = vmul.f32 %v5908, %v6214
        %v6234 = vmul.f32 %v5909, %v6214
        %v6235 = vmul.f32 %v5910, %v6214
        %v6236 = vmul.f32 %v5911, %v6214
        %v6237 = vmul.f32 %v5912, %v6214
        %v6238 = vmul.f32 %v5913, %v6214
        %v6239 = vmul.f32 %v5914, %v6214
        %v6240 = vmul.f32 %v5915, %v6214
        %v6241 = vmul.f32 %v5916, %v6214
        %v6242 = vmul.f32 %v5917, %v6214
        %v6243 = vmul.f32 %v5918, %v6214
        %v6244 = vmul.f32 %v5919, %v6214
        %v6245 = vmul.f32 %v5920, %v6214
        %v6246 = vmul.f32 %v5921, %v6214
        %v6247 = vadd.f32 %v6178, %v6215
        %v6248 = vadd.f32 %v6179, %v6216
        %v6249 = vadd.f32 %v6180, %v6217
        %v6250 = vadd.f32 %v6181, %v6218
        %v6251 = vadd.f32 %v6182, %v6219
        %v6252 = vadd.f32 %v6183, %v6220
        %v6253 = vadd.f32 %v6184, %v6221
        %v6254 = vadd.f32 %v6185, %v6222
        %v6255 = vadd.f32 %v6186, %v6223
        %v6256 = vadd.f32 %v6187, %v6224
        %v6257 = vadd.f32 %v6188, %v6225
        %v6258 = vadd.f32 %v6189, %v6226
        %v6259 = vadd.f32 %v6190, %v6227
        %v6260 = vadd.f32 %v6191, %v6228
        %v6261 = vadd.f32 %v6192, %v6229
        %v6262 = vadd.f32 %v6193, %v6230
        %v6263 = vadd.f32 %v6194, %v6231
        %v6264 = vadd.f32 %v6195, %v6232
        %v6265 = vadd.f32 %v6196, %v6233
        %v6266 = vadd.f32 %v6197, %v6234
        %v6267 = vadd.f32 %v6198, %v6235
        %v6268 = vadd.f32 %v6199, %v6236
        %v6269 = vadd.f32 %v6200, %v6237
        %v6270 = vadd.f32 %v6201, %v6238
        %v6271 = vadd.f32 %v6202, %v6239
        %v6272 = vadd.f32 %v6203, %v6240
        %v6273 = vadd.f32 %v6204, %v6241
        %v6274 = vadd.f32 %v6205, %v6242
        %v6275 = vadd.f32 %v6206, %v6243
        %v6276 = vadd.f32 %v6207, %v6244
        %v6277 = vadd.f32 %v6208, %v6245
        %v6278 = vadd.f32 %v6209, %v6246
        %v6279 = vld [vmem:[%s3 + $0x29] sm:$0x1]
        %v6280 = vlaneseq
        %v6281 = vshrl.u32 %v6280, 7
        %v6282 = vsub.s32 0, %v6281
        %v6283 = vrot.slane %v6279, %v6282
        %v6284 = vmul.f32 %v5896, %v6283
        %v6285 = vmul.f32 %v5897, %v6283
        %v6286 = vmul.f32 %v5898, %v6283
        %v6287 = vmul.f32 %v5899, %v6283
        %v6288 = vmul.f32 %v5900, %v6283
        %v6289 = vmul.f32 %v5901, %v6283
        %v6290 = vmul.f32 %v5902, %v6283
        %v6291 = vmul.f32 %v5903, %v6283
        %v6292 = vmul.f32 %v5904, %v6283
        %v6293 = vmul.f32 %v5905, %v6283
        %v6294 = vmul.f32 %v5906, %v6283
        %v6295 = vmul.f32 %v5907, %v6283
        %v6296 = vmul.f32 %v5908, %v6283
        %v6297 = vmul.f32 %v5909, %v6283
        %v6298 = vmul.f32 %v5910, %v6283
        %v6299 = vmul.f32 %v5911, %v6283
        %v6300 = vmul.f32 %v5912, %v6283
        %v6301 = vmul.f32 %v5913, %v6283
        %v6302 = vmul.f32 %v5914, %v6283
        %v6303 = vmul.f32 %v5915, %v6283
        %v6304 = vmul.f32 %v5916, %v6283
        %v6305 = vmul.f32 %v5917, %v6283
        %v6306 = vmul.f32 %v5918, %v6283
        %v6307 = vmul.f32 %v5919, %v6283
        %v6308 = vmul.f32 %v5920, %v6283
        %v6309 = vmul.f32 %v5921, %v6283
        %v6310 = vmul.f32 %v5922, %v6283
        %v6311 = vmul.f32 %v5923, %v6283
        %v6312 = vmul.f32 %v5924, %v6283
        %v6313 = vmul.f32 %v5925, %v6283
        %v6314 = vmul.f32 %v5926, %v6283
        %v6315 = vmul.f32 %v5927, %v6283
        %v6316 = vadd.f32 %v6247, %v6284
        %v6317 = vadd.f32 %v6248, %v6285
        %v6318 = vadd.f32 %v6249, %v6286
        %v6319 = vadd.f32 %v6250, %v6287
        %v6320 = vadd.f32 %v6251, %v6288
        %v6321 = vadd.f32 %v6252, %v6289
        %v6322 = vadd.f32 %v6253, %v6290
        %v6323 = vadd.f32 %v6254, %v6291
        %v6324 = vadd.f32 %v6255, %v6292
        %v6325 = vadd.f32 %v6256, %v6293
        %v6326 = vadd.f32 %v6257, %v6294
        %v6327 = vadd.f32 %v6258, %v6295
        %v6328 = vadd.f32 %v6259, %v6296
        %v6329 = vadd.f32 %v6260, %v6297
        %v6330 = vadd.f32 %v6261, %v6298
        %v6331 = vadd.f32 %v6262, %v6299
        %v6332 = vadd.f32 %v6263, %v6300
        %v6333 = vadd.f32 %v6264, %v6301
        %v6334 = vadd.f32 %v6265, %v6302
        %v6335 = vadd.f32 %v6266, %v6303
        %v6336 = vadd.f32 %v6267, %v6304
        %v6337 = vadd.f32 %v6268, %v6305
        %v6338 = vadd.f32 %v6269, %v6306
        %v6339 = vadd.f32 %v6270, %v6307
        %v6340 = vadd.f32 %v6271, %v6308
        %v6341 = vadd.f32 %v6272, %v6309
        %v6342 = vadd.f32 %v6273, %v6310
        %v6343 = vadd.f32 %v6274, %v6311
        %v6344 = vadd.f32 %v6275, %v6312
        %v6345 = vadd.f32 %v6276, %v6313
        %v6346 = vadd.f32 %v6277, %v6314
        %v6347 = vadd.f32 %v6278, %v6315
        %v6348 = vld [vmem:[%s3 + $0x30] sm:$0x1]
        %v6349 = vlaneseq
        %v6350 = vshrl.u32 %v6349, 7
        %v6351 = vsub.s32 0, %v6350
        %v6352 = vrot.slane %v6348, %v6351
        %v6353 = vmul.f32 %v5902, %v6352
        %v6354 = vmul.f32 %v5903, %v6352
        %v6355 = vmul.f32 %v5904, %v6352
        %v6356 = vmul.f32 %v5905, %v6352
        %v6357 = vmul.f32 %v5906, %v6352
        %v6358 = vmul.f32 %v5907, %v6352
        %v6359 = vmul.f32 %v5908, %v6352
        %v6360 = vmul.f32 %v5909, %v6352
        %v6361 = vmul.f32 %v5910, %v6352
        %v6362 = vmul.f32 %v5911, %v6352
        %v6363 = vmul.f32 %v5912, %v6352
        %v6364 = vmul.f32 %v5913, %v6352
        %v6365 = vmul.f32 %v5914, %v6352
        %v6366 = vmul.f32 %v5915, %v6352
        %v6367 = vmul.f32 %v5916, %v6352
        %v6368 = vmul.f32 %v5917, %v6352
        %v6369 = vmul.f32 %v5918, %v6352
        %v6370 = vmul.f32 %v5919, %v6352
        %v6371 = vmul.f32 %v5920, %v6352
        %v6372 = vmul.f32 %v5921, %v6352
        %v6373 = vmul.f32 %v5922, %v6352
        %v6374 = vmul.f32 %v5923, %v6352
        %v6375 = vmul.f32 %v5924, %v6352
        %v6376 = vmul.f32 %v5925, %v6352
        %v6377 = vmul.f32 %v5926, %v6352
        %v6378 = vmul.f32 %v5927, %v6352
        %v6379 = vmul.f32 %v5928, %v6352
        %v6380 = vmul.f32 %v5929, %v6352
        %v6381 = vmul.f32 %v5930, %v6352
        %v6382 = vmul.f32 %v5931, %v6352
        %v6383 = vmul.f32 %v5932, %v6352
        %v6384 = vmul.f32 %v5933, %v6352
        %v6385 = vadd.f32 %v6316, %v6353
        %v6386 = vadd.f32 %v6317, %v6354
        %v6387 = vadd.f32 %v6318, %v6355
        %v6388 = vadd.f32 %v6319, %v6356
        %v6389 = vadd.f32 %v6320, %v6357
        %v6390 = vadd.f32 %v6321, %v6358
        %v6391 = vadd.f32 %v6322, %v6359
        %v6392 = vadd.f32 %v6323, %v6360
        %v6393 = vadd.f32 %v6324, %v6361
        %v6394 = vadd.f32 %v6325, %v6362
        %v6395 = vadd.f32 %v6326, %v6363
        %v6396 = vadd.f32 %v6327, %v6364
        %v6397 = vadd.f32 %v6328, %v6365
        %v6398 = vadd.f32 %v6329, %v6366
        %v6399 = vadd.f32 %v6330, %v6367
        %v6400 = vadd.f32 %v6331, %v6368
        %v6401 = vadd.f32 %v6332, %v6369
        %v6402 = vadd.f32 %v6333, %v6370
        %v6403 = vadd.f32 %v6334, %v6371
        %v6404 = vadd.f32 %v6335, %v6372
        %v6405 = vadd.f32 %v6336, %v6373
        %v6406 = vadd.f32 %v6337, %v6374
        %v6407 = vadd.f32 %v6338, %v6375
        %v6408 = vadd.f32 %v6339, %v6376
        %v6409 = vadd.f32 %v6340, %v6377
        %v6410 = vadd.f32 %v6341, %v6378
        %v6411 = vadd.f32 %v6342, %v6379
        %v6412 = vadd.f32 %v6343, %v6380
        %v6413 = vadd.f32 %v6344, %v6381
        %v6414 = vadd.f32 %v6345, %v6382
        %v6415 = vadd.f32 %v6346, %v6383
        %v6416 = vadd.f32 %v6347, %v6384
        %v6417 = vld [vmem:[%s4] sm:$0x1]
        %v6419 = vlaneseq
        %v6420 = vshrl.u32 %v6419, 7
        %v6421 = vsub.s32 0, %v6420
        %v6422 = vrot.slane %v6417, %v6421
        %v6424 = vadd.f32 %v6385, %v6422
        %v6425 = vadd.f32 %v6386, %v6422
        %v6426 = vadd.f32 %v6387, %v6422
        %v6427 = vadd.f32 %v6388, %v6422
        %v6428 = vadd.f32 %v6389, %v6422
        %v6429 = vadd.f32 %v6390, %v6422
        %v6430 = vadd.f32 %v6391, %v6422
        %v6431 = vadd.f32 %v6392, %v6422
        %v6432 = vadd.f32 %v6393, %v6422
        %v6433 = vadd.f32 %v6394, %v6422
        %v6434 = vadd.f32 %v6395, %v6422
        %v6435 = vadd.f32 %v6396, %v6422
        %v6436 = vadd.f32 %v6397, %v6422
        %v6437 = vadd.f32 %v6398, %v6422
        %v6438 = vadd.f32 %v6399, %v6422
        %v6439 = vadd.f32 %v6400, %v6422
        %v6440 = vadd.f32 %v6401, %v6422
        %v6441 = vadd.f32 %v6402, %v6422
        %v6442 = vadd.f32 %v6403, %v6422
        %v6443 = vadd.f32 %v6404, %v6422
        %v6444 = vadd.f32 %v6405, %v6422
        %v6445 = vadd.f32 %v6406, %v6422
        %v6446 = vadd.f32 %v6407, %v6422
        %v6447 = vadd.f32 %v6408, %v6422
        %v6448 = vadd.f32 %v6409, %v6422
        %v6449 = vadd.f32 %v6410, %v6422
        %v6450 = vadd.f32 %v6411, %v6422
        %v6451 = vadd.f32 %v6412, %v6422
        %v6452 = vadd.f32 %v6413, %v6422
        %v6453 = vadd.f32 %v6414, %v6422
        %v6454 = vadd.f32 %v6415, %v6422
        %v6455 = vadd.f32 %v6416, %v6422
        %v6456 = vld [vmem:[%s5] sm:$0xff]
        %v6457 = vld [vmem:[%s5 + $0x8] sm:$0xff]
        %v6458 = vld [vmem:[%s5 + $0x10] sm:$0xff]
        %v6459 = vld [vmem:[%s5 + $0x18] sm:$0xff]
        %v6460 = vld [vmem:[%s6] sm:$0x1]
        %v6462 = vlaneseq
        %v6463 = vshrl.u32 %v6462, 7
        %v6464 = vsub.s32 0, %v6463
        %v6465 = vrot.slane %v6460, %v6464
        %v6468 = vsel %vm297, %v6424, 0
        %v6471 = vsel %vm297, %v6425, 0
        %v6474 = vsel %vm297, %v6426, 0
        %v6477 = vsel %vm297, %v6427, 0
        %v6480 = vsel %vm297, %v6428, 0
        %v6483 = vsel %vm297, %v6429, 0
        %v6486 = vsel %vm297, %v6430, 0
        %v6489 = vsel %vm297, %v6431, 0
        %v6492 = vsel %vm297, %v6432, 0
        %v6495 = vsel %vm297, %v6433, 0
        %v6498 = vsel %vm297, %v6434, 0
        %v6501 = vsel %vm297, %v6435, 0
        %v6504 = vsel %vm297, %v6436, 0
        %v6507 = vsel %vm297, %v6437, 0
        %v6510 = vsel %vm297, %v6438, 0
        %v6513 = vsel %vm297, %v6439, 0
        %v6516 = vsel %vm297, %v6440, 0
        %v6519 = vsel %vm297, %v6441, 0
        %v6522 = vsel %vm297, %v6442, 0
        %v6525 = vsel %vm297, %v6443, 0
        %v6528 = vsel %vm297, %v6444, 0
        %v6531 = vsel %vm297, %v6445, 0
        %v6534 = vsel %vm297, %v6446, 0
        %v6537 = vsel %vm297, %v6447, 0
        %v6540 = vsel %vm297, %v6448, 0
        %v6543 = vsel %vm297, %v6449, 0
        %v6546 = vsel %vm297, %v6450, 0
        %v6549 = vsel %vm297, %v6451, 0
        %v6552 = vsel %vm297, %v6452, 0
        %v6555 = vsel %vm297, %v6453, 0
        %v6558 = vsel %vm297, %v6454, 0
        %v6561 = vsel %vm297, %v6455, 0
        %6563 = vmatprep.subr.mxu0 0.0
        %6564 = vmatpush1.msra.mxu0 %v6456
        %6565 = vmatprep.subr.mxu0 0.0
        %6566 = vmatpush1.msra.mxu0 %v6457
        %6567 = vmatprep.subr.mxu0 0.0
        %6568 = vmatpush1.msra.mxu0 %v6458
        %6569 = vmatprep.subr.mxu0 0.0
        %6570 = vmatpush1.msra.mxu0 %v6459
        %6571 = vmatprep.subr.mxu0 0.0
        %6572 = vmatpush1.msra.mxu0 0.0
        %6573 = vmatprep.subr.mxu0 0.0
        %6574 = vmatpush1.msra.mxu0 0.0
        %6575 = vmatprep.subr.mxu0 0.0
        %6576 = vmatpush1.msra.mxu0 0.0
        %6577 = vmatprep.subr.mxu0 0.0
        %6578 = vmatpush1.msra.mxu0 0.0
        %6579 = vmatprep.subr.mxu0 0.0
        %6580 = vmatpush1.msra.mxu0 0.0
        %6581 = vmatprep.subr.mxu0 0.0
        %6582 = vmatpush1.msra.mxu0 0.0
        %6583 = vmatprep.subr.mxu0 0.0
        %6584 = vmatpush1.msra.mxu0 0.0
        %6585 = vmatprep.subr.mxu0 0.0
        %6586 = vmatpush1.msra.mxu0 0.0
        %6587 = vmatprep.subr.mxu0 0.0
        %6588 = vmatpush1.msra.mxu0 0.0
        %6589 = vmatprep.subr.mxu0 0.0
        %6590 = vmatpush1.msra.mxu0 0.0
        %6591 = vmatprep.subr.mxu0 0.0
        %6592 = vmatpush1.msra.mxu0 0.0
        %6593 = vmatprep.subr.mxu0 0.0
        %6594 = vmatpush1.msra.mxu0 0.0
        %6595 = vmatprep.subr.mxu0 0.0
        %6596 = vmatpush1.msra.mxu0 0.0
        %6597 = vmatprep.subr.mxu0 0.0
        %6598 = vmatpush1.msra.mxu0 0.0
        %6599 = vmatprep.subr.mxu0 0.0
        %6600 = vmatpush1.msra.mxu0 0.0
        %6601 = vmatprep.subr.mxu0 0.0
        %6602 = vmatpush1.msra.mxu0 0.0
        %6603 = vmatprep.subr.mxu0 0.0
        %6604 = vmatpush1.msra.mxu0 0.0
        %6605 = vmatprep.subr.mxu0 0.0
        %6606 = vmatpush1.msra.mxu0 0.0
        %6607 = vmatprep.subr.mxu0 0.0
        %6608 = vmatpush1.msra.mxu0 0.0
        %6609 = vmatprep.subr.mxu0 0.0
        %6610 = vmatpush1.msra.mxu0 0.0
        %6611 = vmatprep.subr.mxu0 0.0
        %6612 = vmatpush1.msra.mxu0 0.0
        %6613 = vmatprep.subr.mxu0 0.0
        %6614 = vmatpush1.msra.mxu0 0.0
        %6615 = vmatprep.subr.mxu0 0.0
        %6616 = vmatpush1.msra.mxu0 0.0
        %6617 = vmatprep.subr.mxu0 0.0
        %6618 = vmatpush1.msra.mxu0 0.0
        %6619 = vmatprep.subr.mxu0 0.0
        %6620 = vmatpush1.msra.mxu0 0.0
        %6621 = vmatprep.subr.mxu0 0.0
        %6622 = vmatpush1.msra.mxu0 0.0
        %6623 = vmatprep.subr.mxu0 0.0
        %6624 = vmatpush1.msra.mxu0 0.0
        %6625 = vmatprep.subr.mxu0 0.0
        %6626 = vmatpush1.msra.mxu0 0.0
        %6627 = vmatprep.mubr.f32.mxu0 0.0
        %6628 = vmatmul.mubr.f32.gmra.mrb[0].mxu0 %v6468
        %v6629 = vpop.f32.mrb[0].mxu0
        %v6630 = vadd.f32 %v6465, %v6629
        %v6631 = vpop.f32.mrb[0].mxu0
        %6632 = vmatprep.mubr.f32.mxu0 0.0
        %6633 = vmatmul.mubr.f32.gmra.mrb[0].mxu0 %v6471
        %v6634 = vpop.f32.mrb[0].mxu0
        %v6635 = vadd.f32 %v6465, %v6634
        %v6636 = vpop.f32.mrb[0].mxu0
        %6637 = vmatprep.mubr.f32.mxu0 0.0
        %6638 = vmatmul.mubr.f32.gmra.mrb[0].mxu0 %v6474
        %v6639 = vpop.f32.mrb[0].mxu0
        %v6640 = vadd.f32 %v6465, %v6639
        %v6641 = vpop.f32.mrb[0].mxu0
        %6642 = vmatprep.mubr.f32.mxu0 0.0
        %6643 = vmatmul.mubr.f32.gmra.mrb[0].mxu0 %v6477
        %v6644 = vpop.f32.mrb[0].mxu0
        %v6645 = vadd.f32 %v6465, %v6644
        %v6646 = vpop.f32.mrb[0].mxu0
        %6647 = vmatprep.mubr.f32.mxu0 0.0
        %6648 = vmatmul.mubr.f32.gmra.mrb[0].mxu0 %v6480
        %v6649 = vpop.f32.mrb[0].mxu0
        %v6650 = vadd.f32 %v6465, %v6649
        %v6651 = vpop.f32.mrb[0].mxu0
        %6652 = vmatprep.mubr.f32.mxu0 0.0
        %6653 = vmatmul.mubr.f32.gmra.mrb[0].mxu0 %v6483
        %v6654 = vpop.f32.mrb[0].mxu0
        %v6655 = vadd.f32 %v6465, %v6654
        %v6656 = vpop.f32.mrb[0].mxu0
        %6657 = vmatprep.mubr.f32.mxu0 0.0
        %6658 = vmatmul.mubr.f32.gmra.mrb[0].mxu0 %v6486
        %v6659 = vpop.f32.mrb[0].mxu0
        %v6660 = vadd.f32 %v6465, %v6659
        %v6661 = vpop.f32.mrb[0].mxu0
        %6662 = vmatprep.mubr.f32.mxu0 0.0
        %6663 = vmatmul.mubr.f32.gmra.mrb[0].mxu0 %v6489
        %v6664 = vpop.f32.mrb[0].mxu0
        %v6665 = vadd.f32 %v6465, %v6664
        %v6666 = vpop.f32.mrb[0].mxu0
        %6667 = vmatprep.mubr.f32.mxu0 0.0
        %6668 = vmatmul.mubr.f32.gmra.mrb[0].mxu0 %v6492
        %v6669 = vpop.f32.mrb[0].mxu0
        %v6670 = vadd.f32 %v6465, %v6669
        %v6671 = vpop.f32.mrb[0].mxu0
        %6672 = vmatprep.mubr.f32.mxu0 0.0
        %6673 = vmatmul.mubr.f32.gmra.mrb[0].mxu0 %v6495
        %v6674 = vpop.f32.mrb[0].mxu0
        %v6675 = vadd.f32 %v6465, %v6674
        %v6676 = vpop.f32.mrb[0].mxu0
        %6677 = vmatprep.mubr.f32.mxu0 0.0
        %6678 = vmatmul.mubr.f32.gmra.mrb[0].mxu0 %v6498
        %v6679 = vpop.f32.mrb[0].mxu0
        %v6680 = vadd.f32 %v6465, %v6679
        %v6681 = vpop.f32.mrb[0].mxu0
        %6682 = vmatprep.mubr.f32.mxu0 0.0
        %6683 = vmatmul.mubr.f32.gmra.mrb[0].mxu0 %v6501
        %v6684 = vpop.f32.mrb[0].mxu0
        %v6685 = vadd.f32 %v6465, %v6684
        %v6686 = vpop.f32.mrb[0].mxu0
        %6687 = vmatprep.mubr.f32.mxu0 0.0
        %6688 = vmatmul.mubr.f32.gmra.mrb[0].mxu0 %v6504
        %v6689 = vpop.f32.mrb[0].mxu0
        %v6690 = vadd.f32 %v6465, %v6689
        %v6691 = vpop.f32.mrb[0].mxu0
        %6692 = vmatprep.mubr.f32.mxu0 0.0
        %6693 = vmatmul.mubr.f32.gmra.mrb[0].mxu0 %v6507
        %v6694 = vpop.f32.mrb[0].mxu0
        %v6695 = vadd.f32 %v6465, %v6694
        %v6696 = vpop.f32.mrb[0].mxu0
        %6697 = vmatprep.mubr.f32.mxu0 0.0
        %6698 = vmatmul.mubr.f32.gmra.mrb[0].mxu0 %v6510
        %v6699 = vpop.f32.mrb[0].mxu0
        %v6700 = vadd.f32 %v6465, %v6699
        %v6701 = vpop.f32.mrb[0].mxu0
        %6702 = vmatprep.mubr.f32.mxu0 0.0
        %6703 = vmatmul.mubr.f32.gmra.mrb[0].mxu0 %v6513
        %v6704 = vpop.f32.mrb[0].mxu0
        %v6705 = vadd.f32 %v6465, %v6704
        %v6706 = vpop.f32.mrb[0].mxu0
        %6707 = vmatprep.mubr.f32.mxu0 0.0
        %6708 = vmatmul.mubr.f32.gmra.mrb[0].mxu0 %v6516
        %v6709 = vpop.f32.mrb[0].mxu0
        %v6710 = vadd.f32 %v6465, %v6709
        %v6711 = vpop.f32.mrb[0].mxu0
        %6712 = vmatprep.mubr.f32.mxu0 0.0
        %6713 = vmatmul.mubr.f32.gmra.mrb[0].mxu0 %v6519
        %v6714 = vpop.f32.mrb[0].mxu0
        %v6715 = vadd.f32 %v6465, %v6714
        %v6716 = vpop.f32.mrb[0].mxu0
        %6717 = vmatprep.mubr.f32.mxu0 0.0
        %6718 = vmatmul.mubr.f32.gmra.mrb[0].mxu0 %v6522
        %v6719 = vpop.f32.mrb[0].mxu0
        %v6720 = vadd.f32 %v6465, %v6719
        %v6721 = vpop.f32.mrb[0].mxu0
        %6722 = vmatprep.mubr.f32.mxu0 0.0
        %6723 = vmatmul.mubr.f32.gmra.mrb[0].mxu0 %v6525
        %v6724 = vpop.f32.mrb[0].mxu0
        %v6725 = vadd.f32 %v6465, %v6724
        %v6726 = vpop.f32.mrb[0].mxu0
        %6727 = vmatprep.mubr.f32.mxu0 0.0
        %6728 = vmatmul.mubr.f32.gmra.mrb[0].mxu0 %v6528
        %v6729 = vpop.f32.mrb[0].mxu0
        %v6730 = vadd.f32 %v6465, %v6729
        %v6731 = vpop.f32.mrb[0].mxu0
        %6732 = vmatprep.mubr.f32.mxu0 0.0
        %6733 = vmatmul.mubr.f32.gmra.mrb[0].mxu0 %v6531
        %v6734 = vpop.f32.mrb[0].mxu0
        %v6735 = vadd.f32 %v6465, %v6734
        %v6736 = vpop.f32.mrb[0].mxu0
        %6737 = vmatprep.mubr.f32.mxu0 0.0
        %6738 = vmatmul.mubr.f32.gmra.mrb[0].mxu0 %v6534
        %v6739 = vpop.f32.mrb[0].mxu0
        %v6740 = vadd.f32 %v6465, %v6739
        %v6741 = vpop.f32.mrb[0].mxu0
        %6742 = vmatprep.mubr.f32.mxu0 0.0
        %6743 = vmatmul.mubr.f32.gmra.mrb[0].mxu0 %v6537
        %v6744 = vpop.f32.mrb[0].mxu0
        %v6745 = vadd.f32 %v6465, %v6744
        %v6746 = vpop.f32.mrb[0].mxu0
        %6747 = vmatprep.mubr.f32.mxu0 0.0
        %6748 = vmatmul.mubr.f32.gmra.mrb[0].mxu0 %v6540
        %v6749 = vpop.f32.mrb[0].mxu0
        %v6750 = vadd.f32 %v6465, %v6749
        %v6751 = vpop.f32.mrb[0].mxu0
        %6752 = vmatprep.mubr.f32.mxu0 0.0
        %6753 = vmatmul.mubr.f32.gmra.mrb[0].mxu0 %v6543
        %v6754 = vpop.f32.mrb[0].mxu0
        %v6755 = vadd.f32 %v6465, %v6754
        %v6756 = vpop.f32.mrb[0].mxu0
        %6757 = vmatprep.mubr.f32.mxu0 0.0
        %6758 = vmatmul.mubr.f32.gmra.mrb[0].mxu0 %v6546
        %v6759 = vpop.f32.mrb[0].mxu0
        %v6760 = vadd.f32 %v6465, %v6759
        %v6761 = vpop.f32.mrb[0].mxu0
        %6762 = vmatprep.mubr.f32.mxu0 0.0
        %6763 = vmatmul.mubr.f32.gmra.mrb[0].mxu0 %v6549
        %v6764 = vpop.f32.mrb[0].mxu0
        %v6765 = vadd.f32 %v6465, %v6764
        %v6766 = vpop.f32.mrb[0].mxu0
        %6767 = vmatprep.mubr.f32.mxu0 0.0
        %6768 = vmatmul.mubr.f32.gmra.mrb[0].mxu0 %v6552
        %v6769 = vpop.f32.mrb[0].mxu0
        %v6770 = vadd.f32 %v6465, %v6769
        %v6771 = vpop.f32.mrb[0].mxu0
        %6772 = vmatprep.mubr.f32.mxu0 0.0
        %6773 = vmatmul.mubr.f32.gmra.mrb[0].mxu0 %v6555
        %v6774 = vpop.f32.mrb[0].mxu0
        %v6775 = vadd.f32 %v6465, %v6774
        %v6776 = vpop.f32.mrb[0].mxu0
        %6777 = vmatprep.mubr.f32.mxu0 0.0
        %6778 = vmatmul.mubr.f32.gmra.mrb[0].mxu0 %v6558
        %v6779 = vpop.f32.mrb[0].mxu0
        %v6780 = vadd.f32 %v6465, %v6779
        %v6781 = vpop.f32.mrb[0].mxu0
        %6782 = vmatprep.mubr.f32.mxu0 0.0
        %6783 = vmatmul.mubr.f32.gmra.mrb[0].mxu0 %v6561
        %v6784 = vpop.f32.mrb[0].mxu0
        %v6785 = vadd.f32 %v6465, %v6784
        %v6786 = vpop.f32.mrb[0].mxu0
        %6787 = vdwg.mxu0
        %v6788 = vld [vmem:[%s266] sm:$0xff]
        %v6789 = vld [vmem:[%s266 + $0x8] sm:$0xff]
        %v6790 = vld [vmem:[%s266 + $0x10] sm:$0xff]
        %v6791 = vld [vmem:[%s266 + $0x18] sm:$0xff]
        %v6792 = vld [vmem:[%s266 + $0x20] sm:$0xff]
        %v6793 = vld [vmem:[%s266 + $0x28] sm:$0xff]
        %v6794 = vld [vmem:[%s266 + $0x30] sm:$0xff]
        %v6795 = vld [vmem:[%s266 + $0x38] sm:$0xff]
        %v6796 = vld [vmem:[%s266 + $0x40] sm:$0xff]
        %v6797 = vld [vmem:[%s266 + $0x48] sm:$0xff]
        %v6798 = vld [vmem:[%s266 + $0x50] sm:$0xff]
        %v6799 = vld [vmem:[%s266 + $0x58] sm:$0xff]
        %v6800 = vld [vmem:[%s266 + $0x60] sm:$0xff]
        %v6801 = vld [vmem:[%s266 + $0x68] sm:$0xff]
        %v6802 = vld [vmem:[%s266 + $0x70] sm:$0xff]
        %v6803 = vld [vmem:[%s266 + $0x78] sm:$0xff]
        %v6804 = vld [vmem:[%s266 + $0x80] sm:$0xff]
        %v6805 = vld [vmem:[%s266 + $0x88] sm:$0xff]
        %v6806 = vld [vmem:[%s266 + $0x90] sm:$0xff]
        %v6807 = vld [vmem:[%s266 + $0x98] sm:$0xff]
        %v6808 = vld [vmem:[%s266 + $0xa0] sm:$0xff]
        %v6809 = vld [vmem:[%s266 + $0xa8] sm:$0xff]
        %v6810 = vld [vmem:[%s266 + $0xb0] sm:$0xff]
        %v6811 = vld [vmem:[%s266 + $0xb8] sm:$0xff]
        %v6812 = vld [vmem:[%s266 + $0xc0] sm:$0xff]
        %v6813 = vld [vmem:[%s266 + $0xc8] sm:$0xff]
        %v6814 = vld [vmem:[%s266 + $0xd0] sm:$0xff]
        %v6815 = vld [vmem:[%s266 + $0xd8] sm:$0xff]
        %v6816 = vld [vmem:[%s266 + $0xe0] sm:$0xff]
        %v6817 = vld [vmem:[%s266 + $0xe8] sm:$0xff]
        %v6818 = vld [vmem:[%s266 + $0xf0] sm:$0xff]
        %v6819 = vld [vmem:[%s266 + $0xf8] sm:$0xff]
        %v6820 = vmul.f32 %v6788, %v6630
        %v6821 = vmul.f32 %v6789, %v6635
        %v6822 = vmul.f32 %v6790, %v6640
        %v6823 = vmul.f32 %v6791, %v6645
        %v6824 = vmul.f32 %v6792, %v6650
        %v6825 = vmul.f32 %v6793, %v6655
        %v6826 = vmul.f32 %v6794, %v6660
        %v6827 = vmul.f32 %v6795, %v6665
        %v6828 = vmul.f32 %v6796, %v6670
        %v6829 = vmul.f32 %v6797, %v6675
        %v6830 = vmul.f32 %v6798, %v6680
        %v6831 = vmul.f32 %v6799, %v6685
        %v6832 = vmul.f32 %v6800, %v6690
        %v6833 = vmul.f32 %v6801, %v6695
        %v6834 = vmul.f32 %v6802, %v6700
        %v6835 = vmul.f32 %v6803, %v6705
        %v6836 = vmul.f32 %v6804, %v6710
        %v6837 = vmul.f32 %v6805, %v6715
        %v6838 = vmul.f32 %v6806, %v6720
        %v6839 = vmul.f32 %v6807, %v6725
        %v6840 = vmul.f32 %v6808, %v6730
        %v6841 = vmul.f32 %v6809, %v6735
        %v6842 = vmul.f32 %v6810, %v6740
        %v6843 = vmul.f32 %v6811, %v6745
        %v6844 = vmul.f32 %v6812, %v6750
        %v6845 = vmul.f32 %v6813, %v6755
        %v6846 = vmul.f32 %v6814, %v6760
        %v6847 = vmul.f32 %v6815, %v6765
        %v6848 = vmul.f32 %v6816, %v6770
        %v6849 = vmul.f32 %v6817, %v6775
        %v6850 = vmul.f32 %v6818, %v6780
        %v6851 = vmul.f32 %v6819, %v6785
        %6852 = vst.msk [vmem:[%s296] sm:$0xff] %vm297, %v6820
        %6853 = vst.msk [vmem:[%s296 + $0x8] sm:$0xff] %vm297, %v6821
        %6854 = vst.msk [vmem:[%s296 + $0x10] sm:$0xff] %vm297, %v6822
        %6855 = vst.msk [vmem:[%s296 + $0x18] sm:$0xff] %vm297, %v6823
        %6856 = vst.msk [vmem:[%s296 + $0x20] sm:$0xff] %vm297, %v6824
        %6857 = vst.msk [vmem:[%s296 + $0x28] sm:$0xff] %vm297, %v6825
        %6858 = vst.msk [vmem:[%s296 + $0x30] sm:$0xff] %vm297, %v6826
        %6859 = vst.msk [vmem:[%s296 + $0x38] sm:$0xff] %vm297, %v6827
        %6860 = vst.msk [vmem:[%s296 + $0x40] sm:$0xff] %vm297, %v6828
        %6861 = vst.msk [vmem:[%s296 + $0x48] sm:$0xff] %vm297, %v6829
        %6862 = vst.msk [vmem:[%s296 + $0x50] sm:$0xff] %vm297, %v6830
        %6863 = vst.msk [vmem:[%s296 + $0x58] sm:$0xff] %vm297, %v6831
        %6864 = vst.msk [vmem:[%s296 + $0x60] sm:$0xff] %vm297, %v6832
        %6865 = vst.msk [vmem:[%s296 + $0x68] sm:$0xff] %vm297, %v6833
        %6866 = vst.msk [vmem:[%s296 + $0x70] sm:$0xff] %vm297, %v6834
        %6867 = vst.msk [vmem:[%s296 + $0x78] sm:$0xff] %vm297, %v6835
        %6868 = vst.msk [vmem:[%s296 + $0x80] sm:$0xff] %vm297, %v6836
        %6869 = vst.msk [vmem:[%s296 + $0x88] sm:$0xff] %vm297, %v6837
        %6870 = vst.msk [vmem:[%s296 + $0x90] sm:$0xff] %vm297, %v6838
        %6871 = vst.msk [vmem:[%s296 + $0x98] sm:$0xff] %vm297, %v6839
        %6872 = vst.msk [vmem:[%s296 + $0xa0] sm:$0xff] %vm297, %v6840
        %6873 = vst.msk [vmem:[%s296 + $0xa8] sm:$0xff] %vm297, %v6841
        %6874 = vst.msk [vmem:[%s296 + $0xb0] sm:$0xff] %vm297, %v6842
        %6875 = vst.msk [vmem:[%s296 + $0xb8] sm:$0xff] %vm297, %v6843
        %6876 = vst.msk [vmem:[%s296 + $0xc0] sm:$0xff] %vm297, %v6844
        %6877 = vst.msk [vmem:[%s296 + $0xc8] sm:$0xff] %vm297, %v6845
        %6878 = vst.msk [vmem:[%s296 + $0xd0] sm:$0xff] %vm297, %v6846
        %6879 = vst.msk [vmem:[%s296 + $0xd8] sm:$0xff] %vm297, %v6847
        %6880 = vst.msk [vmem:[%s296 + $0xe0] sm:$0xff] %vm297, %v6848
        %6881 = vst.msk [vmem:[%s296 + $0xe8] sm:$0xff] %vm297, %v6849
        %6882 = vst.msk [vmem:[%s296 + $0xf0] sm:$0xff] %vm297, %v6850
        %6883 = vst.msk [vmem:[%s296 + $0xf8] sm:$0xff] %vm297, %v6851
        %s6884 = sand.u32 %s184, 1
        %s6885 = scalar_lea.sflag [#allocation5], %s6884
        %s6886 = sand.u32 %s184, 1
        %s6887 = smul.addr %s6886, 256
        %s6888 = scalar_lea.vmem [#allocation6], %s6887
        // Predicated region
        $region53: #{tpu_custom_call.1} parent=47 // pred_check
          %p6889 = pneg %p194
        $region54: #{tpu_custom_call.1} parent=47 // pred_check_branch
          %6891 = sbr.rel (%p6889) target = $region56
        $region55: #{tpu_custom_call.1} parent=47 // pred_region
          %s6893 = ssub.s32 4096, 4096
          %6894 = vsyncadd %s6885, %s6893
          %s6895 = smul.addr %s24, 32
          %s6896 = smul.addr %s6895, 128
          %s6897 = scalar_lea.hbm %s7, %s6896
          %s6898 = sshll.u32 %s6888, 4
          %s6899 = int_to_ptr.vmem [resolvable:$true] %s6898
          %6904 = dma.vmem_to_hbm [thread:$0]  %s6899, 4096, %s6897, %s6885, 128, 128, 8
        $region56: #{tpu_custom_call.1} parent=47 // pred_fallthru
          _
      $region48: #{tpu_custom_call.1} parent=5 // pred_fallthru
        _
      %p6905 = scmp.le.s32.totalorder 2, %s19
      // Predicated region
      $region57: #{tpu_custom_call.1} parent=5 // pred_check
        %p6906 = pneg %p6905
      $region58: #{tpu_custom_call.1} parent=5 // pred_check_branch
        %6908 = sbr.rel (%p6906) target = $region60
      $region59: #{tpu_custom_call.1} parent=5 // pred_region
        %s6909 = ssub.s32 %s19, 2
        // Predicated region
        $region61: #{tpu_custom_call.1} parent=59 // pred_check
          %p6910 = pneg %p200
        $region62: #{tpu_custom_call.1} parent=59 // pred_check_branch
          %6912 = sbr.rel (%p6910) target = $region64
        $region63: #{tpu_custom_call.1} parent=59 // pred_region
          %s6913 = sand.u32 %s185, 1
          %s6914 = scalar_lea.sflag [#allocation5], %s6913
          %s6915 = sand.u32 %s185, 1
          %s6916 = smul.addr %s6915, 256
          %s6917 = scalar_lea.vmem [#allocation6], %s6916
          %6918 = dma.done %s6914, 4096
        $region64: #{tpu_custom_call.1} parent=59 // pred_fallthru
          _
      $region60: #{tpu_custom_call.1} parent=5 // pred_fallthru
        _
    $region6: #{tpu_custom_call.1} parent=1 // loop_footer
      %s23 = sadd.s32 1, %s19
    $region7: #{tpu_custom_call.1} parent=1 // loop_footer_branch
      %18 = sbr.rel target = $region3
    $region8: #{tpu_custom_call.1} parent=1 // loop_exit
      _
    %6919 = vsyncpa [#allocation4], 1
    %s6920 = scalar_lea.sflag [#allocation4], 1
    %6921 = vsyncpa %s6920, 1
    %6922 = vsyncpa [#allocation5], 1
    %s6923 = scalar_lea.sflag [#allocation5], 1
    %6924 = vsyncpa %s6923, 1

</llo_original>
